<compile_context>
chip_gen: v7x
topology: tpu7x:2x2x1
jax: 0.10.0
libtpu: 0.0.40
codegen_flags: <defaults>
</compile_context>

<pallas_src>
import jax
import jax.numpy as jnp
from jax.experimental import pallas as pl
from jax.experimental.pallas import tpu as pltpu

EPS = 1e-5

# (Cout, Cin, K, stride, pad) for the five conv blocks of the reference model.
CONV_CFG = [
    (64, 1, 5, 3, 1),
    (64, 64, 5, 2, 1),
    (128, 64, 3, 1, 1),
    (128, 128, 3, 2, 1),
    (256, 128, 3, 1, 0),
]
H2 = 150  # second classifier Linear width


def _round_up(v, m=8):
    return (v + m - 1) // m * m


def build_ecg_forward(batch, in_ch, in_len, num_classes):
    """Returns (forward_fn, dims); forward_fn(x, params) -> (batch, num_classes)."""
    assert in_ch == 1, "EcgClassificationModel uses a single input channel"
    (C1, _, K1, S1, P1), (C2, _, K2, S2, P2), (C3, _, K3, S3, P3), \
        (C4, _, K4, S4, P4), (C5, _, K5, S5, P5) = CONV_CFG

    L1 = (in_len + 2 * P1 - K1) // S1 + 1          # 233
    L2 = (L1 + 2 * P2 - K2) // S2 + 1              # 116
    Q1 = (L2 - 1) // 2 + 1                         # 58  (pool1: k=1, s=2)
    L3 = (Q1 + 2 * P3 - K3) // S3 + 1              # 58
    L4 = (L3 + 2 * P4 - K4) // S4 + 1              # 29
    L5 = (L4 + 2 * P5 - K5) // S5 + 1              # 27
    Q2 = (L5 - 1) // 2 + 1                         # 14  (pool2: k=1, s=2)
    last_output = C5 * Q2                          # 3584
    H1 = 2048 if last_output > 2 * 2048 else 300   # 300
    NC = num_classes

    # Zero-padded channels-last activation scratch (rows = length positions).
    A1 = _round_up(L1 + 2)    # conv1 out at rows 1..L1       (pad rows 0, L1+1)
    A2 = _round_up(L2 + 4)    # conv2 out at rows 2..L2+1     (pool1 folded)
    A3 = _round_up(L3 + 2)    # conv3 out at rows 1..L3
    A4 = _round_up(L4)        # conv4 out at rows 0..L4-1     (conv5 has no pad)

    f32, bf16 = jnp.float32, jnp.bfloat16

    def epilogue(acc, bst_ref):
        # conv bias -> ReLU -> BatchNorm1d folded to scale/shift (inference).
        y = jnp.maximum(acc + bst_ref[0:1, :], 0.0)
        return y * bst_ref[1:2, :] + bst_ref[2:3, :]

    def kernel(p1_ref, w1_ref, bst1_ref, w2_ref, bst2_ref, w3_ref, bst3_ref,
               w4_ref, bst4_ref, w5_ref, bst5_ref, wc1_ref, bstc1_ref,
               wc2_ref, bc2_ref, wc3_ref, bc3_ref, o_ref,
               a1, a2, a3, a4):
        # Zero the padded buffers; their zero rows implement the conv paddings.
        a1[...] = jnp.zeros_like(a1)
        a2[...] = jnp.zeros_like(a2)
        a3[...] = jnp.zeros_like(a3)

        # --- conv1 (1->64, k=5, s=3, p=1): prebuilt patches (L1, 8) @ (8, 64).
        y = jnp.dot(p1_ref[0], w1_ref[...], preferred_element_type=f32)
        a1[pl.ds(1, L1), :] = epilogue(y, bst1_ref)

        # --- conv2 (64->64, k=5, s=2, p=1): tap j reads rows j, j+2, ...
        acc = jnp.zeros((L2, C2), f32)
        for j in range(K2):
            xj = a1[pl.ds(j, L2, 2), :].astype(bf16)
            acc = acc + jnp.dot(xj, w2_ref[j], preferred_element_type=f32)
        a2[pl.ds(2, L2), :] = epilogue(acc, bst2_ref)

        # --- pool1 (k=1, s=2) folded into conv3's read stride.
        # --- conv3 (64->128, k=3, s=1, p=1): tap j reads rows 2j, 2j+2, ...
        acc = jnp.zeros((L3, C3), f32)
        for j in range(K3):
            xj = a2[pl.ds(2 * j, L3, 2), :].astype(bf16)
            acc = acc + jnp.dot(xj, w3_ref[j], preferred_element_type=f32)
        a3[pl.ds(1, L3), :] = epilogue(acc, bst3_ref)

        # --- conv4 (128->128, k=3, s=2, p=1): tap j reads rows j, j+2, ...
        acc = jnp.zeros((L4, C4), f32)
        for j in range(K4):
            xj = a3[pl.ds(j, L4, 2), :].astype(bf16)
            acc = acc + jnp.dot(xj, w4_ref[j], preferred_element_type=f32)
        a4[pl.ds(0, L4), :] = epilogue(acc, bst4_ref)

        # --- conv5 (128->256, k=3, s=1, p=0), only at the even positions that
        # --- survive pool2 (pool folded into the read stride).
        acc = jnp.zeros((Q2, C5), f32)
        for j in range(K5):
            xj = a4[pl.ds(j, Q2, 2), :].astype(bf16)
            acc = acc + jnp.dot(xj, w5_ref[j], preferred_element_type=f32)
        feat = epilogue(acc, bst5_ref).astype(bf16)            # (Q2, C5)

        # --- classifier: Linear(C5*Q2 -> H1) as a sum over the Q2 positions so
        # --- the PyTorch (C, L)-ordered flatten never has to be materialized.
        h = jnp.zeros((1, H1), f32)
        for l in range(Q2):
            h = h + jnp.dot(feat[l:l + 1, :], wc1_ref[l],
                            preferred_element_type=f32)
        h = h + bstc1_ref[0:1, :]
        h = h * bstc1_ref[1:2, :] + bstc1_ref[2:3, :]          # BatchNorm1d(H1)
        # Dropout(p=0.68) is identity in eval mode.
        h = jnp.dot(h.astype(bf16), wc2_ref[...],
                    preferred_element_type=f32) + bc2_ref[...]
        h = jnp.dot(h.astype(bf16), wc3_ref[...],
                    preferred_element_type=f32) + bc3_ref[...]
        o_ref[...] = h.reshape(1, 1, NC)

    c2 = lambda i: (0, 0)
    c3 = lambda i: (0, 0, 0)
    in_specs = [
        pl.BlockSpec((1, L1, 8), lambda i: (i, 0, 0)),   # conv1 patches / sample
        pl.BlockSpec((8, C1), c2), pl.BlockSpec((3, C1), c2),
        pl.BlockSpec((K2, C1, C2), c3), pl.BlockSpec((3, C2), c2),
        pl.BlockSpec((K3, C2, C3), c3), pl.BlockSpec((3, C3), c2),
        pl.BlockSpec((K4, C3, C4), c3), pl.BlockSpec((3, C4), c2),
        pl.BlockSpec((K5, C4, C5), c3), pl.BlockSpec((3, C5), c2),
        pl.BlockSpec((Q2, C5, H1), c3), pl.BlockSpec((3, H1), c2),
        pl.BlockSpec((H1, H2), c2), pl.BlockSpec((1, H2), c2),
        pl.BlockSpec((H2, NC), c2), pl.BlockSpec((1, NC), c2),
    ]

    flops = 2 * batch * (L1 * 8 * C1 + L2 * K2 * C1 * C2 + L3 * K3 * C2 * C3
                         + L4 * K4 * C3 * C4 + Q2 * K5 * C4 * C5
                         + last_output * H1 + H1 * H2 + H2 * NC)
    bytes_accessed = (2 * (8 * C1 + K2 * C1 * C2 + K3 * C2 * C3 + K4 * C3 * C4
                           + K5 * C4 * C5 + Q2 * C5 * H1 + H1 * H2 + H2 * NC)
                      + 4 * (3 * (C1 + C2 + C3 + C4 + C5 + H1) + H2 + NC)
                      + 2 * batch * L1 * 8 + 4 * batch * NC)

    call = pl.pallas_call(
        kernel,
        out_shape=jax.ShapeDtypeStruct((batch, 1, NC), f32),
        grid=(batch,),
        in_specs=in_specs,
        out_specs=pl.BlockSpec((1, 1, NC), lambda i: (i, 0, 0)),
        scratch_shapes=[
            pltpu.VMEM((A1, C1), f32),
            pltpu.VMEM((A2, C2), f32),
            pltpu.VMEM((A3, C3), f32),
            pltpu.VMEM((A4, C4), f32),
        ],
        compiler_params=pltpu.CompilerParams(
            dimension_semantics=("parallel",)),
        cost_estimate=pl.CostEstimate(flops=flops, transcendentals=0,
                                      bytes_accessed=bytes_accessed),
    )

    def forward(x, params):
        # x: (N, 1, in_len) f32 -> logits (N, num_classes) f32.
        n = x.shape[0]
        xp = jnp.pad(x[:, 0, :], ((0, 0), (P1, P1)))            # (N, in_len + 2)
        cols = [xp[:, j:j + S1 * (L1 - 1) + 1:S1] for j in range(K1)]
        p1 = jnp.stack(cols, axis=-1)                           # (N, L1, K1)
        p1 = jnp.pad(p1, ((0, 0), (0, 0), (0, 8 - K1))).astype(bf16)
        out = call(p1, *params)
        return out.reshape(n, NC)

    dims = dict(L1=L1, L2=L2, Q1=Q1, L3=L3, L4=L4, L5=L5, Q2=Q2,
                last_output=last_output, H1=H1, H2=H2, NC=NC,
                channels=(C1, C2, C3, C4, C5))
    return forward, dims


# ---------------------------------------------------------------------------
# Parameter construction (inference-folded BatchNorm, kernel-ready layouts)
# ---------------------------------------------------------------------------
def _fold_bn(gamma, beta, rmean, rvar):
    scale = gamma / jnp.sqrt(rvar + EPS)
    shift = beta - rmean * scale
    return scale, shift


def _init_conv_bn(key, cout, cin, k):
    kw, kb, kg, kbe, km, kv = jax.random.split(key, 6)
    w = jax.random.normal(kw, (cout, cin, k), jnp.float32) * 0.05
    b = jax.random.normal(kb, (cout,), jnp.float32) * 0.05
    gamma = 1.0 + 0.1 * jax.random.normal(kg, (cout,), jnp.float32)
    beta = 0.1 * jax.random.normal(kbe, (cout,), jnp.float32)
    rmean = 0.05 * jax.random.normal(km, (cout,), jnp.float32)
    rvar = 1.0 + 0.1 * jax.random.uniform(kv, (cout,), jnp.float32)
    scale, shift = _fold_bn(gamma, beta, rmean, rvar)
    wk = jnp.transpose(w, (2, 1, 0))               # (K, Cin, Cout) per-tap matmul form
    bst = jnp.stack([b, scale, shift], axis=0)     # (3, Cout) f32
    return wk, bst


def _init_linear(key, din, dout):
    kw, kb = jax.random.split(key, 2)
    w = jax.random.normal(kw, (din, dout), jnp.float32) * 0.05
    b = jax.random.normal(kb, (dout,), jnp.float32) * 0.05
    return w, b


def init_params(key, dims):
    C1, C2, C3, C4, C5 = dims["channels"]
    Q2, H1, H2_, NC = dims["Q2"], dims["H1"], dims["H2"], dims["NC"]
    last_output = dims["last_output"]
    keys = jax.random.split(key, 9)

    w1k, bst1 = _init_conv_bn(keys[0], C1, 1, 5)
    w2k, bst2 = _init_conv_bn(keys[1], C2, C1, 5)
    w3k, bst3 = _init_conv_bn(keys[2], C3, C2, 3)
    w4k, bst4 = _init_conv_bn(keys[3], C4, C3, 3)
    w5k, bst5 = _init_conv_bn(keys[4], C5, C4, 3)
    # conv1 has Cin=1: squeeze and pad its 5 taps to 8 lanes.
    w1k = jnp.pad(w1k.reshape(5, C1), ((0, 3), (0, 0)))

    wc1, bc1 = _init_linear(keys[5], last_output, H1)
    kg, kbe, km, kv = jax.random.split(keys[6], 4)
    s1, t1 = _fold_bn(
        1.0 + 0.1 * jax.random.normal(kg, (H1,), jnp.float32),
        0.1 * jax.random.normal(kbe, (H1,), jnp.float32),
        0.05 * jax.random.normal(km, (H1,), jnp.float32),
        1.0 + 0.1 * jax.random.uniform(kv, (H1,), jnp.float32),
    )
    bstc1 = jnp.stack([bc1, s1, t1], axis=0)                     # (3, H1)
    # wc1 rows follow PyTorch's flatten order (c * Q2 + l); rearrange into
    # per-position (Q2, C5, H1) blocks so the kernel can contract the
    # channels-last features without materializing the flatten.
    wc1r = jnp.transpose(wc1.reshape(C5, Q2, H1), (1, 0, 2))     # (Q2, C5, H1)
    wc2, bc2 = _init_linear(keys[7], H1, H2_)
    wc3, bc3 = _init_linear(keys[8], H2_, NC)

    bf16 = jnp.bfloat16
    return (
        w1k.astype(bf16), bst1,
        w2k.astype(bf16), bst2,
        w3k.astype(bf16), bst3,
        w4k.astype(bf16), bst4,
        w5k.astype(bf16), bst5,
        wc1r.astype(bf16), bstc1,
        wc2.astype(bf16), bc2[None, :],
        wc3.astype(bf16), bc3[None, :],
    )


# ---------------------------------------------------------------------------
# Main
# ---------------------------------------------------------------------------
if __name__ == "__main__":
    batch, in_ch, in_len, num_classes = 2, 1, 700, 8

    forward, dims = build_ecg_forward(batch, in_ch, in_len, num_classes)

    key = jax.random.PRNGKey(0)
    k_params, k_x = jax.random.split(key)
    params = init_params(k_params, dims)
    x = jax.random.normal(k_x, (batch, in_ch, in_len), jnp.float32)

    logits = jax.jit(forward)(x, params)
    jax.block_until_ready(logits)

    assert logits.shape == (batch, num_classes)
    assert bool(jnp.all(jnp.isfinite(logits)))
    print("KERNEL_OK")
</pallas_src>

<mosaic_0001>
module attributes {stable_mosaic.version = 11 : i64} {
  func.func @kernel(%arg0: i32, %arg1: memref<1x233x8xbf16, #tpu.memory_space<vmem>>, %arg2: memref<8x64xbf16, #tpu.memory_space<vmem>>, %arg3: memref<3x64xf32, #tpu.memory_space<vmem>>, %arg4: memref<5x64x64xbf16, #tpu.memory_space<vmem>>, %arg5: memref<3x64xf32, #tpu.memory_space<vmem>>, %arg6: memref<3x64x128xbf16, #tpu.memory_space<vmem>>, %arg7: memref<3x128xf32, #tpu.memory_space<vmem>>, %arg8: memref<3x128x128xbf16, #tpu.memory_space<vmem>>, %arg9: memref<3x128xf32, #tpu.memory_space<vmem>>, %arg10: memref<3x128x256xbf16, #tpu.memory_space<vmem>>, %arg11: memref<3x256xf32, #tpu.memory_space<vmem>>, %arg12: memref<14x256x300xbf16, #tpu.memory_space<vmem>>, %arg13: memref<3x300xf32, #tpu.memory_space<vmem>>, %arg14: memref<300x150xbf16, #tpu.memory_space<vmem>>, %arg15: memref<1x150xf32, #tpu.memory_space<vmem>>, %arg16: memref<150x8xbf16, #tpu.memory_space<vmem>>, %arg17: memref<1x8xf32, #tpu.memory_space<vmem>>, %arg18: memref<1x1x8xf32, #tpu.memory_space<vmem>>, %arg19: memref<240x64xf32, #tpu.memory_space<vmem>>, %arg20: memref<120x64xf32, #tpu.memory_space<vmem>>, %arg21: memref<64x128xf32, #tpu.memory_space<vmem>>, %arg22: memref<32x128xf32, #tpu.memory_space<vmem>>) attributes {dimension_semantics = [#tpu.dimension_semantics<parallel>], iteration_bounds = array<i64: 2>, scalar_prefetch = 0 : i64, scratch_operands = 4 : i64, tpu.core_type = #tpu.core_type<tc>, window_params = [{transform_indices = @transform_0, window_bounds = array<i64: 1, 233, 8>}, {pipeline_mode = #tpu.pipeline_mode<synchronous>, transform_indices = @transform_1, window_bounds = array<i64: 8, 64>}, {pipeline_mode = #tpu.pipeline_mode<synchronous>, transform_indices = @transform_2, window_bounds = array<i64: 3, 64>}, {pipeline_mode = #tpu.pipeline_mode<synchronous>, transform_indices = @transform_3, window_bounds = array<i64: 5, 64, 64>}, {pipeline_mode = #tpu.pipeline_mode<synchronous>, transform_indices = @transform_4, window_bounds = array<i64: 3, 64>}, {pipeline_mode = #tpu.pipeline_mode<synchronous>, transform_indices = @transform_5, window_bounds = array<i64: 3, 64, 128>}, {pipeline_mode = #tpu.pipeline_mode<synchronous>, transform_indices = @transform_6, window_bounds = array<i64: 3, 128>}, {pipeline_mode = #tpu.pipeline_mode<synchronous>, transform_indices = @transform_7, window_bounds = array<i64: 3, 128, 128>}, {pipeline_mode = #tpu.pipeline_mode<synchronous>, transform_indices = @transform_8, window_bounds = array<i64: 3, 128>}, {pipeline_mode = #tpu.pipeline_mode<synchronous>, transform_indices = @transform_9, window_bounds = array<i64: 3, 128, 256>}, {pipeline_mode = #tpu.pipeline_mode<synchronous>, transform_indices = @transform_10, window_bounds = array<i64: 3, 256>}, {pipeline_mode = #tpu.pipeline_mode<synchronous>, transform_indices = @transform_11, window_bounds = array<i64: 14, 256, 300>}, {pipeline_mode = #tpu.pipeline_mode<synchronous>, transform_indices = @transform_12, window_bounds = array<i64: 3, 300>}, {pipeline_mode = #tpu.pipeline_mode<synchronous>, transform_indices = @transform_13, window_bounds = array<i64: 300, 150>}, {pipeline_mode = #tpu.pipeline_mode<synchronous>, transform_indices = @transform_14, window_bounds = array<i64: 1, 150>}, {pipeline_mode = #tpu.pipeline_mode<synchronous>, transform_indices = @transform_15, window_bounds = array<i64: 150, 8>}, {pipeline_mode = #tpu.pipeline_mode<synchronous>, transform_indices = @transform_16, window_bounds = array<i64: 1, 8>}, {transform_indices = @transform_17, window_bounds = array<i64: 1, 1, 8>}]} {
    %cst = arith.constant 0.000000e+00 : f32
    %0 = vector.broadcast %cst : f32 to vector<240x64xf32>
    %c0 = arith.constant 0 : index
    %c0_0 = arith.constant 0 : index
    %1 = vector.load %arg19[%c0, %c0_0] : memref<240x64xf32, #tpu.memory_space<vmem>>, vector<240x64xf32>
    tpu.vector_store %arg19[%c0, %c0_0], %0 {strides = array<i32>} : memref<240x64xf32, #tpu.memory_space<vmem>>, vector<240x64xf32>,
    %cst_1 = arith.constant 0.000000e+00 : f32
    %2 = vector.broadcast %cst_1 : f32 to vector<120x64xf32>
    %c0_2 = arith.constant 0 : index
    %c0_3 = arith.constant 0 : index
    %3 = vector.load %arg20[%c0_2, %c0_3] : memref<120x64xf32, #tpu.memory_space<vmem>>, vector<120x64xf32>
    tpu.vector_store %arg20[%c0_2, %c0_3], %2 {strides = array<i32>} : memref<120x64xf32, #tpu.memory_space<vmem>>, vector<120x64xf32>,
    %cst_4 = arith.constant 0.000000e+00 : f32
    %4 = vector.broadcast %cst_4 : f32 to vector<64x128xf32>
    %c0_5 = arith.constant 0 : index
    %c0_6 = arith.constant 0 : index
    %5 = vector.load %arg21[%c0_5, %c0_6] : memref<64x128xf32, #tpu.memory_space<vmem>>, vector<64x128xf32>
    tpu.vector_store %arg21[%c0_5, %c0_6], %4 {strides = array<i32>} : memref<64x128xf32, #tpu.memory_space<vmem>>, vector<64x128xf32>,
    %c0_7 = arith.constant 0 : index
    %c0_8 = arith.constant 0 : index
    %c0_9 = arith.constant 0 : index
    %6 = vector.load %arg1[%c0_7, %c0_8, %c0_9] : memref<1x233x8xbf16, #tpu.memory_space<vmem>>, vector<1x233x8xbf16>
    %7 = vector.shape_cast %6 : vector<1x233x8xbf16> to vector<233x8xbf16>
    %c0_10 = arith.constant 0 : index
    %c0_11 = arith.constant 0 : index
    %8 = vector.load %arg2[%c0_10, %c0_11] : memref<8x64xbf16, #tpu.memory_space<vmem>>, vector<8x64xbf16>
    %cst_12 = arith.constant dense<0.000000e+00> : vector<233x64xf32>
    %9 = tpu.matmul %7, %8, %cst_12 {dimension_numbers = #tpu.dot_dimension_numbers<[1], [0], [0], [1], [0, 0, 1, 1], [], []>} : vector<233x8xbf16>, vector<8x64xbf16>, vector<233x64xf32> -> vector<233x64xf32>
    %c0_13 = arith.constant 0 : index
    %c0_14 = arith.constant 0 : index
    %10 = vector.load %arg3[%c0_13, %c0_14] : memref<3x64xf32, #tpu.memory_space<vmem>>, vector<1x64xf32>
    %11 = vector.broadcast %10 : vector<1x64xf32> to vector<233x64xf32>
    %12 = arith.addf %9, %11 : vector<233x64xf32>
    %cst_15 = arith.constant 0.000000e+00 : f32
    %13 = vector.broadcast %cst_15 : f32 to vector<233x64xf32>
    %14 = arith.maximumf %12, %13 : vector<233x64xf32>
    %c1 = arith.constant 1 : index
    %c0_16 = arith.constant 0 : index
    %15 = vector.load %arg3[%c1, %c0_16] : memref<3x64xf32, #tpu.memory_space<vmem>>, vector<1x64xf32>
    %16 = vector.broadcast %15 : vector<1x64xf32> to vector<233x64xf32>
    %17 = arith.mulf %14, %16 : vector<233x64xf32>
    %c2 = arith.constant 2 : index
    %c0_17 = arith.constant 0 : index
    %18 = vector.load %arg3[%c2, %c0_17] : memref<3x64xf32, #tpu.memory_space<vmem>>, vector<1x64xf32>
    %19 = vector.broadcast %18 : vector<1x64xf32> to vector<233x64xf32>
    %20 = arith.addf %17, %19 : vector<233x64xf32>
    %c1_18 = arith.constant 1 : index
    %c0_19 = arith.constant 0 : index
    %21 = vector.load %arg19[%c1_18, %c0_19] : memref<240x64xf32, #tpu.memory_space<vmem>>, vector<233x64xf32>
    tpu.vector_store %arg19[%c1_18, %c0_19], %20 {strides = array<i32>} : memref<240x64xf32, #tpu.memory_space<vmem>>, vector<233x64xf32>,
    %cst_20 = arith.constant 0.000000e+00 : f32
    %22 = vector.broadcast %cst_20 : f32 to vector<116x64xf32>
    %c0_21 = arith.constant 0 : index
    %c0_22 = arith.constant 0 : index
    %23 = tpu.strided_load %arg19[%c0_21, %c0_22] {strides = array<i32: 2, 1>} : memref<240x64xf32, #tpu.memory_space<vmem>>, vector<116x64xf32>
    %24 = arith.truncf %23 : vector<116x64xf32> to vector<116x64xbf16>
    %c0_23 = arith.constant 0 : index
    %c0_24 = arith.constant 0 : index
    %c0_25 = arith.constant 0 : index
    %25 = vector.load %arg4[%c0_23, %c0_24, %c0_25] : memref<5x64x64xbf16, #tpu.memory_space<vmem>>, vector<1x64x64xbf16>
    %26 = vector.shape_cast %25 : vector<1x64x64xbf16> to vector<64x64xbf16>
    %cst_26 = arith.constant dense<0.000000e+00> : vector<116x64xf32>
    %27 = tpu.matmul %24, %26, %cst_26 {dimension_numbers = #tpu.dot_dimension_numbers<[1], [0], [0], [1], [0, 0, 1, 1], [], []>} : vector<116x64xbf16>, vector<64x64xbf16>, vector<116x64xf32> -> vector<116x64xf32>
    %28 = arith.addf %22, %27 : vector<116x64xf32>
    %c1_27 = arith.constant 1 : index
    %c0_28 = arith.constant 0 : index
    %29 = tpu.strided_load %arg19[%c1_27, %c0_28] {strides = array<i32: 2, 1>} : memref<240x64xf32, #tpu.memory_space<vmem>>, vector<116x64xf32>
    %30 = arith.truncf %29 : vector<116x64xf32> to vector<116x64xbf16>
    %c1_29 = arith.constant 1 : index
    %c0_30 = arith.constant 0 : index
    %c0_31 = arith.constant 0 : index
    %31 = vector.load %arg4[%c1_29, %c0_30, %c0_31] : memref<5x64x64xbf16, #tpu.memory_space<vmem>>, vector<1x64x64xbf16>
    %32 = vector.shape_cast %31 : vector<1x64x64xbf16> to vector<64x64xbf16>
    %cst_32 = arith.constant dense<0.000000e+00> : vector<116x64xf32>
    %33 = tpu.matmul %30, %32, %cst_32 {dimension_numbers = #tpu.dot_dimension_numbers<[1], [0], [0], [1], [0, 0, 1, 1], [], []>} : vector<116x64xbf16>, vector<64x64xbf16>, vector<116x64xf32> -> vector<116x64xf32>
    %34 = arith.addf %28, %33 : vector<116x64xf32>
    %c2_33 = arith.constant 2 : index
    %c0_34 = arith.constant 0 : index
    %35 = tpu.strided_load %arg19[%c2_33, %c0_34] {strides = array<i32: 2, 1>} : memref<240x64xf32, #tpu.memory_space<vmem>>, vector<116x64xf32>
    %36 = arith.truncf %35 : vector<116x64xf32> to vector<116x64xbf16>
    %c2_35 = arith.constant 2 : index
    %c0_36 = arith.constant 0 : index
    %c0_37 = arith.constant 0 : index
    %37 = vector.load %arg4[%c2_35, %c0_36, %c0_37] : memref<5x64x64xbf16, #tpu.memory_space<vmem>>, vector<1x64x64xbf16>
    %38 = vector.shape_cast %37 : vector<1x64x64xbf16> to vector<64x64xbf16>
    %cst_38 = arith.constant dense<0.000000e+00> : vector<116x64xf32>
    %39 = tpu.matmul %36, %38, %cst_38 {dimension_numbers = #tpu.dot_dimension_numbers<[1], [0], [0], [1], [0, 0, 1, 1], [], []>} : vector<116x64xbf16>, vector<64x64xbf16>, vector<116x64xf32> -> vector<116x64xf32>
    %40 = arith.addf %34, %39 : vector<116x64xf32>
    %c3 = arith.constant 3 : index
    %c0_39 = arith.constant 0 : index
    %41 = tpu.strided_load %arg19[%c3, %c0_39] {strides = array<i32: 2, 1>} : memref<240x64xf32, #tpu.memory_space<vmem>>, vector<116x64xf32>
    %42 = arith.truncf %41 : vector<116x64xf32> to vector<116x64xbf16>
    %c3_40 = arith.constant 3 : index
    %c0_41 = arith.constant 0 : index
    %c0_42 = arith.constant 0 : index
    %43 = vector.load %arg4[%c3_40, %c0_41, %c0_42] : memref<5x64x64xbf16, #tpu.memory_space<vmem>>, vector<1x64x64xbf16>
    %44 = vector.shape_cast %43 : vector<1x64x64xbf16> to vector<64x64xbf16>
    %cst_43 = arith.constant dense<0.000000e+00> : vector<116x64xf32>
    %45 = tpu.matmul %42, %44, %cst_43 {dimension_numbers = #tpu.dot_dimension_numbers<[1], [0], [0], [1], [0, 0, 1, 1], [], []>} : vector<116x64xbf16>, vector<64x64xbf16>, vector<116x64xf32> -> vector<116x64xf32>
    %46 = arith.addf %40, %45 : vector<116x64xf32>
    %c4 = arith.constant 4 : index
    %c0_44 = arith.constant 0 : index
    %47 = tpu.strided_load %arg19[%c4, %c0_44] {strides = array<i32: 2, 1>} : memref<240x64xf32, #tpu.memory_space<vmem>>, vector<116x64xf32>
    %48 = arith.truncf %47 : vector<116x64xf32> to vector<116x64xbf16>
    %c4_45 = arith.constant 4 : index
    %c0_46 = arith.constant 0 : index
    %c0_47 = arith.constant 0 : index
    %49 = vector.load %arg4[%c4_45, %c0_46, %c0_47] : memref<5x64x64xbf16, #tpu.memory_space<vmem>>, vector<1x64x64xbf16>
    %50 = vector.shape_cast %49 : vector<1x64x64xbf16> to vector<64x64xbf16>
    %cst_48 = arith.constant dense<0.000000e+00> : vector<116x64xf32>
    %51 = tpu.matmul %48, %50, %cst_48 {dimension_numbers = #tpu.dot_dimension_numbers<[1], [0], [0], [1], [0, 0, 1, 1], [], []>} : vector<116x64xbf16>, vector<64x64xbf16>, vector<116x64xf32> -> vector<116x64xf32>
    %52 = arith.addf %46, %51 : vector<116x64xf32>
    %c0_49 = arith.constant 0 : index
    %c0_50 = arith.constant 0 : index
    %53 = vector.load %arg5[%c0_49, %c0_50] : memref<3x64xf32, #tpu.memory_space<vmem>>, vector<1x64xf32>
    %54 = vector.broadcast %53 : vector<1x64xf32> to vector<116x64xf32>
    %55 = arith.addf %52, %54 : vector<116x64xf32>
    %cst_51 = arith.constant 0.000000e+00 : f32
    %56 = vector.broadcast %cst_51 : f32 to vector<116x64xf32>
    %57 = arith.maximumf %55, %56 : vector<116x64xf32>
    %c1_52 = arith.constant 1 : index
    %c0_53 = arith.constant 0 : index
    %58 = vector.load %arg5[%c1_52, %c0_53] : memref<3x64xf32, #tpu.memory_space<vmem>>, vector<1x64xf32>
    %59 = vector.broadcast %58 : vector<1x64xf32> to vector<116x64xf32>
    %60 = arith.mulf %57, %59 : vector<116x64xf32>
    %c2_54 = arith.constant 2 : index
    %c0_55 = arith.constant 0 : index
    %61 = vector.load %arg5[%c2_54, %c0_55] : memref<3x64xf32, #tpu.memory_space<vmem>>, vector<1x64xf32>
    %62 = vector.broadcast %61 : vector<1x64xf32> to vector<116x64xf32>
    %63 = arith.addf %60, %62 : vector<116x64xf32>
    %c2_56 = arith.constant 2 : index
    %c0_57 = arith.constant 0 : index
    %64 = vector.load %arg20[%c2_56, %c0_57] : memref<120x64xf32, #tpu.memory_space<vmem>>, vector<116x64xf32>
    tpu.vector_store %arg20[%c2_56, %c0_57], %63 {strides = array<i32>} : memref<120x64xf32, #tpu.memory_space<vmem>>, vector<116x64xf32>,
    %cst_58 = arith.constant 0.000000e+00 : f32
    %65 = vector.broadcast %cst_58 : f32 to vector<58x128xf32>
    %c0_59 = arith.constant 0 : index
    %c0_60 = arith.constant 0 : index
    %66 = tpu.strided_load %arg20[%c0_59, %c0_60] {strides = array<i32: 2, 1>} : memref<120x64xf32, #tpu.memory_space<vmem>>, vector<58x64xf32>
    %67 = arith.truncf %66 : vector<58x64xf32> to vector<58x64xbf16>
    %c0_61 = arith.constant 0 : index
    %c0_62 = arith.constant 0 : index
    %c0_63 = arith.constant 0 : index
    %68 = vector.load %arg6[%c0_61, %c0_62, %c0_63] : memref<3x64x128xbf16, #tpu.memory_space<vmem>>, vector<1x64x128xbf16>
    %69 = vector.shape_cast %68 : vector<1x64x128xbf16> to vector<64x128xbf16>
    %cst_64 = arith.constant dense<0.000000e+00> : vector<58x128xf32>
    %70 = tpu.matmul %67, %69, %cst_64 {dimension_numbers = #tpu.dot_dimension_numbers<[1], [0], [0], [1], [0, 0, 1, 1], [], []>} : vector<58x64xbf16>, vector<64x128xbf16>, vector<58x128xf32> -> vector<58x128xf32>
    %71 = arith.addf %65, %70 : vector<58x128xf32>
    %c2_65 = arith.constant 2 : index
    %c0_66 = arith.constant 0 : index
    %72 = tpu.strided_load %arg20[%c2_65, %c0_66] {strides = array<i32: 2, 1>} : memref<120x64xf32, #tpu.memory_space<vmem>>, vector<58x64xf32>
    %73 = arith.truncf %72 : vector<58x64xf32> to vector<58x64xbf16>
    %c1_67 = arith.constant 1 : index
    %c0_68 = arith.constant 0 : index
    %c0_69 = arith.constant 0 : index
    %74 = vector.load %arg6[%c1_67, %c0_68, %c0_69] : memref<3x64x128xbf16, #tpu.memory_space<vmem>>, vector<1x64x128xbf16>
    %75 = vector.shape_cast %74 : vector<1x64x128xbf16> to vector<64x128xbf16>
    %cst_70 = arith.constant dense<0.000000e+00> : vector<58x128xf32>
    %76 = tpu.matmul %73, %75, %cst_70 {dimension_numbers = #tpu.dot_dimension_numbers<[1], [0], [0], [1], [0, 0, 1, 1], [], []>} : vector<58x64xbf16>, vector<64x128xbf16>, vector<58x128xf32> -> vector<58x128xf32>
    %77 = arith.addf %71, %76 : vector<58x128xf32>
    %c4_71 = arith.constant 4 : index
    %c0_72 = arith.constant 0 : index
    %78 = tpu.strided_load %arg20[%c4_71, %c0_72] {strides = array<i32: 2, 1>} : memref<120x64xf32, #tpu.memory_space<vmem>>, vector<58x64xf32>
    %79 = arith.truncf %78 : vector<58x64xf32> to vector<58x64xbf16>
    %c2_73 = arith.constant 2 : index
    %c0_74 = arith.constant 0 : index
    %c0_75 = arith.constant 0 : index
    %80 = vector.load %arg6[%c2_73, %c0_74, %c0_75] : memref<3x64x128xbf16, #tpu.memory_space<vmem>>, vector<1x64x128xbf16>
    %81 = vector.shape_cast %80 : vector<1x64x128xbf16> to vector<64x128xbf16>
    %cst_76 = arith.constant dense<0.000000e+00> : vector<58x128xf32>
    %82 = tpu.matmul %79, %81, %cst_76 {dimension_numbers = #tpu.dot_dimension_numbers<[1], [0], [0], [1], [0, 0, 1, 1], [], []>} : vector<58x64xbf16>, vector<64x128xbf16>, vector<58x128xf32> -> vector<58x128xf32>
    %83 = arith.addf %77, %82 : vector<58x128xf32>
    %c0_77 = arith.constant 0 : index
    %c0_78 = arith.constant 0 : index
    %84 = vector.load %arg7[%c0_77, %c0_78] : memref<3x128xf32, #tpu.memory_space<vmem>>, vector<1x128xf32>
    %85 = vector.broadcast %84 : vector<1x128xf32> to vector<58x128xf32>
    %86 = arith.addf %83, %85 : vector<58x128xf32>
    %cst_79 = arith.constant 0.000000e+00 : f32
    %87 = vector.broadcast %cst_79 : f32 to vector<58x128xf32>
    %88 = arith.maximumf %86, %87 : vector<58x128xf32>
    %c1_80 = arith.constant 1 : index
    %c0_81 = arith.constant 0 : index
    %89 = vector.load %arg7[%c1_80, %c0_81] : memref<3x128xf32, #tpu.memory_space<vmem>>, vector<1x128xf32>
    %90 = vector.broadcast %89 : vector<1x128xf32> to vector<58x128xf32>
    %91 = arith.mulf %88, %90 : vector<58x128xf32>
    %c2_82 = arith.constant 2 : index
    %c0_83 = arith.constant 0 : index
    %92 = vector.load %arg7[%c2_82, %c0_83] : memref<3x128xf32, #tpu.memory_space<vmem>>, vector<1x128xf32>
    %93 = vector.broadcast %92 : vector<1x128xf32> to vector<58x128xf32>
    %94 = arith.addf %91, %93 : vector<58x128xf32>
    %c1_84 = arith.constant 1 : index
    %c0_85 = arith.constant 0 : index
    %95 = vector.load %arg21[%c1_84, %c0_85] : memref<64x128xf32, #tpu.memory_space<vmem>>, vector<58x128xf32>
    tpu.vector_store %arg21[%c1_84, %c0_85], %94 {strides = array<i32>} : memref<64x128xf32, #tpu.memory_space<vmem>>, vector<58x128xf32>,
    %cst_86 = arith.constant 0.000000e+00 : f32
    %96 = vector.broadcast %cst_86 : f32 to vector<29x128xf32>
    %c0_87 = arith.constant 0 : index
    %c0_88 = arith.constant 0 : index
    %97 = tpu.strided_load %arg21[%c0_87, %c0_88] {strides = array<i32: 2, 1>} : memref<64x128xf32, #tpu.memory_space<vmem>>, vector<29x128xf32>
    %98 = arith.truncf %97 : vector<29x128xf32> to vector<29x128xbf16>
    %c0_89 = arith.constant 0 : index
    %c0_90 = arith.constant 0 : index
    %c0_91 = arith.constant 0 : index
    %99 = vector.load %arg8[%c0_89, %c0_90, %c0_91] : memref<3x128x128xbf16, #tpu.memory_space<vmem>>, vector<1x128x128xbf16>
    %100 = vector.shape_cast %99 : vector<1x128x128xbf16> to vector<128x128xbf16>
    %cst_92 = arith.constant dense<0.000000e+00> : vector<29x128xf32>
    %101 = tpu.matmul %98, %100, %cst_92 {dimension_numbers = #tpu.dot_dimension_numbers<[1], [0], [0], [1], [0, 0, 1, 1], [], []>} : vector<29x128xbf16>, vector<128x128xbf16>, vector<29x128xf32> -> vector<29x128xf32>
    %102 = arith.addf %96, %101 : vector<29x128xf32>
    %c1_93 = arith.constant 1 : index
    %c0_94 = arith.constant 0 : index
    %103 = tpu.strided_load %arg21[%c1_93, %c0_94] {strides = array<i32: 2, 1>} : memref<64x128xf32, #tpu.memory_space<vmem>>, vector<29x128xf32>
    %104 = arith.truncf %103 : vector<29x128xf32> to vector<29x128xbf16>
    %c1_95 = arith.constant 1 : index
    %c0_96 = arith.constant 0 : index
    %c0_97 = arith.constant 0 : index
    %105 = vector.load %arg8[%c1_95, %c0_96, %c0_97] : memref<3x128x128xbf16, #tpu.memory_space<vmem>>, vector<1x128x128xbf16>
    %106 = vector.shape_cast %105 : vector<1x128x128xbf16> to vector<128x128xbf16>
    %cst_98 = arith.constant dense<0.000000e+00> : vector<29x128xf32>
    %107 = tpu.matmul %104, %106, %cst_98 {dimension_numbers = #tpu.dot_dimension_numbers<[1], [0], [0], [1], [0, 0, 1, 1], [], []>} : vector<29x128xbf16>, vector<128x128xbf16>, vector<29x128xf32> -> vector<29x128xf32>
    %108 = arith.addf %102, %107 : vector<29x128xf32>
    %c2_99 = arith.constant 2 : index
    %c0_100 = arith.constant 0 : index
    %109 = tpu.strided_load %arg21[%c2_99, %c0_100] {strides = array<i32: 2, 1>} : memref<64x128xf32, #tpu.memory_space<vmem>>, vector<29x128xf32>
    %110 = arith.truncf %109 : vector<29x128xf32> to vector<29x128xbf16>
    %c2_101 = arith.constant 2 : index
    %c0_102 = arith.constant 0 : index
    %c0_103 = arith.constant 0 : index
    %111 = vector.load %arg8[%c2_101, %c0_102, %c0_103] : memref<3x128x128xbf16, #tpu.memory_space<vmem>>, vector<1x128x128xbf16>
    %112 = vector.shape_cast %111 : vector<1x128x128xbf16> to vector<128x128xbf16>
    %cst_104 = arith.constant dense<0.000000e+00> : vector<29x128xf32>
    %113 = tpu.matmul %110, %112, %cst_104 {dimension_numbers = #tpu.dot_dimension_numbers<[1], [0], [0], [1], [0, 0, 1, 1], [], []>} : vector<29x128xbf16>, vector<128x128xbf16>, vector<29x128xf32> -> vector<29x128xf32>
    %114 = arith.addf %108, %113 : vector<29x128xf32>
    %c0_105 = arith.constant 0 : index
    %c0_106 = arith.constant 0 : index
    %115 = vector.load %arg9[%c0_105, %c0_106] : memref<3x128xf32, #tpu.memory_space<vmem>>, vector<1x128xf32>
    %116 = vector.broadcast %115 : vector<1x128xf32> to vector<29x128xf32>
    %117 = arith.addf %114, %116 : vector<29x128xf32>
    %cst_107 = arith.constant 0.000000e+00 : f32
    %118 = vector.broadcast %cst_107 : f32 to vector<29x128xf32>
    %119 = arith.maximumf %117, %118 : vector<29x128xf32>
    %c1_108 = arith.constant 1 : index
    %c0_109 = arith.constant 0 : index
    %120 = vector.load %arg9[%c1_108, %c0_109] : memref<3x128xf32, #tpu.memory_space<vmem>>, vector<1x128xf32>
    %121 = vector.broadcast %120 : vector<1x128xf32> to vector<29x128xf32>
    %122 = arith.mulf %119, %121 : vector<29x128xf32>
    %c2_110 = arith.constant 2 : index
    %c0_111 = arith.constant 0 : index
    %123 = vector.load %arg9[%c2_110, %c0_111] : memref<3x128xf32, #tpu.memory_space<vmem>>, vector<1x128xf32>
    %124 = vector.broadcast %123 : vector<1x128xf32> to vector<29x128xf32>
    %125 = arith.addf %122, %124 : vector<29x128xf32>
    %c0_112 = arith.constant 0 : index
    %c0_113 = arith.constant 0 : index
    %126 = vector.load %arg22[%c0_112, %c0_113] : memref<32x128xf32, #tpu.memory_space<vmem>>, vector<29x128xf32>
    tpu.vector_store %arg22[%c0_112, %c0_113], %125 {strides = array<i32>} : memref<32x128xf32, #tpu.memory_space<vmem>>, vector<29x128xf32>,
    %cst_114 = arith.constant 0.000000e+00 : f32
    %127 = vector.broadcast %cst_114 : f32 to vector<14x256xf32>
    %c0_115 = arith.constant 0 : index
    %c0_116 = arith.constant 0 : index
    %128 = tpu.strided_load %arg22[%c0_115, %c0_116] {strides = array<i32: 2, 1>} : memref<32x128xf32, #tpu.memory_space<vmem>>, vector<14x128xf32>
    %129 = arith.truncf %128 : vector<14x128xf32> to vector<14x128xbf16>
    %c0_117 = arith.constant 0 : index
    %c0_118 = arith.constant 0 : index
    %c0_119 = arith.constant 0 : index
    %130 = vector.load %arg10[%c0_117, %c0_118, %c0_119] : memref<3x128x256xbf16, #tpu.memory_space<vmem>>, vector<1x128x256xbf16>
    %131 = vector.shape_cast %130 : vector<1x128x256xbf16> to vector<128x256xbf16>
    %cst_120 = arith.constant dense<0.000000e+00> : vector<14x256xf32>
    %132 = tpu.matmul %129, %131, %cst_120 {dimension_numbers = #tpu.dot_dimension_numbers<[1], [0], [0], [1], [0, 0, 1, 1], [], []>} : vector<14x128xbf16>, vector<128x256xbf16>, vector<14x256xf32> -> vector<14x256xf32>
    %133 = arith.addf %127, %132 : vector<14x256xf32>
    %c1_121 = arith.constant 1 : index
    %c0_122 = arith.constant 0 : index
    %134 = tpu.strided_load %arg22[%c1_121, %c0_122] {strides = array<i32: 2, 1>} : memref<32x128xf32, #tpu.memory_space<vmem>>, vector<14x128xf32>
    %135 = arith.truncf %134 : vector<14x128xf32> to vector<14x128xbf16>
    %c1_123 = arith.constant 1 : index
    %c0_124 = arith.constant 0 : index
    %c0_125 = arith.constant 0 : index
    %136 = vector.load %arg10[%c1_123, %c0_124, %c0_125] : memref<3x128x256xbf16, #tpu.memory_space<vmem>>, vector<1x128x256xbf16>
    %137 = vector.shape_cast %136 : vector<1x128x256xbf16> to vector<128x256xbf16>
    %cst_126 = arith.constant dense<0.000000e+00> : vector<14x256xf32>
    %138 = tpu.matmul %135, %137, %cst_126 {dimension_numbers = #tpu.dot_dimension_numbers<[1], [0], [0], [1], [0, 0, 1, 1], [], []>} : vector<14x128xbf16>, vector<128x256xbf16>, vector<14x256xf32> -> vector<14x256xf32>
    %139 = arith.addf %133, %138 : vector<14x256xf32>
    %c2_127 = arith.constant 2 : index
    %c0_128 = arith.constant 0 : index
    %140 = tpu.strided_load %arg22[%c2_127, %c0_128] {strides = array<i32: 2, 1>} : memref<32x128xf32, #tpu.memory_space<vmem>>, vector<14x128xf32>
    %141 = arith.truncf %140 : vector<14x128xf32> to vector<14x128xbf16>
    %c2_129 = arith.constant 2 : index
    %c0_130 = arith.constant 0 : index
    %c0_131 = arith.constant 0 : index
    %142 = vector.load %arg10[%c2_129, %c0_130, %c0_131] : memref<3x128x256xbf16, #tpu.memory_space<vmem>>, vector<1x128x256xbf16>
    %143 = vector.shape_cast %142 : vector<1x128x256xbf16> to vector<128x256xbf16>
    %cst_132 = arith.constant dense<0.000000e+00> : vector<14x256xf32>
    %144 = tpu.matmul %141, %143, %cst_132 {dimension_numbers = #tpu.dot_dimension_numbers<[1], [0], [0], [1], [0, 0, 1, 1], [], []>} : vector<14x128xbf16>, vector<128x256xbf16>, vector<14x256xf32> -> vector<14x256xf32>
    %145 = arith.addf %139, %144 : vector<14x256xf32>
    %c0_133 = arith.constant 0 : index
    %c0_134 = arith.constant 0 : index
    %146 = vector.load %arg11[%c0_133, %c0_134] : memref<3x256xf32, #tpu.memory_space<vmem>>, vector<1x256xf32>
    %147 = vector.broadcast %146 : vector<1x256xf32> to vector<14x256xf32>
    %148 = arith.addf %145, %147 : vector<14x256xf32>
    %cst_135 = arith.constant 0.000000e+00 : f32
    %149 = vector.broadcast %cst_135 : f32 to vector<14x256xf32>
    %150 = arith.maximumf %148, %149 : vector<14x256xf32>
    %c1_136 = arith.constant 1 : index
    %c0_137 = arith.constant 0 : index
    %151 = vector.load %arg11[%c1_136, %c0_137] : memref<3x256xf32, #tpu.memory_space<vmem>>, vector<1x256xf32>
    %152 = vector.broadcast %151 : vector<1x256xf32> to vector<14x256xf32>
    %153 = arith.mulf %150, %152 : vector<14x256xf32>
    %c2_138 = arith.constant 2 : index
    %c0_139 = arith.constant 0 : index
    %154 = vector.load %arg11[%c2_138, %c0_139] : memref<3x256xf32, #tpu.memory_space<vmem>>, vector<1x256xf32>
    %155 = vector.broadcast %154 : vector<1x256xf32> to vector<14x256xf32>
    %156 = arith.addf %153, %155 : vector<14x256xf32>
    %157 = arith.truncf %156 : vector<14x256xf32> to vector<14x256xbf16>
    %cst_140 = arith.constant 0.000000e+00 : f32
    %158 = vector.broadcast %cst_140 : f32 to vector<1x300xf32>
    %159 = vector.extract_strided_slice %157 {offsets = [0, 0], sizes = [1, 256], strides = [1, 1]} : vector<14x256xbf16> to vector<1x256xbf16>
    %c0_141 = arith.constant 0 : index
    %c0_142 = arith.constant 0 : index
    %c0_143 = arith.constant 0 : index
    %160 = vector.load %arg12[%c0_141, %c0_142, %c0_143] : memref<14x256x300xbf16, #tpu.memory_space<vmem>>, vector<1x256x300xbf16>
    %161 = vector.shape_cast %160 : vector<1x256x300xbf16> to vector<256x300xbf16>
    %cst_144 = arith.constant dense<0.000000e+00> : vector<1x300xf32>
    %162 = tpu.matmul %159, %161, %cst_144 {dimension_numbers = #tpu.dot_dimension_numbers<[1], [0], [0], [1], [0, 0, 1, 1], [], []>} : vector<1x256xbf16>, vector<256x300xbf16>, vector<1x300xf32> -> vector<1x300xf32>
    %163 = arith.addf %158, %162 : vector<1x300xf32>
    %164 = vector.extract_strided_slice %157 {offsets = [1, 0], sizes = [1, 256], strides = [1, 1]} : vector<14x256xbf16> to vector<1x256xbf16>
    %c1_145 = arith.constant 1 : index
    %c0_146 = arith.constant 0 : index
    %c0_147 = arith.constant 0 : index
    %165 = vector.load %arg12[%c1_145, %c0_146, %c0_147] : memref<14x256x300xbf16, #tpu.memory_space<vmem>>, vector<1x256x300xbf16>
    %166 = vector.shape_cast %165 : vector<1x256x300xbf16> to vector<256x300xbf16>
    %cst_148 = arith.constant dense<0.000000e+00> : vector<1x300xf32>
    %167 = tpu.matmul %164, %166, %cst_148 {dimension_numbers = #tpu.dot_dimension_numbers<[1], [0], [0], [1], [0, 0, 1, 1], [], []>} : vector<1x256xbf16>, vector<256x300xbf16>, vector<1x300xf32> -> vector<1x300xf32>
    %168 = arith.addf %163, %167 : vector<1x300xf32>
    %169 = vector.extract_strided_slice %157 {offsets = [2, 0], sizes = [1, 256], strides = [1, 1]} : vector<14x256xbf16> to vector<1x256xbf16>
    %c2_149 = arith.constant 2 : index
    %c0_150 = arith.constant 0 : index
    %c0_151 = arith.constant 0 : index
    %170 = vector.load %arg12[%c2_149, %c0_150, %c0_151] : memref<14x256x300xbf16, #tpu.memory_space<vmem>>, vector<1x256x300xbf16>
    %171 = vector.shape_cast %170 : vector<1x256x300xbf16> to vector<256x300xbf16>
    %cst_152 = arith.constant dense<0.000000e+00> : vector<1x300xf32>
    %172 = tpu.matmul %169, %171, %cst_152 {dimension_numbers = #tpu.dot_dimension_numbers<[1], [0], [0], [1], [0, 0, 1, 1], [], []>} : vector<1x256xbf16>, vector<256x300xbf16>, vector<1x300xf32> -> vector<1x300xf32>
    %173 = arith.addf %168, %172 : vector<1x300xf32>
    %174 = vector.extract_strided_slice %157 {offsets = [3, 0], sizes = [1, 256], strides = [1, 1]} : vector<14x256xbf16> to vector<1x256xbf16>
    %c3_153 = arith.constant 3 : index
    %c0_154 = arith.constant 0 : index
    %c0_155 = arith.constant 0 : index
    %175 = vector.load %arg12[%c3_153, %c0_154, %c0_155] : memref<14x256x300xbf16, #tpu.memory_space<vmem>>, vector<1x256x300xbf16>
    %176 = vector.shape_cast %175 : vector<1x256x300xbf16> to vector<256x300xbf16>
    %cst_156 = arith.constant dense<0.000000e+00> : vector<1x300xf32>
    %177 = tpu.matmul %174, %176, %cst_156 {dimension_numbers = #tpu.dot_dimension_numbers<[1], [0], [0], [1], [0, 0, 1, 1], [], []>} : vector<1x256xbf16>, vector<256x300xbf16>, vector<1x300xf32> -> vector<1x300xf32>
    %178 = arith.addf %173, %177 : vector<1x300xf32>
    %179 = vector.extract_strided_slice %157 {offsets = [4, 0], sizes = [1, 256], strides = [1, 1]} : vector<14x256xbf16> to vector<1x256xbf16>
    %c4_157 = arith.constant 4 : index
    %c0_158 = arith.constant 0 : index
    %c0_159 = arith.constant 0 : index
    %180 = vector.load %arg12[%c4_157, %c0_158, %c0_159] : memref<14x256x300xbf16, #tpu.memory_space<vmem>>, vector<1x256x300xbf16>
    %181 = vector.shape_cast %180 : vector<1x256x300xbf16> to vector<256x300xbf16>
    %cst_160 = arith.constant dense<0.000000e+00> : vector<1x300xf32>
    %182 = tpu.matmul %179, %181, %cst_160 {dimension_numbers = #tpu.dot_dimension_numbers<[1], [0], [0], [1], [0, 0, 1, 1], [], []>} : vector<1x256xbf16>, vector<256x300xbf16>, vector<1x300xf32> -> vector<1x300xf32>
    %183 = arith.addf %178, %182 : vector<1x300xf32>
    %184 = vector.extract_strided_slice %157 {offsets = [5, 0], sizes = [1, 256], strides = [1, 1]} : vector<14x256xbf16> to vector<1x256xbf16>
    %c5 = arith.constant 5 : index
    %c0_161 = arith.constant 0 : index
    %c0_162 = arith.constant 0 : index
    %185 = vector.load %arg12[%c5, %c0_161, %c0_162] : memref<14x256x300xbf16, #tpu.memory_space<vmem>>, vector<1x256x300xbf16>
    %186 = vector.shape_cast %185 : vector<1x256x300xbf16> to vector<256x300xbf16>
    %cst_163 = arith.constant dense<0.000000e+00> : vector<1x300xf32>
    %187 = tpu.matmul %184, %186, %cst_163 {dimension_numbers = #tpu.dot_dimension_numbers<[1], [0], [0], [1], [0, 0, 1, 1], [], []>} : vector<1x256xbf16>, vector<256x300xbf16>, vector<1x300xf32> -> vector<1x300xf32>
    %188 = arith.addf %183, %187 : vector<1x300xf32>
    %189 = vector.extract_strided_slice %157 {offsets = [6, 0], sizes = [1, 256], strides = [1, 1]} : vector<14x256xbf16> to vector<1x256xbf16>
    %c6 = arith.constant 6 : index
    %c0_164 = arith.constant 0 : index
    %c0_165 = arith.constant 0 : index
    %190 = vector.load %arg12[%c6, %c0_164, %c0_165] : memref<14x256x300xbf16, #tpu.memory_space<vmem>>, vector<1x256x300xbf16>
    %191 = vector.shape_cast %190 : vector<1x256x300xbf16> to vector<256x300xbf16>
    %cst_166 = arith.constant dense<0.000000e+00> : vector<1x300xf32>
    %192 = tpu.matmul %189, %191, %cst_166 {dimension_numbers = #tpu.dot_dimension_numbers<[1], [0], [0], [1], [0, 0, 1, 1], [], []>} : vector<1x256xbf16>, vector<256x300xbf16>, vector<1x300xf32> -> vector<1x300xf32>
    %193 = arith.addf %188, %192 : vector<1x300xf32>
    %194 = vector.extract_strided_slice %157 {offsets = [7, 0], sizes = [1, 256], strides = [1, 1]} : vector<14x256xbf16> to vector<1x256xbf16>
    %c7 = arith.constant 7 : index
    %c0_167 = arith.constant 0 : index
    %c0_168 = arith.constant 0 : index
    %195 = vector.load %arg12[%c7, %c0_167, %c0_168] : memref<14x256x300xbf16, #tpu.memory_space<vmem>>, vector<1x256x300xbf16>
    %196 = vector.shape_cast %195 : vector<1x256x300xbf16> to vector<256x300xbf16>
    %cst_169 = arith.constant dense<0.000000e+00> : vector<1x300xf32>
    %197 = tpu.matmul %194, %196, %cst_169 {dimension_numbers = #tpu.dot_dimension_numbers<[1], [0], [0], [1], [0, 0, 1, 1], [], []>} : vector<1x256xbf16>, vector<256x300xbf16>, vector<1x300xf32> -> vector<1x300xf32>
    %198 = arith.addf %193, %197 : vector<1x300xf32>
    %199 = vector.extract_strided_slice %157 {offsets = [8, 0], sizes = [1, 256], strides = [1, 1]} : vector<14x256xbf16> to vector<1x256xbf16>
    %c8 = arith.constant 8 : index
    %c0_170 = arith.constant 0 : index
    %c0_171 = arith.constant 0 : index
    %200 = vector.load %arg12[%c8, %c0_170, %c0_171] : memref<14x256x300xbf16, #tpu.memory_space<vmem>>, vector<1x256x300xbf16>
    %201 = vector.shape_cast %200 : vector<1x256x300xbf16> to vector<256x300xbf16>
    %cst_172 = arith.constant dense<0.000000e+00> : vector<1x300xf32>
    %202 = tpu.matmul %199, %201, %cst_172 {dimension_numbers = #tpu.dot_dimension_numbers<[1], [0], [0], [1], [0, 0, 1, 1], [], []>} : vector<1x256xbf16>, vector<256x300xbf16>, vector<1x300xf32> -> vector<1x300xf32>
    %203 = arith.addf %198, %202 : vector<1x300xf32>
    %204 = vector.extract_strided_slice %157 {offsets = [9, 0], sizes = [1, 256], strides = [1, 1]} : vector<14x256xbf16> to vector<1x256xbf16>
    %c9 = arith.constant 9 : index
    %c0_173 = arith.constant 0 : index
    %c0_174 = arith.constant 0 : index
    %205 = vector.load %arg12[%c9, %c0_173, %c0_174] : memref<14x256x300xbf16, #tpu.memory_space<vmem>>, vector<1x256x300xbf16>
    %206 = vector.shape_cast %205 : vector<1x256x300xbf16> to vector<256x300xbf16>
    %cst_175 = arith.constant dense<0.000000e+00> : vector<1x300xf32>
    %207 = tpu.matmul %204, %206, %cst_175 {dimension_numbers = #tpu.dot_dimension_numbers<[1], [0], [0], [1], [0, 0, 1, 1], [], []>} : vector<1x256xbf16>, vector<256x300xbf16>, vector<1x300xf32> -> vector<1x300xf32>
    %208 = arith.addf %203, %207 : vector<1x300xf32>
    %209 = vector.extract_strided_slice %157 {offsets = [10, 0], sizes = [1, 256], strides = [1, 1]} : vector<14x256xbf16> to vector<1x256xbf16>
    %c10 = arith.constant 10 : index
    %c0_176 = arith.constant 0 : index
    %c0_177 = arith.constant 0 : index
    %210 = vector.load %arg12[%c10, %c0_176, %c0_177] : memref<14x256x300xbf16, #tpu.memory_space<vmem>>, vector<1x256x300xbf16>
    %211 = vector.shape_cast %210 : vector<1x256x300xbf16> to vector<256x300xbf16>
    %cst_178 = arith.constant dense<0.000000e+00> : vector<1x300xf32>
    %212 = tpu.matmul %209, %211, %cst_178 {dimension_numbers = #tpu.dot_dimension_numbers<[1], [0], [0], [1], [0, 0, 1, 1], [], []>} : vector<1x256xbf16>, vector<256x300xbf16>, vector<1x300xf32> -> vector<1x300xf32>
    %213 = arith.addf %208, %212 : vector<1x300xf32>
    %214 = vector.extract_strided_slice %157 {offsets = [11, 0], sizes = [1, 256], strides = [1, 1]} : vector<14x256xbf16> to vector<1x256xbf16>
    %c11 = arith.constant 11 : index
    %c0_179 = arith.constant 0 : index
    %c0_180 = arith.constant 0 : index
    %215 = vector.load %arg12[%c11, %c0_179, %c0_180] : memref<14x256x300xbf16, #tpu.memory_space<vmem>>, vector<1x256x300xbf16>
    %216 = vector.shape_cast %215 : vector<1x256x300xbf16> to vector<256x300xbf16>
    %cst_181 = arith.constant dense<0.000000e+00> : vector<1x300xf32>
    %217 = tpu.matmul %214, %216, %cst_181 {dimension_numbers = #tpu.dot_dimension_numbers<[1], [0], [0], [1], [0, 0, 1, 1], [], []>} : vector<1x256xbf16>, vector<256x300xbf16>, vector<1x300xf32> -> vector<1x300xf32>
    %218 = arith.addf %213, %217 : vector<1x300xf32>
    %219 = vector.extract_strided_slice %157 {offsets = [12, 0], sizes = [1, 256], strides = [1, 1]} : vector<14x256xbf16> to vector<1x256xbf16>
    %c12 = arith.constant 12 : index
    %c0_182 = arith.constant 0 : index
    %c0_183 = arith.constant 0 : index
    %220 = vector.load %arg12[%c12, %c0_182, %c0_183] : memref<14x256x300xbf16, #tpu.memory_space<vmem>>, vector<1x256x300xbf16>
    %221 = vector.shape_cast %220 : vector<1x256x300xbf16> to vector<256x300xbf16>
    %cst_184 = arith.constant dense<0.000000e+00> : vector<1x300xf32>
    %222 = tpu.matmul %219, %221, %cst_184 {dimension_numbers = #tpu.dot_dimension_numbers<[1], [0], [0], [1], [0, 0, 1, 1], [], []>} : vector<1x256xbf16>, vector<256x300xbf16>, vector<1x300xf32> -> vector<1x300xf32>
    %223 = arith.addf %218, %222 : vector<1x300xf32>
    %224 = vector.extract_strided_slice %157 {offsets = [13, 0], sizes = [1, 256], strides = [1, 1]} : vector<14x256xbf16> to vector<1x256xbf16>
    %c13 = arith.constant 13 : index
    %c0_185 = arith.constant 0 : index
    %c0_186 = arith.constant 0 : index
    %225 = vector.load %arg12[%c13, %c0_185, %c0_186] : memref<14x256x300xbf16, #tpu.memory_space<vmem>>, vector<1x256x300xbf16>
    %226 = vector.shape_cast %225 : vector<1x256x300xbf16> to vector<256x300xbf16>
    %cst_187 = arith.constant dense<0.000000e+00> : vector<1x300xf32>
    %227 = tpu.matmul %224, %226, %cst_187 {dimension_numbers = #tpu.dot_dimension_numbers<[1], [0], [0], [1], [0, 0, 1, 1], [], []>} : vector<1x256xbf16>, vector<256x300xbf16>, vector<1x300xf32> -> vector<1x300xf32>
    %228 = arith.addf %223, %227 : vector<1x300xf32>
    %c0_188 = arith.constant 0 : index
    %c0_189 = arith.constant 0 : index
    %229 = vector.load %arg13[%c0_188, %c0_189] : memref<3x300xf32, #tpu.memory_space<vmem>>, vector<1x300xf32>
    %230 = arith.addf %228, %229 : vector<1x300xf32>
    %c1_190 = arith.constant 1 : index
    %c0_191 = arith.constant 0 : index
    %231 = vector.load %arg13[%c1_190, %c0_191] : memref<3x300xf32, #tpu.memory_space<vmem>>, vector<1x300xf32>
    %232 = arith.mulf %230, %231 : vector<1x300xf32>
    %c2_192 = arith.constant 2 : index
    %c0_193 = arith.constant 0 : index
    %233 = vector.load %arg13[%c2_192, %c0_193] : memref<3x300xf32, #tpu.memory_space<vmem>>, vector<1x300xf32>
    %234 = arith.addf %232, %233 : vector<1x300xf32>
    %235 = arith.truncf %234 : vector<1x300xf32> to vector<1x300xbf16>
    %c0_194 = arith.constant 0 : index
    %c0_195 = arith.constant 0 : index
    %236 = vector.load %arg14[%c0_194, %c0_195] : memref<300x150xbf16, #tpu.memory_space<vmem>>, vector<300x150xbf16>
    %cst_196 = arith.constant dense<0.000000e+00> : vector<1x150xf32>
    %237 = tpu.matmul %235, %236, %cst_196 {dimension_numbers = #tpu.dot_dimension_numbers<[1], [0], [0], [1], [0, 0, 1, 1], [], []>} : vector<1x300xbf16>, vector<300x150xbf16>, vector<1x150xf32> -> vector<1x150xf32>
    %c0_197 = arith.constant 0 : index
    %c0_198 = arith.constant 0 : index
    %238 = vector.load %arg15[%c0_197, %c0_198] : memref<1x150xf32, #tpu.memory_space<vmem>>, vector<1x150xf32>
    %239 = arith.addf %237, %238 : vector<1x150xf32>
    %240 = arith.truncf %239 : vector<1x150xf32> to vector<1x150xbf16>
    %c0_199 = arith.constant 0 : index
    %c0_200 = arith.constant 0 : index
    %241 = vector.load %arg16[%c0_199, %c0_200] : memref<150x8xbf16, #tpu.memory_space<vmem>>, vector<150x8xbf16>
    %cst_201 = arith.constant dense<0.000000e+00> : vector<1x8xf32>
    %242 = tpu.matmul %240, %241, %cst_201 {dimension_numbers = #tpu.dot_dimension_numbers<[1], [0], [0], [1], [0, 0, 1, 1], [], []>} : vector<1x150xbf16>, vector<150x8xbf16>, vector<1x8xf32> -> vector<1x8xf32>
    %c0_202 = arith.constant 0 : index
    %c0_203 = arith.constant 0 : index
    %243 = vector.load %arg17[%c0_202, %c0_203] : memref<1x8xf32, #tpu.memory_space<vmem>>, vector<1x8xf32>
    %244 = arith.addf %242, %243 : vector<1x8xf32>
    %245 = vector.shape_cast %244 : vector<1x8xf32> to vector<1x1x8xf32>
    %c0_204 = arith.constant 0 : index
    %c0_205 = arith.constant 0 : index
    %c0_206 = arith.constant 0 : index
    %246 = vector.load %arg18[%c0_204, %c0_205, %c0_206] : memref<1x1x8xf32, #tpu.memory_space<vmem>>, vector<1x1x8xf32>
    tpu.vector_store %arg18[%c0_204, %c0_205, %c0_206], %245 {strides = array<i32>} : memref<1x1x8xf32, #tpu.memory_space<vmem>>, vector<1x1x8xf32>,
    return
  }
  func.func @transform_0(%arg0: i32) -> (i32, i32, i32) {
    %c0_i32 = arith.constant 0 : i32
    %c0_i32_0 = arith.constant 0 : i32
    %c0_i32_1 = arith.constant 0 : i32
    return %arg0, %c0_i32, %c0_i32_0 : i32, i32, i32
  }
  func.func @transform_1(%arg0: i32) -> (i32, i32) {
    %c0_i32 = arith.constant 0 : i32
    %c0_i32_0 = arith.constant 0 : i32
    %c0_i32_1 = arith.constant 0 : i32
    return %c0_i32, %c0_i32_0 : i32, i32
  }
  func.func @transform_2(%arg0: i32) -> (i32, i32) {
    %c0_i32 = arith.constant 0 : i32
    %c0_i32_0 = arith.constant 0 : i32
    %c0_i32_1 = arith.constant 0 : i32
    return %c0_i32, %c0_i32_0 : i32, i32
  }
  func.func @transform_3(%arg0: i32) -> (i32, i32, i32) {
    %c0_i32 = arith.constant 0 : i32
    %c0_i32_0 = arith.constant 0 : i32
    %c0_i32_1 = arith.constant 0 : i32
    %c0_i32_2 = arith.constant 0 : i32
    return %c0_i32, %c0_i32_0, %c0_i32_1 : i32, i32, i32
  }
  func.func @transform_4(%arg0: i32) -> (i32, i32) {
    %c0_i32 = arith.constant 0 : i32
    %c0_i32_0 = arith.constant 0 : i32
    %c0_i32_1 = arith.constant 0 : i32
    return %c0_i32, %c0_i32_0 : i32, i32
  }
  func.func @transform_5(%arg0: i32) -> (i32, i32, i32) {
    %c0_i32 = arith.constant 0 : i32
    %c0_i32_0 = arith.constant 0 : i32
    %c0_i32_1 = arith.constant 0 : i32
    %c0_i32_2 = arith.constant 0 : i32
    return %c0_i32, %c0_i32_0, %c0_i32_1 : i32, i32, i32
  }
  func.func @transform_6(%arg0: i32) -> (i32, i32) {
    %c0_i32 = arith.constant 0 : i32
    %c0_i32_0 = arith.constant 0 : i32
    %c0_i32_1 = arith.constant 0 : i32
    return %c0_i32, %c0_i32_0 : i32, i32
  }
  func.func @transform_7(%arg0: i32) -> (i32, i32, i32) {
    %c0_i32 = arith.constant 0 : i32
    %c0_i32_0 = arith.constant 0 : i32
    %c0_i32_1 = arith.constant 0 : i32
    %c0_i32_2 = arith.constant 0 : i32
    return %c0_i32, %c0_i32_0, %c0_i32_1 : i32, i32, i32
  }
  func.func @transform_8(%arg0: i32) -> (i32, i32) {
    %c0_i32 = arith.constant 0 : i32
    %c0_i32_0 = arith.constant 0 : i32
    %c0_i32_1 = arith.constant 0 : i32
    return %c0_i32, %c0_i32_0 : i32, i32
  }
  func.func @transform_9(%arg0: i32) -> (i32, i32, i32) {
    %c0_i32 = arith.constant 0 : i32
    %c0_i32_0 = arith.constant 0 : i32
    %c0_i32_1 = arith.constant 0 : i32
    %c0_i32_2 = arith.constant 0 : i32
    return %c0_i32, %c0_i32_0, %c0_i32_1 : i32, i32, i32
  }
  func.func @transform_10(%arg0: i32) -> (i32, i32) {
    %c0_i32 = arith.constant 0 : i32
    %c0_i32_0 = arith.constant 0 : i32
    %c0_i32_1 = arith.constant 0 : i32
    return %c0_i32, %c0_i32_0 : i32, i32
  }
  func.func @transform_11(%arg0: i32) -> (i32, i32, i32) {
    %c0_i32 = arith.constant 0 : i32
    %c0_i32_0 = arith.constant 0 : i32
    %c0_i32_1 = arith.constant 0 : i32
    %c0_i32_2 = arith.constant 0 : i32
    return %c0_i32, %c0_i32_0, %c0_i32_1 : i32, i32, i32
  }
  func.func @transform_12(%arg0: i32) -> (i32, i32) {
    %c0_i32 = arith.constant 0 : i32
    %c0_i32_0 = arith.constant 0 : i32
    %c0_i32_1 = arith.constant 0 : i32
    return %c0_i32, %c0_i32_0 : i32, i32
  }
  func.func @transform_13(%arg0: i32) -> (i32, i32) {
    %c0_i32 = arith.constant 0 : i32
    %c0_i32_0 = arith.constant 0 : i32
    %c0_i32_1 = arith.constant 0 : i32
    return %c0_i32, %c0_i32_0 : i32, i32
  }
  func.func @transform_14(%arg0: i32) -> (i32, i32) {
    %c0_i32 = arith.constant 0 : i32
    %c0_i32_0 = arith.constant 0 : i32
    %c0_i32_1 = arith.constant 0 : i32
    return %c0_i32, %c0_i32_0 : i32, i32
  }
  func.func @transform_15(%arg0: i32) -> (i32, i32) {
    %c0_i32 = arith.constant 0 : i32
    %c0_i32_0 = arith.constant 0 : i32
    %c0_i32_1 = arith.constant 0 : i32
    return %c0_i32, %c0_i32_0 : i32, i32
  }
  func.func @transform_16(%arg0: i32) -> (i32, i32) {
    %c0_i32 = arith.constant 0 : i32
    %c0_i32_0 = arith.constant 0 : i32
    %c0_i32_1 = arith.constant 0 : i32
    return %c0_i32, %c0_i32_0 : i32, i32
  }
  func.func @transform_17(%arg0: i32) -> (i32, i32, i32) {
    %c0_i32 = arith.constant 0 : i32
    %c0_i32_0 = arith.constant 0 : i32
    %c0_i32_1 = arith.constant 0 : i32
    return %arg0, %c0_i32, %c0_i32_0 : i32, i32, i32
  }
}

</mosaic_0001>

<llo_original>
// kernel: forward.1
$region0: #{forward.1}
  #allocation0 [shape = 'u32[]', space=smem, size = 0x4, offset = 0x4, fixed_abs, tag = 'smem constant byte address 0x4 - core index']
  #allocation1 [shape = 'u32[144,128]{1,0:T(1,128)}', space=vmem, size = 0x12000, scoped, tag = 'internal scratch']
  #allocation2 [shape = 'f32[240,64]{1,0:T(8,128)}', space=vmem, size = 0x1e000, scoped, tag = 'scratch operand']
  #allocation3 [shape = 'f32[120,64]{1,0:T(8,128)}', space=vmem, size = 0xf000, scoped, tag = 'scratch operand']
  #allocation4 [shape = 'f32[64,128]{1,0:T(8,128)}', space=vmem, size = 0x8000, scoped, tag = 'scratch operand']
  #allocation5 [shape = 'f32[32,128]{1,0:T(8,128)}', space=vmem, size = 0x4000, scoped, tag = 'scratch operand']
  %s0 = inlined_call_operand.vmem [shape: bf16[2,233,8], index: 0, kind: input, shape index: {}]
  %s1 = inlined_call_operand.vmem [shape: bf16[8,64], index: 1, kind: input, shape index: {}]
  %s2 = inlined_call_operand.vmem [shape: f32[3,64], index: 2, kind: input, shape index: {}]
  %s3 = inlined_call_operand.vmem [shape: bf16[5,64,64], index: 3, kind: input, shape index: {}]
  %s4 = inlined_call_operand.vmem [shape: f32[3,64], index: 4, kind: input, shape index: {}]
  %s5 = inlined_call_operand.vmem [shape: bf16[3,64,128], index: 5, kind: input, shape index: {}]
  %s6 = inlined_call_operand.vmem [shape: f32[3,128], index: 6, kind: input, shape index: {}]
  %s7 = inlined_call_operand.vmem [shape: bf16[3,128,128], index: 7, kind: input, shape index: {}]
  %s8 = inlined_call_operand.vmem [shape: f32[3,128], index: 8, kind: input, shape index: {}]
  %s9 = inlined_call_operand.vmem [shape: bf16[3,128,256], index: 9, kind: input, shape index: {}]
  %s10 = inlined_call_operand.vmem [shape: f32[3,256], index: 10, kind: input, shape index: {}]
  %s11 = inlined_call_operand.vmem [shape: bf16[14,256,300], index: 11, kind: input, shape index: {}]
  %s12 = inlined_call_operand.vmem [shape: f32[3,300], index: 12, kind: input, shape index: {}]
  %s13 = inlined_call_operand.vmem [shape: bf16[300,150], index: 13, kind: input, shape index: {}]
  %s14 = inlined_call_operand.vmem [shape: f32[1,150], index: 14, kind: input, shape index: {}]
  %s15 = inlined_call_operand.vmem [shape: bf16[150,8], index: 15, kind: input, shape index: {}]
  %s16 = inlined_call_operand.vmem [shape: f32[1,8], index: 16, kind: input, shape index: {}]
  %s17 = inlined_call_operand.hbm [shape: f32[2,1,8], index: 17, kind: output, shape index: {}]
  %s18 = sld [smem:[#allocation0]]
  $region101: #{forward.1} parent=0
    _
  %s20 = ssub.s32 1, %s18
  %s21 = scalar_select 0, %s20, %s18
  $region1: #{forward.1} parent=0
    #allocation6 [shape = 'u8[1024]{0}', space=vmem, size = 0x400, scoped, tag = 'output window, operand 0']
    #allocation7 [shape = 's32[2]{0}', space=sflag, size = 0x8, scoped, tag = 'scoped memory for forward.1']
    %22 = vsyncpa [#allocation7], 0
    %s23 = scalar_lea.sflag [#allocation7], 1
    %24 = vsyncpa %s23, 0
    loop: start=0, step=1, limit=4
    $region2: #{forward.1} parent=1 // loop_pre_header
      _
    $region3: #{forward.1} parent=1 // loop_header
      %s26 = sphi 0, %s30
      %p27 = scmp.ge.s32.totalorder %s26, 4
      %s36 = sphi 0, %s38
      %s39 = sphi 0, %s36
      %s40 = sphi 0, %s39
      %s56 = sphi 0, %s40
      %s60 = sphi 0, %s60
      %s62 = sphi 0, %s60
      %s63 = sphi 0, %s62
      %s77 = sphi 0, %s63
      %s81 = sphi 0, %s81
      %s83 = sphi 0, %s81
      %s84 = sphi 0, %s83
      %s98 = sphi 0, %s84
      %s102 = sphi 0, %s102
      %s104 = sphi 0, %s102
      %s105 = sphi 0, %s104
      %s119 = sphi 0, %s105
      %s123 = sphi 0, %s123
      %s125 = sphi 0, %s123
      %s126 = sphi 0, %s125
      %s140 = sphi 0, %s126
      %s144 = sphi 0, %s144
      %s146 = sphi 0, %s144
      %s147 = sphi 0, %s146
      %s161 = sphi 0, %s147
      %s165 = sphi 0, %s165
      %s167 = sphi 0, %s165
      %s168 = sphi 0, %s167
      %s182 = sphi 0, %s168
      %s186 = sphi 0, %s186
      %s188 = sphi 0, %s186
      %s189 = sphi 0, %s188
      %s203 = sphi 0, %s189
      %s207 = sphi 0, %s207
      %s209 = sphi 0, %s207
      %s210 = sphi 0, %s209
      %s224 = sphi 0, %s210
      %s228 = sphi 0, %s228
      %s230 = sphi 0, %s228
      %s231 = sphi 0, %s230
      %s245 = sphi 0, %s231
      %s249 = sphi 0, %s249
      %s251 = sphi 0, %s249
      %s252 = sphi 0, %s251
      %s266 = sphi 0, %s252
      %s270 = sphi 0, %s270
      %s272 = sphi 0, %s270
      %s273 = sphi 0, %s272
      %s287 = sphi 0, %s273
      %s291 = sphi 0, %s291
      %s293 = sphi 0, %s291
      %s294 = sphi 0, %s293
      %s308 = sphi 0, %s294
      %s312 = sphi 0, %s312
      %s314 = sphi 0, %s312
      %s315 = sphi 0, %s314
      %s329 = sphi 0, %s315
      %s333 = sphi 0, %s333
      %s335 = sphi 0, %s333
      %s336 = sphi 0, %s335
      %s350 = sphi 0, %s336
      %s354 = sphi 0, %s354
      %s356 = sphi 0, %s354
      %s357 = sphi 0, %s356
      %s371 = sphi 0, %s357
      %s375 = sphi 0, %s375
      %s377 = sphi 0, %s375
      %s378 = sphi 0, %s377
      %s392 = sphi 0, %s378
      %s398 = sphi 0, %s400
      %s401 = sphi 0, %s398
      %s402 = sphi 0, %s401
      %s418 = sphi 0, %s402
    $region4: #{forward.1} parent=1 // loop_header_branch
      %29 = sbr.rel (%p27) target = $region8
    $region5: #{forward.1} parent=1 // loop_body
      %s31 = ssub.s32 %s26, 1
      %s32 = ssub.s32 %s26, 2
      %s33 = sadd.s32 %s26, 1
      %s34 = ssub.s32 %s26, %s33
      %p35 = scmp.eq.s32.totalorder %s34, 0
      %s37 = sadd.s32 %s36, 1
      %s38 = scalar_select %p35, %s36, %s37
      %p41 = pneg %p35
      %p42 = scmp.eq.s32.totalorder %s26, 1
      %p43 = por %p41, %p42
      %p44 = scmp.ne.s32.totalorder %s36, %s39
      %p45 = scmp.eq.s32.totalorder %s26, 0
      %p46 = por %p44, %p45
      %p47 = scmp.ne.s32.totalorder %s36, %s39
      %p48 = scmp.eq.s32.totalorder %s31, 1
      %p49 = por %p47, %p48
      %p50 = scmp.ne.s32.totalorder %s39, %s40
      %p51 = scmp.eq.s32.totalorder %s31, 0
      %p52 = por %p50, %p51
      %p53 = scmp.ne.s32.totalorder %s39, %s40
      %p54 = scmp.eq.s32.totalorder %s32, 1
      %p55 = por %p53, %p54
      %p57 = scmp.ne.s32.totalorder %s40, %s56
      %p58 = scmp.eq.s32.totalorder %s32, 0
      %p59 = por %p57, %p58
      %s61 = sadd.s32 %s60, 1
      %p64 = scmp.eq.s32.totalorder %s26, 1
      %p65 = scmp.ne.s32.totalorder %s60, %s62
      %p66 = scmp.eq.s32.totalorder %s26, 0
      %p67 = por %p65, %p66
      %p68 = scmp.ne.s32.totalorder %s60, %s62
      %p69 = scmp.eq.s32.totalorder %s31, 1
      %p70 = por %p68, %p69
      %p71 = scmp.ne.s32.totalorder %s62, %s63
      %p72 = scmp.eq.s32.totalorder %s31, 0
      %p73 = por %p71, %p72
      %p74 = scmp.ne.s32.totalorder %s62, %s63
      %p75 = scmp.eq.s32.totalorder %s32, 1
      %p76 = por %p74, %p75
      %p78 = scmp.ne.s32.totalorder %s63, %s77
      %p79 = scmp.eq.s32.totalorder %s32, 0
      %p80 = por %p78, %p79
      %s82 = sadd.s32 %s81, 1
      %p85 = scmp.eq.s32.totalorder %s26, 1
      %p86 = scmp.ne.s32.totalorder %s81, %s83
      %p87 = scmp.eq.s32.totalorder %s26, 0
      %p88 = por %p86, %p87
      %p89 = scmp.ne.s32.totalorder %s81, %s83
      %p90 = scmp.eq.s32.totalorder %s31, 1
      %p91 = por %p89, %p90
      %p92 = scmp.ne.s32.totalorder %s83, %s84
      %p93 = scmp.eq.s32.totalorder %s31, 0
      %p94 = por %p92, %p93
      %p95 = scmp.ne.s32.totalorder %s83, %s84
      %p96 = scmp.eq.s32.totalorder %s32, 1
      %p97 = por %p95, %p96
      %p99 = scmp.ne.s32.totalorder %s84, %s98
      %p100 = scmp.eq.s32.totalorder %s32, 0
      %p101 = por %p99, %p100
      %s103 = sadd.s32 %s102, 1
      %p106 = scmp.eq.s32.totalorder %s26, 1
      %p107 = scmp.ne.s32.totalorder %s102, %s104
      %p108 = scmp.eq.s32.totalorder %s26, 0
      %p109 = por %p107, %p108
      %p110 = scmp.ne.s32.totalorder %s102, %s104
      %p111 = scmp.eq.s32.totalorder %s31, 1
      %p112 = por %p110, %p111
      %p113 = scmp.ne.s32.totalorder %s104, %s105
      %p114 = scmp.eq.s32.totalorder %s31, 0
      %p115 = por %p113, %p114
      %p116 = scmp.ne.s32.totalorder %s104, %s105
      %p117 = scmp.eq.s32.totalorder %s32, 1
      %p118 = por %p116, %p117
      %p120 = scmp.ne.s32.totalorder %s105, %s119
      %p121 = scmp.eq.s32.totalorder %s32, 0
      %p122 = por %p120, %p121
      %s124 = sadd.s32 %s123, 1
      %p127 = scmp.eq.s32.totalorder %s26, 1
      %p128 = scmp.ne.s32.totalorder %s123, %s125
      %p129 = scmp.eq.s32.totalorder %s26, 0
      %p130 = por %p128, %p129
      %p131 = scmp.ne.s32.totalorder %s123, %s125
      %p132 = scmp.eq.s32.totalorder %s31, 1
      %p133 = por %p131, %p132
      %p134 = scmp.ne.s32.totalorder %s125, %s126
      %p135 = scmp.eq.s32.totalorder %s31, 0
      %p136 = por %p134, %p135
      %p137 = scmp.ne.s32.totalorder %s125, %s126
      %p138 = scmp.eq.s32.totalorder %s32, 1
      %p139 = por %p137, %p138
      %p141 = scmp.ne.s32.totalorder %s126, %s140
      %p142 = scmp.eq.s32.totalorder %s32, 0
      %p143 = por %p141, %p142
      %s145 = sadd.s32 %s144, 1
      %p148 = scmp.eq.s32.totalorder %s26, 1
      %p149 = scmp.ne.s32.totalorder %s144, %s146
      %p150 = scmp.eq.s32.totalorder %s26, 0
      %p151 = por %p149, %p150
      %p152 = scmp.ne.s32.totalorder %s144, %s146
      %p153 = scmp.eq.s32.totalorder %s31, 1
      %p154 = por %p152, %p153
      %p155 = scmp.ne.s32.totalorder %s146, %s147
      %p156 = scmp.eq.s32.totalorder %s31, 0
      %p157 = por %p155, %p156
      %p158 = scmp.ne.s32.totalorder %s146, %s147
      %p159 = scmp.eq.s32.totalorder %s32, 1
      %p160 = por %p158, %p159
      %p162 = scmp.ne.s32.totalorder %s147, %s161
      %p163 = scmp.eq.s32.totalorder %s32, 0
      %p164 = por %p162, %p163
      %s166 = sadd.s32 %s165, 1
      %p169 = scmp.eq.s32.totalorder %s26, 1
      %p170 = scmp.ne.s32.totalorder %s165, %s167
      %p171 = scmp.eq.s32.totalorder %s26, 0
      %p172 = por %p170, %p171
      %p173 = scmp.ne.s32.totalorder %s165, %s167
      %p174 = scmp.eq.s32.totalorder %s31, 1
      %p175 = por %p173, %p174
      %p176 = scmp.ne.s32.totalorder %s167, %s168
      %p177 = scmp.eq.s32.totalorder %s31, 0
      %p178 = por %p176, %p177
      %p179 = scmp.ne.s32.totalorder %s167, %s168
      %p180 = scmp.eq.s32.totalorder %s32, 1
      %p181 = por %p179, %p180
      %p183 = scmp.ne.s32.totalorder %s168, %s182
      %p184 = scmp.eq.s32.totalorder %s32, 0
      %p185 = por %p183, %p184
      %s187 = sadd.s32 %s186, 1
      %p190 = scmp.eq.s32.totalorder %s26, 1
      %p191 = scmp.ne.s32.totalorder %s186, %s188
      %p192 = scmp.eq.s32.totalorder %s26, 0
      %p193 = por %p191, %p192
      %p194 = scmp.ne.s32.totalorder %s186, %s188
      %p195 = scmp.eq.s32.totalorder %s31, 1
      %p196 = por %p194, %p195
      %p197 = scmp.ne.s32.totalorder %s188, %s189
      %p198 = scmp.eq.s32.totalorder %s31, 0
      %p199 = por %p197, %p198
      %p200 = scmp.ne.s32.totalorder %s188, %s189
      %p201 = scmp.eq.s32.totalorder %s32, 1
      %p202 = por %p200, %p201
      %p204 = scmp.ne.s32.totalorder %s189, %s203
      %p205 = scmp.eq.s32.totalorder %s32, 0
      %p206 = por %p204, %p205
      %s208 = sadd.s32 %s207, 1
      %p211 = scmp.eq.s32.totalorder %s26, 1
      %p212 = scmp.ne.s32.totalorder %s207, %s209
      %p213 = scmp.eq.s32.totalorder %s26, 0
      %p214 = por %p212, %p213
      %p215 = scmp.ne.s32.totalorder %s207, %s209
      %p216 = scmp.eq.s32.totalorder %s31, 1
      %p217 = por %p215, %p216
      %p218 = scmp.ne.s32.totalorder %s209, %s210
      %p219 = scmp.eq.s32.totalorder %s31, 0
      %p220 = por %p218, %p219
      %p221 = scmp.ne.s32.totalorder %s209, %s210
      %p222 = scmp.eq.s32.totalorder %s32, 1
      %p223 = por %p221, %p222
      %p225 = scmp.ne.s32.totalorder %s210, %s224
      %p226 = scmp.eq.s32.totalorder %s32, 0
      %p227 = por %p225, %p226
      %s229 = sadd.s32 %s228, 1
      %p232 = scmp.eq.s32.totalorder %s26, 1
      %p233 = scmp.ne.s32.totalorder %s228, %s230
      %p234 = scmp.eq.s32.totalorder %s26, 0
      %p235 = por %p233, %p234
      %p236 = scmp.ne.s32.totalorder %s228, %s230
      %p237 = scmp.eq.s32.totalorder %s31, 1
      %p238 = por %p236, %p237
      %p239 = scmp.ne.s32.totalorder %s230, %s231
      %p240 = scmp.eq.s32.totalorder %s31, 0
      %p241 = por %p239, %p240
      %p242 = scmp.ne.s32.totalorder %s230, %s231
      %p243 = scmp.eq.s32.totalorder %s32, 1
      %p244 = por %p242, %p243
      %p246 = scmp.ne.s32.totalorder %s231, %s245
      %p247 = scmp.eq.s32.totalorder %s32, 0
      %p248 = por %p246, %p247
      %s250 = sadd.s32 %s249, 1
      %p253 = scmp.eq.s32.totalorder %s26, 1
      %p254 = scmp.ne.s32.totalorder %s249, %s251
      %p255 = scmp.eq.s32.totalorder %s26, 0
      %p256 = por %p254, %p255
      %p257 = scmp.ne.s32.totalorder %s249, %s251
      %p258 = scmp.eq.s32.totalorder %s31, 1
      %p259 = por %p257, %p258
      %p260 = scmp.ne.s32.totalorder %s251, %s252
      %p261 = scmp.eq.s32.totalorder %s31, 0
      %p262 = por %p260, %p261
      %p263 = scmp.ne.s32.totalorder %s251, %s252
      %p264 = scmp.eq.s32.totalorder %s32, 1
      %p265 = por %p263, %p264
      %p267 = scmp.ne.s32.totalorder %s252, %s266
      %p268 = scmp.eq.s32.totalorder %s32, 0
      %p269 = por %p267, %p268
      %s271 = sadd.s32 %s270, 1
      %p274 = scmp.eq.s32.totalorder %s26, 1
      %p275 = scmp.ne.s32.totalorder %s270, %s272
      %p276 = scmp.eq.s32.totalorder %s26, 0
      %p277 = por %p275, %p276
      %p278 = scmp.ne.s32.totalorder %s270, %s272
      %p279 = scmp.eq.s32.totalorder %s31, 1
      %p280 = por %p278, %p279
      %p281 = scmp.ne.s32.totalorder %s272, %s273
      %p282 = scmp.eq.s32.totalorder %s31, 0
      %p283 = por %p281, %p282
      %p284 = scmp.ne.s32.totalorder %s272, %s273
      %p285 = scmp.eq.s32.totalorder %s32, 1
      %p286 = por %p284, %p285
      %p288 = scmp.ne.s32.totalorder %s273, %s287
      %p289 = scmp.eq.s32.totalorder %s32, 0
      %p290 = por %p288, %p289
      %s292 = sadd.s32 %s291, 1
      %p295 = scmp.eq.s32.totalorder %s26, 1
      %p296 = scmp.ne.s32.totalorder %s291, %s293
      %p297 = scmp.eq.s32.totalorder %s26, 0
      %p298 = por %p296, %p297
      %p299 = scmp.ne.s32.totalorder %s291, %s293
      %p300 = scmp.eq.s32.totalorder %s31, 1
      %p301 = por %p299, %p300
      %p302 = scmp.ne.s32.totalorder %s293, %s294
      %p303 = scmp.eq.s32.totalorder %s31, 0
      %p304 = por %p302, %p303
      %p305 = scmp.ne.s32.totalorder %s293, %s294
      %p306 = scmp.eq.s32.totalorder %s32, 1
      %p307 = por %p305, %p306
      %p309 = scmp.ne.s32.totalorder %s294, %s308
      %p310 = scmp.eq.s32.totalorder %s32, 0
      %p311 = por %p309, %p310
      %s313 = sadd.s32 %s312, 1
      %p316 = scmp.eq.s32.totalorder %s26, 1
      %p317 = scmp.ne.s32.totalorder %s312, %s314
      %p318 = scmp.eq.s32.totalorder %s26, 0
      %p319 = por %p317, %p318
      %p320 = scmp.ne.s32.totalorder %s312, %s314
      %p321 = scmp.eq.s32.totalorder %s31, 1
      %p322 = por %p320, %p321
      %p323 = scmp.ne.s32.totalorder %s314, %s315
      %p324 = scmp.eq.s32.totalorder %s31, 0
      %p325 = por %p323, %p324
      %p326 = scmp.ne.s32.totalorder %s314, %s315
      %p327 = scmp.eq.s32.totalorder %s32, 1
      %p328 = por %p326, %p327
      %p330 = scmp.ne.s32.totalorder %s315, %s329
      %p331 = scmp.eq.s32.totalorder %s32, 0
      %p332 = por %p330, %p331
      %s334 = sadd.s32 %s333, 1
      %p337 = scmp.eq.s32.totalorder %s26, 1
      %p338 = scmp.ne.s32.totalorder %s333, %s335
      %p339 = scmp.eq.s32.totalorder %s26, 0
      %p340 = por %p338, %p339
      %p341 = scmp.ne.s32.totalorder %s333, %s335
      %p342 = scmp.eq.s32.totalorder %s31, 1
      %p343 = por %p341, %p342
      %p344 = scmp.ne.s32.totalorder %s335, %s336
      %p345 = scmp.eq.s32.totalorder %s31, 0
      %p346 = por %p344, %p345
      %p347 = scmp.ne.s32.totalorder %s335, %s336
      %p348 = scmp.eq.s32.totalorder %s32, 1
      %p349 = por %p347, %p348
      %p351 = scmp.ne.s32.totalorder %s336, %s350
      %p352 = scmp.eq.s32.totalorder %s32, 0
      %p353 = por %p351, %p352
      %s355 = sadd.s32 %s354, 1
      %p358 = scmp.eq.s32.totalorder %s26, 1
      %p359 = scmp.ne.s32.totalorder %s354, %s356
      %p360 = scmp.eq.s32.totalorder %s26, 0
      %p361 = por %p359, %p360
      %p362 = scmp.ne.s32.totalorder %s354, %s356
      %p363 = scmp.eq.s32.totalorder %s31, 1
      %p364 = por %p362, %p363
      %p365 = scmp.ne.s32.totalorder %s356, %s357
      %p366 = scmp.eq.s32.totalorder %s31, 0
      %p367 = por %p365, %p366
      %p368 = scmp.ne.s32.totalorder %s356, %s357
      %p369 = scmp.eq.s32.totalorder %s32, 1
      %p370 = por %p368, %p369
      %p372 = scmp.ne.s32.totalorder %s357, %s371
      %p373 = scmp.eq.s32.totalorder %s32, 0
      %p374 = por %p372, %p373
      %s376 = sadd.s32 %s375, 1
      %p379 = scmp.eq.s32.totalorder %s26, 1
      %p380 = scmp.ne.s32.totalorder %s375, %s377
      %p381 = scmp.eq.s32.totalorder %s26, 0
      %p382 = por %p380, %p381
      %p383 = scmp.ne.s32.totalorder %s375, %s377
      %p384 = scmp.eq.s32.totalorder %s31, 1
      %p385 = por %p383, %p384
      %p386 = scmp.ne.s32.totalorder %s377, %s378
      %p387 = scmp.eq.s32.totalorder %s31, 0
      %p388 = por %p386, %p387
      %p389 = scmp.ne.s32.totalorder %s377, %s378
      %p390 = scmp.eq.s32.totalorder %s32, 1
      %p391 = por %p389, %p390
      %p393 = scmp.ne.s32.totalorder %s378, %s392
      %p394 = scmp.eq.s32.totalorder %s32, 0
      %p395 = por %p393, %p394
      %s396 = ssub.s32 %s26, %s33
      %p397 = scmp.eq.s32.totalorder %s396, 0
      %s399 = sadd.s32 %s398, 1
      %s400 = scalar_select %p397, %s398, %s399
      %p403 = pneg %p397
      %p404 = scmp.eq.s32.totalorder %s26, 1
      %p405 = por %p403, %p404
      %p406 = scmp.ne.s32.totalorder %s398, %s401
      %p407 = scmp.eq.s32.totalorder %s26, 0
      %p408 = por %p406, %p407
      %p409 = scmp.ne.s32.totalorder %s398, %s401
      %p410 = scmp.eq.s32.totalorder %s31, 1
      %p411 = por %p409, %p410
      %p412 = scmp.ne.s32.totalorder %s401, %s402
      %p413 = scmp.eq.s32.totalorder %s31, 0
      %p414 = por %p412, %p413
      %p415 = scmp.ne.s32.totalorder %s401, %s402
      %p416 = scmp.eq.s32.totalorder %s32, 1
      %p417 = por %p415, %p416
      %p419 = scmp.ne.s32.totalorder %s402, %s418
      %p420 = scmp.eq.s32.totalorder %s32, 0
      %p421 = por %p419, %p420
      %p422 = scmp.le.s32.totalorder 1, %s26
      %p423 = scmp.lt.s32.totalorder %s26, 3
      %p424 = pnand %p422, %p423
      %p425 = pneg %p424
      // Predicated region
      $region9: #{forward.1} parent=5 // pred_check
        _
      $region10: #{forward.1} parent=5 // pred_check_branch
        %427 = sbr.rel (%p424) target = $region12
      $region11: #{forward.1} parent=5 // pred_region
        %s428 = ssub.s32 %s26, 1
        // Predicated region
        $region13: #{forward.1} parent=11 // pred_check
          %p429 = pneg %p73
        $region14: #{forward.1} parent=11 // pred_check_branch
          %431 = sbr.rel (%p429) target = $region16
        $region15: #{forward.1} parent=11 // pred_region
          _
        $region16: #{forward.1} parent=11 // pred_fallthru
          _
        // Predicated region
        $region17: #{forward.1} parent=11 // pred_check
          %p432 = pneg %p94
        $region18: #{forward.1} parent=11 // pred_check_branch
          %434 = sbr.rel (%p432) target = $region20
        $region19: #{forward.1} parent=11 // pred_region
          _
        $region20: #{forward.1} parent=11 // pred_fallthru
          _
        // Predicated region
        $region21: #{forward.1} parent=11 // pred_check
          %p435 = pneg %p115
        $region22: #{forward.1} parent=11 // pred_check_branch
          %437 = sbr.rel (%p435) target = $region24
        $region23: #{forward.1} parent=11 // pred_region
          _
        $region24: #{forward.1} parent=11 // pred_fallthru
          _
        // Predicated region
        $region25: #{forward.1} parent=11 // pred_check
          %p438 = pneg %p136
        $region26: #{forward.1} parent=11 // pred_check_branch
          %440 = sbr.rel (%p438) target = $region28
        $region27: #{forward.1} parent=11 // pred_region
          _
        $region28: #{forward.1} parent=11 // pred_fallthru
          _
        // Predicated region
        $region29: #{forward.1} parent=11 // pred_check
          %p441 = pneg %p157
        $region30: #{forward.1} parent=11 // pred_check_branch
          %443 = sbr.rel (%p441) target = $region32
        $region31: #{forward.1} parent=11 // pred_region
          _
        $region32: #{forward.1} parent=11 // pred_fallthru
          _
        // Predicated region
        $region33: #{forward.1} parent=11 // pred_check
          %p444 = pneg %p178
        $region34: #{forward.1} parent=11 // pred_check_branch
          %446 = sbr.rel (%p444) target = $region36
        $region35: #{forward.1} parent=11 // pred_region
          _
        $region36: #{forward.1} parent=11 // pred_fallthru
          _
        // Predicated region
        $region37: #{forward.1} parent=11 // pred_check
          %p447 = pneg %p199
        $region38: #{forward.1} parent=11 // pred_check_branch
          %449 = sbr.rel (%p447) target = $region40
        $region39: #{forward.1} parent=11 // pred_region
          _
        $region40: #{forward.1} parent=11 // pred_fallthru
          _
        // Predicated region
        $region41: #{forward.1} parent=11 // pred_check
          %p450 = pneg %p220
        $region42: #{forward.1} parent=11 // pred_check_branch
          %452 = sbr.rel (%p450) target = $region44
        $region43: #{forward.1} parent=11 // pred_region
          _
        $region44: #{forward.1} parent=11 // pred_fallthru
          _
        // Predicated region
        $region45: #{forward.1} parent=11 // pred_check
          %p453 = pneg %p241
        $region46: #{forward.1} parent=11 // pred_check_branch
          %455 = sbr.rel (%p453) target = $region48
        $region47: #{forward.1} parent=11 // pred_region
          _
        $region48: #{forward.1} parent=11 // pred_fallthru
          _
        // Predicated region
        $region49: #{forward.1} parent=11 // pred_check
          %p456 = pneg %p262
        $region50: #{forward.1} parent=11 // pred_check_branch
          %458 = sbr.rel (%p456) target = $region52
        $region51: #{forward.1} parent=11 // pred_region
          _
        $region52: #{forward.1} parent=11 // pred_fallthru
          _
        // Predicated region
        $region53: #{forward.1} parent=11 // pred_check
          %p459 = pneg %p283
        $region54: #{forward.1} parent=11 // pred_check_branch
          %461 = sbr.rel (%p459) target = $region56
        $region55: #{forward.1} parent=11 // pred_region
          _
        $region56: #{forward.1} parent=11 // pred_fallthru
          _
        // Predicated region
        $region57: #{forward.1} parent=11 // pred_check
          %p462 = pneg %p304
        $region58: #{forward.1} parent=11 // pred_check_branch
          %464 = sbr.rel (%p462) target = $region60
        $region59: #{forward.1} parent=11 // pred_region
          _
        $region60: #{forward.1} parent=11 // pred_fallthru
          _
        // Predicated region
        $region61: #{forward.1} parent=11 // pred_check
          %p465 = pneg %p325
        $region62: #{forward.1} parent=11 // pred_check_branch
          %467 = sbr.rel (%p465) target = $region64
        $region63: #{forward.1} parent=11 // pred_region
          _
        $region64: #{forward.1} parent=11 // pred_fallthru
          _
        // Predicated region
        $region65: #{forward.1} parent=11 // pred_check
          %p468 = pneg %p346
        $region66: #{forward.1} parent=11 // pred_check_branch
          %470 = sbr.rel (%p468) target = $region68
        $region67: #{forward.1} parent=11 // pred_region
          _
        $region68: #{forward.1} parent=11 // pred_fallthru
          _
        // Predicated region
        $region69: #{forward.1} parent=11 // pred_check
          %p471 = pneg %p367
        $region70: #{forward.1} parent=11 // pred_check_branch
          %473 = sbr.rel (%p471) target = $region72
        $region71: #{forward.1} parent=11 // pred_region
          _
        $region72: #{forward.1} parent=11 // pred_fallthru
          _
        // Predicated region
        $region73: #{forward.1} parent=11 // pred_check
          %p474 = pneg %p388
        $region74: #{forward.1} parent=11 // pred_check_branch
          %476 = sbr.rel (%p474) target = $region76
        $region75: #{forward.1} parent=11 // pred_region
          _
        $region76: #{forward.1} parent=11 // pred_fallthru
          _
      $region12: #{forward.1} parent=5 // pred_fallthru
        _
      %p477 = scmp.lt.s32.totalorder %s26, 2
      // Predicated region
      $region77: #{forward.1} parent=5 // pred_check
        %p478 = pneg %p477
      $region78: #{forward.1} parent=5 // pred_check_branch
        %480 = sbr.rel (%p478) target = $region80
      $region79: #{forward.1} parent=5 // pred_region
        // Predicated region
        $region81: #{forward.1} parent=79 // pred_check
          %p481 = pneg %p46
        $region82: #{forward.1} parent=79 // pred_check_branch
          %483 = sbr.rel (%p481) target = $region84
        $region83: #{forward.1} parent=79 // pred_region
          %p484 = scmp.lt.s32.totalorder %s26, 1
          %s485 = scalar_select %p484, %s26, 1
          %s486 = smul.addr %s485, 30
          %s487 = smul.addr %s486, 4
          %s488 = scalar_lea.vmem %s0, %s487
        $region84: #{forward.1} parent=79 // pred_fallthru
          _
      $region80: #{forward.1} parent=5 // pred_fallthru
        _
      %p489 = scmp.le.s32.totalorder 1, %s26
      %p490 = scmp.lt.s32.totalorder %s26, 3
      %p491 = pnand %p489, %p490
      %p492 = pneg %p491
      // Predicated region
      $region85: #{forward.1} parent=5 // pred_check
        _
      $region86: #{forward.1} parent=5 // pred_check_branch
        %494 = sbr.rel (%p491) target = $region88
      $region87: #{forward.1} parent=5 // pred_region
        %s495 = ssub.s32 %s26, 1
        %p496 = scmp.lt.s32.totalorder %s31, 1
        %s497 = scalar_select %p496, %s31, 1
        %s498 = smul.addr %s497, 30
        %s499 = smul.addr %s498, 4
        %s500 = scalar_lea.vmem %s0, %s499
        %p501 = pneg %p52
        %p502 = pneg %p49
        %p503 = pneg %p73
        %p504 = pneg %p70
        %p505 = pneg %p94
        %p506 = pneg %p91
        %p507 = pneg %p115
        %p508 = pneg %p112
        %p509 = pneg %p136
        %p510 = pneg %p133
        %p511 = pneg %p157
        %p512 = pneg %p154
        %p513 = pneg %p178
        %p514 = pneg %p175
        %p515 = pneg %p199
        %p516 = pneg %p196
        %p517 = pneg %p220
        %p518 = pneg %p217
        %p519 = pneg %p241
        %p520 = pneg %p238
        %p521 = pneg %p262
        %p522 = pneg %p259
        %p523 = pneg %p283
        %p524 = pneg %p280
        %p525 = pneg %p304
        %p526 = pneg %p301
        %p527 = pneg %p325
        %p528 = pneg %p322
        %p529 = pneg %p346
        %p530 = pneg %p343
        %p531 = pneg %p367
        %p532 = pneg %p364
        %p533 = pneg %p388
        %p534 = pneg %p385
        %p535 = pneg %p414
        %p536 = pneg %p411
        %s537 = sand.u32 %s401, 1
        %s538 = scalar_lea.sflag [#allocation7], %s537
        %s539 = sand.u32 %s401, 1
        %s540 = scalar_lea.vmem [#allocation6], %s539
        %p541 = scmp.lt.s32.totalorder %s31, 1
        %s542 = scalar_select %p541, %s31, 1
        %s543 = smul.addr %s542, 30
        %s544 = smul.addr %s543, 4
        %s545 = scalar_lea.vmem %s0, %s544
        %vm547 = vcmask 523264
        %548 = vst.msk [vmem:[#allocation2] sm:$0xff] %vm547, 0.0
        %549 = vst.msk [vmem:[#allocation2 + $0x8] sm:$0xff] %vm547, 0.0
        %550 = vst.msk [vmem:[#allocation2 + $0x10] sm:$0xff] %vm547, 0.0
        %551 = vst.msk [vmem:[#allocation2 + $0x18] sm:$0xff] %vm547, 0.0
        %552 = vst.msk [vmem:[#allocation2 + $0x20] sm:$0xff] %vm547, 0.0
        %553 = vst.msk [vmem:[#allocation2 + $0x28] sm:$0xff] %vm547, 0.0
        %554 = vst.msk [vmem:[#allocation2 + $0x30] sm:$0xff] %vm547, 0.0
        %555 = vst.msk [vmem:[#allocation2 + $0x38] sm:$0xff] %vm547, 0.0
        %556 = vst.msk [vmem:[#allocation2 + $0x40] sm:$0xff] %vm547, 0.0
        %557 = vst.msk [vmem:[#allocation2 + $0x48] sm:$0xff] %vm547, 0.0
        %558 = vst.msk [vmem:[#allocation2 + $0x50] sm:$0xff] %vm547, 0.0
        %559 = vst.msk [vmem:[#allocation2 + $0x58] sm:$0xff] %vm547, 0.0
        %560 = vst.msk [vmem:[#allocation2 + $0x60] sm:$0xff] %vm547, 0.0
        %561 = vst.msk [vmem:[#allocation2 + $0x68] sm:$0xff] %vm547, 0.0
        %562 = vst.msk [vmem:[#allocation2 + $0x70] sm:$0xff] %vm547, 0.0
        %563 = vst.msk [vmem:[#allocation2 + $0x78] sm:$0xff] %vm547, 0.0
        %564 = vst.msk [vmem:[#allocation2 + $0x80] sm:$0xff] %vm547, 0.0
        %565 = vst.msk [vmem:[#allocation2 + $0x88] sm:$0xff] %vm547, 0.0
        %566 = vst.msk [vmem:[#allocation2 + $0x90] sm:$0xff] %vm547, 0.0
        %567 = vst.msk [vmem:[#allocation2 + $0x98] sm:$0xff] %vm547, 0.0
        %568 = vst.msk [vmem:[#allocation2 + $0xa0] sm:$0xff] %vm547, 0.0
        %569 = vst.msk [vmem:[#allocation2 + $0xa8] sm:$0xff] %vm547, 0.0
        %570 = vst.msk [vmem:[#allocation2 + $0xb0] sm:$0xff] %vm547, 0.0
        %571 = vst.msk [vmem:[#allocation2 + $0xb8] sm:$0xff] %vm547, 0.0
        %572 = vst.msk [vmem:[#allocation2 + $0xc0] sm:$0xff] %vm547, 0.0
        %573 = vst.msk [vmem:[#allocation2 + $0xc8] sm:$0xff] %vm547, 0.0
        %574 = vst.msk [vmem:[#allocation2 + $0xd0] sm:$0xff] %vm547, 0.0
        %575 = vst.msk [vmem:[#allocation2 + $0xd8] sm:$0xff] %vm547, 0.0
        %576 = vst.msk [vmem:[#allocation2 + $0xe0] sm:$0xff] %vm547, 0.0
        %577 = vst.msk [vmem:[#allocation2 + $0xe8] sm:$0xff] %vm547, 0.0
        %578 = vst.msk [vmem:[#allocation3] sm:$0xff] %vm547, 0.0
        %579 = vst.msk [vmem:[#allocation3 + $0x8] sm:$0xff] %vm547, 0.0
        %580 = vst.msk [vmem:[#allocation3 + $0x10] sm:$0xff] %vm547, 0.0
        %581 = vst.msk [vmem:[#allocation3 + $0x18] sm:$0xff] %vm547, 0.0
        %582 = vst.msk [vmem:[#allocation3 + $0x20] sm:$0xff] %vm547, 0.0
        %583 = vst.msk [vmem:[#allocation3 + $0x28] sm:$0xff] %vm547, 0.0
        %584 = vst.msk [vmem:[#allocation3 + $0x30] sm:$0xff] %vm547, 0.0
        %585 = vst.msk [vmem:[#allocation3 + $0x38] sm:$0xff] %vm547, 0.0
        %586 = vst.msk [vmem:[#allocation3 + $0x40] sm:$0xff] %vm547, 0.0
        %587 = vst.msk [vmem:[#allocation3 + $0x48] sm:$0xff] %vm547, 0.0
        %588 = vst.msk [vmem:[#allocation3 + $0x50] sm:$0xff] %vm547, 0.0
        %589 = vst.msk [vmem:[#allocation3 + $0x58] sm:$0xff] %vm547, 0.0
        %590 = vst.msk [vmem:[#allocation3 + $0x60] sm:$0xff] %vm547, 0.0
        %591 = vst.msk [vmem:[#allocation3 + $0x68] sm:$0xff] %vm547, 0.0
        %592 = vst.msk [vmem:[#allocation3 + $0x70] sm:$0xff] %vm547, 0.0
        %593 = vst [vmem:[#allocation4] sm:$0xff] 0.0
        %594 = vst [vmem:[#allocation4 + $0x8] sm:$0xff] 0.0
        %595 = vst [vmem:[#allocation4 + $0x10] sm:$0xff] 0.0
        %596 = vst [vmem:[#allocation4 + $0x18] sm:$0xff] 0.0
        %597 = vst [vmem:[#allocation4 + $0x20] sm:$0xff] 0.0
        %598 = vst [vmem:[#allocation4 + $0x28] sm:$0xff] 0.0
        %599 = vst [vmem:[#allocation4 + $0x30] sm:$0xff] 0.0
        %600 = vst [vmem:[#allocation4 + $0x38] sm:$0xff] 0.0
        %v601 = vld [vmem:[%s545] sm:$0xf]
        %v602 = vld [vmem:[%s545 + $0x4] sm:$0xf]
        %v603 = vld [vmem:[%s545 + $0x8] sm:$0xf]
        %v604 = vld [vmem:[%s545 + $0xc] sm:$0xf]
        %v605 = vld [vmem:[%s545 + $0x10] sm:$0xf]
        %v606 = vld [vmem:[%s545 + $0x14] sm:$0xf]
        %v607 = vld [vmem:[%s545 + $0x18] sm:$0xf]
        %v608 = vld [vmem:[%s545 + $0x1c] sm:$0xf]
        %v609 = vld [vmem:[%s545 + $0x20] sm:$0xf]
        %v610 = vld [vmem:[%s545 + $0x24] sm:$0xf]
        %v611 = vld [vmem:[%s545 + $0x28] sm:$0xf]
        %v612 = vld [vmem:[%s545 + $0x2c] sm:$0xf]
        %v613 = vld [vmem:[%s545 + $0x30] sm:$0xf]
        %v614 = vld [vmem:[%s545 + $0x34] sm:$0xf]
        %v615 = vld [vmem:[%s545 + $0x38] sm:$0xf]
        %v616 = vld [vmem:[%s545 + $0x3c] sm:$0xf]
        %v617 = vld [vmem:[%s545 + $0x40] sm:$0xf]
        %v618 = vld [vmem:[%s545 + $0x44] sm:$0xf]
        %v619 = vld [vmem:[%s545 + $0x48] sm:$0xf]
        %v620 = vld [vmem:[%s545 + $0x4c] sm:$0xf]
        %v621 = vld [vmem:[%s545 + $0x50] sm:$0xf]
        %v622 = vld [vmem:[%s545 + $0x54] sm:$0xf]
        %v623 = vld [vmem:[%s545 + $0x58] sm:$0xf]
        %v624 = vld [vmem:[%s545 + $0x5c] sm:$0xf]
        %v625 = vld [vmem:[%s545 + $0x60] sm:$0xf]
        %v626 = vld [vmem:[%s545 + $0x64] sm:$0xf]
        %v627 = vld [vmem:[%s545 + $0x68] sm:$0xf]
        %v628 = vld [vmem:[%s545 + $0x6c] sm:$0xf]
        %v629 = vld [vmem:[%s545 + $0x70] sm:$0xf]
        %v630 = vld [vmem:[%s545 + $0x74] sm:$0x1]
        %v631 = vld [vmem:[%s1] sm:$0xf]
        %v632 = vld [vmem:[%s2] sm:$0x1]
        %v633 = vlaneseq
        %v634 = vshrl.u32 %v633, 7
        %v635 = vsub.s32 0, %v634
        %v636 = vrot.slane %v632, %v635
        %v667 = vunpack.c.l.b16 %v601
        %v668 = vunpack.c.l.b16 %v602
        %v669 = vunpack.c.l.b16 %v603
        %v670 = vunpack.c.l.b16 %v604
        %v671 = vunpack.c.l.b16 %v605
        %v672 = vunpack.c.l.b16 %v606
        %v673 = vunpack.c.l.b16 %v607
        %v674 = vunpack.c.l.b16 %v608
        %v675 = vunpack.c.l.b16 %v609
        %v676 = vunpack.c.l.b16 %v610
        %v677 = vunpack.c.l.b16 %v611
        %v678 = vunpack.c.l.b16 %v612
        %v679 = vunpack.c.l.b16 %v613
        %v680 = vunpack.c.l.b16 %v614
        %v681 = vunpack.c.l.b16 %v615
        %v682 = vunpack.c.l.b16 %v616
        %v683 = vunpack.c.l.b16 %v617
        %v684 = vunpack.c.l.b16 %v618
        %v685 = vunpack.c.l.b16 %v619
        %v686 = vunpack.c.l.b16 %v620
        %v687 = vunpack.c.l.b16 %v621
        %v688 = vunpack.c.l.b16 %v622
        %v689 = vunpack.c.l.b16 %v623
        %v690 = vunpack.c.l.b16 %v624
        %v691 = vunpack.c.l.b16 %v625
        %v692 = vunpack.c.l.b16 %v626
        %v693 = vunpack.c.l.b16 %v627
        %v694 = vunpack.c.l.b16 %v628
        %v695 = vunpack.c.l.b16 %v629
        %v696 = vunpack.c.l.b16 %v630
        %v697 = vpack.c.b16 %v668, %v667
        %v698 = vpack.c.b16 %v670, %v669
        %v699 = vpack.c.b16 %v672, %v671
        %v700 = vpack.c.b16 %v674, %v673
        %v701 = vpack.c.b16 %v676, %v675
        %v702 = vpack.c.b16 %v678, %v677
        %v703 = vpack.c.b16 %v680, %v679
        %v704 = vpack.c.b16 %v682, %v681
        %v705 = vpack.c.b16 %v684, %v683
        %v706 = vpack.c.b16 %v686, %v685
        %v707 = vpack.c.b16 %v688, %v687
        %v708 = vpack.c.b16 %v690, %v689
        %v709 = vpack.c.b16 %v692, %v691
        %v710 = vpack.c.b16 %v694, %v693
        %v711 = vpack.c.b16 %v696, %v695
        %vm712 = vcmask 64512
        %v714 = vsel %vm712, %v697, 0
        %v717 = vsel %vm712, %v698, 0
        %v720 = vsel %vm712, %v699, 0
        %v723 = vsel %vm712, %v700, 0
        %v726 = vsel %vm712, %v701, 0
        %v729 = vsel %vm712, %v702, 0
        %v732 = vsel %vm712, %v703, 0
        %v735 = vsel %vm712, %v704, 0
        %v738 = vsel %vm712, %v705, 0
        %v741 = vsel %vm712, %v706, 0
        %v744 = vsel %vm712, %v707, 0
        %v747 = vsel %vm712, %v708, 0
        %v750 = vsel %vm712, %v709, 0
        %v753 = vsel %vm712, %v710, 0
        %v756 = vsel %vm712, %v711, 0
        %vm758 = vcmask 1043456
        %v760 = vsel %vm758, %v631, 0
        %762 = vmatprep.subr.bf16.mxu0 0
        %763 = vmatpush1.bf16.msra.mxu0 %v760
        %764 = vmatprep.subr.bf16.mxu0 0
        %765 = vmatpush1.bf16.msra.mxu0 0
        %766 = vmatprep.subr.bf16.mxu0 0
        %767 = vmatpush1.bf16.msra.mxu0 0
        %768 = vmatprep.subr.bf16.mxu0 0
        %769 = vmatpush1.bf16.msra.mxu0 0
        %770 = vmatprep.subr.bf16.mxu0 0
        %771 = vmatpush1.bf16.msra.mxu0 0
        %772 = vmatprep.subr.bf16.mxu0 0
        %773 = vmatpush1.bf16.msra.mxu0 0
        %774 = vmatprep.subr.bf16.mxu0 0
        %775 = vmatpush1.bf16.msra.mxu0 0
        %776 = vmatprep.subr.bf16.mxu0 0
        %777 = vmatpush1.bf16.msra.mxu0 0
        %778 = vmatprep.subr.bf16.mxu0 0
        %779 = vmatpush1.bf16.msra.mxu0 0
        %780 = vmatprep.subr.bf16.mxu0 0
        %781 = vmatpush1.bf16.msra.mxu0 0
        %782 = vmatprep.subr.bf16.mxu0 0
        %783 = vmatpush1.bf16.msra.mxu0 0
        %784 = vmatprep.subr.bf16.mxu0 0
        %785 = vmatpush1.bf16.msra.mxu0 0
        %786 = vmatprep.subr.bf16.mxu0 0
        %787 = vmatpush1.bf16.msra.mxu0 0
        %788 = vmatprep.subr.bf16.mxu0 0
        %789 = vmatpush1.bf16.msra.mxu0 0
        %790 = vmatprep.subr.bf16.mxu0 0
        %791 = vmatpush1.bf16.msra.mxu0 0
        %792 = vmatprep.subr.bf16.mxu0 0
        %793 = vmatpush1.bf16.msra.mxu0 0
        %794 = vmatprep.mubr.bf16.mxu0 0
        %795 = vmatmul.mubr.bf16.gmra.mrb[0].mxu0 %v714
        %v796 = vpop.f32.mrb[0].mxu0
        %v797 = vadd.f32 %v636, %v796
        %v798 = vpop.f32.mrb[0].mxu0
        %v799 = vpop.f32.mrb[0].mxu0
        %v800 = vadd.f32 %v636, %v799
        %v801 = vpop.f32.mrb[0].mxu0
        %802 = vmatprep.mubr.bf16.mxu0 0
        %803 = vmatmul.mubr.bf16.gmra.mrb[0].mxu0 %v717
        %v804 = vpop.f32.mrb[0].mxu0
        %v805 = vadd.f32 %v636, %v804
        %v806 = vpop.f32.mrb[0].mxu0
        %v807 = vpop.f32.mrb[0].mxu0
        %v808 = vadd.f32 %v636, %v807
        %v809 = vpop.f32.mrb[0].mxu0
        %810 = vmatprep.mubr.bf16.mxu0 0
        %811 = vmatmul.mubr.bf16.gmra.mrb[0].mxu0 %v720
        %v812 = vpop.f32.mrb[0].mxu0
        %v813 = vadd.f32 %v636, %v812
        %v814 = vpop.f32.mrb[0].mxu0
        %v815 = vpop.f32.mrb[0].mxu0
        %v816 = vadd.f32 %v636, %v815
        %v817 = vpop.f32.mrb[0].mxu0
        %818 = vmatprep.mubr.bf16.mxu0 0
        %819 = vmatmul.mubr.bf16.gmra.mrb[0].mxu0 %v723
        %v820 = vpop.f32.mrb[0].mxu0
        %v821 = vadd.f32 %v636, %v820
        %v822 = vpop.f32.mrb[0].mxu0
        %v823 = vpop.f32.mrb[0].mxu0
        %v824 = vadd.f32 %v636, %v823
        %v825 = vpop.f32.mrb[0].mxu0
        %826 = vmatprep.mubr.bf16.mxu0 0
        %827 = vmatmul.mubr.bf16.gmra.mrb[0].mxu0 %v726
        %v828 = vpop.f32.mrb[0].mxu0
        %v829 = vadd.f32 %v636, %v828
        %v830 = vpop.f32.mrb[0].mxu0
        %v831 = vpop.f32.mrb[0].mxu0
        %v832 = vadd.f32 %v636, %v831
        %v833 = vpop.f32.mrb[0].mxu0
        %834 = vmatprep.mubr.bf16.mxu0 0
        %835 = vmatmul.mubr.bf16.gmra.mrb[0].mxu0 %v729
        %v836 = vpop.f32.mrb[0].mxu0
        %v837 = vadd.f32 %v636, %v836
        %v838 = vpop.f32.mrb[0].mxu0
        %v839 = vpop.f32.mrb[0].mxu0
        %v840 = vadd.f32 %v636, %v839
        %v841 = vpop.f32.mrb[0].mxu0
        %842 = vmatprep.mubr.bf16.mxu0 0
        %843 = vmatmul.mubr.bf16.gmra.mrb[0].mxu0 %v732
        %v844 = vpop.f32.mrb[0].mxu0
        %v845 = vadd.f32 %v636, %v844
        %v846 = vpop.f32.mrb[0].mxu0
        %v847 = vpop.f32.mrb[0].mxu0
        %v848 = vadd.f32 %v636, %v847
        %v849 = vpop.f32.mrb[0].mxu0
        %850 = vmatprep.mubr.bf16.mxu0 0
        %851 = vmatmul.mubr.bf16.gmra.mrb[0].mxu0 %v735
        %v852 = vpop.f32.mrb[0].mxu0
        %v853 = vadd.f32 %v636, %v852
        %v854 = vpop.f32.mrb[0].mxu0
        %v855 = vpop.f32.mrb[0].mxu0
        %v856 = vadd.f32 %v636, %v855
        %v857 = vpop.f32.mrb[0].mxu0
        %858 = vmatprep.mubr.bf16.mxu0 0
        %859 = vmatmul.mubr.bf16.gmra.mrb[0].mxu0 %v738
        %v860 = vpop.f32.mrb[0].mxu0
        %v861 = vadd.f32 %v636, %v860
        %v862 = vpop.f32.mrb[0].mxu0
        %v863 = vpop.f32.mrb[0].mxu0
        %v864 = vadd.f32 %v636, %v863
        %v865 = vpop.f32.mrb[0].mxu0
        %866 = vmatprep.mubr.bf16.mxu0 0
        %867 = vmatmul.mubr.bf16.gmra.mrb[0].mxu0 %v741
        %v868 = vpop.f32.mrb[0].mxu0
        %v869 = vadd.f32 %v636, %v868
        %v870 = vpop.f32.mrb[0].mxu0
        %v871 = vpop.f32.mrb[0].mxu0
        %v872 = vadd.f32 %v636, %v871
        %v873 = vpop.f32.mrb[0].mxu0
        %874 = vmatprep.mubr.bf16.mxu0 0
        %875 = vmatmul.mubr.bf16.gmra.mrb[0].mxu0 %v744
        %v876 = vpop.f32.mrb[0].mxu0
        %v877 = vadd.f32 %v636, %v876
        %v878 = vpop.f32.mrb[0].mxu0
        %v879 = vpop.f32.mrb[0].mxu0
        %v880 = vadd.f32 %v636, %v879
        %v881 = vpop.f32.mrb[0].mxu0
        %882 = vmatprep.mubr.bf16.mxu0 0
        %883 = vmatmul.mubr.bf16.gmra.mrb[0].mxu0 %v747
        %v884 = vpop.f32.mrb[0].mxu0
        %v885 = vadd.f32 %v636, %v884
        %v886 = vpop.f32.mrb[0].mxu0
        %v887 = vpop.f32.mrb[0].mxu0
        %v888 = vadd.f32 %v636, %v887
        %v889 = vpop.f32.mrb[0].mxu0
        %890 = vmatprep.mubr.bf16.mxu0 0
        %891 = vmatmul.mubr.bf16.gmra.mrb[0].mxu0 %v750
        %v892 = vpop.f32.mrb[0].mxu0
        %v893 = vadd.f32 %v636, %v892
        %v894 = vpop.f32.mrb[0].mxu0
        %v895 = vpop.f32.mrb[0].mxu0
        %v896 = vadd.f32 %v636, %v895
        %v897 = vpop.f32.mrb[0].mxu0
        %898 = vmatprep.mubr.bf16.mxu0 0
        %899 = vmatmul.mubr.bf16.gmra.mrb[0].mxu0 %v753
        %v900 = vpop.f32.mrb[0].mxu0
        %v901 = vadd.f32 %v636, %v900
        %v902 = vpop.f32.mrb[0].mxu0
        %v903 = vpop.f32.mrb[0].mxu0
        %v904 = vadd.f32 %v636, %v903
        %v905 = vpop.f32.mrb[0].mxu0
        %906 = vmatprep.mubr.bf16.mxu0 0
        %907 = vmatmul.mubr.bf16.gmra.mrb[0].mxu0 %v756
        %v908 = vpop.f32.mrb[0].mxu0
        %v909 = vadd.f32 %v636, %v908
        %v910 = vpop.f32.mrb[0].mxu0
        %v911 = vpop.f32.mrb[0].mxu0
        %v912 = vadd.f32 %v636, %v911
        %v913 = vpop.f32.mrb[0].mxu0
        %914 = vdwg.mxu0
        %v915 = vmax.f32 %v797, 0.0
        %v916 = vmax.f32 %v800, 0.0
        %v917 = vmax.f32 %v805, 0.0
        %v918 = vmax.f32 %v808, 0.0
        %v919 = vmax.f32 %v813, 0.0
        %v920 = vmax.f32 %v816, 0.0
        %v921 = vmax.f32 %v821, 0.0
        %v922 = vmax.f32 %v824, 0.0
        %v923 = vmax.f32 %v829, 0.0
        %v924 = vmax.f32 %v832, 0.0
        %v925 = vmax.f32 %v837, 0.0
        %v926 = vmax.f32 %v840, 0.0
        %v927 = vmax.f32 %v845, 0.0
        %v928 = vmax.f32 %v848, 0.0
        %v929 = vmax.f32 %v853, 0.0
        %v930 = vmax.f32 %v856, 0.0
        %v931 = vmax.f32 %v861, 0.0
        %v932 = vmax.f32 %v864, 0.0
        %v933 = vmax.f32 %v869, 0.0
        %v934 = vmax.f32 %v872, 0.0
        %v935 = vmax.f32 %v877, 0.0
        %v936 = vmax.f32 %v880, 0.0
        %v937 = vmax.f32 %v885, 0.0
        %v938 = vmax.f32 %v888, 0.0
        %v939 = vmax.f32 %v893, 0.0
        %v940 = vmax.f32 %v896, 0.0
        %v941 = vmax.f32 %v901, 0.0
        %v942 = vmax.f32 %v904, 0.0
        %v943 = vmax.f32 %v909, 0.0
        %v944 = vmax.f32 %v912, 0.0
        %v945 = vld [vmem:[%s2 + $0x1] sm:$0x1]
        %v946 = vlaneseq
        %v947 = vshrl.u32 %v946, 7
        %v948 = vsub.s32 0, %v947
        %v949 = vrot.slane %v945, %v948
        %v950 = vmul.f32 %v915, %v949
        %v951 = vmul.f32 %v916, %v949
        %v952 = vmul.f32 %v917, %v949
        %v953 = vmul.f32 %v918, %v949
        %v954 = vmul.f32 %v919, %v949
        %v955 = vmul.f32 %v920, %v949
        %v956 = vmul.f32 %v921, %v949
        %v957 = vmul.f32 %v922, %v949
        %v958 = vmul.f32 %v923, %v949
        %v959 = vmul.f32 %v924, %v949
        %v960 = vmul.f32 %v925, %v949
        %v961 = vmul.f32 %v926, %v949
        %v962 = vmul.f32 %v927, %v949
        %v963 = vmul.f32 %v928, %v949
        %v964 = vmul.f32 %v929, %v949
        %v965 = vmul.f32 %v930, %v949
        %v966 = vmul.f32 %v931, %v949
        %v967 = vmul.f32 %v932, %v949
        %v968 = vmul.f32 %v933, %v949
        %v969 = vmul.f32 %v934, %v949
        %v970 = vmul.f32 %v935, %v949
        %v971 = vmul.f32 %v936, %v949
        %v972 = vmul.f32 %v937, %v949
        %v973 = vmul.f32 %v938, %v949
        %v974 = vmul.f32 %v939, %v949
        %v975 = vmul.f32 %v940, %v949
        %v976 = vmul.f32 %v941, %v949
        %v977 = vmul.f32 %v942, %v949
        %v978 = vmul.f32 %v943, %v949
        %v979 = vmul.f32 %v944, %v949
        %v980 = vld [vmem:[%s2 + $0x2] sm:$0x1]
        %v981 = vlaneseq
        %v982 = vshrl.u32 %v981, 7
        %v983 = vsub.s32 0, %v982
        %v984 = vrot.slane %v980, %v983
        %v985 = vadd.f32 %v950, %v984
        %v986 = vadd.f32 %v951, %v984
        %v987 = vadd.f32 %v952, %v984
        %v988 = vadd.f32 %v953, %v984
        %v989 = vadd.f32 %v954, %v984
        %v990 = vadd.f32 %v955, %v984
        %v991 = vadd.f32 %v956, %v984
        %v992 = vadd.f32 %v957, %v984
        %v993 = vadd.f32 %v958, %v984
        %v994 = vadd.f32 %v959, %v984
        %v995 = vadd.f32 %v960, %v984
        %v996 = vadd.f32 %v961, %v984
        %v997 = vadd.f32 %v962, %v984
        %v998 = vadd.f32 %v963, %v984
        %v999 = vadd.f32 %v964, %v984
        %v1000 = vadd.f32 %v965, %v984
        %v1001 = vadd.f32 %v966, %v984
        %v1002 = vadd.f32 %v967, %v984
        %v1003 = vadd.f32 %v968, %v984
        %v1004 = vadd.f32 %v969, %v984
        %v1005 = vadd.f32 %v970, %v984
        %v1006 = vadd.f32 %v971, %v984
        %v1007 = vadd.f32 %v972, %v984
        %v1008 = vadd.f32 %v973, %v984
        %v1009 = vadd.f32 %v974, %v984
        %v1010 = vadd.f32 %v975, %v984
        %v1011 = vadd.f32 %v976, %v984
        %v1012 = vadd.f32 %v977, %v984
        %v1013 = vadd.f32 %v978, %v984
        %v1014 = vadd.f32 %v979, %v984
        %1015 = vst.msk [vmem:[#allocation2 + $0x1] sm:$0xff] %vm547, %v985
        %1016 = vst.msk [vmem:[#allocation2 + $0x9] sm:$0xff] %vm547, %v986
        %1017 = vst.msk [vmem:[#allocation2 + $0x11] sm:$0xff] %vm547, %v987
        %1018 = vst.msk [vmem:[#allocation2 + $0x19] sm:$0xff] %vm547, %v988
        %1019 = vst.msk [vmem:[#allocation2 + $0x21] sm:$0xff] %vm547, %v989
        %1020 = vst.msk [vmem:[#allocation2 + $0x29] sm:$0xff] %vm547, %v990
        %1021 = vst.msk [vmem:[#allocation2 + $0x31] sm:$0xff] %vm547, %v991
        %1022 = vst.msk [vmem:[#allocation2 + $0x39] sm:$0xff] %vm547, %v992
        %1023 = vst.msk [vmem:[#allocation2 + $0x41] sm:$0xff] %vm547, %v993
        %1024 = vst.msk [vmem:[#allocation2 + $0x49] sm:$0xff] %vm547, %v994
        %1025 = vst.msk [vmem:[#allocation2 + $0x51] sm:$0xff] %vm547, %v995
        %1026 = vst.msk [vmem:[#allocation2 + $0x59] sm:$0xff] %vm547, %v996
        %1027 = vst.msk [vmem:[#allocation2 + $0x61] sm:$0xff] %vm547, %v997
        %1028 = vst.msk [vmem:[#allocation2 + $0x69] sm:$0xff] %vm547, %v998
        %1029 = vst.msk [vmem:[#allocation2 + $0x71] sm:$0xff] %vm547, %v999
        %1030 = vst.msk [vmem:[#allocation2 + $0x79] sm:$0xff] %vm547, %v1000
        %1031 = vst.msk [vmem:[#allocation2 + $0x81] sm:$0xff] %vm547, %v1001
        %1032 = vst.msk [vmem:[#allocation2 + $0x89] sm:$0xff] %vm547, %v1002
        %1033 = vst.msk [vmem:[#allocation2 + $0x91] sm:$0xff] %vm547, %v1003
        %1034 = vst.msk [vmem:[#allocation2 + $0x99] sm:$0xff] %vm547, %v1004
        %1035 = vst.msk [vmem:[#allocation2 + $0xa1] sm:$0xff] %vm547, %v1005
        %1036 = vst.msk [vmem:[#allocation2 + $0xa9] sm:$0xff] %vm547, %v1006
        %1037 = vst.msk [vmem:[#allocation2 + $0xb1] sm:$0xff] %vm547, %v1007
        %1038 = vst.msk [vmem:[#allocation2 + $0xb9] sm:$0xff] %vm547, %v1008
        %1039 = vst.msk [vmem:[#allocation2 + $0xc1] sm:$0xff] %vm547, %v1009
        %1040 = vst.msk [vmem:[#allocation2 + $0xc9] sm:$0xff] %vm547, %v1010
        %1041 = vst.msk [vmem:[#allocation2 + $0xd1] sm:$0xff] %vm547, %v1011
        %1042 = vst.msk [vmem:[#allocation2 + $0xd9] sm:$0xff] %vm547, %v1012
        %1043 = vst.msk [vmem:[#allocation2 + $0xe1] sm:$0xff] %vm547, %v1013
        %vm1044 = vcmask 516096
        %1045 = vst.msk [vmem:[#allocation2 + $0xe9] sm:$0x1] %vm1044, %v1014
        %v1046 = vld [vmem:[#allocation2] ss:$2 sm:$0xff]
        %s1047 = scalar_lea.vmem [#allocation2], 16
        %v1048 = vld [vmem:[%s1047] ss:$2 sm:$0xff]
        %s1049 = scalar_lea.vmem [#allocation2], 32
        %v1050 = vld [vmem:[%s1049] ss:$2 sm:$0xff]
        %s1051 = scalar_lea.vmem [#allocation2], 48
        %v1052 = vld [vmem:[%s1051] ss:$2 sm:$0xff]
        %s1053 = scalar_lea.vmem [#allocation2], 64
        %v1054 = vld [vmem:[%s1053] ss:$2 sm:$0xff]
        %s1055 = scalar_lea.vmem [#allocation2], 80
        %v1056 = vld [vmem:[%s1055] ss:$2 sm:$0xff]
        %s1057 = scalar_lea.vmem [#allocation2], 96
        %v1058 = vld [vmem:[%s1057] ss:$2 sm:$0xff]
        %s1059 = scalar_lea.vmem [#allocation2], 112
        %v1060 = vld [vmem:[%s1059] ss:$2 sm:$0xff]
        %s1061 = scalar_lea.vmem [#allocation2], 128
        %v1062 = vld [vmem:[%s1061] ss:$2 sm:$0xff]
        %s1063 = scalar_lea.vmem [#allocation2], 144
        %v1064 = vld [vmem:[%s1063] ss:$2 sm:$0xff]
        %s1065 = scalar_lea.vmem [#allocation2], 160
        %v1066 = vld [vmem:[%s1065] ss:$2 sm:$0xff]
        %s1067 = scalar_lea.vmem [#allocation2], 176
        %v1068 = vld [vmem:[%s1067] ss:$2 sm:$0xff]
        %s1069 = scalar_lea.vmem [#allocation2], 192
        %v1070 = vld [vmem:[%s1069] ss:$2 sm:$0xff]
        %s1071 = scalar_lea.vmem [#allocation2], 208
        %v1072 = vld [vmem:[%s1071] ss:$2 sm:$0xff]
        %s1073 = scalar_lea.vmem [#allocation2], 224
        %v1074 = vld [vmem:[%s1073] ss:$2 sm:$0xf]
        %v1075 = vpack.c.bf16 %v1048, %v1046
        %v1076 = vpack.c.bf16 %v1052, %v1050
        %v1077 = vpack.c.bf16 %v1056, %v1054
        %v1078 = vpack.c.bf16 %v1060, %v1058
        %v1079 = vpack.c.bf16 %v1064, %v1062
        %v1080 = vpack.c.bf16 %v1068, %v1066
        %v1081 = vpack.c.bf16 %v1072, %v1070
        %v1082 = vpack.c.bf16 %v1074, %v1074
        %v1083 = vld [vmem:[%s3] sm:$0xf]
        %v1084 = vld [vmem:[%s3 + $0x4] sm:$0xf]
        %v1085 = vld [vmem:[%s3 + $0x8] sm:$0xf]
        %v1086 = vld [vmem:[%s3 + $0xc] sm:$0xf]
        %v1087 = vld [vmem:[%s3 + $0x10] sm:$0xf]
        %v1088 = vld [vmem:[%s3 + $0x14] sm:$0xf]
        %v1089 = vld [vmem:[%s3 + $0x18] sm:$0xf]
        %v1090 = vld [vmem:[%s3 + $0x1c] sm:$0xf]
        %s1091 = scalar_lea.vmem [#allocation2], 1
        %v1092 = vld [vmem:[%s1091] ss:$2 sm:$0xff]
        %s1093 = scalar_lea.vmem [#allocation2], 17
        %v1094 = vld [vmem:[%s1093] ss:$2 sm:$0xff]
        %s1095 = scalar_lea.vmem [#allocation2], 33
        %v1096 = vld [vmem:[%s1095] ss:$2 sm:$0xff]
        %s1097 = scalar_lea.vmem [#allocation2], 49
        %v1098 = vld [vmem:[%s1097] ss:$2 sm:$0xff]
        %s1099 = scalar_lea.vmem [#allocation2], 65
        %v1100 = vld [vmem:[%s1099] ss:$2 sm:$0xff]
        %s1101 = scalar_lea.vmem [#allocation2], 81
        %v1102 = vld [vmem:[%s1101] ss:$2 sm:$0xff]
        %s1103 = scalar_lea.vmem [#allocation2], 97
        %v1104 = vld [vmem:[%s1103] ss:$2 sm:$0xff]
        %s1105 = scalar_lea.vmem [#allocation2], 113
        %v1106 = vld [vmem:[%s1105] ss:$2 sm:$0xff]
        %s1107 = scalar_lea.vmem [#allocation2], 129
        %v1108 = vld [vmem:[%s1107] ss:$2 sm:$0xff]
        %s1109 = scalar_lea.vmem [#allocation2], 145
        %v1110 = vld [vmem:[%s1109] ss:$2 sm:$0xff]
        %s1111 = scalar_lea.vmem [#allocation2], 161
        %v1112 = vld [vmem:[%s1111] ss:$2 sm:$0xff]
        %s1113 = scalar_lea.vmem [#allocation2], 177
        %v1114 = vld [vmem:[%s1113] ss:$2 sm:$0xff]
        %s1115 = scalar_lea.vmem [#allocation2], 193
        %v1116 = vld [vmem:[%s1115] ss:$2 sm:$0xff]
        %s1117 = scalar_lea.vmem [#allocation2], 209
        %v1118 = vld [vmem:[%s1117] ss:$2 sm:$0xff]
        %s1119 = scalar_lea.vmem [#allocation2], 225
        %v1120 = vld [vmem:[%s1119] ss:$2 sm:$0xf]
        %v1121 = vpack.c.bf16 %v1094, %v1092
        %v1122 = vpack.c.bf16 %v1098, %v1096
        %v1123 = vpack.c.bf16 %v1102, %v1100
        %v1124 = vpack.c.bf16 %v1106, %v1104
        %v1125 = vpack.c.bf16 %v1110, %v1108
        %v1126 = vpack.c.bf16 %v1114, %v1112
        %v1127 = vpack.c.bf16 %v1118, %v1116
        %v1128 = vpack.c.bf16 %v1120, %v1120
        %s1129 = scalar_lea.vmem %s3, 32
        %v1130 = vld [vmem:[%s1129] sm:$0xf]
        %v1131 = vld [vmem:[%s1129 + $0x4] sm:$0xf]
        %v1132 = vld [vmem:[%s1129 + $0x8] sm:$0xf]
        %v1133 = vld [vmem:[%s1129 + $0xc] sm:$0xf]
        %v1134 = vld [vmem:[%s1129 + $0x10] sm:$0xf]
        %v1135 = vld [vmem:[%s1129 + $0x14] sm:$0xf]
        %v1136 = vld [vmem:[%s1129 + $0x18] sm:$0xf]
        %v1137 = vld [vmem:[%s1129 + $0x1c] sm:$0xf]
        %v1146 = vunpack.c.l.b16 %v1130
        %v1147 = vunpack.c.l.b16 %v1131
        %v1148 = vunpack.c.l.b16 %v1132
        %v1149 = vunpack.c.l.b16 %v1133
        %v1150 = vunpack.c.l.b16 %v1134
        %v1151 = vunpack.c.l.b16 %v1135
        %v1152 = vunpack.c.l.b16 %v1136
        %v1153 = vunpack.c.l.b16 %v1137
        %v1154 = vpack.c.b16 %v1147, %v1146
        %v1155 = vpack.c.b16 %v1149, %v1148
        %v1156 = vpack.c.b16 %v1151, %v1150
        %v1157 = vpack.c.b16 %v1153, %v1152
        %v1163 = vsel %vm547, %v1121, 0
        %v1166 = vsel %vm547, %v1122, 0
        %v1169 = vsel %vm547, %v1123, 0
        %v1172 = vsel %vm547, %v1124, 0
        %v1175 = vsel %vm547, %v1125, 0
        %v1178 = vsel %vm547, %v1126, 0
        %v1181 = vsel %vm547, %v1127, 0
        %v1184 = vsel %vm547, %v1128, 0
        %1186 = vmatprep.subr.bf16.mxu0 0
        %1187 = vmatpush1.bf16.msra.mxu0 %v1154
        %1188 = vmatprep.subr.bf16.mxu0 0
        %1189 = vmatpush1.bf16.msra.mxu0 %v1155
        %1190 = vmatprep.subr.bf16.mxu0 0
        %1191 = vmatpush1.bf16.msra.mxu0 %v1156
        %1192 = vmatprep.subr.bf16.mxu0 0
        %1193 = vmatpush1.bf16.msra.mxu0 %v1157
        %1194 = vmatprep.subr.bf16.mxu0 0
        %1195 = vmatpush1.bf16.msra.mxu0 0
        %1196 = vmatprep.subr.bf16.mxu0 0
        %1197 = vmatpush1.bf16.msra.mxu0 0
        %1198 = vmatprep.subr.bf16.mxu0 0
        %1199 = vmatpush1.bf16.msra.mxu0 0
        %1200 = vmatprep.subr.bf16.mxu0 0
        %1201 = vmatpush1.bf16.msra.mxu0 0
        %1202 = vmatprep.subr.bf16.mxu0 0
        %1203 = vmatpush1.bf16.msra.mxu0 0
        %1204 = vmatprep.subr.bf16.mxu0 0
        %1205 = vmatpush1.bf16.msra.mxu0 0
        %1206 = vmatprep.subr.bf16.mxu0 0
        %1207 = vmatpush1.bf16.msra.mxu0 0
        %1208 = vmatprep.subr.bf16.mxu0 0
        %1209 = vmatpush1.bf16.msra.mxu0 0
        %1210 = vmatprep.subr.bf16.mxu0 0
        %1211 = vmatpush1.bf16.msra.mxu0 0
        %1212 = vmatprep.subr.bf16.mxu0 0
        %1213 = vmatpush1.bf16.msra.mxu0 0
        %1214 = vmatprep.subr.bf16.mxu0 0
        %1215 = vmatpush1.bf16.msra.mxu0 0
        %1216 = vmatprep.subr.bf16.mxu0 0
        %1217 = vmatpush1.bf16.msra.mxu0 0
        %1218 = vmatprep.mubr.bf16.mxu0 0
        %1219 = vmatmul.mubr.bf16.gmra.mrb[0].mxu0 %v1163
        %v1220 = vpop.f32.mrb[0].mxu0
        %v1221 = vadd.f32 0.0, %v1220
        %v1222 = vpop.f32.mrb[0].mxu0
        %v1223 = vpop.f32.mrb[0].mxu0
        %v1224 = vadd.f32 0.0, %v1223
        %v1225 = vpop.f32.mrb[0].mxu0
        %1226 = vmatprep.mubr.bf16.mxu0 0
        %1227 = vmatmul.mubr.bf16.gmra.mrb[0].mxu0 %v1166
        %v1228 = vpop.f32.mrb[0].mxu0
        %v1229 = vadd.f32 0.0, %v1228
        %v1230 = vpop.f32.mrb[0].mxu0
        %v1231 = vpop.f32.mrb[0].mxu0
        %v1232 = vadd.f32 0.0, %v1231
        %v1233 = vpop.f32.mrb[0].mxu0
        %1234 = vmatprep.mubr.bf16.mxu0 0
        %1235 = vmatmul.mubr.bf16.gmra.mrb[0].mxu0 %v1169
        %v1236 = vpop.f32.mrb[0].mxu0
        %v1237 = vadd.f32 0.0, %v1236
        %v1238 = vpop.f32.mrb[0].mxu0
        %v1239 = vpop.f32.mrb[0].mxu0
        %v1240 = vadd.f32 0.0, %v1239
        %v1241 = vpop.f32.mrb[0].mxu0
        %1242 = vmatprep.mubr.bf16.mxu0 0
        %1243 = vmatmul.mubr.bf16.gmra.mrb[0].mxu0 %v1172
        %v1244 = vpop.f32.mrb[0].mxu0
        %v1245 = vadd.f32 0.0, %v1244
        %v1246 = vpop.f32.mrb[0].mxu0
        %v1247 = vpop.f32.mrb[0].mxu0
        %v1248 = vadd.f32 0.0, %v1247
        %v1249 = vpop.f32.mrb[0].mxu0
        %1250 = vmatprep.mubr.bf16.mxu0 0
        %1251 = vmatmul.mubr.bf16.gmra.mrb[0].mxu0 %v1175
        %v1252 = vpop.f32.mrb[0].mxu0
        %v1253 = vadd.f32 0.0, %v1252
        %v1254 = vpop.f32.mrb[0].mxu0
        %v1255 = vpop.f32.mrb[0].mxu0
        %v1256 = vadd.f32 0.0, %v1255
        %v1257 = vpop.f32.mrb[0].mxu0
        %1258 = vmatprep.mubr.bf16.mxu0 0
        %1259 = vmatmul.mubr.bf16.gmra.mrb[0].mxu0 %v1178
        %v1260 = vpop.f32.mrb[0].mxu0
        %v1261 = vadd.f32 0.0, %v1260
        %v1262 = vpop.f32.mrb[0].mxu0
        %v1263 = vpop.f32.mrb[0].mxu0
        %v1264 = vadd.f32 0.0, %v1263
        %v1265 = vpop.f32.mrb[0].mxu0
        %1266 = vmatprep.mubr.bf16.mxu0 0
        %1267 = vmatmul.mubr.bf16.gmra.mrb[0].mxu0 %v1181
        %v1268 = vpop.f32.mrb[0].mxu0
        %v1269 = vadd.f32 0.0, %v1268
        %v1270 = vpop.f32.mrb[0].mxu0
        %v1271 = vpop.f32.mrb[0].mxu0
        %v1272 = vadd.f32 0.0, %v1271
        %v1273 = vpop.f32.mrb[0].mxu0
        %1274 = vmatprep.mubr.bf16.mxu0 0
        %1275 = vmatmul.mubr.bf16.gmra.mrb[0].mxu0 %v1184
        %v1276 = vpop.f32.mrb[0].mxu0
        %v1277 = vadd.f32 0.0, %v1276
        %v1278 = vpop.f32.mrb[0].mxu0
        %v1279 = vpop.f32.mrb[0].mxu0
        %v1280 = vpop.f32.mrb[0].mxu0
        %1281 = vdwg.mxu0
        %v1290 = vunpack.c.l.b16 %v1083
        %v1291 = vunpack.c.l.b16 %v1084
        %v1292 = vunpack.c.l.b16 %v1085
        %v1293 = vunpack.c.l.b16 %v1086
        %v1294 = vunpack.c.l.b16 %v1087
        %v1295 = vunpack.c.l.b16 %v1088
        %v1296 = vunpack.c.l.b16 %v1089
        %v1297 = vunpack.c.l.b16 %v1090
        %v1298 = vpack.c.b16 %v1291, %v1290
        %v1299 = vpack.c.b16 %v1293, %v1292
        %v1300 = vpack.c.b16 %v1295, %v1294
        %v1301 = vpack.c.b16 %v1297, %v1296
        %v1307 = vsel %vm547, %v1075, 0
        %v1310 = vsel %vm547, %v1076, 0
        %v1313 = vsel %vm547, %v1077, 0
        %v1316 = vsel %vm547, %v1078, 0
        %v1319 = vsel %vm547, %v1079, 0
        %v1322 = vsel %vm547, %v1080, 0
        %v1325 = vsel %vm547, %v1081, 0
        %v1328 = vsel %vm547, %v1082, 0
        %1330 = vmatprep.subr.bf16.mxu0 0
        %1331 = vmatpush1.bf16.msra.mxu0 %v1298
        %1332 = vmatprep.subr.bf16.mxu0 0
        %1333 = vmatpush1.bf16.msra.mxu0 %v1299
        %1334 = vmatprep.subr.bf16.mxu0 0
        %1335 = vmatpush1.bf16.msra.mxu0 %v1300
        %1336 = vmatprep.subr.bf16.mxu0 0
        %1337 = vmatpush1.bf16.msra.mxu0 %v1301
        %1338 = vmatprep.subr.bf16.mxu0 0
        %1339 = vmatpush1.bf16.msra.mxu0 0
        %1340 = vmatprep.subr.bf16.mxu0 0
        %1341 = vmatpush1.bf16.msra.mxu0 0
        %1342 = vmatprep.subr.bf16.mxu0 0
        %1343 = vmatpush1.bf16.msra.mxu0 0
        %1344 = vmatprep.subr.bf16.mxu0 0
        %1345 = vmatpush1.bf16.msra.mxu0 0
        %1346 = vmatprep.subr.bf16.mxu0 0
        %1347 = vmatpush1.bf16.msra.mxu0 0
        %1348 = vmatprep.subr.bf16.mxu0 0
        %1349 = vmatpush1.bf16.msra.mxu0 0
        %1350 = vmatprep.subr.bf16.mxu0 0
        %1351 = vmatpush1.bf16.msra.mxu0 0
        %1352 = vmatprep.subr.bf16.mxu0 0
        %1353 = vmatpush1.bf16.msra.mxu0 0
        %1354 = vmatprep.subr.bf16.mxu0 0
        %1355 = vmatpush1.bf16.msra.mxu0 0
        %1356 = vmatprep.subr.bf16.mxu0 0
        %1357 = vmatpush1.bf16.msra.mxu0 0
        %1358 = vmatprep.subr.bf16.mxu0 0
        %1359 = vmatpush1.bf16.msra.mxu0 0
        %1360 = vmatprep.subr.bf16.mxu0 0
        %1361 = vmatpush1.bf16.msra.mxu0 0
        %1362 = vmatprep.mubr.bf16.mxu0 0
        %1363 = vmatmul.mubr.bf16.gmra.mrb[0].mxu0 %v1307
        %v1364 = vpop.f32.mrb[0].mxu0
        %v1365 = vadd.f32 %v1221, %v1364
        %v1366 = vpop.f32.mrb[0].mxu0
        %v1367 = vpop.f32.mrb[0].mxu0
        %v1368 = vadd.f32 %v1224, %v1367
        %v1369 = vpop.f32.mrb[0].mxu0
        %1370 = vmatprep.mubr.bf16.mxu0 0
        %1371 = vmatmul.mubr.bf16.gmra.mrb[0].mxu0 %v1310
        %v1372 = vpop.f32.mrb[0].mxu0
        %v1373 = vadd.f32 %v1229, %v1372
        %v1374 = vpop.f32.mrb[0].mxu0
        %v1375 = vpop.f32.mrb[0].mxu0
        %v1376 = vadd.f32 %v1232, %v1375
        %v1377 = vpop.f32.mrb[0].mxu0
        %1378 = vmatprep.mubr.bf16.mxu0 0
        %1379 = vmatmul.mubr.bf16.gmra.mrb[0].mxu0 %v1313
        %v1380 = vpop.f32.mrb[0].mxu0
        %v1381 = vadd.f32 %v1237, %v1380
        %v1382 = vpop.f32.mrb[0].mxu0
        %v1383 = vpop.f32.mrb[0].mxu0
        %v1384 = vadd.f32 %v1240, %v1383
        %v1385 = vpop.f32.mrb[0].mxu0
        %1386 = vmatprep.mubr.bf16.mxu0 0
        %1387 = vmatmul.mubr.bf16.gmra.mrb[0].mxu0 %v1316
        %v1388 = vpop.f32.mrb[0].mxu0
        %v1389 = vadd.f32 %v1245, %v1388
        %v1390 = vpop.f32.mrb[0].mxu0
        %v1391 = vpop.f32.mrb[0].mxu0
        %v1392 = vadd.f32 %v1248, %v1391
        %v1393 = vpop.f32.mrb[0].mxu0
        %1394 = vmatprep.mubr.bf16.mxu0 0
        %1395 = vmatmul.mubr.bf16.gmra.mrb[0].mxu0 %v1319
        %v1396 = vpop.f32.mrb[0].mxu0
        %v1397 = vadd.f32 %v1253, %v1396
        %v1398 = vpop.f32.mrb[0].mxu0
        %v1399 = vpop.f32.mrb[0].mxu0
        %v1400 = vadd.f32 %v1256, %v1399
        %v1401 = vpop.f32.mrb[0].mxu0
        %1402 = vmatprep.mubr.bf16.mxu0 0
        %1403 = vmatmul.mubr.bf16.gmra.mrb[0].mxu0 %v1322
        %v1404 = vpop.f32.mrb[0].mxu0
        %v1405 = vadd.f32 %v1261, %v1404
        %v1406 = vpop.f32.mrb[0].mxu0
        %v1407 = vpop.f32.mrb[0].mxu0
        %v1408 = vadd.f32 %v1264, %v1407
        %v1409 = vpop.f32.mrb[0].mxu0
        %1410 = vmatprep.mubr.bf16.mxu0 0
        %1411 = vmatmul.mubr.bf16.gmra.mrb[0].mxu0 %v1325
        %v1412 = vpop.f32.mrb[0].mxu0
        %v1413 = vadd.f32 %v1269, %v1412
        %v1414 = vpop.f32.mrb[0].mxu0
        %v1415 = vpop.f32.mrb[0].mxu0
        %v1416 = vadd.f32 %v1272, %v1415
        %v1417 = vpop.f32.mrb[0].mxu0
        %1418 = vmatprep.mubr.bf16.mxu0 0
        %1419 = vmatmul.mubr.bf16.gmra.mrb[0].mxu0 %v1328
        %v1420 = vpop.f32.mrb[0].mxu0
        %v1421 = vadd.f32 %v1277, %v1420
        %v1422 = vpop.f32.mrb[0].mxu0
        %v1423 = vpop.f32.mrb[0].mxu0
        %v1424 = vpop.f32.mrb[0].mxu0
        %1425 = vdwg.mxu0
        %s1426 = scalar_lea.vmem [#allocation2], 2
        %v1427 = vld [vmem:[%s1426] ss:$2 sm:$0xff]
        %s1428 = scalar_lea.vmem [#allocation2], 18
        %v1429 = vld [vmem:[%s1428] ss:$2 sm:$0xff]
        %s1430 = scalar_lea.vmem [#allocation2], 34
        %v1431 = vld [vmem:[%s1430] ss:$2 sm:$0xff]
        %s1432 = scalar_lea.vmem [#allocation2], 50
        %v1433 = vld [vmem:[%s1432] ss:$2 sm:$0xff]
        %s1434 = scalar_lea.vmem [#allocation2], 66
        %v1435 = vld [vmem:[%s1434] ss:$2 sm:$0xff]
        %s1436 = scalar_lea.vmem [#allocation2], 82
        %v1437 = vld [vmem:[%s1436] ss:$2 sm:$0xff]
        %s1438 = scalar_lea.vmem [#allocation2], 98
        %v1439 = vld [vmem:[%s1438] ss:$2 sm:$0xff]
        %s1440 = scalar_lea.vmem [#allocation2], 114
        %v1441 = vld [vmem:[%s1440] ss:$2 sm:$0xff]
        %s1442 = scalar_lea.vmem [#allocation2], 130
        %v1443 = vld [vmem:[%s1442] ss:$2 sm:$0xff]
        %s1444 = scalar_lea.vmem [#allocation2], 146
        %v1445 = vld [vmem:[%s1444] ss:$2 sm:$0xff]
        %s1446 = scalar_lea.vmem [#allocation2], 162
        %v1447 = vld [vmem:[%s1446] ss:$2 sm:$0xff]
        %s1448 = scalar_lea.vmem [#allocation2], 178
        %v1449 = vld [vmem:[%s1448] ss:$2 sm:$0xff]
        %s1450 = scalar_lea.vmem [#allocation2], 194
        %v1451 = vld [vmem:[%s1450] ss:$2 sm:$0xff]
        %s1452 = scalar_lea.vmem [#allocation2], 210
        %v1453 = vld [vmem:[%s1452] ss:$2 sm:$0xff]
        %s1454 = scalar_lea.vmem [#allocation2], 226
        %v1455 = vld [vmem:[%s1454] ss:$2 sm:$0xf]
        %v1456 = vpack.c.bf16 %v1429, %v1427
        %v1457 = vpack.c.bf16 %v1433, %v1431
        %v1458 = vpack.c.bf16 %v1437, %v1435
        %v1459 = vpack.c.bf16 %v1441, %v1439
        %v1460 = vpack.c.bf16 %v1445, %v1443
        %v1461 = vpack.c.bf16 %v1449, %v1447
        %v1462 = vpack.c.bf16 %v1453, %v1451
        %v1463 = vpack.c.bf16 %v1455, %v1455
        %s1464 = scalar_lea.vmem %s3, 64
        %v1465 = vld [vmem:[%s1464] sm:$0xf]
        %v1466 = vld [vmem:[%s1464 + $0x4] sm:$0xf]
        %v1467 = vld [vmem:[%s1464 + $0x8] sm:$0xf]
        %v1468 = vld [vmem:[%s1464 + $0xc] sm:$0xf]
        %v1469 = vld [vmem:[%s1464 + $0x10] sm:$0xf]
        %v1470 = vld [vmem:[%s1464 + $0x14] sm:$0xf]
        %v1471 = vld [vmem:[%s1464 + $0x18] sm:$0xf]
        %v1472 = vld [vmem:[%s1464 + $0x1c] sm:$0xf]
        %v1481 = vunpack.c.l.b16 %v1465
        %v1482 = vunpack.c.l.b16 %v1466
        %v1483 = vunpack.c.l.b16 %v1467
        %v1484 = vunpack.c.l.b16 %v1468
        %v1485 = vunpack.c.l.b16 %v1469
        %v1486 = vunpack.c.l.b16 %v1470
        %v1487 = vunpack.c.l.b16 %v1471
        %v1488 = vunpack.c.l.b16 %v1472
        %v1489 = vpack.c.b16 %v1482, %v1481
        %v1490 = vpack.c.b16 %v1484, %v1483
        %v1491 = vpack.c.b16 %v1486, %v1485
        %v1492 = vpack.c.b16 %v1488, %v1487
        %v1498 = vsel %vm547, %v1456, 0
        %v1501 = vsel %vm547, %v1457, 0
        %v1504 = vsel %vm547, %v1458, 0
        %v1507 = vsel %vm547, %v1459, 0
        %v1510 = vsel %vm547, %v1460, 0
        %v1513 = vsel %vm547, %v1461, 0
        %v1516 = vsel %vm547, %v1462, 0
        %v1519 = vsel %vm547, %v1463, 0
        %1521 = vmatprep.subr.bf16.mxu0 0
        %1522 = vmatpush1.bf16.msra.mxu0 %v1489
        %1523 = vmatprep.subr.bf16.mxu0 0
        %1524 = vmatpush1.bf16.msra.mxu0 %v1490
        %1525 = vmatprep.subr.bf16.mxu0 0
        %1526 = vmatpush1.bf16.msra.mxu0 %v1491
        %1527 = vmatprep.subr.bf16.mxu0 0
        %1528 = vmatpush1.bf16.msra.mxu0 %v1492
        %1529 = vmatprep.subr.bf16.mxu0 0
        %1530 = vmatpush1.bf16.msra.mxu0 0
        %1531 = vmatprep.subr.bf16.mxu0 0
        %1532 = vmatpush1.bf16.msra.mxu0 0
        %1533 = vmatprep.subr.bf16.mxu0 0
        %1534 = vmatpush1.bf16.msra.mxu0 0
        %1535 = vmatprep.subr.bf16.mxu0 0
        %1536 = vmatpush1.bf16.msra.mxu0 0
        %1537 = vmatprep.subr.bf16.mxu0 0
        %1538 = vmatpush1.bf16.msra.mxu0 0
        %1539 = vmatprep.subr.bf16.mxu0 0
        %1540 = vmatpush1.bf16.msra.mxu0 0
        %1541 = vmatprep.subr.bf16.mxu0 0
        %1542 = vmatpush1.bf16.msra.mxu0 0
        %1543 = vmatprep.subr.bf16.mxu0 0
        %1544 = vmatpush1.bf16.msra.mxu0 0
        %1545 = vmatprep.subr.bf16.mxu0 0
        %1546 = vmatpush1.bf16.msra.mxu0 0
        %1547 = vmatprep.subr.bf16.mxu0 0
        %1548 = vmatpush1.bf16.msra.mxu0 0
        %1549 = vmatprep.subr.bf16.mxu0 0
        %1550 = vmatpush1.bf16.msra.mxu0 0
        %1551 = vmatprep.subr.bf16.mxu0 0
        %1552 = vmatpush1.bf16.msra.mxu0 0
        %1553 = vmatprep.mubr.bf16.mxu0 0
        %1554 = vmatmul.mubr.bf16.gmra.mrb[0].mxu0 %v1498
        %v1555 = vpop.f32.mrb[0].mxu0
        %v1556 = vadd.f32 0.0, %v1555
        %v1557 = vpop.f32.mrb[0].mxu0
        %v1558 = vpop.f32.mrb[0].mxu0
        %v1559 = vadd.f32 0.0, %v1558
        %v1560 = vpop.f32.mrb[0].mxu0
        %1561 = vmatprep.mubr.bf16.mxu0 0
        %1562 = vmatmul.mubr.bf16.gmra.mrb[0].mxu0 %v1501
        %v1563 = vpop.f32.mrb[0].mxu0
        %v1564 = vadd.f32 0.0, %v1563
        %v1565 = vpop.f32.mrb[0].mxu0
        %v1566 = vpop.f32.mrb[0].mxu0
        %v1567 = vadd.f32 0.0, %v1566
        %v1568 = vpop.f32.mrb[0].mxu0
        %1569 = vmatprep.mubr.bf16.mxu0 0
        %1570 = vmatmul.mubr.bf16.gmra.mrb[0].mxu0 %v1504
        %v1571 = vpop.f32.mrb[0].mxu0
        %v1572 = vadd.f32 0.0, %v1571
        %v1573 = vpop.f32.mrb[0].mxu0
        %v1574 = vpop.f32.mrb[0].mxu0
        %v1575 = vadd.f32 0.0, %v1574
        %v1576 = vpop.f32.mrb[0].mxu0
        %1577 = vmatprep.mubr.bf16.mxu0 0
        %1578 = vmatmul.mubr.bf16.gmra.mrb[0].mxu0 %v1507
        %v1579 = vpop.f32.mrb[0].mxu0
        %v1580 = vadd.f32 0.0, %v1579
        %v1581 = vpop.f32.mrb[0].mxu0
        %v1582 = vpop.f32.mrb[0].mxu0
        %v1583 = vadd.f32 0.0, %v1582
        %v1584 = vpop.f32.mrb[0].mxu0
        %1585 = vmatprep.mubr.bf16.mxu0 0
        %1586 = vmatmul.mubr.bf16.gmra.mrb[0].mxu0 %v1510
        %v1587 = vpop.f32.mrb[0].mxu0
        %v1588 = vadd.f32 0.0, %v1587
        %v1589 = vpop.f32.mrb[0].mxu0
        %v1590 = vpop.f32.mrb[0].mxu0
        %v1591 = vadd.f32 0.0, %v1590
        %v1592 = vpop.f32.mrb[0].mxu0
        %1593 = vmatprep.mubr.bf16.mxu0 0
        %1594 = vmatmul.mubr.bf16.gmra.mrb[0].mxu0 %v1513
        %v1595 = vpop.f32.mrb[0].mxu0
        %v1596 = vadd.f32 0.0, %v1595
        %v1597 = vpop.f32.mrb[0].mxu0
        %v1598 = vpop.f32.mrb[0].mxu0
        %v1599 = vadd.f32 0.0, %v1598
        %v1600 = vpop.f32.mrb[0].mxu0
        %1601 = vmatprep.mubr.bf16.mxu0 0
        %1602 = vmatmul.mubr.bf16.gmra.mrb[0].mxu0 %v1516
        %v1603 = vpop.f32.mrb[0].mxu0
        %v1604 = vadd.f32 0.0, %v1603
        %v1605 = vpop.f32.mrb[0].mxu0
        %v1606 = vpop.f32.mrb[0].mxu0
        %v1607 = vadd.f32 0.0, %v1606
        %v1608 = vpop.f32.mrb[0].mxu0
        %1609 = vmatprep.mubr.bf16.mxu0 0
        %1610 = vmatmul.mubr.bf16.gmra.mrb[0].mxu0 %v1519
        %v1611 = vpop.f32.mrb[0].mxu0
        %v1612 = vadd.f32 0.0, %v1611
        %v1613 = vpop.f32.mrb[0].mxu0
        %v1614 = vpop.f32.mrb[0].mxu0
        %v1615 = vpop.f32.mrb[0].mxu0
        %1616 = vdwg.mxu0
        %v1617 = vadd.f32 %v1365, %v1556
        %v1618 = vadd.f32 %v1368, %v1559
        %v1619 = vadd.f32 %v1373, %v1564
        %v1620 = vadd.f32 %v1376, %v1567
        %v1621 = vadd.f32 %v1381, %v1572
        %v1622 = vadd.f32 %v1384, %v1575
        %v1623 = vadd.f32 %v1389, %v1580
        %v1624 = vadd.f32 %v1392, %v1583
        %v1625 = vadd.f32 %v1397, %v1588
        %v1626 = vadd.f32 %v1400, %v1591
        %v1627 = vadd.f32 %v1405, %v1596
        %v1628 = vadd.f32 %v1408, %v1599
        %v1629 = vadd.f32 %v1413, %v1604
        %v1630 = vadd.f32 %v1416, %v1607
        %v1631 = vadd.f32 %v1421, %v1612
        %s1632 = scalar_lea.vmem [#allocation2], 3
        %v1633 = vld [vmem:[%s1632] ss:$2 sm:$0xff]
        %s1634 = scalar_lea.vmem [#allocation2], 19
        %v1635 = vld [vmem:[%s1634] ss:$2 sm:$0xff]
        %s1636 = scalar_lea.vmem [#allocation2], 35
        %v1637 = vld [vmem:[%s1636] ss:$2 sm:$0xff]
        %s1638 = scalar_lea.vmem [#allocation2], 51
        %v1639 = vld [vmem:[%s1638] ss:$2 sm:$0xff]
        %s1640 = scalar_lea.vmem [#allocation2], 67
        %v1641 = vld [vmem:[%s1640] ss:$2 sm:$0xff]
        %s1642 = scalar_lea.vmem [#allocation2], 83
        %v1643 = vld [vmem:[%s1642] ss:$2 sm:$0xff]
        %s1644 = scalar_lea.vmem [#allocation2], 99
        %v1645 = vld [vmem:[%s1644] ss:$2 sm:$0xff]
        %s1646 = scalar_lea.vmem [#allocation2], 115
        %v1647 = vld [vmem:[%s1646] ss:$2 sm:$0xff]
        %s1648 = scalar_lea.vmem [#allocation2], 131
        %v1649 = vld [vmem:[%s1648] ss:$2 sm:$0xff]
        %s1650 = scalar_lea.vmem [#allocation2], 147
        %v1651 = vld [vmem:[%s1650] ss:$2 sm:$0xff]
        %s1652 = scalar_lea.vmem [#allocation2], 163
        %v1653 = vld [vmem:[%s1652] ss:$2 sm:$0xff]
        %s1654 = scalar_lea.vmem [#allocation2], 179
        %v1655 = vld [vmem:[%s1654] ss:$2 sm:$0xff]
        %s1656 = scalar_lea.vmem [#allocation2], 195
        %v1657 = vld [vmem:[%s1656] ss:$2 sm:$0xff]
        %s1658 = scalar_lea.vmem [#allocation2], 211
        %v1659 = vld [vmem:[%s1658] ss:$2 sm:$0xff]
        %s1660 = scalar_lea.vmem [#allocation2], 227
        %v1661 = vld [vmem:[%s1660] ss:$2 sm:$0xf]
        %v1662 = vpack.c.bf16 %v1635, %v1633
        %v1663 = vpack.c.bf16 %v1639, %v1637
        %v1664 = vpack.c.bf16 %v1643, %v1641
        %v1665 = vpack.c.bf16 %v1647, %v1645
        %v1666 = vpack.c.bf16 %v1651, %v1649
        %v1667 = vpack.c.bf16 %v1655, %v1653
        %v1668 = vpack.c.bf16 %v1659, %v1657
        %v1669 = vpack.c.bf16 %v1661, %v1661
        %s1670 = scalar_lea.vmem %s3, 96
        %v1671 = vld [vmem:[%s1670] sm:$0xf]
        %v1672 = vld [vmem:[%s1670 + $0x4] sm:$0xf]
        %v1673 = vld [vmem:[%s1670 + $0x8] sm:$0xf]
        %v1674 = vld [vmem:[%s1670 + $0xc] sm:$0xf]
        %v1675 = vld [vmem:[%s1670 + $0x10] sm:$0xf]
        %v1676 = vld [vmem:[%s1670 + $0x14] sm:$0xf]
        %v1677 = vld [vmem:[%s1670 + $0x18] sm:$0xf]
        %v1678 = vld [vmem:[%s1670 + $0x1c] sm:$0xf]
        %v1687 = vunpack.c.l.b16 %v1671
        %v1688 = vunpack.c.l.b16 %v1672
        %v1689 = vunpack.c.l.b16 %v1673
        %v1690 = vunpack.c.l.b16 %v1674
        %v1691 = vunpack.c.l.b16 %v1675
        %v1692 = vunpack.c.l.b16 %v1676
        %v1693 = vunpack.c.l.b16 %v1677
        %v1694 = vunpack.c.l.b16 %v1678
        %v1695 = vpack.c.b16 %v1688, %v1687
        %v1696 = vpack.c.b16 %v1690, %v1689
        %v1697 = vpack.c.b16 %v1692, %v1691
        %v1698 = vpack.c.b16 %v1694, %v1693
        %v1704 = vsel %vm547, %v1662, 0
        %v1707 = vsel %vm547, %v1663, 0
        %v1710 = vsel %vm547, %v1664, 0
        %v1713 = vsel %vm547, %v1665, 0
        %v1716 = vsel %vm547, %v1666, 0
        %v1719 = vsel %vm547, %v1667, 0
        %v1722 = vsel %vm547, %v1668, 0
        %v1725 = vsel %vm547, %v1669, 0
        %1727 = vmatprep.subr.bf16.mxu0 0
        %1728 = vmatpush1.bf16.msra.mxu0 %v1695
        %1729 = vmatprep.subr.bf16.mxu0 0
        %1730 = vmatpush1.bf16.msra.mxu0 %v1696
        %1731 = vmatprep.subr.bf16.mxu0 0
        %1732 = vmatpush1.bf16.msra.mxu0 %v1697
        %1733 = vmatprep.subr.bf16.mxu0 0
        %1734 = vmatpush1.bf16.msra.mxu0 %v1698
        %1735 = vmatprep.subr.bf16.mxu0 0
        %1736 = vmatpush1.bf16.msra.mxu0 0
        %1737 = vmatprep.subr.bf16.mxu0 0
        %1738 = vmatpush1.bf16.msra.mxu0 0
        %1739 = vmatprep.subr.bf16.mxu0 0
        %1740 = vmatpush1.bf16.msra.mxu0 0
        %1741 = vmatprep.subr.bf16.mxu0 0
        %1742 = vmatpush1.bf16.msra.mxu0 0
        %1743 = vmatprep.subr.bf16.mxu0 0
        %1744 = vmatpush1.bf16.msra.mxu0 0
        %1745 = vmatprep.subr.bf16.mxu0 0
        %1746 = vmatpush1.bf16.msra.mxu0 0
        %1747 = vmatprep.subr.bf16.mxu0 0
        %1748 = vmatpush1.bf16.msra.mxu0 0
        %1749 = vmatprep.subr.bf16.mxu0 0
        %1750 = vmatpush1.bf16.msra.mxu0 0
        %1751 = vmatprep.subr.bf16.mxu0 0
        %1752 = vmatpush1.bf16.msra.mxu0 0
        %1753 = vmatprep.subr.bf16.mxu0 0
        %1754 = vmatpush1.bf16.msra.mxu0 0
        %1755 = vmatprep.subr.bf16.mxu0 0
        %1756 = vmatpush1.bf16.msra.mxu0 0
        %1757 = vmatprep.subr.bf16.mxu0 0
        %1758 = vmatpush1.bf16.msra.mxu0 0
        %1759 = vmatprep.mubr.bf16.mxu0 0
        %1760 = vmatmul.mubr.bf16.gmra.mrb[0].mxu0 %v1704
        %v1761 = vpop.f32.mrb[0].mxu0
        %v1762 = vadd.f32 0.0, %v1761
        %v1763 = vpop.f32.mrb[0].mxu0
        %v1764 = vpop.f32.mrb[0].mxu0
        %v1765 = vadd.f32 0.0, %v1764
        %v1766 = vpop.f32.mrb[0].mxu0
        %1767 = vmatprep.mubr.bf16.mxu0 0
        %1768 = vmatmul.mubr.bf16.gmra.mrb[0].mxu0 %v1707
        %v1769 = vpop.f32.mrb[0].mxu0
        %v1770 = vadd.f32 0.0, %v1769
        %v1771 = vpop.f32.mrb[0].mxu0
        %v1772 = vpop.f32.mrb[0].mxu0
        %v1773 = vadd.f32 0.0, %v1772
        %v1774 = vpop.f32.mrb[0].mxu0
        %1775 = vmatprep.mubr.bf16.mxu0 0
        %1776 = vmatmul.mubr.bf16.gmra.mrb[0].mxu0 %v1710
        %v1777 = vpop.f32.mrb[0].mxu0
        %v1778 = vadd.f32 0.0, %v1777
        %v1779 = vpop.f32.mrb[0].mxu0
        %v1780 = vpop.f32.mrb[0].mxu0
        %v1781 = vadd.f32 0.0, %v1780
        %v1782 = vpop.f32.mrb[0].mxu0
        %1783 = vmatprep.mubr.bf16.mxu0 0
        %1784 = vmatmul.mubr.bf16.gmra.mrb[0].mxu0 %v1713
        %v1785 = vpop.f32.mrb[0].mxu0
        %v1786 = vadd.f32 0.0, %v1785
        %v1787 = vpop.f32.mrb[0].mxu0
        %v1788 = vpop.f32.mrb[0].mxu0
        %v1789 = vadd.f32 0.0, %v1788
        %v1790 = vpop.f32.mrb[0].mxu0
        %1791 = vmatprep.mubr.bf16.mxu0 0
        %1792 = vmatmul.mubr.bf16.gmra.mrb[0].mxu0 %v1716
        %v1793 = vpop.f32.mrb[0].mxu0
        %v1794 = vadd.f32 0.0, %v1793
        %v1795 = vpop.f32.mrb[0].mxu0
        %v1796 = vpop.f32.mrb[0].mxu0
        %v1797 = vadd.f32 0.0, %v1796
        %v1798 = vpop.f32.mrb[0].mxu0
        %1799 = vmatprep.mubr.bf16.mxu0 0
        %1800 = vmatmul.mubr.bf16.gmra.mrb[0].mxu0 %v1719
        %v1801 = vpop.f32.mrb[0].mxu0
        %v1802 = vadd.f32 0.0, %v1801
        %v1803 = vpop.f32.mrb[0].mxu0
        %v1804 = vpop.f32.mrb[0].mxu0
        %v1805 = vadd.f32 0.0, %v1804
        %v1806 = vpop.f32.mrb[0].mxu0
        %1807 = vmatprep.mubr.bf16.mxu0 0
        %1808 = vmatmul.mubr.bf16.gmra.mrb[0].mxu0 %v1722
        %v1809 = vpop.f32.mrb[0].mxu0
        %v1810 = vadd.f32 0.0, %v1809
        %v1811 = vpop.f32.mrb[0].mxu0
        %v1812 = vpop.f32.mrb[0].mxu0
        %v1813 = vadd.f32 0.0, %v1812
        %v1814 = vpop.f32.mrb[0].mxu0
        %1815 = vmatprep.mubr.bf16.mxu0 0
        %1816 = vmatmul.mubr.bf16.gmra.mrb[0].mxu0 %v1725
        %v1817 = vpop.f32.mrb[0].mxu0
        %v1818 = vadd.f32 0.0, %v1817
        %v1819 = vpop.f32.mrb[0].mxu0
        %v1820 = vpop.f32.mrb[0].mxu0
        %v1821 = vpop.f32.mrb[0].mxu0
        %1822 = vdwg.mxu0
        %v1823 = vadd.f32 %v1617, %v1762
        %v1824 = vadd.f32 %v1618, %v1765
        %v1825 = vadd.f32 %v1619, %v1770
        %v1826 = vadd.f32 %v1620, %v1773
        %v1827 = vadd.f32 %v1621, %v1778
        %v1828 = vadd.f32 %v1622, %v1781
        %v1829 = vadd.f32 %v1623, %v1786
        %v1830 = vadd.f32 %v1624, %v1789
        %v1831 = vadd.f32 %v1625, %v1794
        %v1832 = vadd.f32 %v1626, %v1797
        %v1833 = vadd.f32 %v1627, %v1802
        %v1834 = vadd.f32 %v1628, %v1805
        %v1835 = vadd.f32 %v1629, %v1810
        %v1836 = vadd.f32 %v1630, %v1813
        %v1837 = vadd.f32 %v1631, %v1818
        %s1838 = scalar_lea.vmem [#allocation2], 4
        %v1839 = vld [vmem:[%s1838] ss:$2 sm:$0xff]
        %s1840 = scalar_lea.vmem [#allocation2], 20
        %v1841 = vld [vmem:[%s1840] ss:$2 sm:$0xff]
        %s1842 = scalar_lea.vmem [#allocation2], 36
        %v1843 = vld [vmem:[%s1842] ss:$2 sm:$0xff]
        %s1844 = scalar_lea.vmem [#allocation2], 52
        %v1845 = vld [vmem:[%s1844] ss:$2 sm:$0xff]
        %s1846 = scalar_lea.vmem [#allocation2], 68
        %v1847 = vld [vmem:[%s1846] ss:$2 sm:$0xff]
        %s1848 = scalar_lea.vmem [#allocation2], 84
        %v1849 = vld [vmem:[%s1848] ss:$2 sm:$0xff]
        %s1850 = scalar_lea.vmem [#allocation2], 100
        %v1851 = vld [vmem:[%s1850] ss:$2 sm:$0xff]
        %s1852 = scalar_lea.vmem [#allocation2], 116
        %v1853 = vld [vmem:[%s1852] ss:$2 sm:$0xff]
        %s1854 = scalar_lea.vmem [#allocation2], 132
        %v1855 = vld [vmem:[%s1854] ss:$2 sm:$0xff]
        %s1856 = scalar_lea.vmem [#allocation2], 148
        %v1857 = vld [vmem:[%s1856] ss:$2 sm:$0xff]
        %s1858 = scalar_lea.vmem [#allocation2], 164
        %v1859 = vld [vmem:[%s1858] ss:$2 sm:$0xff]
        %s1860 = scalar_lea.vmem [#allocation2], 180
        %v1861 = vld [vmem:[%s1860] ss:$2 sm:$0xff]
        %s1862 = scalar_lea.vmem [#allocation2], 196
        %v1863 = vld [vmem:[%s1862] ss:$2 sm:$0xff]
        %s1864 = scalar_lea.vmem [#allocation2], 212
        %v1865 = vld [vmem:[%s1864] ss:$2 sm:$0xff]
        %s1866 = scalar_lea.vmem [#allocation2], 228
        %v1867 = vld [vmem:[%s1866] ss:$2 sm:$0xf]
        %v1868 = vpack.c.bf16 %v1841, %v1839
        %v1869 = vpack.c.bf16 %v1845, %v1843
        %v1870 = vpack.c.bf16 %v1849, %v1847
        %v1871 = vpack.c.bf16 %v1853, %v1851
        %v1872 = vpack.c.bf16 %v1857, %v1855
        %v1873 = vpack.c.bf16 %v1861, %v1859
        %v1874 = vpack.c.bf16 %v1865, %v1863
        %v1875 = vpack.c.bf16 %v1867, %v1867
        %s1876 = scalar_lea.vmem %s3, 128
        %v1877 = vld [vmem:[%s1876] sm:$0xf]
        %v1878 = vld [vmem:[%s1876 + $0x4] sm:$0xf]
        %v1879 = vld [vmem:[%s1876 + $0x8] sm:$0xf]
        %v1880 = vld [vmem:[%s1876 + $0xc] sm:$0xf]
        %v1881 = vld [vmem:[%s1876 + $0x10] sm:$0xf]
        %v1882 = vld [vmem:[%s1876 + $0x14] sm:$0xf]
        %v1883 = vld [vmem:[%s1876 + $0x18] sm:$0xf]
        %v1884 = vld [vmem:[%s1876 + $0x1c] sm:$0xf]
        %v1893 = vunpack.c.l.b16 %v1877
        %v1894 = vunpack.c.l.b16 %v1878
        %v1895 = vunpack.c.l.b16 %v1879
        %v1896 = vunpack.c.l.b16 %v1880
        %v1897 = vunpack.c.l.b16 %v1881
        %v1898 = vunpack.c.l.b16 %v1882
        %v1899 = vunpack.c.l.b16 %v1883
        %v1900 = vunpack.c.l.b16 %v1884
        %v1901 = vpack.c.b16 %v1894, %v1893
        %v1902 = vpack.c.b16 %v1896, %v1895
        %v1903 = vpack.c.b16 %v1898, %v1897
        %v1904 = vpack.c.b16 %v1900, %v1899
        %v1910 = vsel %vm547, %v1868, 0
        %v1913 = vsel %vm547, %v1869, 0
        %v1916 = vsel %vm547, %v1870, 0
        %v1919 = vsel %vm547, %v1871, 0
        %v1922 = vsel %vm547, %v1872, 0
        %v1925 = vsel %vm547, %v1873, 0
        %v1928 = vsel %vm547, %v1874, 0
        %v1931 = vsel %vm547, %v1875, 0
        %1933 = vmatprep.subr.bf16.mxu0 0
        %1934 = vmatpush1.bf16.msra.mxu0 %v1901
        %1935 = vmatprep.subr.bf16.mxu0 0
        %1936 = vmatpush1.bf16.msra.mxu0 %v1902
        %1937 = vmatprep.subr.bf16.mxu0 0
        %1938 = vmatpush1.bf16.msra.mxu0 %v1903
        %1939 = vmatprep.subr.bf16.mxu0 0
        %1940 = vmatpush1.bf16.msra.mxu0 %v1904
        %1941 = vmatprep.subr.bf16.mxu0 0
        %1942 = vmatpush1.bf16.msra.mxu0 0
        %1943 = vmatprep.subr.bf16.mxu0 0
        %1944 = vmatpush1.bf16.msra.mxu0 0
        %1945 = vmatprep.subr.bf16.mxu0 0
        %1946 = vmatpush1.bf16.msra.mxu0 0
        %1947 = vmatprep.subr.bf16.mxu0 0
        %1948 = vmatpush1.bf16.msra.mxu0 0
        %1949 = vmatprep.subr.bf16.mxu0 0
        %1950 = vmatpush1.bf16.msra.mxu0 0
        %1951 = vmatprep.subr.bf16.mxu0 0
        %1952 = vmatpush1.bf16.msra.mxu0 0
        %1953 = vmatprep.subr.bf16.mxu0 0
        %1954 = vmatpush1.bf16.msra.mxu0 0
        %1955 = vmatprep.subr.bf16.mxu0 0
        %1956 = vmatpush1.bf16.msra.mxu0 0
        %1957 = vmatprep.subr.bf16.mxu0 0
        %1958 = vmatpush1.bf16.msra.mxu0 0
        %1959 = vmatprep.subr.bf16.mxu0 0
        %1960 = vmatpush1.bf16.msra.mxu0 0
        %1961 = vmatprep.subr.bf16.mxu0 0
        %1962 = vmatpush1.bf16.msra.mxu0 0
        %1963 = vmatprep.subr.bf16.mxu0 0
        %1964 = vmatpush1.bf16.msra.mxu0 0
        %1965 = vmatprep.mubr.bf16.mxu0 0
        %1966 = vmatmul.mubr.bf16.gmra.mrb[0].mxu0 %v1910
        %v1967 = vpop.f32.mrb[0].mxu0
        %v1968 = vadd.f32 0.0, %v1967
        %v1969 = vpop.f32.mrb[0].mxu0
        %v1970 = vpop.f32.mrb[0].mxu0
        %v1971 = vadd.f32 0.0, %v1970
        %v1972 = vpop.f32.mrb[0].mxu0
        %1973 = vmatprep.mubr.bf16.mxu0 0
        %1974 = vmatmul.mubr.bf16.gmra.mrb[0].mxu0 %v1913
        %v1975 = vpop.f32.mrb[0].mxu0
        %v1976 = vadd.f32 0.0, %v1975
        %v1977 = vpop.f32.mrb[0].mxu0
        %v1978 = vpop.f32.mrb[0].mxu0
        %v1979 = vadd.f32 0.0, %v1978
        %v1980 = vpop.f32.mrb[0].mxu0
        %1981 = vmatprep.mubr.bf16.mxu0 0
        %1982 = vmatmul.mubr.bf16.gmra.mrb[0].mxu0 %v1916
        %v1983 = vpop.f32.mrb[0].mxu0
        %v1984 = vadd.f32 0.0, %v1983
        %v1985 = vpop.f32.mrb[0].mxu0
        %v1986 = vpop.f32.mrb[0].mxu0
        %v1987 = vadd.f32 0.0, %v1986
        %v1988 = vpop.f32.mrb[0].mxu0
        %1989 = vmatprep.mubr.bf16.mxu0 0
        %1990 = vmatmul.mubr.bf16.gmra.mrb[0].mxu0 %v1919
        %v1991 = vpop.f32.mrb[0].mxu0
        %v1992 = vadd.f32 0.0, %v1991
        %v1993 = vpop.f32.mrb[0].mxu0
        %v1994 = vpop.f32.mrb[0].mxu0
        %v1995 = vadd.f32 0.0, %v1994
        %v1996 = vpop.f32.mrb[0].mxu0
        %1997 = vmatprep.mubr.bf16.mxu0 0
        %1998 = vmatmul.mubr.bf16.gmra.mrb[0].mxu0 %v1922
        %v1999 = vpop.f32.mrb[0].mxu0
        %v2000 = vadd.f32 0.0, %v1999
        %v2001 = vpop.f32.mrb[0].mxu0
        %v2002 = vpop.f32.mrb[0].mxu0
        %v2003 = vadd.f32 0.0, %v2002
        %v2004 = vpop.f32.mrb[0].mxu0
        %2005 = vmatprep.mubr.bf16.mxu0 0
        %2006 = vmatmul.mubr.bf16.gmra.mrb[0].mxu0 %v1925
        %v2007 = vpop.f32.mrb[0].mxu0
        %v2008 = vadd.f32 0.0, %v2007
        %v2009 = vpop.f32.mrb[0].mxu0
        %v2010 = vpop.f32.mrb[0].mxu0
        %v2011 = vadd.f32 0.0, %v2010
        %v2012 = vpop.f32.mrb[0].mxu0
        %2013 = vmatprep.mubr.bf16.mxu0 0
        %2014 = vmatmul.mubr.bf16.gmra.mrb[0].mxu0 %v1928
        %v2015 = vpop.f32.mrb[0].mxu0
        %v2016 = vadd.f32 0.0, %v2015
        %v2017 = vpop.f32.mrb[0].mxu0
        %v2018 = vpop.f32.mrb[0].mxu0
        %v2019 = vadd.f32 0.0, %v2018
        %v2020 = vpop.f32.mrb[0].mxu0
        %2021 = vmatprep.mubr.bf16.mxu0 0
        %2022 = vmatmul.mubr.bf16.gmra.mrb[0].mxu0 %v1931
        %v2023 = vpop.f32.mrb[0].mxu0
        %v2024 = vadd.f32 0.0, %v2023
        %v2025 = vpop.f32.mrb[0].mxu0
        %v2026 = vpop.f32.mrb[0].mxu0
        %v2027 = vpop.f32.mrb[0].mxu0
        %2028 = vdwg.mxu0
        %v2029 = vadd.f32 %v1823, %v1968
        %v2030 = vadd.f32 %v1824, %v1971
        %v2031 = vadd.f32 %v1825, %v1976
        %v2032 = vadd.f32 %v1826, %v1979
        %v2033 = vadd.f32 %v1827, %v1984
        %v2034 = vadd.f32 %v1828, %v1987
        %v2035 = vadd.f32 %v1829, %v1992
        %v2036 = vadd.f32 %v1830, %v1995
        %v2037 = vadd.f32 %v1831, %v2000
        %v2038 = vadd.f32 %v1832, %v2003
        %v2039 = vadd.f32 %v1833, %v2008
        %v2040 = vadd.f32 %v1834, %v2011
        %v2041 = vadd.f32 %v1835, %v2016
        %v2042 = vadd.f32 %v1836, %v2019
        %v2043 = vadd.f32 %v1837, %v2024
        %v2044 = vld [vmem:[%s4] sm:$0x1]
        %v2045 = vlaneseq
        %v2046 = vshrl.u32 %v2045, 7
        %v2047 = vsub.s32 0, %v2046
        %v2048 = vrot.slane %v2044, %v2047
        %v2049 = vadd.f32 %v2029, %v2048
        %v2050 = vadd.f32 %v2030, %v2048
        %v2051 = vadd.f32 %v2031, %v2048
        %v2052 = vadd.f32 %v2032, %v2048
        %v2053 = vadd.f32 %v2033, %v2048
        %v2054 = vadd.f32 %v2034, %v2048
        %v2055 = vadd.f32 %v2035, %v2048
        %v2056 = vadd.f32 %v2036, %v2048
        %v2057 = vadd.f32 %v2037, %v2048
        %v2058 = vadd.f32 %v2038, %v2048
        %v2059 = vadd.f32 %v2039, %v2048
        %v2060 = vadd.f32 %v2040, %v2048
        %v2061 = vadd.f32 %v2041, %v2048
        %v2062 = vadd.f32 %v2042, %v2048
        %v2063 = vadd.f32 %v2043, %v2048
        %v2064 = vmax.f32 %v2049, 0.0
        %v2065 = vmax.f32 %v2050, 0.0
        %v2066 = vmax.f32 %v2051, 0.0
        %v2067 = vmax.f32 %v2052, 0.0
        %v2068 = vmax.f32 %v2053, 0.0
        %v2069 = vmax.f32 %v2054, 0.0
        %v2070 = vmax.f32 %v2055, 0.0
        %v2071 = vmax.f32 %v2056, 0.0
        %v2072 = vmax.f32 %v2057, 0.0
        %v2073 = vmax.f32 %v2058, 0.0
        %v2074 = vmax.f32 %v2059, 0.0
        %v2075 = vmax.f32 %v2060, 0.0
        %v2076 = vmax.f32 %v2061, 0.0
        %v2077 = vmax.f32 %v2062, 0.0
        %v2078 = vmax.f32 %v2063, 0.0
        %v2079 = vld [vmem:[%s4 + $0x1] sm:$0x1]
        %v2080 = vlaneseq
        %v2081 = vshrl.u32 %v2080, 7
        %v2082 = vsub.s32 0, %v2081
        %v2083 = vrot.slane %v2079, %v2082
        %v2084 = vmul.f32 %v2064, %v2083
        %v2085 = vmul.f32 %v2065, %v2083
        %v2086 = vmul.f32 %v2066, %v2083
        %v2087 = vmul.f32 %v2067, %v2083
        %v2088 = vmul.f32 %v2068, %v2083
        %v2089 = vmul.f32 %v2069, %v2083
        %v2090 = vmul.f32 %v2070, %v2083
        %v2091 = vmul.f32 %v2071, %v2083
        %v2092 = vmul.f32 %v2072, %v2083
        %v2093 = vmul.f32 %v2073, %v2083
        %v2094 = vmul.f32 %v2074, %v2083
        %v2095 = vmul.f32 %v2075, %v2083
        %v2096 = vmul.f32 %v2076, %v2083
        %v2097 = vmul.f32 %v2077, %v2083
        %v2098 = vmul.f32 %v2078, %v2083
        %v2099 = vld [vmem:[%s4 + $0x2] sm:$0x1]
        %v2100 = vlaneseq
        %v2101 = vshrl.u32 %v2100, 7
        %v2102 = vsub.s32 0, %v2101
        %v2103 = vrot.slane %v2099, %v2102
        %v2104 = vadd.f32 %v2084, %v2103
        %v2105 = vadd.f32 %v2085, %v2103
        %v2106 = vadd.f32 %v2086, %v2103
        %v2107 = vadd.f32 %v2087, %v2103
        %v2108 = vadd.f32 %v2088, %v2103
        %v2109 = vadd.f32 %v2089, %v2103
        %v2110 = vadd.f32 %v2090, %v2103
        %v2111 = vadd.f32 %v2091, %v2103
        %v2112 = vadd.f32 %v2092, %v2103
        %v2113 = vadd.f32 %v2093, %v2103
        %v2114 = vadd.f32 %v2094, %v2103
        %v2115 = vadd.f32 %v2095, %v2103
        %v2116 = vadd.f32 %v2096, %v2103
        %v2117 = vadd.f32 %v2097, %v2103
        %v2118 = vadd.f32 %v2098, %v2103
        %2119 = vst.msk [vmem:[#allocation3 + $0x2] sm:$0xff] %vm547, %v2104
        %2120 = vst.msk [vmem:[#allocation3 + $0xa] sm:$0xff] %vm547, %v2105
        %2121 = vst.msk [vmem:[#allocation3 + $0x12] sm:$0xff] %vm547, %v2106
        %2122 = vst.msk [vmem:[#allocation3 + $0x1a] sm:$0xff] %vm547, %v2107
        %2123 = vst.msk [vmem:[#allocation3 + $0x22] sm:$0xff] %vm547, %v2108
        %2124 = vst.msk [vmem:[#allocation3 + $0x2a] sm:$0xff] %vm547, %v2109
        %2125 = vst.msk [vmem:[#allocation3 + $0x32] sm:$0xff] %vm547, %v2110
        %2126 = vst.msk [vmem:[#allocation3 + $0x3a] sm:$0xff] %vm547, %v2111
        %2127 = vst.msk [vmem:[#allocation3 + $0x42] sm:$0xff] %vm547, %v2112
        %2128 = vst.msk [vmem:[#allocation3 + $0x4a] sm:$0xff] %vm547, %v2113
        %2129 = vst.msk [vmem:[#allocation3 + $0x52] sm:$0xff] %vm547, %v2114
        %2130 = vst.msk [vmem:[#allocation3 + $0x5a] sm:$0xff] %vm547, %v2115
        %2131 = vst.msk [vmem:[#allocation3 + $0x62] sm:$0xff] %vm547, %v2116
        %2132 = vst.msk [vmem:[#allocation3 + $0x6a] sm:$0xff] %vm547, %v2117
        %vm2133 = vcmask 519168
        %2134 = vst.msk [vmem:[#allocation3 + $0x72] sm:$0xf] %vm2133, %v2118
        %v2135 = vld [vmem:[#allocation3] ss:$2 sm:$0xff]
        %s2136 = scalar_lea.vmem [#allocation3], 16
        %v2137 = vld [vmem:[%s2136] ss:$2 sm:$0xff]
        %s2138 = scalar_lea.vmem [#allocation3], 32
        %v2139 = vld [vmem:[%s2138] ss:$2 sm:$0xff]
        %s2140 = scalar_lea.vmem [#allocation3], 48
        %v2141 = vld [vmem:[%s2140] ss:$2 sm:$0xff]
        %s2142 = scalar_lea.vmem [#allocation3], 64
        %v2143 = vld [vmem:[%s2142] ss:$2 sm:$0xff]
        %s2144 = scalar_lea.vmem [#allocation3], 80
        %v2145 = vld [vmem:[%s2144] ss:$2 sm:$0xff]
        %s2146 = scalar_lea.vmem [#allocation3], 96
        %v2147 = vld [vmem:[%s2146] ss:$2 sm:$0xff]
        %s2148 = scalar_lea.vmem [#allocation3], 112
        %v2149 = vld [vmem:[%s2148] ss:$2 sm:$0x3]
        %v2150 = vpack.c.bf16 %v2137, %v2135
        %v2151 = vpack.c.bf16 %v2141, %v2139
        %v2152 = vpack.c.bf16 %v2145, %v2143
        %v2153 = vpack.c.bf16 %v2149, %v2147
        %v2154 = vld [vmem:[%s5] sm:$0xf]
        %v2155 = vld [vmem:[%s5 + $0x4] sm:$0xf]
        %v2156 = vld [vmem:[%s5 + $0x8] sm:$0xf]
        %v2157 = vld [vmem:[%s5 + $0xc] sm:$0xf]
        %v2158 = vld [vmem:[%s5 + $0x10] sm:$0xf]
        %v2159 = vld [vmem:[%s5 + $0x14] sm:$0xf]
        %v2160 = vld [vmem:[%s5 + $0x18] sm:$0xf]
        %v2161 = vld [vmem:[%s5 + $0x1c] sm:$0xf]
        %s2162 = scalar_lea.vmem [#allocation3], 2
        %v2163 = vld [vmem:[%s2162] ss:$2 sm:$0xff]
        %s2164 = scalar_lea.vmem [#allocation3], 18
        %v2165 = vld [vmem:[%s2164] ss:$2 sm:$0xff]
        %s2166 = scalar_lea.vmem [#allocation3], 34
        %v2167 = vld [vmem:[%s2166] ss:$2 sm:$0xff]
        %s2168 = scalar_lea.vmem [#allocation3], 50
        %v2169 = vld [vmem:[%s2168] ss:$2 sm:$0xff]
        %s2170 = scalar_lea.vmem [#allocation3], 66
        %v2171 = vld [vmem:[%s2170] ss:$2 sm:$0xff]
        %s2172 = scalar_lea.vmem [#allocation3], 82
        %v2173 = vld [vmem:[%s2172] ss:$2 sm:$0xff]
        %s2174 = scalar_lea.vmem [#allocation3], 98
        %v2175 = vld [vmem:[%s2174] ss:$2 sm:$0xff]
        %s2176 = scalar_lea.vmem [#allocation3], 114
        %v2177 = vld [vmem:[%s2176] ss:$2 sm:$0x3]
        %v2178 = vpack.c.bf16 %v2165, %v2163
        %v2179 = vpack.c.bf16 %v2169, %v2167
        %v2180 = vpack.c.bf16 %v2173, %v2171
        %v2181 = vpack.c.bf16 %v2177, %v2175
        %s2182 = scalar_lea.vmem %s5, 32
        %v2183 = vld [vmem:[%s2182] sm:$0xf]
        %v2184 = vld [vmem:[%s2182 + $0x4] sm:$0xf]
        %v2185 = vld [vmem:[%s2182 + $0x8] sm:$0xf]
        %v2186 = vld [vmem:[%s2182 + $0xc] sm:$0xf]
        %v2187 = vld [vmem:[%s2182 + $0x10] sm:$0xf]
        %v2188 = vld [vmem:[%s2182 + $0x14] sm:$0xf]
        %v2189 = vld [vmem:[%s2182 + $0x18] sm:$0xf]
        %v2190 = vld [vmem:[%s2182 + $0x1c] sm:$0xf]
        %v2199 = vunpack.c.l.b16 %v2183
        %v2200 = vunpack.c.l.b16 %v2184
        %v2201 = vunpack.c.l.b16 %v2185
        %v2202 = vunpack.c.l.b16 %v2186
        %v2203 = vunpack.c.l.b16 %v2187
        %v2204 = vunpack.c.l.b16 %v2188
        %v2205 = vunpack.c.l.b16 %v2189
        %v2206 = vunpack.c.l.b16 %v2190
        %v2207 = vpack.c.b16 %v2200, %v2199
        %v2208 = vpack.c.b16 %v2202, %v2201
        %v2209 = vpack.c.b16 %v2204, %v2203
        %v2210 = vpack.c.b16 %v2206, %v2205
        %v2216 = vsel %vm547, %v2178, 0
        %v2219 = vsel %vm547, %v2179, 0
        %v2222 = vsel %vm547, %v2180, 0
        %v2225 = vsel %vm547, %v2181, 0
        %2227 = vmatprep.subr.bf16.mxu0 0
        %2228 = vmatpush1.bf16.msra.mxu0 %v2207
        %2229 = vmatprep.subr.bf16.mxu0 0
        %2230 = vmatpush1.bf16.msra.mxu0 %v2208
        %2231 = vmatprep.subr.bf16.mxu0 0
        %2232 = vmatpush1.bf16.msra.mxu0 %v2209
        %2233 = vmatprep.subr.bf16.mxu0 0
        %2234 = vmatpush1.bf16.msra.mxu0 %v2210
        %2235 = vmatprep.subr.bf16.mxu0 0
        %2236 = vmatpush1.bf16.msra.mxu0 0
        %2237 = vmatprep.subr.bf16.mxu0 0
        %2238 = vmatpush1.bf16.msra.mxu0 0
        %2239 = vmatprep.subr.bf16.mxu0 0
        %2240 = vmatpush1.bf16.msra.mxu0 0
        %2241 = vmatprep.subr.bf16.mxu0 0
        %2242 = vmatpush1.bf16.msra.mxu0 0
        %2243 = vmatprep.subr.bf16.mxu0 0
        %2244 = vmatpush1.bf16.msra.mxu0 0
        %2245 = vmatprep.subr.bf16.mxu0 0
        %2246 = vmatpush1.bf16.msra.mxu0 0
        %2247 = vmatprep.subr.bf16.mxu0 0
        %2248 = vmatpush1.bf16.msra.mxu0 0
        %2249 = vmatprep.subr.bf16.mxu0 0
        %2250 = vmatpush1.bf16.msra.mxu0 0
        %2251 = vmatprep.subr.bf16.mxu0 0
        %2252 = vmatpush1.bf16.msra.mxu0 0
        %2253 = vmatprep.subr.bf16.mxu0 0
        %2254 = vmatpush1.bf16.msra.mxu0 0
        %2255 = vmatprep.subr.bf16.mxu0 0
        %2256 = vmatpush1.bf16.msra.mxu0 0
        %2257 = vmatprep.subr.bf16.mxu0 0
        %2258 = vmatpush1.bf16.msra.mxu0 0
        %2259 = vmatprep.mubr.bf16.mxu0 0
        %2260 = vmatmul.mubr.bf16.gmra.mrb[0].mxu0 %v2216
        %v2261 = vpop.f32.mrb[0].mxu0
        %v2262 = vadd.f32 0.0, %v2261
        %v2263 = vpop.f32.mrb[0].mxu0
        %v2264 = vpop.f32.mrb[0].mxu0
        %v2265 = vadd.f32 0.0, %v2264
        %v2266 = vpop.f32.mrb[0].mxu0
        %2267 = vmatprep.mubr.bf16.mxu0 0
        %2268 = vmatmul.mubr.bf16.gmra.mrb[0].mxu0 %v2219
        %v2269 = vpop.f32.mrb[0].mxu0
        %v2270 = vadd.f32 0.0, %v2269
        %v2271 = vpop.f32.mrb[0].mxu0
        %v2272 = vpop.f32.mrb[0].mxu0
        %v2273 = vadd.f32 0.0, %v2272
        %v2274 = vpop.f32.mrb[0].mxu0
        %2275 = vmatprep.mubr.bf16.mxu0 0
        %2276 = vmatmul.mubr.bf16.gmra.mrb[0].mxu0 %v2222
        %v2277 = vpop.f32.mrb[0].mxu0
        %v2278 = vadd.f32 0.0, %v2277
        %v2279 = vpop.f32.mrb[0].mxu0
        %v2280 = vpop.f32.mrb[0].mxu0
        %v2281 = vadd.f32 0.0, %v2280
        %v2282 = vpop.f32.mrb[0].mxu0
        %2283 = vmatprep.mubr.bf16.mxu0 0
        %2284 = vmatmul.mubr.bf16.gmra.mrb[0].mxu0 %v2225
        %v2285 = vpop.f32.mrb[0].mxu0
        %v2286 = vadd.f32 0.0, %v2285
        %v2287 = vpop.f32.mrb[0].mxu0
        %v2288 = vpop.f32.mrb[0].mxu0
        %v2289 = vadd.f32 0.0, %v2288
        %v2290 = vpop.f32.mrb[0].mxu0
        %2291 = vdwg.mxu0
        %v2300 = vunpack.c.l.b16 %v2154
        %v2301 = vunpack.c.l.b16 %v2155
        %v2302 = vunpack.c.l.b16 %v2156
        %v2303 = vunpack.c.l.b16 %v2157
        %v2304 = vunpack.c.l.b16 %v2158
        %v2305 = vunpack.c.l.b16 %v2159
        %v2306 = vunpack.c.l.b16 %v2160
        %v2307 = vunpack.c.l.b16 %v2161
        %v2308 = vpack.c.b16 %v2301, %v2300
        %v2309 = vpack.c.b16 %v2303, %v2302
        %v2310 = vpack.c.b16 %v2305, %v2304
        %v2311 = vpack.c.b16 %v2307, %v2306
        %v2317 = vsel %vm547, %v2150, 0
        %v2320 = vsel %vm547, %v2151, 0
        %v2323 = vsel %vm547, %v2152, 0
        %v2326 = vsel %vm547, %v2153, 0
        %2328 = vmatprep.subr.bf16.mxu0 0
        %2329 = vmatpush1.bf16.msra.mxu0 %v2308
        %2330 = vmatprep.subr.bf16.mxu0 0
        %2331 = vmatpush1.bf16.msra.mxu0 %v2309
        %2332 = vmatprep.subr.bf16.mxu0 0
        %2333 = vmatpush1.bf16.msra.mxu0 %v2310
        %2334 = vmatprep.subr.bf16.mxu0 0
        %2335 = vmatpush1.bf16.msra.mxu0 %v2311
        %2336 = vmatprep.subr.bf16.mxu0 0
        %2337 = vmatpush1.bf16.msra.mxu0 0
        %2338 = vmatprep.subr.bf16.mxu0 0
        %2339 = vmatpush1.bf16.msra.mxu0 0
        %2340 = vmatprep.subr.bf16.mxu0 0
        %2341 = vmatpush1.bf16.msra.mxu0 0
        %2342 = vmatprep.subr.bf16.mxu0 0
        %2343 = vmatpush1.bf16.msra.mxu0 0
        %2344 = vmatprep.subr.bf16.mxu0 0
        %2345 = vmatpush1.bf16.msra.mxu0 0
        %2346 = vmatprep.subr.bf16.mxu0 0
        %2347 = vmatpush1.bf16.msra.mxu0 0
        %2348 = vmatprep.subr.bf16.mxu0 0
        %2349 = vmatpush1.bf16.msra.mxu0 0
        %2350 = vmatprep.subr.bf16.mxu0 0
        %2351 = vmatpush1.bf16.msra.mxu0 0
        %2352 = vmatprep.subr.bf16.mxu0 0
        %2353 = vmatpush1.bf16.msra.mxu0 0
        %2354 = vmatprep.subr.bf16.mxu0 0
        %2355 = vmatpush1.bf16.msra.mxu0 0
        %2356 = vmatprep.subr.bf16.mxu0 0
        %2357 = vmatpush1.bf16.msra.mxu0 0
        %2358 = vmatprep.subr.bf16.mxu0 0
        %2359 = vmatpush1.bf16.msra.mxu0 0
        %2360 = vmatprep.mubr.bf16.mxu0 0
        %2361 = vmatmul.mubr.bf16.gmra.mrb[0].mxu0 %v2317
        %v2362 = vpop.f32.mrb[0].mxu0
        %v2363 = vadd.f32 %v2262, %v2362
        %v2364 = vpop.f32.mrb[0].mxu0
        %v2365 = vpop.f32.mrb[0].mxu0
        %v2366 = vadd.f32 %v2265, %v2365
        %v2367 = vpop.f32.mrb[0].mxu0
        %2368 = vmatprep.mubr.bf16.mxu0 0
        %2369 = vmatmul.mubr.bf16.gmra.mrb[0].mxu0 %v2320
        %v2370 = vpop.f32.mrb[0].mxu0
        %v2371 = vadd.f32 %v2270, %v2370
        %v2372 = vpop.f32.mrb[0].mxu0
        %v2373 = vpop.f32.mrb[0].mxu0
        %v2374 = vadd.f32 %v2273, %v2373
        %v2375 = vpop.f32.mrb[0].mxu0
        %2376 = vmatprep.mubr.bf16.mxu0 0
        %2377 = vmatmul.mubr.bf16.gmra.mrb[0].mxu0 %v2323
        %v2378 = vpop.f32.mrb[0].mxu0
        %v2379 = vadd.f32 %v2278, %v2378
        %v2380 = vpop.f32.mrb[0].mxu0
        %v2381 = vpop.f32.mrb[0].mxu0
        %v2382 = vadd.f32 %v2281, %v2381
        %v2383 = vpop.f32.mrb[0].mxu0
        %2384 = vmatprep.mubr.bf16.mxu0 0
        %2385 = vmatmul.mubr.bf16.gmra.mrb[0].mxu0 %v2326
        %v2386 = vpop.f32.mrb[0].mxu0
        %v2387 = vadd.f32 %v2286, %v2386
        %v2388 = vpop.f32.mrb[0].mxu0
        %v2389 = vpop.f32.mrb[0].mxu0
        %v2390 = vadd.f32 %v2289, %v2389
        %v2391 = vpop.f32.mrb[0].mxu0
        %2392 = vdwg.mxu0
        %s2393 = scalar_lea.vmem [#allocation3], 4
        %v2394 = vld [vmem:[%s2393] ss:$2 sm:$0xff]
        %s2395 = scalar_lea.vmem [#allocation3], 20
        %v2396 = vld [vmem:[%s2395] ss:$2 sm:$0xff]
        %s2397 = scalar_lea.vmem [#allocation3], 36
        %v2398 = vld [vmem:[%s2397] ss:$2 sm:$0xff]
        %s2399 = scalar_lea.vmem [#allocation3], 52
        %v2400 = vld [vmem:[%s2399] ss:$2 sm:$0xff]
        %s2401 = scalar_lea.vmem [#allocation3], 68
        %v2402 = vld [vmem:[%s2401] ss:$2 sm:$0xff]
        %s2403 = scalar_lea.vmem [#allocation3], 84
        %v2404 = vld [vmem:[%s2403] ss:$2 sm:$0xff]
        %s2405 = scalar_lea.vmem [#allocation3], 100
        %v2406 = vld [vmem:[%s2405] ss:$2 sm:$0xff]
        %s2407 = scalar_lea.vmem [#allocation3], 116
        %v2408 = vld [vmem:[%s2407] ss:$2 sm:$0x3]
        %v2409 = vpack.c.bf16 %v2396, %v2394
        %v2410 = vpack.c.bf16 %v2400, %v2398
        %v2411 = vpack.c.bf16 %v2404, %v2402
        %v2412 = vpack.c.bf16 %v2408, %v2406
        %s2413 = scalar_lea.vmem %s5, 64
        %v2414 = vld [vmem:[%s2413] sm:$0xf]
        %v2415 = vld [vmem:[%s2413 + $0x4] sm:$0xf]
        %v2416 = vld [vmem:[%s2413 + $0x8] sm:$0xf]
        %v2417 = vld [vmem:[%s2413 + $0xc] sm:$0xf]
        %v2418 = vld [vmem:[%s2413 + $0x10] sm:$0xf]
        %v2419 = vld [vmem:[%s2413 + $0x14] sm:$0xf]
        %v2420 = vld [vmem:[%s2413 + $0x18] sm:$0xf]
        %v2421 = vld [vmem:[%s2413 + $0x1c] sm:$0xf]
        %v2430 = vunpack.c.l.b16 %v2414
        %v2431 = vunpack.c.l.b16 %v2415
        %v2432 = vunpack.c.l.b16 %v2416
        %v2433 = vunpack.c.l.b16 %v2417
        %v2434 = vunpack.c.l.b16 %v2418
        %v2435 = vunpack.c.l.b16 %v2419
        %v2436 = vunpack.c.l.b16 %v2420
        %v2437 = vunpack.c.l.b16 %v2421
        %v2438 = vpack.c.b16 %v2431, %v2430
        %v2439 = vpack.c.b16 %v2433, %v2432
        %v2440 = vpack.c.b16 %v2435, %v2434
        %v2441 = vpack.c.b16 %v2437, %v2436
        %v2447 = vsel %vm547, %v2409, 0
        %v2450 = vsel %vm547, %v2410, 0
        %v2453 = vsel %vm547, %v2411, 0
        %v2456 = vsel %vm547, %v2412, 0
        %2458 = vmatprep.subr.bf16.mxu0 0
        %2459 = vmatpush1.bf16.msra.mxu0 %v2438
        %2460 = vmatprep.subr.bf16.mxu0 0
        %2461 = vmatpush1.bf16.msra.mxu0 %v2439
        %2462 = vmatprep.subr.bf16.mxu0 0
        %2463 = vmatpush1.bf16.msra.mxu0 %v2440
        %2464 = vmatprep.subr.bf16.mxu0 0
        %2465 = vmatpush1.bf16.msra.mxu0 %v2441
        %2466 = vmatprep.subr.bf16.mxu0 0
        %2467 = vmatpush1.bf16.msra.mxu0 0
        %2468 = vmatprep.subr.bf16.mxu0 0
        %2469 = vmatpush1.bf16.msra.mxu0 0
        %2470 = vmatprep.subr.bf16.mxu0 0
        %2471 = vmatpush1.bf16.msra.mxu0 0
        %2472 = vmatprep.subr.bf16.mxu0 0
        %2473 = vmatpush1.bf16.msra.mxu0 0
        %2474 = vmatprep.subr.bf16.mxu0 0
        %2475 = vmatpush1.bf16.msra.mxu0 0
        %2476 = vmatprep.subr.bf16.mxu0 0
        %2477 = vmatpush1.bf16.msra.mxu0 0
        %2478 = vmatprep.subr.bf16.mxu0 0
        %2479 = vmatpush1.bf16.msra.mxu0 0
        %2480 = vmatprep.subr.bf16.mxu0 0
        %2481 = vmatpush1.bf16.msra.mxu0 0
        %2482 = vmatprep.subr.bf16.mxu0 0
        %2483 = vmatpush1.bf16.msra.mxu0 0
        %2484 = vmatprep.subr.bf16.mxu0 0
        %2485 = vmatpush1.bf16.msra.mxu0 0
        %2486 = vmatprep.subr.bf16.mxu0 0
        %2487 = vmatpush1.bf16.msra.mxu0 0
        %2488 = vmatprep.subr.bf16.mxu0 0
        %2489 = vmatpush1.bf16.msra.mxu0 0
        %2490 = vmatprep.mubr.bf16.mxu0 0
        %2491 = vmatmul.mubr.bf16.gmra.mrb[0].mxu0 %v2447
        %v2492 = vpop.f32.mrb[0].mxu0
        %v2493 = vadd.f32 0.0, %v2492
        %v2494 = vpop.f32.mrb[0].mxu0
        %v2495 = vpop.f32.mrb[0].mxu0
        %v2496 = vadd.f32 0.0, %v2495
        %v2497 = vpop.f32.mrb[0].mxu0
        %2498 = vmatprep.mubr.bf16.mxu0 0
        %2499 = vmatmul.mubr.bf16.gmra.mrb[0].mxu0 %v2450
        %v2500 = vpop.f32.mrb[0].mxu0
        %v2501 = vadd.f32 0.0, %v2500
        %v2502 = vpop.f32.mrb[0].mxu0
        %v2503 = vpop.f32.mrb[0].mxu0
        %v2504 = vadd.f32 0.0, %v2503
        %v2505 = vpop.f32.mrb[0].mxu0
        %2506 = vmatprep.mubr.bf16.mxu0 0
        %2507 = vmatmul.mubr.bf16.gmra.mrb[0].mxu0 %v2453
        %v2508 = vpop.f32.mrb[0].mxu0
        %v2509 = vadd.f32 0.0, %v2508
        %v2510 = vpop.f32.mrb[0].mxu0
        %v2511 = vpop.f32.mrb[0].mxu0
        %v2512 = vadd.f32 0.0, %v2511
        %v2513 = vpop.f32.mrb[0].mxu0
        %2514 = vmatprep.mubr.bf16.mxu0 0
        %2515 = vmatmul.mubr.bf16.gmra.mrb[0].mxu0 %v2456
        %v2516 = vpop.f32.mrb[0].mxu0
        %v2517 = vadd.f32 0.0, %v2516
        %v2518 = vpop.f32.mrb[0].mxu0
        %v2519 = vpop.f32.mrb[0].mxu0
        %v2520 = vadd.f32 0.0, %v2519
        %v2521 = vpop.f32.mrb[0].mxu0
        %2522 = vdwg.mxu0
        %v2523 = vadd.f32 %v2363, %v2493
        %v2524 = vadd.f32 %v2366, %v2496
        %v2525 = vadd.f32 %v2371, %v2501
        %v2526 = vadd.f32 %v2374, %v2504
        %v2527 = vadd.f32 %v2379, %v2509
        %v2528 = vadd.f32 %v2382, %v2512
        %v2529 = vadd.f32 %v2387, %v2517
        %v2530 = vadd.f32 %v2390, %v2520
        %v2531 = vld [vmem:[%s6] sm:$0x1]
        %v2532 = vlaneseq
        %v2533 = vshrl.u32 %v2532, 7
        %v2534 = vsub.s32 0, %v2533
        %v2535 = vrot.slane %v2531, %v2534
        %v2536 = vadd.f32 %v2523, %v2535
        %v2537 = vadd.f32 %v2524, %v2535
        %v2538 = vadd.f32 %v2525, %v2535
        %v2539 = vadd.f32 %v2526, %v2535
        %v2540 = vadd.f32 %v2527, %v2535
        %v2541 = vadd.f32 %v2528, %v2535
        %v2542 = vadd.f32 %v2529, %v2535
        %v2543 = vadd.f32 %v2530, %v2535
        %v2544 = vmax.f32 %v2536, 0.0
        %v2545 = vmax.f32 %v2537, 0.0
        %v2546 = vmax.f32 %v2538, 0.0
        %v2547 = vmax.f32 %v2539, 0.0
        %v2548 = vmax.f32 %v2540, 0.0
        %v2549 = vmax.f32 %v2541, 0.0
        %v2550 = vmax.f32 %v2542, 0.0
        %v2551 = vmax.f32 %v2543, 0.0
        %v2552 = vld [vmem:[%s6 + $0x1] sm:$0x1]
        %v2553 = vlaneseq
        %v2554 = vshrl.u32 %v2553, 7
        %v2555 = vsub.s32 0, %v2554
        %v2556 = vrot.slane %v2552, %v2555
        %v2557 = vmul.f32 %v2544, %v2556
        %v2558 = vmul.f32 %v2545, %v2556
        %v2559 = vmul.f32 %v2546, %v2556
        %v2560 = vmul.f32 %v2547, %v2556
        %v2561 = vmul.f32 %v2548, %v2556
        %v2562 = vmul.f32 %v2549, %v2556
        %v2563 = vmul.f32 %v2550, %v2556
        %v2564 = vmul.f32 %v2551, %v2556
        %v2565 = vld [vmem:[%s6 + $0x2] sm:$0x1]
        %v2566 = vlaneseq
        %v2567 = vshrl.u32 %v2566, 7
        %v2568 = vsub.s32 0, %v2567
        %v2569 = vrot.slane %v2565, %v2568
        %v2570 = vadd.f32 %v2557, %v2569
        %v2571 = vadd.f32 %v2558, %v2569
        %v2572 = vadd.f32 %v2559, %v2569
        %v2573 = vadd.f32 %v2560, %v2569
        %v2574 = vadd.f32 %v2561, %v2569
        %v2575 = vadd.f32 %v2562, %v2569
        %v2576 = vadd.f32 %v2563, %v2569
        %v2577 = vadd.f32 %v2564, %v2569
        %2578 = vst [vmem:[#allocation4 + $0x1] sm:$0xff] %v2570
        %2579 = vst [vmem:[#allocation4 + $0x9] sm:$0xff] %v2571
        %2580 = vst [vmem:[#allocation4 + $0x11] sm:$0xff] %v2572
        %2581 = vst [vmem:[#allocation4 + $0x19] sm:$0xff] %v2573
        %2582 = vst [vmem:[#allocation4 + $0x21] sm:$0xff] %v2574
        %2583 = vst [vmem:[#allocation4 + $0x29] sm:$0xff] %v2575
        %2584 = vst [vmem:[#allocation4 + $0x31] sm:$0xff] %v2576
        %2585 = vst [vmem:[#allocation4 + $0x39] sm:$0x3] %v2577
        %v2586 = vld [vmem:[#allocation4] ss:$2 sm:$0xff]
        %s2587 = scalar_lea.vmem [#allocation4], 16
        %v2588 = vld [vmem:[%s2587] ss:$2 sm:$0xff]
        %s2589 = scalar_lea.vmem [#allocation4], 32
        %v2590 = vld [vmem:[%s2589] ss:$2 sm:$0xff]
        %s2591 = scalar_lea.vmem [#allocation4], 48
        %v2592 = vld [vmem:[%s2591] ss:$2 sm:$0x1f]
        %v2593 = vpack.c.bf16 %v2588, %v2586
        %v2594 = vpack.c.bf16 %v2592, %v2590
        %v2595 = vld [vmem:[%s7] sm:$0xf]
        %v2596 = vld [vmem:[%s7 + $0x4] sm:$0xf]
        %v2597 = vld [vmem:[%s7 + $0x8] sm:$0xf]
        %v2598 = vld [vmem:[%s7 + $0xc] sm:$0xf]
        %v2599 = vld [vmem:[%s7 + $0x10] sm:$0xf]
        %v2600 = vld [vmem:[%s7 + $0x14] sm:$0xf]
        %v2601 = vld [vmem:[%s7 + $0x18] sm:$0xf]
        %v2602 = vld [vmem:[%s7 + $0x1c] sm:$0xf]
        %v2603 = vld [vmem:[%s7 + $0x20] sm:$0xf]
        %v2604 = vld [vmem:[%s7 + $0x24] sm:$0xf]
        %v2605 = vld [vmem:[%s7 + $0x28] sm:$0xf]
        %v2606 = vld [vmem:[%s7 + $0x2c] sm:$0xf]
        %v2607 = vld [vmem:[%s7 + $0x30] sm:$0xf]
        %v2608 = vld [vmem:[%s7 + $0x34] sm:$0xf]
        %v2609 = vld [vmem:[%s7 + $0x38] sm:$0xf]
        %v2610 = vld [vmem:[%s7 + $0x3c] sm:$0xf]
        %s2611 = scalar_lea.vmem [#allocation4], 1
        %v2612 = vld [vmem:[%s2611] ss:$2 sm:$0xff]
        %s2613 = scalar_lea.vmem [#allocation4], 17
        %v2614 = vld [vmem:[%s2613] ss:$2 sm:$0xff]
        %s2615 = scalar_lea.vmem [#allocation4], 33
        %v2616 = vld [vmem:[%s2615] ss:$2 sm:$0xff]
        %s2617 = scalar_lea.vmem [#allocation4], 49
        %v2618 = vld [vmem:[%s2617] ss:$2 sm:$0x1f]
        %v2619 = vpack.c.bf16 %v2614, %v2612
        %v2620 = vpack.c.bf16 %v2618, %v2616
        %s2621 = scalar_lea.vmem %s7, 64
        %v2622 = vld [vmem:[%s2621] sm:$0xf]
        %v2623 = vld [vmem:[%s2621 + $0x4] sm:$0xf]
        %v2624 = vld [vmem:[%s2621 + $0x8] sm:$0xf]
        %v2625 = vld [vmem:[%s2621 + $0xc] sm:$0xf]
        %v2626 = vld [vmem:[%s2621 + $0x10] sm:$0xf]
        %v2627 = vld [vmem:[%s2621 + $0x14] sm:$0xf]
        %v2628 = vld [vmem:[%s2621 + $0x18] sm:$0xf]
        %v2629 = vld [vmem:[%s2621 + $0x1c] sm:$0xf]
        %v2630 = vld [vmem:[%s2621 + $0x20] sm:$0xf]
        %v2631 = vld [vmem:[%s2621 + $0x24] sm:$0xf]
        %v2632 = vld [vmem:[%s2621 + $0x28] sm:$0xf]
        %v2633 = vld [vmem:[%s2621 + $0x2c] sm:$0xf]
        %v2634 = vld [vmem:[%s2621 + $0x30] sm:$0xf]
        %v2635 = vld [vmem:[%s2621 + $0x34] sm:$0xf]
        %v2636 = vld [vmem:[%s2621 + $0x38] sm:$0xf]
        %v2637 = vld [vmem:[%s2621 + $0x3c] sm:$0xf]
        %v2654 = vunpack.c.l.b16 %v2622
        %v2655 = vunpack.c.l.b16 %v2623
        %v2656 = vunpack.c.l.b16 %v2624
        %v2657 = vunpack.c.l.b16 %v2625
        %v2658 = vunpack.c.l.b16 %v2626
        %v2659 = vunpack.c.l.b16 %v2627
        %v2660 = vunpack.c.l.b16 %v2628
        %v2661 = vunpack.c.l.b16 %v2629
        %v2662 = vunpack.c.l.b16 %v2630
        %v2663 = vunpack.c.l.b16 %v2631
        %v2664 = vunpack.c.l.b16 %v2632
        %v2665 = vunpack.c.l.b16 %v2633
        %v2666 = vunpack.c.l.b16 %v2634
        %v2667 = vunpack.c.l.b16 %v2635
        %v2668 = vunpack.c.l.b16 %v2636
        %v2669 = vunpack.c.l.b16 %v2637
        %v2670 = vpack.c.b16 %v2655, %v2654
        %v2671 = vpack.c.b16 %v2657, %v2656
        %v2672 = vpack.c.b16 %v2659, %v2658
        %v2673 = vpack.c.b16 %v2661, %v2660
        %v2674 = vpack.c.b16 %v2663, %v2662
        %v2675 = vpack.c.b16 %v2665, %v2664
        %v2676 = vpack.c.b16 %v2667, %v2666
        %v2677 = vpack.c.b16 %v2669, %v2668
        %2686 = vmatprep.subr.bf16.mxu0 0
        %2687 = vmatpush1.bf16.msra.mxu0 %v2670
        %2688 = vmatprep.subr.bf16.mxu0 0
        %2689 = vmatpush1.bf16.msra.mxu0 %v2671
        %2690 = vmatprep.subr.bf16.mxu0 0
        %2691 = vmatpush1.bf16.msra.mxu0 %v2672
        %2692 = vmatprep.subr.bf16.mxu0 0
        %2693 = vmatpush1.bf16.msra.mxu0 %v2673
        %2694 = vmatprep.subr.bf16.mxu0 0
        %2695 = vmatpush1.bf16.msra.mxu0 %v2674
        %2696 = vmatprep.subr.bf16.mxu0 0
        %2697 = vmatpush1.bf16.msra.mxu0 %v2675
        %2698 = vmatprep.subr.bf16.mxu0 0
        %2699 = vmatpush1.bf16.msra.mxu0 %v2676
        %2700 = vmatprep.subr.bf16.mxu0 0
        %2701 = vmatpush1.bf16.msra.mxu0 %v2677
        %2702 = vmatprep.subr.bf16.mxu0 0
        %2703 = vmatpush1.bf16.msra.mxu0 0
        %2704 = vmatprep.subr.bf16.mxu0 0
        %2705 = vmatpush1.bf16.msra.mxu0 0
        %2706 = vmatprep.subr.bf16.mxu0 0
        %2707 = vmatpush1.bf16.msra.mxu0 0
        %2708 = vmatprep.subr.bf16.mxu0 0
        %2709 = vmatpush1.bf16.msra.mxu0 0
        %2710 = vmatprep.subr.bf16.mxu0 0
        %2711 = vmatpush1.bf16.msra.mxu0 0
        %2712 = vmatprep.subr.bf16.mxu0 0
        %2713 = vmatpush1.bf16.msra.mxu0 0
        %2714 = vmatprep.subr.bf16.mxu0 0
        %2715 = vmatpush1.bf16.msra.mxu0 0
        %2716 = vmatprep.subr.bf16.mxu0 0
        %2717 = vmatpush1.bf16.msra.mxu0 0
        %2718 = vmatprep.mubr.bf16.mxu0 0
        %2719 = vmatmul.mubr.bf16.gmra.mrb[0].mxu0 %v2619
        %v2720 = vpop.f32.mrb[0].mxu0
        %v2721 = vadd.f32 0.0, %v2720
        %v2722 = vpop.f32.mrb[0].mxu0
        %v2723 = vpop.f32.mrb[0].mxu0
        %v2724 = vadd.f32 0.0, %v2723
        %v2725 = vpop.f32.mrb[0].mxu0
        %2726 = vmatprep.mubr.bf16.mxu0 0
        %2727 = vmatmul.mubr.bf16.gmra.mrb[0].mxu0 %v2620
        %v2728 = vpop.f32.mrb[0].mxu0
        %v2729 = vadd.f32 0.0, %v2728
        %v2730 = vpop.f32.mrb[0].mxu0
        %v2731 = vpop.f32.mrb[0].mxu0
        %v2732 = vadd.f32 0.0, %v2731
        %v2733 = vpop.f32.mrb[0].mxu0
        %2734 = vdwg.mxu0
        %v2751 = vunpack.c.l.b16 %v2595
        %v2752 = vunpack.c.l.b16 %v2596
        %v2753 = vunpack.c.l.b16 %v2597
        %v2754 = vunpack.c.l.b16 %v2598
        %v2755 = vunpack.c.l.b16 %v2599
        %v2756 = vunpack.c.l.b16 %v2600
        %v2757 = vunpack.c.l.b16 %v2601
        %v2758 = vunpack.c.l.b16 %v2602
        %v2759 = vunpack.c.l.b16 %v2603
        %v2760 = vunpack.c.l.b16 %v2604
        %v2761 = vunpack.c.l.b16 %v2605
        %v2762 = vunpack.c.l.b16 %v2606
        %v2763 = vunpack.c.l.b16 %v2607
        %v2764 = vunpack.c.l.b16 %v2608
        %v2765 = vunpack.c.l.b16 %v2609
        %v2766 = vunpack.c.l.b16 %v2610
        %v2767 = vpack.c.b16 %v2752, %v2751
        %v2768 = vpack.c.b16 %v2754, %v2753
        %v2769 = vpack.c.b16 %v2756, %v2755
        %v2770 = vpack.c.b16 %v2758, %v2757
        %v2771 = vpack.c.b16 %v2760, %v2759
        %v2772 = vpack.c.b16 %v2762, %v2761
        %v2773 = vpack.c.b16 %v2764, %v2763
        %v2774 = vpack.c.b16 %v2766, %v2765
        %2783 = vmatprep.subr.bf16.mxu0 0
        %2784 = vmatpush1.bf16.msra.mxu0 %v2767
        %2785 = vmatprep.subr.bf16.mxu0 0
        %2786 = vmatpush1.bf16.msra.mxu0 %v2768
        %2787 = vmatprep.subr.bf16.mxu0 0
        %2788 = vmatpush1.bf16.msra.mxu0 %v2769
        %2789 = vmatprep.subr.bf16.mxu0 0
        %2790 = vmatpush1.bf16.msra.mxu0 %v2770
        %2791 = vmatprep.subr.bf16.mxu0 0
        %2792 = vmatpush1.bf16.msra.mxu0 %v2771
        %2793 = vmatprep.subr.bf16.mxu0 0
        %2794 = vmatpush1.bf16.msra.mxu0 %v2772
        %2795 = vmatprep.subr.bf16.mxu0 0
        %2796 = vmatpush1.bf16.msra.mxu0 %v2773
        %2797 = vmatprep.subr.bf16.mxu0 0
        %2798 = vmatpush1.bf16.msra.mxu0 %v2774
        %2799 = vmatprep.subr.bf16.mxu0 0
        %2800 = vmatpush1.bf16.msra.mxu0 0
        %2801 = vmatprep.subr.bf16.mxu0 0
        %2802 = vmatpush1.bf16.msra.mxu0 0
        %2803 = vmatprep.subr.bf16.mxu0 0
        %2804 = vmatpush1.bf16.msra.mxu0 0
        %2805 = vmatprep.subr.bf16.mxu0 0
        %2806 = vmatpush1.bf16.msra.mxu0 0
        %2807 = vmatprep.subr.bf16.mxu0 0
        %2808 = vmatpush1.bf16.msra.mxu0 0
        %2809 = vmatprep.subr.bf16.mxu0 0
        %2810 = vmatpush1.bf16.msra.mxu0 0
        %2811 = vmatprep.subr.bf16.mxu0 0
        %2812 = vmatpush1.bf16.msra.mxu0 0
        %2813 = vmatprep.subr.bf16.mxu0 0
        %2814 = vmatpush1.bf16.msra.mxu0 0
        %2815 = vmatprep.mubr.bf16.mxu0 0
        %2816 = vmatmul.mubr.bf16.gmra.mrb[0].mxu0 %v2593
        %v2817 = vpop.f32.mrb[0].mxu0
        %v2818 = vadd.f32 %v2721, %v2817
        %v2819 = vpop.f32.mrb[0].mxu0
        %v2820 = vpop.f32.mrb[0].mxu0
        %v2821 = vadd.f32 %v2724, %v2820
        %v2822 = vpop.f32.mrb[0].mxu0
        %2823 = vmatprep.mubr.bf16.mxu0 0
        %2824 = vmatmul.mubr.bf16.gmra.mrb[0].mxu0 %v2594
        %v2825 = vpop.f32.mrb[0].mxu0
        %v2826 = vadd.f32 %v2729, %v2825
        %v2827 = vpop.f32.mrb[0].mxu0
        %v2828 = vpop.f32.mrb[0].mxu0
        %v2829 = vadd.f32 %v2732, %v2828
        %v2830 = vpop.f32.mrb[0].mxu0
        %2831 = vdwg.mxu0
        %s2832 = scalar_lea.vmem [#allocation4], 2
        %v2833 = vld [vmem:[%s2832] ss:$2 sm:$0xff]
        %s2834 = scalar_lea.vmem [#allocation4], 18
        %v2835 = vld [vmem:[%s2834] ss:$2 sm:$0xff]
        %s2836 = scalar_lea.vmem [#allocation4], 34
        %v2837 = vld [vmem:[%s2836] ss:$2 sm:$0xff]
        %s2838 = scalar_lea.vmem [#allocation4], 50
        %v2839 = vld [vmem:[%s2838] ss:$2 sm:$0x1f]
        %v2840 = vpack.c.bf16 %v2835, %v2833
        %v2841 = vpack.c.bf16 %v2839, %v2837
        %s2842 = scalar_lea.vmem %s7, 128
        %v2843 = vld [vmem:[%s2842] sm:$0xf]
        %v2844 = vld [vmem:[%s2842 + $0x4] sm:$0xf]
        %v2845 = vld [vmem:[%s2842 + $0x8] sm:$0xf]
        %v2846 = vld [vmem:[%s2842 + $0xc] sm:$0xf]
        %v2847 = vld [vmem:[%s2842 + $0x10] sm:$0xf]
        %v2848 = vld [vmem:[%s2842 + $0x14] sm:$0xf]
        %v2849 = vld [vmem:[%s2842 + $0x18] sm:$0xf]
        %v2850 = vld [vmem:[%s2842 + $0x1c] sm:$0xf]
        %v2851 = vld [vmem:[%s2842 + $0x20] sm:$0xf]
        %v2852 = vld [vmem:[%s2842 + $0x24] sm:$0xf]
        %v2853 = vld [vmem:[%s2842 + $0x28] sm:$0xf]
        %v2854 = vld [vmem:[%s2842 + $0x2c] sm:$0xf]
        %v2855 = vld [vmem:[%s2842 + $0x30] sm:$0xf]
        %v2856 = vld [vmem:[%s2842 + $0x34] sm:$0xf]
        %v2857 = vld [vmem:[%s2842 + $0x38] sm:$0xf]
        %v2858 = vld [vmem:[%s2842 + $0x3c] sm:$0xf]
        %v2875 = vunpack.c.l.b16 %v2843
        %v2876 = vunpack.c.l.b16 %v2844
        %v2877 = vunpack.c.l.b16 %v2845
        %v2878 = vunpack.c.l.b16 %v2846
        %v2879 = vunpack.c.l.b16 %v2847
        %v2880 = vunpack.c.l.b16 %v2848
        %v2881 = vunpack.c.l.b16 %v2849
        %v2882 = vunpack.c.l.b16 %v2850
        %v2883 = vunpack.c.l.b16 %v2851
        %v2884 = vunpack.c.l.b16 %v2852
        %v2885 = vunpack.c.l.b16 %v2853
        %v2886 = vunpack.c.l.b16 %v2854
        %v2887 = vunpack.c.l.b16 %v2855
        %v2888 = vunpack.c.l.b16 %v2856
        %v2889 = vunpack.c.l.b16 %v2857
        %v2890 = vunpack.c.l.b16 %v2858
        %v2891 = vpack.c.b16 %v2876, %v2875
        %v2892 = vpack.c.b16 %v2878, %v2877
        %v2893 = vpack.c.b16 %v2880, %v2879
        %v2894 = vpack.c.b16 %v2882, %v2881
        %v2895 = vpack.c.b16 %v2884, %v2883
        %v2896 = vpack.c.b16 %v2886, %v2885
        %v2897 = vpack.c.b16 %v2888, %v2887
        %v2898 = vpack.c.b16 %v2890, %v2889
        %2907 = vmatprep.subr.bf16.mxu0 0
        %2908 = vmatpush1.bf16.msra.mxu0 %v2891
        %2909 = vmatprep.subr.bf16.mxu0 0
        %2910 = vmatpush1.bf16.msra.mxu0 %v2892
        %2911 = vmatprep.subr.bf16.mxu0 0
        %2912 = vmatpush1.bf16.msra.mxu0 %v2893
        %2913 = vmatprep.subr.bf16.mxu0 0
        %2914 = vmatpush1.bf16.msra.mxu0 %v2894
        %2915 = vmatprep.subr.bf16.mxu0 0
        %2916 = vmatpush1.bf16.msra.mxu0 %v2895
        %2917 = vmatprep.subr.bf16.mxu0 0
        %2918 = vmatpush1.bf16.msra.mxu0 %v2896
        %2919 = vmatprep.subr.bf16.mxu0 0
        %2920 = vmatpush1.bf16.msra.mxu0 %v2897
        %2921 = vmatprep.subr.bf16.mxu0 0
        %2922 = vmatpush1.bf16.msra.mxu0 %v2898
        %2923 = vmatprep.subr.bf16.mxu0 0
        %2924 = vmatpush1.bf16.msra.mxu0 0
        %2925 = vmatprep.subr.bf16.mxu0 0
        %2926 = vmatpush1.bf16.msra.mxu0 0
        %2927 = vmatprep.subr.bf16.mxu0 0
        %2928 = vmatpush1.bf16.msra.mxu0 0
        %2929 = vmatprep.subr.bf16.mxu0 0
        %2930 = vmatpush1.bf16.msra.mxu0 0
        %2931 = vmatprep.subr.bf16.mxu0 0
        %2932 = vmatpush1.bf16.msra.mxu0 0
        %2933 = vmatprep.subr.bf16.mxu0 0
        %2934 = vmatpush1.bf16.msra.mxu0 0
        %2935 = vmatprep.subr.bf16.mxu0 0
        %2936 = vmatpush1.bf16.msra.mxu0 0
        %2937 = vmatprep.subr.bf16.mxu0 0
        %2938 = vmatpush1.bf16.msra.mxu0 0
        %2939 = vmatprep.mubr.bf16.mxu0 0
        %2940 = vmatmul.mubr.bf16.gmra.mrb[0].mxu0 %v2840
        %v2941 = vpop.f32.mrb[0].mxu0
        %v2942 = vadd.f32 0.0, %v2941
        %v2943 = vpop.f32.mrb[0].mxu0
        %v2944 = vpop.f32.mrb[0].mxu0
        %v2945 = vadd.f32 0.0, %v2944
        %v2946 = vpop.f32.mrb[0].mxu0
        %2947 = vmatprep.mubr.bf16.mxu0 0
        %2948 = vmatmul.mubr.bf16.gmra.mrb[0].mxu0 %v2841
        %v2949 = vpop.f32.mrb[0].mxu0
        %v2950 = vadd.f32 0.0, %v2949
        %v2951 = vpop.f32.mrb[0].mxu0
        %v2952 = vpop.f32.mrb[0].mxu0
        %v2953 = vadd.f32 0.0, %v2952
        %v2954 = vpop.f32.mrb[0].mxu0
        %2955 = vdwg.mxu0
        %v2956 = vadd.f32 %v2818, %v2942
        %v2957 = vadd.f32 %v2821, %v2945
        %v2958 = vadd.f32 %v2826, %v2950
        %v2959 = vadd.f32 %v2829, %v2953
        %v2960 = vld [vmem:[%s8] sm:$0x1]
        %v2961 = vlaneseq
        %v2962 = vshrl.u32 %v2961, 7
        %v2963 = vsub.s32 0, %v2962
        %v2964 = vrot.slane %v2960, %v2963
        %v2965 = vadd.f32 %v2956, %v2964
        %v2966 = vadd.f32 %v2957, %v2964
        %v2967 = vadd.f32 %v2958, %v2964
        %v2968 = vadd.f32 %v2959, %v2964
        %v2969 = vmax.f32 %v2965, 0.0
        %v2970 = vmax.f32 %v2966, 0.0
        %v2971 = vmax.f32 %v2967, 0.0
        %v2972 = vmax.f32 %v2968, 0.0
        %v2973 = vld [vmem:[%s8 + $0x1] sm:$0x1]
        %v2974 = vlaneseq
        %v2975 = vshrl.u32 %v2974, 7
        %v2976 = vsub.s32 0, %v2975
        %v2977 = vrot.slane %v2973, %v2976
        %v2978 = vmul.f32 %v2969, %v2977
        %v2979 = vmul.f32 %v2970, %v2977
        %v2980 = vmul.f32 %v2971, %v2977
        %v2981 = vmul.f32 %v2972, %v2977
        %v2982 = vld [vmem:[%s8 + $0x2] sm:$0x1]
        %v2983 = vlaneseq
        %v2984 = vshrl.u32 %v2983, 7
        %v2985 = vsub.s32 0, %v2984
        %v2986 = vrot.slane %v2982, %v2985
        %v2987 = vadd.f32 %v2978, %v2986
        %v2988 = vadd.f32 %v2979, %v2986
        %v2989 = vadd.f32 %v2980, %v2986
        %v2990 = vadd.f32 %v2981, %v2986
        %2991 = vst [vmem:[#allocation5] sm:$0xff] %v2987
        %2992 = vst [vmem:[#allocation5 + $0x8] sm:$0xff] %v2988
        %2993 = vst [vmem:[#allocation5 + $0x10] sm:$0xff] %v2989
        %2994 = vst [vmem:[#allocation5 + $0x18] sm:$0x1f] %v2990
        %v2995 = vld [vmem:[#allocation5] ss:$2 sm:$0xff]
        %s2996 = scalar_lea.vmem [#allocation5], 16
        %v2997 = vld [vmem:[%s2996] ss:$2 sm:$0x3f]
        %v2998 = vpack.c.bf16 %v2997, %v2995
        %v2999 = vld [vmem:[%s9] sm:$0xff]
        %v3000 = vld [vmem:[%s9 + $0x8] sm:$0xff]
        %v3001 = vld [vmem:[%s9 + $0x10] sm:$0xff]
        %v3002 = vld [vmem:[%s9 + $0x18] sm:$0xff]
        %v3003 = vld [vmem:[%s9 + $0x20] sm:$0xff]
        %v3004 = vld [vmem:[%s9 + $0x28] sm:$0xff]
        %v3005 = vld [vmem:[%s9 + $0x30] sm:$0xff]
        %v3006 = vld [vmem:[%s9 + $0x38] sm:$0xff]
        %v3007 = vld [vmem:[%s9 + $0x40] sm:$0xff]
        %v3008 = vld [vmem:[%s9 + $0x48] sm:$0xff]
        %v3009 = vld [vmem:[%s9 + $0x50] sm:$0xff]
        %v3010 = vld [vmem:[%s9 + $0x58] sm:$0xff]
        %v3011 = vld [vmem:[%s9 + $0x60] sm:$0xff]
        %v3012 = vld [vmem:[%s9 + $0x68] sm:$0xff]
        %v3013 = vld [vmem:[%s9 + $0x70] sm:$0xff]
        %v3014 = vld [vmem:[%s9 + $0x78] sm:$0xff]
        %s3015 = scalar_lea.vmem [#allocation5], 1
        %v3016 = vld [vmem:[%s3015] ss:$2 sm:$0xff]
        %s3017 = scalar_lea.vmem [#allocation5], 17
        %v3018 = vld [vmem:[%s3017] ss:$2 sm:$0x3f]
        %v3019 = vpack.c.bf16 %v3018, %v3016
        %s3020 = scalar_lea.vmem %s9, 128
        %v3021 = vld [vmem:[%s3020] sm:$0xff]
        %v3022 = vld [vmem:[%s3020 + $0x8] sm:$0xff]
        %v3023 = vld [vmem:[%s3020 + $0x10] sm:$0xff]
        %v3024 = vld [vmem:[%s3020 + $0x18] sm:$0xff]
        %v3025 = vld [vmem:[%s3020 + $0x20] sm:$0xff]
        %v3026 = vld [vmem:[%s3020 + $0x28] sm:$0xff]
        %v3027 = vld [vmem:[%s3020 + $0x30] sm:$0xff]
        %v3028 = vld [vmem:[%s3020 + $0x38] sm:$0xff]
        %v3029 = vld [vmem:[%s3020 + $0x40] sm:$0xff]
        %v3030 = vld [vmem:[%s3020 + $0x48] sm:$0xff]
        %v3031 = vld [vmem:[%s3020 + $0x50] sm:$0xff]
        %v3032 = vld [vmem:[%s3020 + $0x58] sm:$0xff]
        %v3033 = vld [vmem:[%s3020 + $0x60] sm:$0xff]
        %v3034 = vld [vmem:[%s3020 + $0x68] sm:$0xff]
        %v3035 = vld [vmem:[%s3020 + $0x70] sm:$0xff]
        %v3036 = vld [vmem:[%s3020 + $0x78] sm:$0xff]
        %v3053 = vunpack.c.l.b16 %v3021
        %v3054 = vunpack.c.h.b16 %v3021
        %v3055 = vunpack.c.l.b16 %v3022
        %v3056 = vunpack.c.h.b16 %v3022
        %v3057 = vunpack.c.l.b16 %v3023
        %v3058 = vunpack.c.h.b16 %v3023
        %v3059 = vunpack.c.l.b16 %v3024
        %v3060 = vunpack.c.h.b16 %v3024
        %v3061 = vunpack.c.l.b16 %v3025
        %v3062 = vunpack.c.h.b16 %v3025
        %v3063 = vunpack.c.l.b16 %v3026
        %v3064 = vunpack.c.h.b16 %v3026
        %v3065 = vunpack.c.l.b16 %v3027
        %v3066 = vunpack.c.h.b16 %v3027
        %v3067 = vunpack.c.l.b16 %v3028
        %v3068 = vunpack.c.h.b16 %v3028
        %v3069 = vunpack.c.l.b16 %v3029
        %v3070 = vunpack.c.h.b16 %v3029
        %v3071 = vunpack.c.l.b16 %v3030
        %v3072 = vunpack.c.h.b16 %v3030
        %v3073 = vunpack.c.l.b16 %v3031
        %v3074 = vunpack.c.h.b16 %v3031
        %v3075 = vunpack.c.l.b16 %v3032
        %v3076 = vunpack.c.h.b16 %v3032
        %v3077 = vunpack.c.l.b16 %v3033
        %v3078 = vunpack.c.h.b16 %v3033
        %v3079 = vunpack.c.l.b16 %v3034
        %v3080 = vunpack.c.h.b16 %v3034
        %v3081 = vunpack.c.l.b16 %v3035
        %v3082 = vunpack.c.h.b16 %v3035
        %v3083 = vunpack.c.l.b16 %v3036
        %v3084 = vunpack.c.h.b16 %v3036
        %v3085 = vpack.c.b16 %v3055, %v3053
        %v3086 = vpack.c.b16 %v3056, %v3054
        %v3087 = vpack.c.b16 %v3059, %v3057
        %v3088 = vpack.c.b16 %v3060, %v3058
        %v3089 = vpack.c.b16 %v3063, %v3061
        %v3090 = vpack.c.b16 %v3064, %v3062
        %v3091 = vpack.c.b16 %v3067, %v3065
        %v3092 = vpack.c.b16 %v3068, %v3066
        %v3093 = vpack.c.b16 %v3071, %v3069
        %v3094 = vpack.c.b16 %v3072, %v3070
        %v3095 = vpack.c.b16 %v3075, %v3073
        %v3096 = vpack.c.b16 %v3076, %v3074
        %v3097 = vpack.c.b16 %v3079, %v3077
        %v3098 = vpack.c.b16 %v3080, %v3078
        %v3099 = vpack.c.b16 %v3083, %v3081
        %v3100 = vpack.c.b16 %v3084, %v3082
        %3117 = vmatprep.subr.bf16.mxu0 %v3086
        %3118 = vmatpush1.bf16.msra.mxu0 %v3085
        %3119 = vmatprep.subr.bf16.mxu0 %v3088
        %3120 = vmatpush1.bf16.msra.mxu0 %v3087
        %3121 = vmatprep.subr.bf16.mxu0 %v3090
        %3122 = vmatpush1.bf16.msra.mxu0 %v3089
        %3123 = vmatprep.subr.bf16.mxu0 %v3092
        %3124 = vmatpush1.bf16.msra.mxu0 %v3091
        %3125 = vmatprep.subr.bf16.mxu0 %v3094
        %3126 = vmatpush1.bf16.msra.mxu0 %v3093
        %3127 = vmatprep.subr.bf16.mxu0 %v3096
        %3128 = vmatpush1.bf16.msra.mxu0 %v3095
        %3129 = vmatprep.subr.bf16.mxu0 %v3098
        %3130 = vmatpush1.bf16.msra.mxu0 %v3097
        %3131 = vmatprep.subr.bf16.mxu0 %v3100
        %3132 = vmatpush1.bf16.msra.mxu0 %v3099
        %3133 = vmatprep.subr.bf16.mxu0 0
        %3134 = vmatpush1.bf16.msra.mxu0 0
        %3135 = vmatprep.subr.bf16.mxu0 0
        %3136 = vmatpush1.bf16.msra.mxu0 0
        %3137 = vmatprep.subr.bf16.mxu0 0
        %3138 = vmatpush1.bf16.msra.mxu0 0
        %3139 = vmatprep.subr.bf16.mxu0 0
        %3140 = vmatpush1.bf16.msra.mxu0 0
        %3141 = vmatprep.subr.bf16.mxu0 0
        %3142 = vmatpush1.bf16.msra.mxu0 0
        %3143 = vmatprep.subr.bf16.mxu0 0
        %3144 = vmatpush1.bf16.msra.mxu0 0
        %3145 = vmatprep.subr.bf16.mxu0 0
        %3146 = vmatpush1.bf16.msra.mxu0 0
        %3147 = vmatprep.subr.bf16.mxu0 0
        %3148 = vmatpush1.bf16.msra.mxu0 0
        %3149 = vmatprep.mubr.bf16.mxu0 0
        %3150 = vmatmul.mubr.bf16.gmra.mrb[0].mxu0 %v3019
        %v3151 = vpop.f32.mrb[0].mxu0
        %v3152 = vadd.f32 0.0, %v3151
        %v3153 = vpop.f32.mrb[0].mxu0
        %v3154 = vadd.f32 0.0, %v3153
        %v3155 = vpop.f32.mrb[0].mxu0
        %v3156 = vadd.f32 0.0, %v3155
        %v3157 = vpop.f32.mrb[0].mxu0
        %v3158 = vadd.f32 0.0, %v3157
        %3159 = vdwg.mxu0
        %v3176 = vunpack.c.l.b16 %v2999
        %v3177 = vunpack.c.h.b16 %v2999
        %v3178 = vunpack.c.l.b16 %v3000
        %v3179 = vunpack.c.h.b16 %v3000
        %v3180 = vunpack.c.l.b16 %v3001
        %v3181 = vunpack.c.h.b16 %v3001
        %v3182 = vunpack.c.l.b16 %v3002
        %v3183 = vunpack.c.h.b16 %v3002
        %v3184 = vunpack.c.l.b16 %v3003
        %v3185 = vunpack.c.h.b16 %v3003
        %v3186 = vunpack.c.l.b16 %v3004
        %v3187 = vunpack.c.h.b16 %v3004
        %v3188 = vunpack.c.l.b16 %v3005
        %v3189 = vunpack.c.h.b16 %v3005
        %v3190 = vunpack.c.l.b16 %v3006
        %v3191 = vunpack.c.h.b16 %v3006
        %v3192 = vunpack.c.l.b16 %v3007
        %v3193 = vunpack.c.h.b16 %v3007
        %v3194 = vunpack.c.l.b16 %v3008
        %v3195 = vunpack.c.h.b16 %v3008
        %v3196 = vunpack.c.l.b16 %v3009
        %v3197 = vunpack.c.h.b16 %v3009
        %v3198 = vunpack.c.l.b16 %v3010
        %v3199 = vunpack.c.h.b16 %v3010
        %v3200 = vunpack.c.l.b16 %v3011
        %v3201 = vunpack.c.h.b16 %v3011
        %v3202 = vunpack.c.l.b16 %v3012
        %v3203 = vunpack.c.h.b16 %v3012
        %v3204 = vunpack.c.l.b16 %v3013
        %v3205 = vunpack.c.h.b16 %v3013
        %v3206 = vunpack.c.l.b16 %v3014
        %v3207 = vunpack.c.h.b16 %v3014
        %v3208 = vpack.c.b16 %v3178, %v3176
        %v3209 = vpack.c.b16 %v3179, %v3177
        %v3210 = vpack.c.b16 %v3182, %v3180
        %v3211 = vpack.c.b16 %v3183, %v3181
        %v3212 = vpack.c.b16 %v3186, %v3184
        %v3213 = vpack.c.b16 %v3187, %v3185
        %v3214 = vpack.c.b16 %v3190, %v3188
        %v3215 = vpack.c.b16 %v3191, %v3189
        %v3216 = vpack.c.b16 %v3194, %v3192
        %v3217 = vpack.c.b16 %v3195, %v3193
        %v3218 = vpack.c.b16 %v3198, %v3196
        %v3219 = vpack.c.b16 %v3199, %v3197
        %v3220 = vpack.c.b16 %v3202, %v3200
        %v3221 = vpack.c.b16 %v3203, %v3201
        %v3222 = vpack.c.b16 %v3206, %v3204
        %v3223 = vpack.c.b16 %v3207, %v3205
        %3240 = vmatprep.subr.bf16.mxu0 %v3209
        %3241 = vmatpush1.bf16.msra.mxu0 %v3208
        %3242 = vmatprep.subr.bf16.mxu0 %v3211
        %3243 = vmatpush1.bf16.msra.mxu0 %v3210
        %3244 = vmatprep.subr.bf16.mxu0 %v3213
        %3245 = vmatpush1.bf16.msra.mxu0 %v3212
        %3246 = vmatprep.subr.bf16.mxu0 %v3215
        %3247 = vmatpush1.bf16.msra.mxu0 %v3214
        %3248 = vmatprep.subr.bf16.mxu0 %v3217
        %3249 = vmatpush1.bf16.msra.mxu0 %v3216
        %3250 = vmatprep.subr.bf16.mxu0 %v3219
        %3251 = vmatpush1.bf16.msra.mxu0 %v3218
        %3252 = vmatprep.subr.bf16.mxu0 %v3221
        %3253 = vmatpush1.bf16.msra.mxu0 %v3220
        %3254 = vmatprep.subr.bf16.mxu0 %v3223
        %3255 = vmatpush1.bf16.msra.mxu0 %v3222
        %3256 = vmatprep.subr.bf16.mxu0 0
        %3257 = vmatpush1.bf16.msra.mxu0 0
        %3258 = vmatprep.subr.bf16.mxu0 0
        %3259 = vmatpush1.bf16.msra.mxu0 0
        %3260 = vmatprep.subr.bf16.mxu0 0
        %3261 = vmatpush1.bf16.msra.mxu0 0
        %3262 = vmatprep.subr.bf16.mxu0 0
        %3263 = vmatpush1.bf16.msra.mxu0 0
        %3264 = vmatprep.subr.bf16.mxu0 0
        %3265 = vmatpush1.bf16.msra.mxu0 0
        %3266 = vmatprep.subr.bf16.mxu0 0
        %3267 = vmatpush1.bf16.msra.mxu0 0
        %3268 = vmatprep.subr.bf16.mxu0 0
        %3269 = vmatpush1.bf16.msra.mxu0 0
        %3270 = vmatprep.subr.bf16.mxu0 0
        %3271 = vmatpush1.bf16.msra.mxu0 0
        %3272 = vmatprep.mubr.bf16.mxu0 0
        %3273 = vmatmul.mubr.bf16.gmra.mrb[0].mxu0 %v2998
        %v3274 = vpop.f32.mrb[0].mxu0
        %v3275 = vadd.f32 %v3152, %v3274
        %v3276 = vpop.f32.mrb[0].mxu0
        %v3277 = vadd.f32 %v3154, %v3276
        %v3278 = vpop.f32.mrb[0].mxu0
        %v3279 = vadd.f32 %v3156, %v3278
        %v3280 = vpop.f32.mrb[0].mxu0
        %v3281 = vadd.f32 %v3158, %v3280
        %3282 = vdwg.mxu0
        %s3283 = scalar_lea.vmem [#allocation5], 2
        %v3284 = vld [vmem:[%s3283] ss:$2 sm:$0xff]
        %s3285 = scalar_lea.vmem [#allocation5], 18
        %v3286 = vld [vmem:[%s3285] ss:$2 sm:$0x3f]
        %v3287 = vpack.c.bf16 %v3286, %v3284
        %s3288 = scalar_lea.vmem %s9, 256
        %v3289 = vld [vmem:[%s3288] sm:$0xff]
        %v3290 = vld [vmem:[%s3288 + $0x8] sm:$0xff]
        %v3291 = vld [vmem:[%s3288 + $0x10] sm:$0xff]
        %v3292 = vld [vmem:[%s3288 + $0x18] sm:$0xff]
        %v3293 = vld [vmem:[%s3288 + $0x20] sm:$0xff]
        %v3294 = vld [vmem:[%s3288 + $0x28] sm:$0xff]
        %v3295 = vld [vmem:[%s3288 + $0x30] sm:$0xff]
        %v3296 = vld [vmem:[%s3288 + $0x38] sm:$0xff]
        %v3297 = vld [vmem:[%s3288 + $0x40] sm:$0xff]
        %v3298 = vld [vmem:[%s3288 + $0x48] sm:$0xff]
        %v3299 = vld [vmem:[%s3288 + $0x50] sm:$0xff]
        %v3300 = vld [vmem:[%s3288 + $0x58] sm:$0xff]
        %v3301 = vld [vmem:[%s3288 + $0x60] sm:$0xff]
        %v3302 = vld [vmem:[%s3288 + $0x68] sm:$0xff]
        %v3303 = vld [vmem:[%s3288 + $0x70] sm:$0xff]
        %v3304 = vld [vmem:[%s3288 + $0x78] sm:$0xff]
        %v3321 = vunpack.c.l.b16 %v3289
        %v3322 = vunpack.c.h.b16 %v3289
        %v3323 = vunpack.c.l.b16 %v3290
        %v3324 = vunpack.c.h.b16 %v3290
        %v3325 = vunpack.c.l.b16 %v3291
        %v3326 = vunpack.c.h.b16 %v3291
        %v3327 = vunpack.c.l.b16 %v3292
        %v3328 = vunpack.c.h.b16 %v3292
        %v3329 = vunpack.c.l.b16 %v3293
        %v3330 = vunpack.c.h.b16 %v3293
        %v3331 = vunpack.c.l.b16 %v3294
        %v3332 = vunpack.c.h.b16 %v3294
        %v3333 = vunpack.c.l.b16 %v3295
        %v3334 = vunpack.c.h.b16 %v3295
        %v3335 = vunpack.c.l.b16 %v3296
        %v3336 = vunpack.c.h.b16 %v3296
        %v3337 = vunpack.c.l.b16 %v3297
        %v3338 = vunpack.c.h.b16 %v3297
        %v3339 = vunpack.c.l.b16 %v3298
        %v3340 = vunpack.c.h.b16 %v3298
        %v3341 = vunpack.c.l.b16 %v3299
        %v3342 = vunpack.c.h.b16 %v3299
        %v3343 = vunpack.c.l.b16 %v3300
        %v3344 = vunpack.c.h.b16 %v3300
        %v3345 = vunpack.c.l.b16 %v3301
        %v3346 = vunpack.c.h.b16 %v3301
        %v3347 = vunpack.c.l.b16 %v3302
        %v3348 = vunpack.c.h.b16 %v3302
        %v3349 = vunpack.c.l.b16 %v3303
        %v3350 = vunpack.c.h.b16 %v3303
        %v3351 = vunpack.c.l.b16 %v3304
        %v3352 = vunpack.c.h.b16 %v3304
        %v3353 = vpack.c.b16 %v3323, %v3321
        %v3354 = vpack.c.b16 %v3324, %v3322
        %v3355 = vpack.c.b16 %v3327, %v3325
        %v3356 = vpack.c.b16 %v3328, %v3326
        %v3357 = vpack.c.b16 %v3331, %v3329
        %v3358 = vpack.c.b16 %v3332, %v3330
        %v3359 = vpack.c.b16 %v3335, %v3333
        %v3360 = vpack.c.b16 %v3336, %v3334
        %v3361 = vpack.c.b16 %v3339, %v3337
        %v3362 = vpack.c.b16 %v3340, %v3338
        %v3363 = vpack.c.b16 %v3343, %v3341
        %v3364 = vpack.c.b16 %v3344, %v3342
        %v3365 = vpack.c.b16 %v3347, %v3345
        %v3366 = vpack.c.b16 %v3348, %v3346
        %v3367 = vpack.c.b16 %v3351, %v3349
        %v3368 = vpack.c.b16 %v3352, %v3350
        %3385 = vmatprep.subr.bf16.mxu0 %v3354
        %3386 = vmatpush1.bf16.msra.mxu0 %v3353
        %3387 = vmatprep.subr.bf16.mxu0 %v3356
        %3388 = vmatpush1.bf16.msra.mxu0 %v3355
        %3389 = vmatprep.subr.bf16.mxu0 %v3358
        %3390 = vmatpush1.bf16.msra.mxu0 %v3357
        %3391 = vmatprep.subr.bf16.mxu0 %v3360
        %3392 = vmatpush1.bf16.msra.mxu0 %v3359
        %3393 = vmatprep.subr.bf16.mxu0 %v3362
        %3394 = vmatpush1.bf16.msra.mxu0 %v3361
        %3395 = vmatprep.subr.bf16.mxu0 %v3364
        %3396 = vmatpush1.bf16.msra.mxu0 %v3363
        %3397 = vmatprep.subr.bf16.mxu0 %v3366
        %3398 = vmatpush1.bf16.msra.mxu0 %v3365
        %3399 = vmatprep.subr.bf16.mxu0 %v3368
        %3400 = vmatpush1.bf16.msra.mxu0 %v3367
        %3401 = vmatprep.subr.bf16.mxu0 0
        %3402 = vmatpush1.bf16.msra.mxu0 0
        %3403 = vmatprep.subr.bf16.mxu0 0
        %3404 = vmatpush1.bf16.msra.mxu0 0
        %3405 = vmatprep.subr.bf16.mxu0 0
        %3406 = vmatpush1.bf16.msra.mxu0 0
        %3407 = vmatprep.subr.bf16.mxu0 0
        %3408 = vmatpush1.bf16.msra.mxu0 0
        %3409 = vmatprep.subr.bf16.mxu0 0
        %3410 = vmatpush1.bf16.msra.mxu0 0
        %3411 = vmatprep.subr.bf16.mxu0 0
        %3412 = vmatpush1.bf16.msra.mxu0 0
        %3413 = vmatprep.subr.bf16.mxu0 0
        %3414 = vmatpush1.bf16.msra.mxu0 0
        %3415 = vmatprep.subr.bf16.mxu0 0
        %3416 = vmatpush1.bf16.msra.mxu0 0
        %3417 = vmatprep.mubr.bf16.mxu0 0
        %3418 = vmatmul.mubr.bf16.gmra.mrb[0].mxu0 %v3287
        %v3419 = vpop.f32.mrb[0].mxu0
        %v3420 = vadd.f32 0.0, %v3419
        %v3421 = vpop.f32.mrb[0].mxu0
        %v3422 = vadd.f32 0.0, %v3421
        %v3423 = vpop.f32.mrb[0].mxu0
        %v3424 = vadd.f32 0.0, %v3423
        %v3425 = vpop.f32.mrb[0].mxu0
        %v3426 = vadd.f32 0.0, %v3425
        %3427 = vdwg.mxu0
        %v3428 = vadd.f32 %v3275, %v3420
        %v3429 = vadd.f32 %v3277, %v3422
        %v3430 = vadd.f32 %v3279, %v3424
        %v3431 = vadd.f32 %v3281, %v3426
        %v3432 = vld [vmem:[%s10] ss:$4 sm:$0x3]
        %v3434 = vlaneseq
        %v3435 = vshrl.u32 %v3434, 7
        %v3436 = vsub.s32 0, %v3435
        %v3437 = vrot.slane %v3432, %v3436
        %v3438 = vlaneseq
        %v3439 = vshrl.u32 %v3438, 7
        %v3440 = vsub.s32 1, %v3439
        %v3441 = vrot.slane %v3432, %v3440
        %v3444 = vadd.f32 %v3428, %v3437
        %v3445 = vadd.f32 %v3429, %v3441
        %v3446 = vadd.f32 %v3430, %v3437
        %v3447 = vadd.f32 %v3431, %v3441
        %v3448 = vmax.f32 %v3444, 0.0
        %v3449 = vmax.f32 %v3445, 0.0
        %v3450 = vmax.f32 %v3446, 0.0
        %v3451 = vmax.f32 %v3447, 0.0
        %s3452 = scalar_lea.vmem %s10, 1
        %v3453 = vld [vmem:[%s3452] ss:$4 sm:$0x3]
        %v3455 = vlaneseq
        %v3456 = vshrl.u32 %v3455, 7
        %v3457 = vsub.s32 0, %v3456
        %v3458 = vrot.slane %v3453, %v3457
        %v3459 = vlaneseq
        %v3460 = vshrl.u32 %v3459, 7
        %v3461 = vsub.s32 1, %v3460
        %v3462 = vrot.slane %v3453, %v3461
        %v3465 = vmul.f32 %v3448, %v3458
        %v3466 = vmul.f32 %v3449, %v3462
        %v3467 = vmul.f32 %v3450, %v3458
        %v3468 = vmul.f32 %v3451, %v3462
        %s3469 = scalar_lea.vmem %s10, 2
        %v3470 = vld [vmem:[%s3469] ss:$4 sm:$0x3]
        %v3472 = vlaneseq
        %v3473 = vshrl.u32 %v3472, 7
        %v3474 = vsub.s32 0, %v3473
        %v3475 = vrot.slane %v3470, %v3474
        %v3476 = vlaneseq
        %v3477 = vshrl.u32 %v3476, 7
        %v3478 = vsub.s32 1, %v3477
        %v3479 = vrot.slane %v3470, %v3478
        %v3482 = vadd.f32 %v3465, %v3475
        %v3483 = vadd.f32 %v3466, %v3479
        %v3484 = vadd.f32 %v3467, %v3475
        %v3485 = vadd.f32 %v3468, %v3479
        %v3486 = vpack.c.bf16 %v3484, %v3482
        %v3487 = vpack.c.bf16 %v3485, %v3483
        %v3488 = vld [vmem:[%s11] sm:$0xff]
        %v3489 = vld [vmem:[%s11 + $0x8] sm:$0xf]
        %v3490 = vld [vmem:[%s11 + $0xc] sm:$0xff]
        %v3491 = vld [vmem:[%s11 + $0x14] sm:$0xf]
        %v3492 = vld [vmem:[%s11 + $0x18] sm:$0xff]
        %v3493 = vld [vmem:[%s11 + $0x20] sm:$0xf]
        %v3494 = vld [vmem:[%s11 + $0x24] sm:$0xff]
        %v3495 = vld [vmem:[%s11 + $0x2c] sm:$0xf]
        %v3496 = vld [vmem:[%s11 + $0x30] sm:$0xff]
        %v3497 = vld [vmem:[%s11 + $0x38] sm:$0xf]
        %v3498 = vld [vmem:[%s11 + $0x3c] sm:$0xff]
        %v3499 = vld [vmem:[%s11 + $0x44] sm:$0xf]
        %v3500 = vld [vmem:[%s11 + $0x48] sm:$0xff]
        %v3501 = vld [vmem:[%s11 + $0x50] sm:$0xf]
        %v3502 = vld [vmem:[%s11 + $0x54] sm:$0xff]
        %v3503 = vld [vmem:[%s11 + $0x5c] sm:$0xf]
        %v3504 = vld [vmem:[%s11 + $0x60] sm:$0xff]
        %v3505 = vld [vmem:[%s11 + $0x68] sm:$0xf]
        %v3506 = vld [vmem:[%s11 + $0x6c] sm:$0xff]
        %v3507 = vld [vmem:[%s11 + $0x74] sm:$0xf]
        %v3508 = vld [vmem:[%s11 + $0x78] sm:$0xff]
        %v3509 = vld [vmem:[%s11 + $0x80] sm:$0xf]
        %v3510 = vld [vmem:[%s11 + $0x84] sm:$0xff]
        %v3511 = vld [vmem:[%s11 + $0x8c] sm:$0xf]
        %v3512 = vld [vmem:[%s11 + $0x90] sm:$0xff]
        %v3513 = vld [vmem:[%s11 + $0x98] sm:$0xf]
        %v3514 = vld [vmem:[%s11 + $0x9c] sm:$0xff]
        %v3515 = vld [vmem:[%s11 + $0xa4] sm:$0xf]
        %v3516 = vld [vmem:[%s11 + $0xa8] sm:$0xff]
        %v3517 = vld [vmem:[%s11 + $0xb0] sm:$0xf]
        %v3518 = vld [vmem:[%s11 + $0xb4] sm:$0xff]
        %v3519 = vld [vmem:[%s11 + $0xbc] sm:$0xf]
        %v3520 = vld [vmem:[%s11 + $0xc0] sm:$0xff]
        %v3521 = vld [vmem:[%s11 + $0xc8] sm:$0xf]
        %v3522 = vld [vmem:[%s11 + $0xcc] sm:$0xff]
        %v3523 = vld [vmem:[%s11 + $0xd4] sm:$0xf]
        %v3524 = vld [vmem:[%s11 + $0xd8] sm:$0xff]
        %v3525 = vld [vmem:[%s11 + $0xe0] sm:$0xf]
        %v3526 = vld [vmem:[%s11 + $0xe4] sm:$0xff]
        %v3527 = vld [vmem:[%s11 + $0xec] sm:$0xf]
        %v3528 = vld [vmem:[%s11 + $0xf0] sm:$0xff]
        %v3529 = vld [vmem:[%s11 + $0xf8] sm:$0xf]
        %v3530 = vld [vmem:[%s11 + $0xfc] sm:$0xff]
        %v3531 = vld [vmem:[%s11 + $0x104] sm:$0xf]
        %v3532 = vld [vmem:[%s11 + $0x108] sm:$0xff]
        %v3533 = vld [vmem:[%s11 + $0x110] sm:$0xf]
        %v3534 = vld [vmem:[%s11 + $0x114] sm:$0xff]
        %v3535 = vld [vmem:[%s11 + $0x11c] sm:$0xf]
        %v3536 = vld [vmem:[%s11 + $0x120] sm:$0xff]
        %v3537 = vld [vmem:[%s11 + $0x128] sm:$0xf]
        %v3538 = vld [vmem:[%s11 + $0x12c] sm:$0xff]
        %v3539 = vld [vmem:[%s11 + $0x134] sm:$0xf]
        %v3540 = vld [vmem:[%s11 + $0x138] sm:$0xff]
        %v3541 = vld [vmem:[%s11 + $0x140] sm:$0xf]
        %v3542 = vld [vmem:[%s11 + $0x144] sm:$0xff]
        %v3543 = vld [vmem:[%s11 + $0x14c] sm:$0xf]
        %v3544 = vld [vmem:[%s11 + $0x150] sm:$0xff]
        %v3545 = vld [vmem:[%s11 + $0x158] sm:$0xf]
        %v3546 = vld [vmem:[%s11 + $0x15c] sm:$0xff]
        %v3547 = vld [vmem:[%s11 + $0x164] sm:$0xf]
        %v3548 = vld [vmem:[%s11 + $0x168] sm:$0xff]
        %v3549 = vld [vmem:[%s11 + $0x170] sm:$0xf]
        %v3550 = vld [vmem:[%s11 + $0x174] sm:$0xff]
        %v3551 = vld [vmem:[%s11 + $0x17c] sm:$0xf]
        %s3552 = scalar_lea.vmem %s11, 384
        %v3553 = vld [vmem:[%s3552] sm:$0xff]
        %v3554 = vld [vmem:[%s3552 + $0x8] sm:$0xf]
        %v3555 = vld [vmem:[%s3552 + $0xc] sm:$0xff]
        %v3556 = vld [vmem:[%s3552 + $0x14] sm:$0xf]
        %v3557 = vld [vmem:[%s3552 + $0x18] sm:$0xff]
        %v3558 = vld [vmem:[%s3552 + $0x20] sm:$0xf]
        %v3559 = vld [vmem:[%s3552 + $0x24] sm:$0xff]
        %v3560 = vld [vmem:[%s3552 + $0x2c] sm:$0xf]
        %v3561 = vld [vmem:[%s3552 + $0x30] sm:$0xff]
        %v3562 = vld [vmem:[%s3552 + $0x38] sm:$0xf]
        %v3563 = vld [vmem:[%s3552 + $0x3c] sm:$0xff]
        %v3564 = vld [vmem:[%s3552 + $0x44] sm:$0xf]
        %v3565 = vld [vmem:[%s3552 + $0x48] sm:$0xff]
        %v3566 = vld [vmem:[%s3552 + $0x50] sm:$0xf]
        %v3567 = vld [vmem:[%s3552 + $0x54] sm:$0xff]
        %v3568 = vld [vmem:[%s3552 + $0x5c] sm:$0xf]
        %v3569 = vld [vmem:[%s3552 + $0x60] sm:$0xff]
        %v3570 = vld [vmem:[%s3552 + $0x68] sm:$0xf]
        %v3571 = vld [vmem:[%s3552 + $0x6c] sm:$0xff]
        %v3572 = vld [vmem:[%s3552 + $0x74] sm:$0xf]
        %v3573 = vld [vmem:[%s3552 + $0x78] sm:$0xff]
        %v3574 = vld [vmem:[%s3552 + $0x80] sm:$0xf]
        %v3575 = vld [vmem:[%s3552 + $0x84] sm:$0xff]
        %v3576 = vld [vmem:[%s3552 + $0x8c] sm:$0xf]
        %v3577 = vld [vmem:[%s3552 + $0x90] sm:$0xff]
        %v3578 = vld [vmem:[%s3552 + $0x98] sm:$0xf]
        %v3579 = vld [vmem:[%s3552 + $0x9c] sm:$0xff]
        %v3580 = vld [vmem:[%s3552 + $0xa4] sm:$0xf]
        %v3581 = vld [vmem:[%s3552 + $0xa8] sm:$0xff]
        %v3582 = vld [vmem:[%s3552 + $0xb0] sm:$0xf]
        %v3583 = vld [vmem:[%s3552 + $0xb4] sm:$0xff]
        %v3584 = vld [vmem:[%s3552 + $0xbc] sm:$0xf]
        %v3585 = vld [vmem:[%s3552 + $0xc0] sm:$0xff]
        %v3586 = vld [vmem:[%s3552 + $0xc8] sm:$0xf]
        %v3587 = vld [vmem:[%s3552 + $0xcc] sm:$0xff]
        %v3588 = vld [vmem:[%s3552 + $0xd4] sm:$0xf]
        %v3589 = vld [vmem:[%s3552 + $0xd8] sm:$0xff]
        %v3590 = vld [vmem:[%s3552 + $0xe0] sm:$0xf]
        %v3591 = vld [vmem:[%s3552 + $0xe4] sm:$0xff]
        %v3592 = vld [vmem:[%s3552 + $0xec] sm:$0xf]
        %v3593 = vld [vmem:[%s3552 + $0xf0] sm:$0xff]
        %v3594 = vld [vmem:[%s3552 + $0xf8] sm:$0xf]
        %v3595 = vld [vmem:[%s3552 + $0xfc] sm:$0xff]
        %v3596 = vld [vmem:[%s3552 + $0x104] sm:$0xf]
        %v3597 = vld [vmem:[%s3552 + $0x108] sm:$0xff]
        %v3598 = vld [vmem:[%s3552 + $0x110] sm:$0xf]
        %v3599 = vld [vmem:[%s3552 + $0x114] sm:$0xff]
        %v3600 = vld [vmem:[%s3552 + $0x11c] sm:$0xf]
        %v3601 = vld [vmem:[%s3552 + $0x120] sm:$0xff]
        %v3602 = vld [vmem:[%s3552 + $0x128] sm:$0xf]
        %v3603 = vld [vmem:[%s3552 + $0x12c] sm:$0xff]
        %v3604 = vld [vmem:[%s3552 + $0x134] sm:$0xf]
        %v3605 = vld [vmem:[%s3552 + $0x138] sm:$0xff]
        %v3606 = vld [vmem:[%s3552 + $0x140] sm:$0xf]
        %v3607 = vld [vmem:[%s3552 + $0x144] sm:$0xff]
        %v3608 = vld [vmem:[%s3552 + $0x14c] sm:$0xf]
        %v3609 = vld [vmem:[%s3552 + $0x150] sm:$0xff]
        %v3610 = vld [vmem:[%s3552 + $0x158] sm:$0xf]
        %v3611 = vld [vmem:[%s3552 + $0x15c] sm:$0xff]
        %v3612 = vld [vmem:[%s3552 + $0x164] sm:$0xf]
        %v3613 = vld [vmem:[%s3552 + $0x168] sm:$0xff]
        %v3614 = vld [vmem:[%s3552 + $0x170] sm:$0xf]
        %v3615 = vld [vmem:[%s3552 + $0x174] sm:$0xff]
        %v3616 = vld [vmem:[%s3552 + $0x17c] sm:$0xf]
        %v3618 = vshrl.u32 %v3486, 16
        %v3621 = vshrl.u32 %v3487, 16
        %v3689 = vunpack.c.l.b16 %v3553
        %v3690 = vunpack.c.h.b16 %v3553
        %v3691 = vunpack.c.l.b16 %v3554
        %v3692 = vunpack.c.l.b16 %v3555
        %v3693 = vunpack.c.h.b16 %v3555
        %v3694 = vunpack.c.l.b16 %v3556
        %v3695 = vunpack.c.l.b16 %v3557
        %v3696 = vunpack.c.h.b16 %v3557
        %v3697 = vunpack.c.l.b16 %v3558
        %v3698 = vunpack.c.l.b16 %v3559
        %v3699 = vunpack.c.h.b16 %v3559
        %v3700 = vunpack.c.l.b16 %v3560
        %v3701 = vunpack.c.l.b16 %v3561
        %v3702 = vunpack.c.h.b16 %v3561
        %v3703 = vunpack.c.l.b16 %v3562
        %v3704 = vunpack.c.l.b16 %v3563
        %v3705 = vunpack.c.h.b16 %v3563
        %v3706 = vunpack.c.l.b16 %v3564
        %v3707 = vunpack.c.l.b16 %v3565
        %v3708 = vunpack.c.h.b16 %v3565
        %v3709 = vunpack.c.l.b16 %v3566
        %v3710 = vunpack.c.l.b16 %v3567
        %v3711 = vunpack.c.h.b16 %v3567
        %v3712 = vunpack.c.l.b16 %v3568
        %v3713 = vunpack.c.l.b16 %v3569
        %v3714 = vunpack.c.h.b16 %v3569
        %v3715 = vunpack.c.l.b16 %v3570
        %v3716 = vunpack.c.l.b16 %v3571
        %v3717 = vunpack.c.h.b16 %v3571
        %v3718 = vunpack.c.l.b16 %v3572
        %v3719 = vunpack.c.l.b16 %v3573
        %v3720 = vunpack.c.h.b16 %v3573
        %v3721 = vunpack.c.l.b16 %v3574
        %v3722 = vunpack.c.l.b16 %v3575
        %v3723 = vunpack.c.h.b16 %v3575
        %v3724 = vunpack.c.l.b16 %v3576
        %v3725 = vunpack.c.l.b16 %v3577
        %v3726 = vunpack.c.h.b16 %v3577
        %v3727 = vunpack.c.l.b16 %v3578
        %v3728 = vunpack.c.l.b16 %v3579
        %v3729 = vunpack.c.h.b16 %v3579
        %v3730 = vunpack.c.l.b16 %v3580
        %v3731 = vunpack.c.l.b16 %v3581
        %v3732 = vunpack.c.h.b16 %v3581
        %v3733 = vunpack.c.l.b16 %v3582
        %v3734 = vunpack.c.l.b16 %v3583
        %v3735 = vunpack.c.h.b16 %v3583
        %v3736 = vunpack.c.l.b16 %v3584
        %v3737 = vunpack.c.l.b16 %v3585
        %v3738 = vunpack.c.h.b16 %v3585
        %v3739 = vunpack.c.l.b16 %v3586
        %v3740 = vunpack.c.l.b16 %v3587
        %v3741 = vunpack.c.h.b16 %v3587
        %v3742 = vunpack.c.l.b16 %v3588
        %v3743 = vunpack.c.l.b16 %v3589
        %v3744 = vunpack.c.h.b16 %v3589
        %v3745 = vunpack.c.l.b16 %v3590
        %v3746 = vunpack.c.l.b16 %v3591
        %v3747 = vunpack.c.h.b16 %v3591
        %v3748 = vunpack.c.l.b16 %v3592
        %v3749 = vunpack.c.l.b16 %v3593
        %v3750 = vunpack.c.h.b16 %v3593
        %v3751 = vunpack.c.l.b16 %v3594
        %v3752 = vunpack.c.l.b16 %v3595
        %v3753 = vunpack.c.h.b16 %v3595
        %v3754 = vunpack.c.l.b16 %v3596
        %v3755 = vunpack.c.l.b16 %v3597
        %v3756 = vunpack.c.h.b16 %v3597
        %v3757 = vunpack.c.l.b16 %v3598
        %v3758 = vunpack.c.l.b16 %v3599
        %v3759 = vunpack.c.h.b16 %v3599
        %v3760 = vunpack.c.l.b16 %v3600
        %v3761 = vunpack.c.l.b16 %v3601
        %v3762 = vunpack.c.h.b16 %v3601
        %v3763 = vunpack.c.l.b16 %v3602
        %v3764 = vunpack.c.l.b16 %v3603
        %v3765 = vunpack.c.h.b16 %v3603
        %v3766 = vunpack.c.l.b16 %v3604
        %v3767 = vunpack.c.l.b16 %v3605
        %v3768 = vunpack.c.h.b16 %v3605
        %v3769 = vunpack.c.l.b16 %v3606
        %v3770 = vunpack.c.l.b16 %v3607
        %v3771 = vunpack.c.h.b16 %v3607
        %v3772 = vunpack.c.l.b16 %v3608
        %v3773 = vunpack.c.l.b16 %v3609
        %v3774 = vunpack.c.h.b16 %v3609
        %v3775 = vunpack.c.l.b16 %v3610
        %v3776 = vunpack.c.l.b16 %v3611
        %v3777 = vunpack.c.h.b16 %v3611
        %v3778 = vunpack.c.l.b16 %v3612
        %v3779 = vunpack.c.l.b16 %v3613
        %v3780 = vunpack.c.h.b16 %v3613
        %v3781 = vunpack.c.l.b16 %v3614
        %v3782 = vunpack.c.l.b16 %v3615
        %v3783 = vunpack.c.h.b16 %v3615
        %v3784 = vunpack.c.l.b16 %v3616
        %v3785 = vpack.c.b16 %v3692, %v3689
        %v3786 = vpack.c.b16 %v3693, %v3690
        %v3787 = vpack.c.b16 %v3694, %v3691
        %v3788 = vpack.c.b16 %v3698, %v3695
        %v3789 = vpack.c.b16 %v3699, %v3696
        %v3790 = vpack.c.b16 %v3700, %v3697
        %v3791 = vpack.c.b16 %v3704, %v3701
        %v3792 = vpack.c.b16 %v3705, %v3702
        %v3793 = vpack.c.b16 %v3706, %v3703
        %v3794 = vpack.c.b16 %v3710, %v3707
        %v3795 = vpack.c.b16 %v3711, %v3708
        %v3796 = vpack.c.b16 %v3712, %v3709
        %v3797 = vpack.c.b16 %v3716, %v3713
        %v3798 = vpack.c.b16 %v3717, %v3714
        %v3799 = vpack.c.b16 %v3718, %v3715
        %v3800 = vpack.c.b16 %v3722, %v3719
        %v3801 = vpack.c.b16 %v3723, %v3720
        %v3802 = vpack.c.b16 %v3724, %v3721
        %v3803 = vpack.c.b16 %v3728, %v3725
        %v3804 = vpack.c.b16 %v3729, %v3726
        %v3805 = vpack.c.b16 %v3730, %v3727
        %v3806 = vpack.c.b16 %v3734, %v3731
        %v3807 = vpack.c.b16 %v3735, %v3732
        %v3808 = vpack.c.b16 %v3736, %v3733
        %v3809 = vpack.c.b16 %v3740, %v3737
        %v3810 = vpack.c.b16 %v3741, %v3738
        %v3811 = vpack.c.b16 %v3742, %v3739
        %v3812 = vpack.c.b16 %v3746, %v3743
        %v3813 = vpack.c.b16 %v3747, %v3744
        %v3814 = vpack.c.b16 %v3748, %v3745
        %v3815 = vpack.c.b16 %v3752, %v3749
        %v3816 = vpack.c.b16 %v3753, %v3750
        %v3817 = vpack.c.b16 %v3754, %v3751
        %v3818 = vpack.c.b16 %v3758, %v3755
        %v3819 = vpack.c.b16 %v3759, %v3756
        %v3820 = vpack.c.b16 %v3760, %v3757
        %v3821 = vpack.c.b16 %v3764, %v3761
        %v3822 = vpack.c.b16 %v3765, %v3762
        %v3823 = vpack.c.b16 %v3766, %v3763
        %v3824 = vpack.c.b16 %v3770, %v3767
        %v3825 = vpack.c.b16 %v3771, %v3768
        %v3826 = vpack.c.b16 %v3772, %v3769
        %v3827 = vpack.c.b16 %v3776, %v3773
        %v3828 = vpack.c.b16 %v3777, %v3774
        %v3829 = vpack.c.b16 %v3778, %v3775
        %v3830 = vpack.c.b16 %v3782, %v3779
        %v3831 = vpack.c.b16 %v3783, %v3780
        %v3832 = vpack.c.b16 %v3784, %v3781
        %3881 = vmatprep.subr.bf16.mxu0 %v3786
        %3882 = vmatpush1.bf16.msra.mxu0 %v3785
        %3883 = vmatprep.subr.bf16.mxu0 %v3789
        %3884 = vmatpush1.bf16.msra.mxu0 %v3788
        %3885 = vmatprep.subr.bf16.mxu0 %v3792
        %3886 = vmatpush1.bf16.msra.mxu0 %v3791
        %3887 = vmatprep.subr.bf16.mxu0 %v3795
        %3888 = vmatpush1.bf16.msra.mxu0 %v3794
        %3889 = vmatprep.subr.bf16.mxu0 %v3798
        %3890 = vmatpush1.bf16.msra.mxu0 %v3797
        %3891 = vmatprep.subr.bf16.mxu0 %v3801
        %3892 = vmatpush1.bf16.msra.mxu0 %v3800
        %3893 = vmatprep.subr.bf16.mxu0 %v3804
        %3894 = vmatpush1.bf16.msra.mxu0 %v3803
        %3895 = vmatprep.subr.bf16.mxu0 %v3807
        %3896 = vmatpush1.bf16.msra.mxu0 %v3806
        %3897 = vmatprep.subr.bf16.mxu0 %v3810
        %3898 = vmatpush1.bf16.msra.mxu0 %v3809
        %3899 = vmatprep.subr.bf16.mxu0 %v3813
        %3900 = vmatpush1.bf16.msra.mxu0 %v3812
        %3901 = vmatprep.subr.bf16.mxu0 %v3816
        %3902 = vmatpush1.bf16.msra.mxu0 %v3815
        %3903 = vmatprep.subr.bf16.mxu0 %v3819
        %3904 = vmatpush1.bf16.msra.mxu0 %v3818
        %3905 = vmatprep.subr.bf16.mxu0 %v3822
        %3906 = vmatpush1.bf16.msra.mxu0 %v3821
        %3907 = vmatprep.subr.bf16.mxu0 %v3825
        %3908 = vmatpush1.bf16.msra.mxu0 %v3824
        %3909 = vmatprep.subr.bf16.mxu0 %v3828
        %3910 = vmatpush1.bf16.msra.mxu0 %v3827
        %3911 = vmatprep.subr.bf16.mxu0 %v3831
        %3912 = vmatpush1.bf16.msra.mxu0 %v3830
        %3913 = vmatprep.mubr.bf16.mxu0 %v3621
        %3914 = vmatmul.mubr.bf16.gmra.mrb[0].mxu0 %v3618
        %v3915 = vpop.f32.mrb[0].mxu0
        %v3916 = vadd.f32 0.0, %v3915
        %v3917 = vpop.f32.mrb[0].mxu0
        %v3918 = vadd.f32 0.0, %v3917
        %v3919 = vpop.f32.mrb[0].mxu0
        %v3920 = vpop.f32.mrb[0].mxu0
        %3921 = vdwg.mxu0
        %3922 = vmatprep.subr.bf16.mxu0 0
        %3923 = vmatpush1.bf16.msra.mxu0 %v3787
        %3924 = vmatprep.subr.bf16.mxu0 0
        %3925 = vmatpush1.bf16.msra.mxu0 %v3790
        %3926 = vmatprep.subr.bf16.mxu0 0
        %3927 = vmatpush1.bf16.msra.mxu0 %v3793
        %3928 = vmatprep.subr.bf16.mxu0 0
        %3929 = vmatpush1.bf16.msra.mxu0 %v3796
        %3930 = vmatprep.subr.bf16.mxu0 0
        %3931 = vmatpush1.bf16.msra.mxu0 %v3799
        %3932 = vmatprep.subr.bf16.mxu0 0
        %3933 = vmatpush1.bf16.msra.mxu0 %v3802
        %3934 = vmatprep.subr.bf16.mxu0 0
        %3935 = vmatpush1.bf16.msra.mxu0 %v3805
        %3936 = vmatprep.subr.bf16.mxu0 0
        %3937 = vmatpush1.bf16.msra.mxu0 %v3808
        %3938 = vmatprep.subr.bf16.mxu0 0
        %3939 = vmatpush1.bf16.msra.mxu0 %v3811
        %3940 = vmatprep.subr.bf16.mxu0 0
        %3941 = vmatpush1.bf16.msra.mxu0 %v3814
        %3942 = vmatprep.subr.bf16.mxu0 0
        %3943 = vmatpush1.bf16.msra.mxu0 %v3817
        %3944 = vmatprep.subr.bf16.mxu0 0
        %3945 = vmatpush1.bf16.msra.mxu0 %v3820
        %3946 = vmatprep.subr.bf16.mxu0 0
        %3947 = vmatpush1.bf16.msra.mxu0 %v3823
        %3948 = vmatprep.subr.bf16.mxu0 0
        %3949 = vmatpush1.bf16.msra.mxu0 %v3826
        %3950 = vmatprep.subr.bf16.mxu0 0
        %3951 = vmatpush1.bf16.msra.mxu0 %v3829
        %3952 = vmatprep.subr.bf16.mxu0 0
        %3953 = vmatpush1.bf16.msra.mxu0 %v3832
        %3954 = vmatprep.mubr.bf16.mxu0 %v3621
        %3955 = vmatmul.mubr.bf16.gmra.mrb[0].mxu0 %v3618
        %v3956 = vpop.f32.mrb[0].mxu0
        %v3957 = vadd.f32 0.0, %v3956
        %v3958 = vpop.f32.mrb[0].mxu0
        %v3959 = vpop.f32.mrb[0].mxu0
        %v3960 = vpop.f32.mrb[0].mxu0
        %3961 = vdwg.mxu0
        %v4026 = vunpack.c.l.b16 %v3488
        %v4027 = vunpack.c.h.b16 %v3488
        %v4028 = vunpack.c.l.b16 %v3489
        %v4029 = vunpack.c.l.b16 %v3490
        %v4030 = vunpack.c.h.b16 %v3490
        %v4031 = vunpack.c.l.b16 %v3491
        %v4032 = vunpack.c.l.b16 %v3492
        %v4033 = vunpack.c.h.b16 %v3492
        %v4034 = vunpack.c.l.b16 %v3493
        %v4035 = vunpack.c.l.b16 %v3494
        %v4036 = vunpack.c.h.b16 %v3494
        %v4037 = vunpack.c.l.b16 %v3495
        %v4038 = vunpack.c.l.b16 %v3496
        %v4039 = vunpack.c.h.b16 %v3496
        %v4040 = vunpack.c.l.b16 %v3497
        %v4041 = vunpack.c.l.b16 %v3498
        %v4042 = vunpack.c.h.b16 %v3498
        %v4043 = vunpack.c.l.b16 %v3499
        %v4044 = vunpack.c.l.b16 %v3500
        %v4045 = vunpack.c.h.b16 %v3500
        %v4046 = vunpack.c.l.b16 %v3501
        %v4047 = vunpack.c.l.b16 %v3502
        %v4048 = vunpack.c.h.b16 %v3502
        %v4049 = vunpack.c.l.b16 %v3503
        %v4050 = vunpack.c.l.b16 %v3504
        %v4051 = vunpack.c.h.b16 %v3504
        %v4052 = vunpack.c.l.b16 %v3505
        %v4053 = vunpack.c.l.b16 %v3506
        %v4054 = vunpack.c.h.b16 %v3506
        %v4055 = vunpack.c.l.b16 %v3507
        %v4056 = vunpack.c.l.b16 %v3508
        %v4057 = vunpack.c.h.b16 %v3508
        %v4058 = vunpack.c.l.b16 %v3509
        %v4059 = vunpack.c.l.b16 %v3510
        %v4060 = vunpack.c.h.b16 %v3510
        %v4061 = vunpack.c.l.b16 %v3511
        %v4062 = vunpack.c.l.b16 %v3512
        %v4063 = vunpack.c.h.b16 %v3512
        %v4064 = vunpack.c.l.b16 %v3513
        %v4065 = vunpack.c.l.b16 %v3514
        %v4066 = vunpack.c.h.b16 %v3514
        %v4067 = vunpack.c.l.b16 %v3515
        %v4068 = vunpack.c.l.b16 %v3516
        %v4069 = vunpack.c.h.b16 %v3516
        %v4070 = vunpack.c.l.b16 %v3517
        %v4071 = vunpack.c.l.b16 %v3518
        %v4072 = vunpack.c.h.b16 %v3518
        %v4073 = vunpack.c.l.b16 %v3519
        %v4074 = vunpack.c.l.b16 %v3520
        %v4075 = vunpack.c.h.b16 %v3520
        %v4076 = vunpack.c.l.b16 %v3521
        %v4077 = vunpack.c.l.b16 %v3522
        %v4078 = vunpack.c.h.b16 %v3522
        %v4079 = vunpack.c.l.b16 %v3523
        %v4080 = vunpack.c.l.b16 %v3524
        %v4081 = vunpack.c.h.b16 %v3524
        %v4082 = vunpack.c.l.b16 %v3525
        %v4083 = vunpack.c.l.b16 %v3526
        %v4084 = vunpack.c.h.b16 %v3526
        %v4085 = vunpack.c.l.b16 %v3527
        %v4086 = vunpack.c.l.b16 %v3528
        %v4087 = vunpack.c.h.b16 %v3528
        %v4088 = vunpack.c.l.b16 %v3529
        %v4089 = vunpack.c.l.b16 %v3530
        %v4090 = vunpack.c.h.b16 %v3530
        %v4091 = vunpack.c.l.b16 %v3531
        %v4092 = vunpack.c.l.b16 %v3532
        %v4093 = vunpack.c.h.b16 %v3532
        %v4094 = vunpack.c.l.b16 %v3533
        %v4095 = vunpack.c.l.b16 %v3534
        %v4096 = vunpack.c.h.b16 %v3534
        %v4097 = vunpack.c.l.b16 %v3535
        %v4098 = vunpack.c.l.b16 %v3536
        %v4099 = vunpack.c.h.b16 %v3536
        %v4100 = vunpack.c.l.b16 %v3537
        %v4101 = vunpack.c.l.b16 %v3538
        %v4102 = vunpack.c.h.b16 %v3538
        %v4103 = vunpack.c.l.b16 %v3539
        %v4104 = vunpack.c.l.b16 %v3540
        %v4105 = vunpack.c.h.b16 %v3540
        %v4106 = vunpack.c.l.b16 %v3541
        %v4107 = vunpack.c.l.b16 %v3542
        %v4108 = vunpack.c.h.b16 %v3542
        %v4109 = vunpack.c.l.b16 %v3543
        %v4110 = vunpack.c.l.b16 %v3544
        %v4111 = vunpack.c.h.b16 %v3544
        %v4112 = vunpack.c.l.b16 %v3545
        %v4113 = vunpack.c.l.b16 %v3546
        %v4114 = vunpack.c.h.b16 %v3546
        %v4115 = vunpack.c.l.b16 %v3547
        %v4116 = vunpack.c.l.b16 %v3548
        %v4117 = vunpack.c.h.b16 %v3548
        %v4118 = vunpack.c.l.b16 %v3549
        %v4119 = vunpack.c.l.b16 %v3550
        %v4120 = vunpack.c.h.b16 %v3550
        %v4121 = vunpack.c.l.b16 %v3551
        %v4122 = vpack.c.b16 %v4029, %v4026
        %v4123 = vpack.c.b16 %v4030, %v4027
        %v4124 = vpack.c.b16 %v4031, %v4028
        %v4125 = vpack.c.b16 %v4035, %v4032
        %v4126 = vpack.c.b16 %v4036, %v4033
        %v4127 = vpack.c.b16 %v4037, %v4034
        %v4128 = vpack.c.b16 %v4041, %v4038
        %v4129 = vpack.c.b16 %v4042, %v4039
        %v4130 = vpack.c.b16 %v4043, %v4040
        %v4131 = vpack.c.b16 %v4047, %v4044
        %v4132 = vpack.c.b16 %v4048, %v4045
        %v4133 = vpack.c.b16 %v4049, %v4046
        %v4134 = vpack.c.b16 %v4053, %v4050
        %v4135 = vpack.c.b16 %v4054, %v4051
        %v4136 = vpack.c.b16 %v4055, %v4052
        %v4137 = vpack.c.b16 %v4059, %v4056
        %v4138 = vpack.c.b16 %v4060, %v4057
        %v4139 = vpack.c.b16 %v4061, %v4058
        %v4140 = vpack.c.b16 %v4065, %v4062
        %v4141 = vpack.c.b16 %v4066, %v4063
        %v4142 = vpack.c.b16 %v4067, %v4064
        %v4143 = vpack.c.b16 %v4071, %v4068
        %v4144 = vpack.c.b16 %v4072, %v4069
        %v4145 = vpack.c.b16 %v4073, %v4070
        %v4146 = vpack.c.b16 %v4077, %v4074
        %v4147 = vpack.c.b16 %v4078, %v4075
        %v4148 = vpack.c.b16 %v4079, %v4076
        %v4149 = vpack.c.b16 %v4083, %v4080
        %v4150 = vpack.c.b16 %v4084, %v4081
        %v4151 = vpack.c.b16 %v4085, %v4082
        %v4152 = vpack.c.b16 %v4089, %v4086
        %v4153 = vpack.c.b16 %v4090, %v4087
        %v4154 = vpack.c.b16 %v4091, %v4088
        %v4155 = vpack.c.b16 %v4095, %v4092
        %v4156 = vpack.c.b16 %v4096, %v4093
        %v4157 = vpack.c.b16 %v4097, %v4094
        %v4158 = vpack.c.b16 %v4101, %v4098
        %v4159 = vpack.c.b16 %v4102, %v4099
        %v4160 = vpack.c.b16 %v4103, %v4100
        %v4161 = vpack.c.b16 %v4107, %v4104
        %v4162 = vpack.c.b16 %v4108, %v4105
        %v4163 = vpack.c.b16 %v4109, %v4106
        %v4164 = vpack.c.b16 %v4113, %v4110
        %v4165 = vpack.c.b16 %v4114, %v4111
        %v4166 = vpack.c.b16 %v4115, %v4112
        %v4167 = vpack.c.b16 %v4119, %v4116
        %v4168 = vpack.c.b16 %v4120, %v4117
        %v4169 = vpack.c.b16 %v4121, %v4118
        %4218 = vmatprep.subr.bf16.mxu0 %v4123
        %4219 = vmatpush1.bf16.msra.mxu0 %v4122
        %4220 = vmatprep.subr.bf16.mxu0 %v4126
        %4221 = vmatpush1.bf16.msra.mxu0 %v4125
        %4222 = vmatprep.subr.bf16.mxu0 %v4129
        %4223 = vmatpush1.bf16.msra.mxu0 %v4128
        %4224 = vmatprep.subr.bf16.mxu0 %v4132
        %4225 = vmatpush1.bf16.msra.mxu0 %v4131
        %4226 = vmatprep.subr.bf16.mxu0 %v4135
        %4227 = vmatpush1.bf16.msra.mxu0 %v4134
        %4228 = vmatprep.subr.bf16.mxu0 %v4138
        %4229 = vmatpush1.bf16.msra.mxu0 %v4137
        %4230 = vmatprep.subr.bf16.mxu0 %v4141
        %4231 = vmatpush1.bf16.msra.mxu0 %v4140
        %4232 = vmatprep.subr.bf16.mxu0 %v4144
        %4233 = vmatpush1.bf16.msra.mxu0 %v4143
        %4234 = vmatprep.subr.bf16.mxu0 %v4147
        %4235 = vmatpush1.bf16.msra.mxu0 %v4146
        %4236 = vmatprep.subr.bf16.mxu0 %v4150
        %4237 = vmatpush1.bf16.msra.mxu0 %v4149
        %4238 = vmatprep.subr.bf16.mxu0 %v4153
        %4239 = vmatpush1.bf16.msra.mxu0 %v4152
        %4240 = vmatprep.subr.bf16.mxu0 %v4156
        %4241 = vmatpush1.bf16.msra.mxu0 %v4155
        %4242 = vmatprep.subr.bf16.mxu0 %v4159
        %4243 = vmatpush1.bf16.msra.mxu0 %v4158
        %4244 = vmatprep.subr.bf16.mxu0 %v4162
        %4245 = vmatpush1.bf16.msra.mxu0 %v4161
        %4246 = vmatprep.subr.bf16.mxu0 %v4165
        %4247 = vmatpush1.bf16.msra.mxu0 %v4164
        %4248 = vmatprep.subr.bf16.mxu0 %v4168
        %4249 = vmatpush1.bf16.msra.mxu0 %v4167
        %4250 = vmatprep.mubr.bf16.mxu0 %v3487
        %4251 = vmatmul.mubr.bf16.gmra.mrb[0].mxu0 %v3486
        %v4252 = vpop.f32.mrb[0].mxu0
        %v4253 = vadd.f32 %v3916, %v4252
        %v4254 = vpop.f32.mrb[0].mxu0
        %v4255 = vadd.f32 %v3918, %v4254
        %v4256 = vpop.f32.mrb[0].mxu0
        %v4257 = vpop.f32.mrb[0].mxu0
        %4258 = vdwg.mxu0
        %4259 = vmatprep.subr.bf16.mxu0 0
        %4260 = vmatpush1.bf16.msra.mxu0 %v4124
        %4261 = vmatprep.subr.bf16.mxu0 0
        %4262 = vmatpush1.bf16.msra.mxu0 %v4127
        %4263 = vmatprep.subr.bf16.mxu0 0
        %4264 = vmatpush1.bf16.msra.mxu0 %v4130
        %4265 = vmatprep.subr.bf16.mxu0 0
        %4266 = vmatpush1.bf16.msra.mxu0 %v4133
        %4267 = vmatprep.subr.bf16.mxu0 0
        %4268 = vmatpush1.bf16.msra.mxu0 %v4136
        %4269 = vmatprep.subr.bf16.mxu0 0
        %4270 = vmatpush1.bf16.msra.mxu0 %v4139
        %4271 = vmatprep.subr.bf16.mxu0 0
        %4272 = vmatpush1.bf16.msra.mxu0 %v4142
        %4273 = vmatprep.subr.bf16.mxu0 0
        %4274 = vmatpush1.bf16.msra.mxu0 %v4145
        %4275 = vmatprep.subr.bf16.mxu0 0
        %4276 = vmatpush1.bf16.msra.mxu0 %v4148
        %4277 = vmatprep.subr.bf16.mxu0 0
        %4278 = vmatpush1.bf16.msra.mxu0 %v4151
        %4279 = vmatprep.subr.bf16.mxu0 0
        %4280 = vmatpush1.bf16.msra.mxu0 %v4154
        %4281 = vmatprep.subr.bf16.mxu0 0
        %4282 = vmatpush1.bf16.msra.mxu0 %v4157
        %4283 = vmatprep.subr.bf16.mxu0 0
        %4284 = vmatpush1.bf16.msra.mxu0 %v4160
        %4285 = vmatprep.subr.bf16.mxu0 0
        %4286 = vmatpush1.bf16.msra.mxu0 %v4163
        %4287 = vmatprep.subr.bf16.mxu0 0
        %4288 = vmatpush1.bf16.msra.mxu0 %v4166
        %4289 = vmatprep.subr.bf16.mxu0 0
        %4290 = vmatpush1.bf16.msra.mxu0 %v4169
        %4291 = vmatprep.mubr.bf16.mxu0 %v3487
        %4292 = vmatmul.mubr.bf16.gmra.mrb[0].mxu0 %v3486
        %v4293 = vpop.f32.mrb[0].mxu0
        %v4294 = vadd.f32 %v3957, %v4293
        %v4295 = vpop.f32.mrb[0].mxu0
        %v4296 = vpop.f32.mrb[0].mxu0
        %v4297 = vpop.f32.mrb[0].mxu0
        %4298 = vdwg.mxu0
        %s4299 = scalar_lea.vmem %s11, 768
        %v4300 = vld [vmem:[%s4299] sm:$0xff]
        %v4301 = vld [vmem:[%s4299 + $0x8] sm:$0xf]
        %v4302 = vld [vmem:[%s4299 + $0xc] sm:$0xff]
        %v4303 = vld [vmem:[%s4299 + $0x14] sm:$0xf]
        %v4304 = vld [vmem:[%s4299 + $0x18] sm:$0xff]
        %v4305 = vld [vmem:[%s4299 + $0x20] sm:$0xf]
        %v4306 = vld [vmem:[%s4299 + $0x24] sm:$0xff]
        %v4307 = vld [vmem:[%s4299 + $0x2c] sm:$0xf]
        %v4308 = vld [vmem:[%s4299 + $0x30] sm:$0xff]
        %v4309 = vld [vmem:[%s4299 + $0x38] sm:$0xf]
        %v4310 = vld [vmem:[%s4299 + $0x3c] sm:$0xff]
        %v4311 = vld [vmem:[%s4299 + $0x44] sm:$0xf]
        %v4312 = vld [vmem:[%s4299 + $0x48] sm:$0xff]
        %v4313 = vld [vmem:[%s4299 + $0x50] sm:$0xf]
        %v4314 = vld [vmem:[%s4299 + $0x54] sm:$0xff]
        %v4315 = vld [vmem:[%s4299 + $0x5c] sm:$0xf]
        %v4316 = vld [vmem:[%s4299 + $0x60] sm:$0xff]
        %v4317 = vld [vmem:[%s4299 + $0x68] sm:$0xf]
        %v4318 = vld [vmem:[%s4299 + $0x6c] sm:$0xff]
        %v4319 = vld [vmem:[%s4299 + $0x74] sm:$0xf]
        %v4320 = vld [vmem:[%s4299 + $0x78] sm:$0xff]
        %v4321 = vld [vmem:[%s4299 + $0x80] sm:$0xf]
        %v4322 = vld [vmem:[%s4299 + $0x84] sm:$0xff]
        %v4323 = vld [vmem:[%s4299 + $0x8c] sm:$0xf]
        %v4324 = vld [vmem:[%s4299 + $0x90] sm:$0xff]
        %v4325 = vld [vmem:[%s4299 + $0x98] sm:$0xf]
        %v4326 = vld [vmem:[%s4299 + $0x9c] sm:$0xff]
        %v4327 = vld [vmem:[%s4299 + $0xa4] sm:$0xf]
        %v4328 = vld [vmem:[%s4299 + $0xa8] sm:$0xff]
        %v4329 = vld [vmem:[%s4299 + $0xb0] sm:$0xf]
        %v4330 = vld [vmem:[%s4299 + $0xb4] sm:$0xff]
        %v4331 = vld [vmem:[%s4299 + $0xbc] sm:$0xf]
        %v4332 = vld [vmem:[%s4299 + $0xc0] sm:$0xff]
        %v4333 = vld [vmem:[%s4299 + $0xc8] sm:$0xf]
        %v4334 = vld [vmem:[%s4299 + $0xcc] sm:$0xff]
        %v4335 = vld [vmem:[%s4299 + $0xd4] sm:$0xf]
        %v4336 = vld [vmem:[%s4299 + $0xd8] sm:$0xff]
        %v4337 = vld [vmem:[%s4299 + $0xe0] sm:$0xf]
        %v4338 = vld [vmem:[%s4299 + $0xe4] sm:$0xff]
        %v4339 = vld [vmem:[%s4299 + $0xec] sm:$0xf]
        %v4340 = vld [vmem:[%s4299 + $0xf0] sm:$0xff]
        %v4341 = vld [vmem:[%s4299 + $0xf8] sm:$0xf]
        %v4342 = vld [vmem:[%s4299 + $0xfc] sm:$0xff]
        %v4343 = vld [vmem:[%s4299 + $0x104] sm:$0xf]
        %v4344 = vld [vmem:[%s4299 + $0x108] sm:$0xff]
        %v4345 = vld [vmem:[%s4299 + $0x110] sm:$0xf]
        %v4346 = vld [vmem:[%s4299 + $0x114] sm:$0xff]
        %v4347 = vld [vmem:[%s4299 + $0x11c] sm:$0xf]
        %v4348 = vld [vmem:[%s4299 + $0x120] sm:$0xff]
        %v4349 = vld [vmem:[%s4299 + $0x128] sm:$0xf]
        %v4350 = vld [vmem:[%s4299 + $0x12c] sm:$0xff]
        %v4351 = vld [vmem:[%s4299 + $0x134] sm:$0xf]
        %v4352 = vld [vmem:[%s4299 + $0x138] sm:$0xff]
        %v4353 = vld [vmem:[%s4299 + $0x140] sm:$0xf]
        %v4354 = vld [vmem:[%s4299 + $0x144] sm:$0xff]
        %v4355 = vld [vmem:[%s4299 + $0x14c] sm:$0xf]
        %v4356 = vld [vmem:[%s4299 + $0x150] sm:$0xff]
        %v4357 = vld [vmem:[%s4299 + $0x158] sm:$0xf]
        %v4358 = vld [vmem:[%s4299 + $0x15c] sm:$0xff]
        %v4359 = vld [vmem:[%s4299 + $0x164] sm:$0xf]
        %v4360 = vld [vmem:[%s4299 + $0x168] sm:$0xff]
        %v4361 = vld [vmem:[%s4299 + $0x170] sm:$0xf]
        %v4362 = vld [vmem:[%s4299 + $0x174] sm:$0xff]
        %v4363 = vld [vmem:[%s4299 + $0x17c] sm:$0xf]
        %v4366 = vrot.slane %v3486, 1
        %v4367 = vrot.slane %v3487, 1
        %v4434 = vunpack.c.l.b16 %v4300
        %v4435 = vunpack.c.h.b16 %v4300
        %v4436 = vunpack.c.l.b16 %v4301
        %v4437 = vunpack.c.l.b16 %v4302
        %v4438 = vunpack.c.h.b16 %v4302
        %v4439 = vunpack.c.l.b16 %v4303
        %v4440 = vunpack.c.l.b16 %v4304
        %v4441 = vunpack.c.h.b16 %v4304
        %v4442 = vunpack.c.l.b16 %v4305
        %v4443 = vunpack.c.l.b16 %v4306
        %v4444 = vunpack.c.h.b16 %v4306
        %v4445 = vunpack.c.l.b16 %v4307
        %v4446 = vunpack.c.l.b16 %v4308
        %v4447 = vunpack.c.h.b16 %v4308
        %v4448 = vunpack.c.l.b16 %v4309
        %v4449 = vunpack.c.l.b16 %v4310
        %v4450 = vunpack.c.h.b16 %v4310
        %v4451 = vunpack.c.l.b16 %v4311
        %v4452 = vunpack.c.l.b16 %v4312
        %v4453 = vunpack.c.h.b16 %v4312
        %v4454 = vunpack.c.l.b16 %v4313
        %v4455 = vunpack.c.l.b16 %v4314
        %v4456 = vunpack.c.h.b16 %v4314
        %v4457 = vunpack.c.l.b16 %v4315
        %v4458 = vunpack.c.l.b16 %v4316
        %v4459 = vunpack.c.h.b16 %v4316
        %v4460 = vunpack.c.l.b16 %v4317
        %v4461 = vunpack.c.l.b16 %v4318
        %v4462 = vunpack.c.h.b16 %v4318
        %v4463 = vunpack.c.l.b16 %v4319
        %v4464 = vunpack.c.l.b16 %v4320
        %v4465 = vunpack.c.h.b16 %v4320
        %v4466 = vunpack.c.l.b16 %v4321
        %v4467 = vunpack.c.l.b16 %v4322
        %v4468 = vunpack.c.h.b16 %v4322
        %v4469 = vunpack.c.l.b16 %v4323
        %v4470 = vunpack.c.l.b16 %v4324
        %v4471 = vunpack.c.h.b16 %v4324
        %v4472 = vunpack.c.l.b16 %v4325
        %v4473 = vunpack.c.l.b16 %v4326
        %v4474 = vunpack.c.h.b16 %v4326
        %v4475 = vunpack.c.l.b16 %v4327
        %v4476 = vunpack.c.l.b16 %v4328
        %v4477 = vunpack.c.h.b16 %v4328
        %v4478 = vunpack.c.l.b16 %v4329
        %v4479 = vunpack.c.l.b16 %v4330
        %v4480 = vunpack.c.h.b16 %v4330
        %v4481 = vunpack.c.l.b16 %v4331
        %v4482 = vunpack.c.l.b16 %v4332
        %v4483 = vunpack.c.h.b16 %v4332
        %v4484 = vunpack.c.l.b16 %v4333
        %v4485 = vunpack.c.l.b16 %v4334
        %v4486 = vunpack.c.h.b16 %v4334
        %v4487 = vunpack.c.l.b16 %v4335
        %v4488 = vunpack.c.l.b16 %v4336
        %v4489 = vunpack.c.h.b16 %v4336
        %v4490 = vunpack.c.l.b16 %v4337
        %v4491 = vunpack.c.l.b16 %v4338
        %v4492 = vunpack.c.h.b16 %v4338
        %v4493 = vunpack.c.l.b16 %v4339
        %v4494 = vunpack.c.l.b16 %v4340
        %v4495 = vunpack.c.h.b16 %v4340
        %v4496 = vunpack.c.l.b16 %v4341
        %v4497 = vunpack.c.l.b16 %v4342
        %v4498 = vunpack.c.h.b16 %v4342
        %v4499 = vunpack.c.l.b16 %v4343
        %v4500 = vunpack.c.l.b16 %v4344
        %v4501 = vunpack.c.h.b16 %v4344
        %v4502 = vunpack.c.l.b16 %v4345
        %v4503 = vunpack.c.l.b16 %v4346
        %v4504 = vunpack.c.h.b16 %v4346
        %v4505 = vunpack.c.l.b16 %v4347
        %v4506 = vunpack.c.l.b16 %v4348
        %v4507 = vunpack.c.h.b16 %v4348
        %v4508 = vunpack.c.l.b16 %v4349
        %v4509 = vunpack.c.l.b16 %v4350
        %v4510 = vunpack.c.h.b16 %v4350
        %v4511 = vunpack.c.l.b16 %v4351
        %v4512 = vunpack.c.l.b16 %v4352
        %v4513 = vunpack.c.h.b16 %v4352
        %v4514 = vunpack.c.l.b16 %v4353
        %v4515 = vunpack.c.l.b16 %v4354
        %v4516 = vunpack.c.h.b16 %v4354
        %v4517 = vunpack.c.l.b16 %v4355
        %v4518 = vunpack.c.l.b16 %v4356
        %v4519 = vunpack.c.h.b16 %v4356
        %v4520 = vunpack.c.l.b16 %v4357
        %v4521 = vunpack.c.l.b16 %v4358
        %v4522 = vunpack.c.h.b16 %v4358
        %v4523 = vunpack.c.l.b16 %v4359
        %v4524 = vunpack.c.l.b16 %v4360
        %v4525 = vunpack.c.h.b16 %v4360
        %v4526 = vunpack.c.l.b16 %v4361
        %v4527 = vunpack.c.l.b16 %v4362
        %v4528 = vunpack.c.h.b16 %v4362
        %v4529 = vunpack.c.l.b16 %v4363
        %v4530 = vpack.c.b16 %v4437, %v4434
        %v4531 = vpack.c.b16 %v4438, %v4435
        %v4532 = vpack.c.b16 %v4439, %v4436
        %v4533 = vpack.c.b16 %v4443, %v4440
        %v4534 = vpack.c.b16 %v4444, %v4441
        %v4535 = vpack.c.b16 %v4445, %v4442
        %v4536 = vpack.c.b16 %v4449, %v4446
        %v4537 = vpack.c.b16 %v4450, %v4447
        %v4538 = vpack.c.b16 %v4451, %v4448
        %v4539 = vpack.c.b16 %v4455, %v4452
        %v4540 = vpack.c.b16 %v4456, %v4453
        %v4541 = vpack.c.b16 %v4457, %v4454
        %v4542 = vpack.c.b16 %v4461, %v4458
        %v4543 = vpack.c.b16 %v4462, %v4459
        %v4544 = vpack.c.b16 %v4463, %v4460
        %v4545 = vpack.c.b16 %v4467, %v4464
        %v4546 = vpack.c.b16 %v4468, %v4465
        %v4547 = vpack.c.b16 %v4469, %v4466
        %v4548 = vpack.c.b16 %v4473, %v4470
        %v4549 = vpack.c.b16 %v4474, %v4471
        %v4550 = vpack.c.b16 %v4475, %v4472
        %v4551 = vpack.c.b16 %v4479, %v4476
        %v4552 = vpack.c.b16 %v4480, %v4477
        %v4553 = vpack.c.b16 %v4481, %v4478
        %v4554 = vpack.c.b16 %v4485, %v4482
        %v4555 = vpack.c.b16 %v4486, %v4483
        %v4556 = vpack.c.b16 %v4487, %v4484
        %v4557 = vpack.c.b16 %v4491, %v4488
        %v4558 = vpack.c.b16 %v4492, %v4489
        %v4559 = vpack.c.b16 %v4493, %v4490
        %v4560 = vpack.c.b16 %v4497, %v4494
        %v4561 = vpack.c.b16 %v4498, %v4495
        %v4562 = vpack.c.b16 %v4499, %v4496
        %v4563 = vpack.c.b16 %v4503, %v4500
        %v4564 = vpack.c.b16 %v4504, %v4501
        %v4565 = vpack.c.b16 %v4505, %v4502
        %v4566 = vpack.c.b16 %v4509, %v4506
        %v4567 = vpack.c.b16 %v4510, %v4507
        %v4568 = vpack.c.b16 %v4511, %v4508
        %v4569 = vpack.c.b16 %v4515, %v4512
        %v4570 = vpack.c.b16 %v4516, %v4513
        %v4571 = vpack.c.b16 %v4517, %v4514
        %v4572 = vpack.c.b16 %v4521, %v4518
        %v4573 = vpack.c.b16 %v4522, %v4519
        %v4574 = vpack.c.b16 %v4523, %v4520
        %v4575 = vpack.c.b16 %v4527, %v4524
        %v4576 = vpack.c.b16 %v4528, %v4525
        %v4577 = vpack.c.b16 %v4529, %v4526
        %4626 = vmatprep.subr.bf16.mxu0 %v4531
        %4627 = vmatpush1.bf16.msra.mxu0 %v4530
        %4628 = vmatprep.subr.bf16.mxu0 %v4534
        %4629 = vmatpush1.bf16.msra.mxu0 %v4533
        %4630 = vmatprep.subr.bf16.mxu0 %v4537
        %4631 = vmatpush1.bf16.msra.mxu0 %v4536
        %4632 = vmatprep.subr.bf16.mxu0 %v4540
        %4633 = vmatpush1.bf16.msra.mxu0 %v4539
        %4634 = vmatprep.subr.bf16.mxu0 %v4543
        %4635 = vmatpush1.bf16.msra.mxu0 %v4542
        %4636 = vmatprep.subr.bf16.mxu0 %v4546
        %4637 = vmatpush1.bf16.msra.mxu0 %v4545
        %4638 = vmatprep.subr.bf16.mxu0 %v4549
        %4639 = vmatpush1.bf16.msra.mxu0 %v4548
        %4640 = vmatprep.subr.bf16.mxu0 %v4552
        %4641 = vmatpush1.bf16.msra.mxu0 %v4551
        %4642 = vmatprep.subr.bf16.mxu0 %v4555
        %4643 = vmatpush1.bf16.msra.mxu0 %v4554
        %4644 = vmatprep.subr.bf16.mxu0 %v4558
        %4645 = vmatpush1.bf16.msra.mxu0 %v4557
        %4646 = vmatprep.subr.bf16.mxu0 %v4561
        %4647 = vmatpush1.bf16.msra.mxu0 %v4560
        %4648 = vmatprep.subr.bf16.mxu0 %v4564
        %4649 = vmatpush1.bf16.msra.mxu0 %v4563
        %4650 = vmatprep.subr.bf16.mxu0 %v4567
        %4651 = vmatpush1.bf16.msra.mxu0 %v4566
        %4652 = vmatprep.subr.bf16.mxu0 %v4570
        %4653 = vmatpush1.bf16.msra.mxu0 %v4569
        %4654 = vmatprep.subr.bf16.mxu0 %v4573
        %4655 = vmatpush1.bf16.msra.mxu0 %v4572
        %4656 = vmatprep.subr.bf16.mxu0 %v4576
        %4657 = vmatpush1.bf16.msra.mxu0 %v4575
        %4658 = vmatprep.mubr.bf16.mxu0 %v4367
        %4659 = vmatmul.mubr.bf16.gmra.mrb[0].mxu0 %v4366
        %v4660 = vpop.f32.mrb[0].mxu0
        %v4661 = vadd.f32 0.0, %v4660
        %v4662 = vpop.f32.mrb[0].mxu0
        %v4663 = vadd.f32 0.0, %v4662
        %v4664 = vpop.f32.mrb[0].mxu0
        %v4665 = vpop.f32.mrb[0].mxu0
        %4666 = vdwg.mxu0
        %4667 = vmatprep.subr.bf16.mxu0 0
        %4668 = vmatpush1.bf16.msra.mxu0 %v4532
        %4669 = vmatprep.subr.bf16.mxu0 0
        %4670 = vmatpush1.bf16.msra.mxu0 %v4535
        %4671 = vmatprep.subr.bf16.mxu0 0
        %4672 = vmatpush1.bf16.msra.mxu0 %v4538
        %4673 = vmatprep.subr.bf16.mxu0 0
        %4674 = vmatpush1.bf16.msra.mxu0 %v4541
        %4675 = vmatprep.subr.bf16.mxu0 0
        %4676 = vmatpush1.bf16.msra.mxu0 %v4544
        %4677 = vmatprep.subr.bf16.mxu0 0
        %4678 = vmatpush1.bf16.msra.mxu0 %v4547
        %4679 = vmatprep.subr.bf16.mxu0 0
        %4680 = vmatpush1.bf16.msra.mxu0 %v4550
        %4681 = vmatprep.subr.bf16.mxu0 0
        %4682 = vmatpush1.bf16.msra.mxu0 %v4553
        %4683 = vmatprep.subr.bf16.mxu0 0
        %4684 = vmatpush1.bf16.msra.mxu0 %v4556
        %4685 = vmatprep.subr.bf16.mxu0 0
        %4686 = vmatpush1.bf16.msra.mxu0 %v4559
        %4687 = vmatprep.subr.bf16.mxu0 0
        %4688 = vmatpush1.bf16.msra.mxu0 %v4562
        %4689 = vmatprep.subr.bf16.mxu0 0
        %4690 = vmatpush1.bf16.msra.mxu0 %v4565
        %4691 = vmatprep.subr.bf16.mxu0 0
        %4692 = vmatpush1.bf16.msra.mxu0 %v4568
        %4693 = vmatprep.subr.bf16.mxu0 0
        %4694 = vmatpush1.bf16.msra.mxu0 %v4571
        %4695 = vmatprep.subr.bf16.mxu0 0
        %4696 = vmatpush1.bf16.msra.mxu0 %v4574
        %4697 = vmatprep.subr.bf16.mxu0 0
        %4698 = vmatpush1.bf16.msra.mxu0 %v4577
        %4699 = vmatprep.mubr.bf16.mxu0 %v4367
        %4700 = vmatmul.mubr.bf16.gmra.mrb[0].mxu0 %v4366
        %v4701 = vpop.f32.mrb[0].mxu0
        %v4702 = vadd.f32 0.0, %v4701
        %v4703 = vpop.f32.mrb[0].mxu0
        %v4704 = vpop.f32.mrb[0].mxu0
        %v4705 = vpop.f32.mrb[0].mxu0
        %4706 = vdwg.mxu0
        %v4707 = vadd.f32 %v4253, %v4661
        %v4708 = vadd.f32 %v4255, %v4663
        %v4709 = vadd.f32 %v4294, %v4702
        %s4710 = scalar_lea.vmem %s11, 1152
        %v4711 = vld [vmem:[%s4710] sm:$0xff]
        %v4712 = vld [vmem:[%s4710 + $0x8] sm:$0xf]
        %v4713 = vld [vmem:[%s4710 + $0xc] sm:$0xff]
        %v4714 = vld [vmem:[%s4710 + $0x14] sm:$0xf]
        %v4715 = vld [vmem:[%s4710 + $0x18] sm:$0xff]
        %v4716 = vld [vmem:[%s4710 + $0x20] sm:$0xf]
        %v4717 = vld [vmem:[%s4710 + $0x24] sm:$0xff]
        %v4718 = vld [vmem:[%s4710 + $0x2c] sm:$0xf]
        %v4719 = vld [vmem:[%s4710 + $0x30] sm:$0xff]
        %v4720 = vld [vmem:[%s4710 + $0x38] sm:$0xf]
        %v4721 = vld [vmem:[%s4710 + $0x3c] sm:$0xff]
        %v4722 = vld [vmem:[%s4710 + $0x44] sm:$0xf]
        %v4723 = vld [vmem:[%s4710 + $0x48] sm:$0xff]
        %v4724 = vld [vmem:[%s4710 + $0x50] sm:$0xf]
        %v4725 = vld [vmem:[%s4710 + $0x54] sm:$0xff]
        %v4726 = vld [vmem:[%s4710 + $0x5c] sm:$0xf]
        %v4727 = vld [vmem:[%s4710 + $0x60] sm:$0xff]
        %v4728 = vld [vmem:[%s4710 + $0x68] sm:$0xf]
        %v4729 = vld [vmem:[%s4710 + $0x6c] sm:$0xff]
        %v4730 = vld [vmem:[%s4710 + $0x74] sm:$0xf]
        %v4731 = vld [vmem:[%s4710 + $0x78] sm:$0xff]
        %v4732 = vld [vmem:[%s4710 + $0x80] sm:$0xf]
        %v4733 = vld [vmem:[%s4710 + $0x84] sm:$0xff]
        %v4734 = vld [vmem:[%s4710 + $0x8c] sm:$0xf]
        %v4735 = vld [vmem:[%s4710 + $0x90] sm:$0xff]
        %v4736 = vld [vmem:[%s4710 + $0x98] sm:$0xf]
        %v4737 = vld [vmem:[%s4710 + $0x9c] sm:$0xff]
        %v4738 = vld [vmem:[%s4710 + $0xa4] sm:$0xf]
        %v4739 = vld [vmem:[%s4710 + $0xa8] sm:$0xff]
        %v4740 = vld [vmem:[%s4710 + $0xb0] sm:$0xf]
        %v4741 = vld [vmem:[%s4710 + $0xb4] sm:$0xff]
        %v4742 = vld [vmem:[%s4710 + $0xbc] sm:$0xf]
        %v4743 = vld [vmem:[%s4710 + $0xc0] sm:$0xff]
        %v4744 = vld [vmem:[%s4710 + $0xc8] sm:$0xf]
        %v4745 = vld [vmem:[%s4710 + $0xcc] sm:$0xff]
        %v4746 = vld [vmem:[%s4710 + $0xd4] sm:$0xf]
        %v4747 = vld [vmem:[%s4710 + $0xd8] sm:$0xff]
        %v4748 = vld [vmem:[%s4710 + $0xe0] sm:$0xf]
        %v4749 = vld [vmem:[%s4710 + $0xe4] sm:$0xff]
        %v4750 = vld [vmem:[%s4710 + $0xec] sm:$0xf]
        %v4751 = vld [vmem:[%s4710 + $0xf0] sm:$0xff]
        %v4752 = vld [vmem:[%s4710 + $0xf8] sm:$0xf]
        %v4753 = vld [vmem:[%s4710 + $0xfc] sm:$0xff]
        %v4754 = vld [vmem:[%s4710 + $0x104] sm:$0xf]
        %v4755 = vld [vmem:[%s4710 + $0x108] sm:$0xff]
        %v4756 = vld [vmem:[%s4710 + $0x110] sm:$0xf]
        %v4757 = vld [vmem:[%s4710 + $0x114] sm:$0xff]
        %v4758 = vld [vmem:[%s4710 + $0x11c] sm:$0xf]
        %v4759 = vld [vmem:[%s4710 + $0x120] sm:$0xff]
        %v4760 = vld [vmem:[%s4710 + $0x128] sm:$0xf]
        %v4761 = vld [vmem:[%s4710 + $0x12c] sm:$0xff]
        %v4762 = vld [vmem:[%s4710 + $0x134] sm:$0xf]
        %v4763 = vld [vmem:[%s4710 + $0x138] sm:$0xff]
        %v4764 = vld [vmem:[%s4710 + $0x140] sm:$0xf]
        %v4765 = vld [vmem:[%s4710 + $0x144] sm:$0xff]
        %v4766 = vld [vmem:[%s4710 + $0x14c] sm:$0xf]
        %v4767 = vld [vmem:[%s4710 + $0x150] sm:$0xff]
        %v4768 = vld [vmem:[%s4710 + $0x158] sm:$0xf]
        %v4769 = vld [vmem:[%s4710 + $0x15c] sm:$0xff]
        %v4770 = vld [vmem:[%s4710 + $0x164] sm:$0xf]
        %v4771 = vld [vmem:[%s4710 + $0x168] sm:$0xff]
        %v4772 = vld [vmem:[%s4710 + $0x170] sm:$0xf]
        %v4773 = vld [vmem:[%s4710 + $0x174] sm:$0xff]
        %v4774 = vld [vmem:[%s4710 + $0x17c] sm:$0xf]
        %v4775 = vrot.slane %v3618, 1
        %v4776 = vrot.slane %v3621, 1
        %v4843 = vunpack.c.l.b16 %v4711
        %v4844 = vunpack.c.h.b16 %v4711
        %v4845 = vunpack.c.l.b16 %v4712
        %v4846 = vunpack.c.l.b16 %v4713
        %v4847 = vunpack.c.h.b16 %v4713
        %v4848 = vunpack.c.l.b16 %v4714
        %v4849 = vunpack.c.l.b16 %v4715
        %v4850 = vunpack.c.h.b16 %v4715
        %v4851 = vunpack.c.l.b16 %v4716
        %v4852 = vunpack.c.l.b16 %v4717
        %v4853 = vunpack.c.h.b16 %v4717
        %v4854 = vunpack.c.l.b16 %v4718
        %v4855 = vunpack.c.l.b16 %v4719
        %v4856 = vunpack.c.h.b16 %v4719
        %v4857 = vunpack.c.l.b16 %v4720
        %v4858 = vunpack.c.l.b16 %v4721
        %v4859 = vunpack.c.h.b16 %v4721
        %v4860 = vunpack.c.l.b16 %v4722
        %v4861 = vunpack.c.l.b16 %v4723
        %v4862 = vunpack.c.h.b16 %v4723
        %v4863 = vunpack.c.l.b16 %v4724
        %v4864 = vunpack.c.l.b16 %v4725
        %v4865 = vunpack.c.h.b16 %v4725
        %v4866 = vunpack.c.l.b16 %v4726
        %v4867 = vunpack.c.l.b16 %v4727
        %v4868 = vunpack.c.h.b16 %v4727
        %v4869 = vunpack.c.l.b16 %v4728
        %v4870 = vunpack.c.l.b16 %v4729
        %v4871 = vunpack.c.h.b16 %v4729
        %v4872 = vunpack.c.l.b16 %v4730
        %v4873 = vunpack.c.l.b16 %v4731
        %v4874 = vunpack.c.h.b16 %v4731
        %v4875 = vunpack.c.l.b16 %v4732
        %v4876 = vunpack.c.l.b16 %v4733
        %v4877 = vunpack.c.h.b16 %v4733
        %v4878 = vunpack.c.l.b16 %v4734
        %v4879 = vunpack.c.l.b16 %v4735
        %v4880 = vunpack.c.h.b16 %v4735
        %v4881 = vunpack.c.l.b16 %v4736
        %v4882 = vunpack.c.l.b16 %v4737
        %v4883 = vunpack.c.h.b16 %v4737
        %v4884 = vunpack.c.l.b16 %v4738
        %v4885 = vunpack.c.l.b16 %v4739
        %v4886 = vunpack.c.h.b16 %v4739
        %v4887 = vunpack.c.l.b16 %v4740
        %v4888 = vunpack.c.l.b16 %v4741
        %v4889 = vunpack.c.h.b16 %v4741
        %v4890 = vunpack.c.l.b16 %v4742
        %v4891 = vunpack.c.l.b16 %v4743
        %v4892 = vunpack.c.h.b16 %v4743
        %v4893 = vunpack.c.l.b16 %v4744
        %v4894 = vunpack.c.l.b16 %v4745
        %v4895 = vunpack.c.h.b16 %v4745
        %v4896 = vunpack.c.l.b16 %v4746
        %v4897 = vunpack.c.l.b16 %v4747
        %v4898 = vunpack.c.h.b16 %v4747
        %v4899 = vunpack.c.l.b16 %v4748
        %v4900 = vunpack.c.l.b16 %v4749
        %v4901 = vunpack.c.h.b16 %v4749
        %v4902 = vunpack.c.l.b16 %v4750
        %v4903 = vunpack.c.l.b16 %v4751
        %v4904 = vunpack.c.h.b16 %v4751
        %v4905 = vunpack.c.l.b16 %v4752
        %v4906 = vunpack.c.l.b16 %v4753
        %v4907 = vunpack.c.h.b16 %v4753
        %v4908 = vunpack.c.l.b16 %v4754
        %v4909 = vunpack.c.l.b16 %v4755
        %v4910 = vunpack.c.h.b16 %v4755
        %v4911 = vunpack.c.l.b16 %v4756
        %v4912 = vunpack.c.l.b16 %v4757
        %v4913 = vunpack.c.h.b16 %v4757
        %v4914 = vunpack.c.l.b16 %v4758
        %v4915 = vunpack.c.l.b16 %v4759
        %v4916 = vunpack.c.h.b16 %v4759
        %v4917 = vunpack.c.l.b16 %v4760
        %v4918 = vunpack.c.l.b16 %v4761
        %v4919 = vunpack.c.h.b16 %v4761
        %v4920 = vunpack.c.l.b16 %v4762
        %v4921 = vunpack.c.l.b16 %v4763
        %v4922 = vunpack.c.h.b16 %v4763
        %v4923 = vunpack.c.l.b16 %v4764
        %v4924 = vunpack.c.l.b16 %v4765
        %v4925 = vunpack.c.h.b16 %v4765
        %v4926 = vunpack.c.l.b16 %v4766
        %v4927 = vunpack.c.l.b16 %v4767
        %v4928 = vunpack.c.h.b16 %v4767
        %v4929 = vunpack.c.l.b16 %v4768
        %v4930 = vunpack.c.l.b16 %v4769
        %v4931 = vunpack.c.h.b16 %v4769
        %v4932 = vunpack.c.l.b16 %v4770
        %v4933 = vunpack.c.l.b16 %v4771
        %v4934 = vunpack.c.h.b16 %v4771
        %v4935 = vunpack.c.l.b16 %v4772
        %v4936 = vunpack.c.l.b16 %v4773
        %v4937 = vunpack.c.h.b16 %v4773
        %v4938 = vunpack.c.l.b16 %v4774
        %v4939 = vpack.c.b16 %v4846, %v4843
        %v4940 = vpack.c.b16 %v4847, %v4844
        %v4941 = vpack.c.b16 %v4848, %v4845
        %v4942 = vpack.c.b16 %v4852, %v4849
        %v4943 = vpack.c.b16 %v4853, %v4850
        %v4944 = vpack.c.b16 %v4854, %v4851
        %v4945 = vpack.c.b16 %v4858, %v4855
        %v4946 = vpack.c.b16 %v4859, %v4856
        %v4947 = vpack.c.b16 %v4860, %v4857
        %v4948 = vpack.c.b16 %v4864, %v4861
        %v4949 = vpack.c.b16 %v4865, %v4862
        %v4950 = vpack.c.b16 %v4866, %v4863
        %v4951 = vpack.c.b16 %v4870, %v4867
        %v4952 = vpack.c.b16 %v4871, %v4868
        %v4953 = vpack.c.b16 %v4872, %v4869
        %v4954 = vpack.c.b16 %v4876, %v4873
        %v4955 = vpack.c.b16 %v4877, %v4874
        %v4956 = vpack.c.b16 %v4878, %v4875
        %v4957 = vpack.c.b16 %v4882, %v4879
        %v4958 = vpack.c.b16 %v4883, %v4880
        %v4959 = vpack.c.b16 %v4884, %v4881
        %v4960 = vpack.c.b16 %v4888, %v4885
        %v4961 = vpack.c.b16 %v4889, %v4886
        %v4962 = vpack.c.b16 %v4890, %v4887
        %v4963 = vpack.c.b16 %v4894, %v4891
        %v4964 = vpack.c.b16 %v4895, %v4892
        %v4965 = vpack.c.b16 %v4896, %v4893
        %v4966 = vpack.c.b16 %v4900, %v4897
        %v4967 = vpack.c.b16 %v4901, %v4898
        %v4968 = vpack.c.b16 %v4902, %v4899
        %v4969 = vpack.c.b16 %v4906, %v4903
        %v4970 = vpack.c.b16 %v4907, %v4904
        %v4971 = vpack.c.b16 %v4908, %v4905
        %v4972 = vpack.c.b16 %v4912, %v4909
        %v4973 = vpack.c.b16 %v4913, %v4910
        %v4974 = vpack.c.b16 %v4914, %v4911
        %v4975 = vpack.c.b16 %v4918, %v4915
        %v4976 = vpack.c.b16 %v4919, %v4916
        %v4977 = vpack.c.b16 %v4920, %v4917
        %v4978 = vpack.c.b16 %v4924, %v4921
        %v4979 = vpack.c.b16 %v4925, %v4922
        %v4980 = vpack.c.b16 %v4926, %v4923
        %v4981 = vpack.c.b16 %v4930, %v4927
        %v4982 = vpack.c.b16 %v4931, %v4928
        %v4983 = vpack.c.b16 %v4932, %v4929
        %v4984 = vpack.c.b16 %v4936, %v4933
        %v4985 = vpack.c.b16 %v4937, %v4934
        %v4986 = vpack.c.b16 %v4938, %v4935
        %5035 = vmatprep.subr.bf16.mxu0 %v4940
        %5036 = vmatpush1.bf16.msra.mxu0 %v4939
        %5037 = vmatprep.subr.bf16.mxu0 %v4943
        %5038 = vmatpush1.bf16.msra.mxu0 %v4942
        %5039 = vmatprep.subr.bf16.mxu0 %v4946
        %5040 = vmatpush1.bf16.msra.mxu0 %v4945
        %5041 = vmatprep.subr.bf16.mxu0 %v4949
        %5042 = vmatpush1.bf16.msra.mxu0 %v4948
        %5043 = vmatprep.subr.bf16.mxu0 %v4952
        %5044 = vmatpush1.bf16.msra.mxu0 %v4951
        %5045 = vmatprep.subr.bf16.mxu0 %v4955
        %5046 = vmatpush1.bf16.msra.mxu0 %v4954
        %5047 = vmatprep.subr.bf16.mxu0 %v4958
        %5048 = vmatpush1.bf16.msra.mxu0 %v4957
        %5049 = vmatprep.subr.bf16.mxu0 %v4961
        %5050 = vmatpush1.bf16.msra.mxu0 %v4960
        %5051 = vmatprep.subr.bf16.mxu0 %v4964
        %5052 = vmatpush1.bf16.msra.mxu0 %v4963
        %5053 = vmatprep.subr.bf16.mxu0 %v4967
        %5054 = vmatpush1.bf16.msra.mxu0 %v4966
        %5055 = vmatprep.subr.bf16.mxu0 %v4970
        %5056 = vmatpush1.bf16.msra.mxu0 %v4969
        %5057 = vmatprep.subr.bf16.mxu0 %v4973
        %5058 = vmatpush1.bf16.msra.mxu0 %v4972
        %5059 = vmatprep.subr.bf16.mxu0 %v4976
        %5060 = vmatpush1.bf16.msra.mxu0 %v4975
        %5061 = vmatprep.subr.bf16.mxu0 %v4979
        %5062 = vmatpush1.bf16.msra.mxu0 %v4978
        %5063 = vmatprep.subr.bf16.mxu0 %v4982
        %5064 = vmatpush1.bf16.msra.mxu0 %v4981
        %5065 = vmatprep.subr.bf16.mxu0 %v4985
        %5066 = vmatpush1.bf16.msra.mxu0 %v4984
        %5067 = vmatprep.mubr.bf16.mxu0 %v4776
        %5068 = vmatmul.mubr.bf16.gmra.mrb[0].mxu0 %v4775
        %v5069 = vpop.f32.mrb[0].mxu0
        %v5070 = vadd.f32 0.0, %v5069
        %v5071 = vpop.f32.mrb[0].mxu0
        %v5072 = vadd.f32 0.0, %v5071
        %v5073 = vpop.f32.mrb[0].mxu0
        %v5074 = vpop.f32.mrb[0].mxu0
        %5075 = vdwg.mxu0
        %5076 = vmatprep.subr.bf16.mxu0 0
        %5077 = vmatpush1.bf16.msra.mxu0 %v4941
        %5078 = vmatprep.subr.bf16.mxu0 0
        %5079 = vmatpush1.bf16.msra.mxu0 %v4944
        %5080 = vmatprep.subr.bf16.mxu0 0
        %5081 = vmatpush1.bf16.msra.mxu0 %v4947
        %5082 = vmatprep.subr.bf16.mxu0 0
        %5083 = vmatpush1.bf16.msra.mxu0 %v4950
        %5084 = vmatprep.subr.bf16.mxu0 0
        %5085 = vmatpush1.bf16.msra.mxu0 %v4953
        %5086 = vmatprep.subr.bf16.mxu0 0
        %5087 = vmatpush1.bf16.msra.mxu0 %v4956
        %5088 = vmatprep.subr.bf16.mxu0 0
        %5089 = vmatpush1.bf16.msra.mxu0 %v4959
        %5090 = vmatprep.subr.bf16.mxu0 0
        %5091 = vmatpush1.bf16.msra.mxu0 %v4962
        %5092 = vmatprep.subr.bf16.mxu0 0
        %5093 = vmatpush1.bf16.msra.mxu0 %v4965
        %5094 = vmatprep.subr.bf16.mxu0 0
        %5095 = vmatpush1.bf16.msra.mxu0 %v4968
        %5096 = vmatprep.subr.bf16.mxu0 0
        %5097 = vmatpush1.bf16.msra.mxu0 %v4971
        %5098 = vmatprep.subr.bf16.mxu0 0
        %5099 = vmatpush1.bf16.msra.mxu0 %v4974
        %5100 = vmatprep.subr.bf16.mxu0 0
        %5101 = vmatpush1.bf16.msra.mxu0 %v4977
        %5102 = vmatprep.subr.bf16.mxu0 0
        %5103 = vmatpush1.bf16.msra.mxu0 %v4980
        %5104 = vmatprep.subr.bf16.mxu0 0
        %5105 = vmatpush1.bf16.msra.mxu0 %v4983
        %5106 = vmatprep.subr.bf16.mxu0 0
        %5107 = vmatpush1.bf16.msra.mxu0 %v4986
        %5108 = vmatprep.mubr.bf16.mxu0 %v4776
        %5109 = vmatmul.mubr.bf16.gmra.mrb[0].mxu0 %v4775
        %v5110 = vpop.f32.mrb[0].mxu0
        %v5111 = vadd.f32 0.0, %v5110
        %v5112 = vpop.f32.mrb[0].mxu0
        %v5113 = vpop.f32.mrb[0].mxu0
        %v5114 = vpop.f32.mrb[0].mxu0
        %5115 = vdwg.mxu0
        %v5116 = vadd.f32 %v4707, %v5070
        %v5117 = vadd.f32 %v4708, %v5072
        %v5118 = vadd.f32 %v4709, %v5111
        %s5119 = scalar_lea.vmem %s11, 1536
        %v5120 = vld [vmem:[%s5119] sm:$0xff]
        %v5121 = vld [vmem:[%s5119 + $0x8] sm:$0xf]
        %v5122 = vld [vmem:[%s5119 + $0xc] sm:$0xff]
        %v5123 = vld [vmem:[%s5119 + $0x14] sm:$0xf]
        %v5124 = vld [vmem:[%s5119 + $0x18] sm:$0xff]
        %v5125 = vld [vmem:[%s5119 + $0x20] sm:$0xf]
        %v5126 = vld [vmem:[%s5119 + $0x24] sm:$0xff]
        %v5127 = vld [vmem:[%s5119 + $0x2c] sm:$0xf]
        %v5128 = vld [vmem:[%s5119 + $0x30] sm:$0xff]
        %v5129 = vld [vmem:[%s5119 + $0x38] sm:$0xf]
        %v5130 = vld [vmem:[%s5119 + $0x3c] sm:$0xff]
        %v5131 = vld [vmem:[%s5119 + $0x44] sm:$0xf]
        %v5132 = vld [vmem:[%s5119 + $0x48] sm:$0xff]
        %v5133 = vld [vmem:[%s5119 + $0x50] sm:$0xf]
        %v5134 = vld [vmem:[%s5119 + $0x54] sm:$0xff]
        %v5135 = vld [vmem:[%s5119 + $0x5c] sm:$0xf]
        %v5136 = vld [vmem:[%s5119 + $0x60] sm:$0xff]
        %v5137 = vld [vmem:[%s5119 + $0x68] sm:$0xf]
        %v5138 = vld [vmem:[%s5119 + $0x6c] sm:$0xff]
        %v5139 = vld [vmem:[%s5119 + $0x74] sm:$0xf]
        %v5140 = vld [vmem:[%s5119 + $0x78] sm:$0xff]
        %v5141 = vld [vmem:[%s5119 + $0x80] sm:$0xf]
        %v5142 = vld [vmem:[%s5119 + $0x84] sm:$0xff]
        %v5143 = vld [vmem:[%s5119 + $0x8c] sm:$0xf]
        %v5144 = vld [vmem:[%s5119 + $0x90] sm:$0xff]
        %v5145 = vld [vmem:[%s5119 + $0x98] sm:$0xf]
        %v5146 = vld [vmem:[%s5119 + $0x9c] sm:$0xff]
        %v5147 = vld [vmem:[%s5119 + $0xa4] sm:$0xf]
        %v5148 = vld [vmem:[%s5119 + $0xa8] sm:$0xff]
        %v5149 = vld [vmem:[%s5119 + $0xb0] sm:$0xf]
        %v5150 = vld [vmem:[%s5119 + $0xb4] sm:$0xff]
        %v5151 = vld [vmem:[%s5119 + $0xbc] sm:$0xf]
        %v5152 = vld [vmem:[%s5119 + $0xc0] sm:$0xff]
        %v5153 = vld [vmem:[%s5119 + $0xc8] sm:$0xf]
        %v5154 = vld [vmem:[%s5119 + $0xcc] sm:$0xff]
        %v5155 = vld [vmem:[%s5119 + $0xd4] sm:$0xf]
        %v5156 = vld [vmem:[%s5119 + $0xd8] sm:$0xff]
        %v5157 = vld [vmem:[%s5119 + $0xe0] sm:$0xf]
        %v5158 = vld [vmem:[%s5119 + $0xe4] sm:$0xff]
        %v5159 = vld [vmem:[%s5119 + $0xec] sm:$0xf]
        %v5160 = vld [vmem:[%s5119 + $0xf0] sm:$0xff]
        %v5161 = vld [vmem:[%s5119 + $0xf8] sm:$0xf]
        %v5162 = vld [vmem:[%s5119 + $0xfc] sm:$0xff]
        %v5163 = vld [vmem:[%s5119 + $0x104] sm:$0xf]
        %v5164 = vld [vmem:[%s5119 + $0x108] sm:$0xff]
        %v5165 = vld [vmem:[%s5119 + $0x110] sm:$0xf]
        %v5166 = vld [vmem:[%s5119 + $0x114] sm:$0xff]
        %v5167 = vld [vmem:[%s5119 + $0x11c] sm:$0xf]
        %v5168 = vld [vmem:[%s5119 + $0x120] sm:$0xff]
        %v5169 = vld [vmem:[%s5119 + $0x128] sm:$0xf]
        %v5170 = vld [vmem:[%s5119 + $0x12c] sm:$0xff]
        %v5171 = vld [vmem:[%s5119 + $0x134] sm:$0xf]
        %v5172 = vld [vmem:[%s5119 + $0x138] sm:$0xff]
        %v5173 = vld [vmem:[%s5119 + $0x140] sm:$0xf]
        %v5174 = vld [vmem:[%s5119 + $0x144] sm:$0xff]
        %v5175 = vld [vmem:[%s5119 + $0x14c] sm:$0xf]
        %v5176 = vld [vmem:[%s5119 + $0x150] sm:$0xff]
        %v5177 = vld [vmem:[%s5119 + $0x158] sm:$0xf]
        %v5178 = vld [vmem:[%s5119 + $0x15c] sm:$0xff]
        %v5179 = vld [vmem:[%s5119 + $0x164] sm:$0xf]
        %v5180 = vld [vmem:[%s5119 + $0x168] sm:$0xff]
        %v5181 = vld [vmem:[%s5119 + $0x170] sm:$0xf]
        %v5182 = vld [vmem:[%s5119 + $0x174] sm:$0xff]
        %v5183 = vld [vmem:[%s5119 + $0x17c] sm:$0xf]
        %v5184 = vrot.slane %v3486, 2
        %v5185 = vrot.slane %v3487, 2
        %v5252 = vunpack.c.l.b16 %v5120
        %v5253 = vunpack.c.h.b16 %v5120
        %v5254 = vunpack.c.l.b16 %v5121
        %v5255 = vunpack.c.l.b16 %v5122
        %v5256 = vunpack.c.h.b16 %v5122
        %v5257 = vunpack.c.l.b16 %v5123
        %v5258 = vunpack.c.l.b16 %v5124
        %v5259 = vunpack.c.h.b16 %v5124
        %v5260 = vunpack.c.l.b16 %v5125
        %v5261 = vunpack.c.l.b16 %v5126
        %v5262 = vunpack.c.h.b16 %v5126
        %v5263 = vunpack.c.l.b16 %v5127
        %v5264 = vunpack.c.l.b16 %v5128
        %v5265 = vunpack.c.h.b16 %v5128
        %v5266 = vunpack.c.l.b16 %v5129
        %v5267 = vunpack.c.l.b16 %v5130
        %v5268 = vunpack.c.h.b16 %v5130
        %v5269 = vunpack.c.l.b16 %v5131
        %v5270 = vunpack.c.l.b16 %v5132
        %v5271 = vunpack.c.h.b16 %v5132
        %v5272 = vunpack.c.l.b16 %v5133
        %v5273 = vunpack.c.l.b16 %v5134
        %v5274 = vunpack.c.h.b16 %v5134
        %v5275 = vunpack.c.l.b16 %v5135
        %v5276 = vunpack.c.l.b16 %v5136
        %v5277 = vunpack.c.h.b16 %v5136
        %v5278 = vunpack.c.l.b16 %v5137
        %v5279 = vunpack.c.l.b16 %v5138
        %v5280 = vunpack.c.h.b16 %v5138
        %v5281 = vunpack.c.l.b16 %v5139
        %v5282 = vunpack.c.l.b16 %v5140
        %v5283 = vunpack.c.h.b16 %v5140
        %v5284 = vunpack.c.l.b16 %v5141
        %v5285 = vunpack.c.l.b16 %v5142
        %v5286 = vunpack.c.h.b16 %v5142
        %v5287 = vunpack.c.l.b16 %v5143
        %v5288 = vunpack.c.l.b16 %v5144
        %v5289 = vunpack.c.h.b16 %v5144
        %v5290 = vunpack.c.l.b16 %v5145
        %v5291 = vunpack.c.l.b16 %v5146
        %v5292 = vunpack.c.h.b16 %v5146
        %v5293 = vunpack.c.l.b16 %v5147
        %v5294 = vunpack.c.l.b16 %v5148
        %v5295 = vunpack.c.h.b16 %v5148
        %v5296 = vunpack.c.l.b16 %v5149
        %v5297 = vunpack.c.l.b16 %v5150
        %v5298 = vunpack.c.h.b16 %v5150
        %v5299 = vunpack.c.l.b16 %v5151
        %v5300 = vunpack.c.l.b16 %v5152
        %v5301 = vunpack.c.h.b16 %v5152
        %v5302 = vunpack.c.l.b16 %v5153
        %v5303 = vunpack.c.l.b16 %v5154
        %v5304 = vunpack.c.h.b16 %v5154
        %v5305 = vunpack.c.l.b16 %v5155
        %v5306 = vunpack.c.l.b16 %v5156
        %v5307 = vunpack.c.h.b16 %v5156
        %v5308 = vunpack.c.l.b16 %v5157
        %v5309 = vunpack.c.l.b16 %v5158
        %v5310 = vunpack.c.h.b16 %v5158
        %v5311 = vunpack.c.l.b16 %v5159
        %v5312 = vunpack.c.l.b16 %v5160
        %v5313 = vunpack.c.h.b16 %v5160
        %v5314 = vunpack.c.l.b16 %v5161
        %v5315 = vunpack.c.l.b16 %v5162
        %v5316 = vunpack.c.h.b16 %v5162
        %v5317 = vunpack.c.l.b16 %v5163
        %v5318 = vunpack.c.l.b16 %v5164
        %v5319 = vunpack.c.h.b16 %v5164
        %v5320 = vunpack.c.l.b16 %v5165
        %v5321 = vunpack.c.l.b16 %v5166
        %v5322 = vunpack.c.h.b16 %v5166
        %v5323 = vunpack.c.l.b16 %v5167
        %v5324 = vunpack.c.l.b16 %v5168
        %v5325 = vunpack.c.h.b16 %v5168
        %v5326 = vunpack.c.l.b16 %v5169
        %v5327 = vunpack.c.l.b16 %v5170
        %v5328 = vunpack.c.h.b16 %v5170
        %v5329 = vunpack.c.l.b16 %v5171
        %v5330 = vunpack.c.l.b16 %v5172
        %v5331 = vunpack.c.h.b16 %v5172
        %v5332 = vunpack.c.l.b16 %v5173
        %v5333 = vunpack.c.l.b16 %v5174
        %v5334 = vunpack.c.h.b16 %v5174
        %v5335 = vunpack.c.l.b16 %v5175
        %v5336 = vunpack.c.l.b16 %v5176
        %v5337 = vunpack.c.h.b16 %v5176
        %v5338 = vunpack.c.l.b16 %v5177
        %v5339 = vunpack.c.l.b16 %v5178
        %v5340 = vunpack.c.h.b16 %v5178
        %v5341 = vunpack.c.l.b16 %v5179
        %v5342 = vunpack.c.l.b16 %v5180
        %v5343 = vunpack.c.h.b16 %v5180
        %v5344 = vunpack.c.l.b16 %v5181
        %v5345 = vunpack.c.l.b16 %v5182
        %v5346 = vunpack.c.h.b16 %v5182
        %v5347 = vunpack.c.l.b16 %v5183
        %v5348 = vpack.c.b16 %v5255, %v5252
        %v5349 = vpack.c.b16 %v5256, %v5253
        %v5350 = vpack.c.b16 %v5257, %v5254
        %v5351 = vpack.c.b16 %v5261, %v5258
        %v5352 = vpack.c.b16 %v5262, %v5259
        %v5353 = vpack.c.b16 %v5263, %v5260
        %v5354 = vpack.c.b16 %v5267, %v5264
        %v5355 = vpack.c.b16 %v5268, %v5265
        %v5356 = vpack.c.b16 %v5269, %v5266
        %v5357 = vpack.c.b16 %v5273, %v5270
        %v5358 = vpack.c.b16 %v5274, %v5271
        %v5359 = vpack.c.b16 %v5275, %v5272
        %v5360 = vpack.c.b16 %v5279, %v5276
        %v5361 = vpack.c.b16 %v5280, %v5277
        %v5362 = vpack.c.b16 %v5281, %v5278
        %v5363 = vpack.c.b16 %v5285, %v5282
        %v5364 = vpack.c.b16 %v5286, %v5283
        %v5365 = vpack.c.b16 %v5287, %v5284
        %v5366 = vpack.c.b16 %v5291, %v5288
        %v5367 = vpack.c.b16 %v5292, %v5289
        %v5368 = vpack.c.b16 %v5293, %v5290
        %v5369 = vpack.c.b16 %v5297, %v5294
        %v5370 = vpack.c.b16 %v5298, %v5295
        %v5371 = vpack.c.b16 %v5299, %v5296
        %v5372 = vpack.c.b16 %v5303, %v5300
        %v5373 = vpack.c.b16 %v5304, %v5301
        %v5374 = vpack.c.b16 %v5305, %v5302
        %v5375 = vpack.c.b16 %v5309, %v5306
        %v5376 = vpack.c.b16 %v5310, %v5307
        %v5377 = vpack.c.b16 %v5311, %v5308
        %v5378 = vpack.c.b16 %v5315, %v5312
        %v5379 = vpack.c.b16 %v5316, %v5313
        %v5380 = vpack.c.b16 %v5317, %v5314
        %v5381 = vpack.c.b16 %v5321, %v5318
        %v5382 = vpack.c.b16 %v5322, %v5319
        %v5383 = vpack.c.b16 %v5323, %v5320
        %v5384 = vpack.c.b16 %v5327, %v5324
        %v5385 = vpack.c.b16 %v5328, %v5325
        %v5386 = vpack.c.b16 %v5329, %v5326
        %v5387 = vpack.c.b16 %v5333, %v5330
        %v5388 = vpack.c.b16 %v5334, %v5331
        %v5389 = vpack.c.b16 %v5335, %v5332
        %v5390 = vpack.c.b16 %v5339, %v5336
        %v5391 = vpack.c.b16 %v5340, %v5337
        %v5392 = vpack.c.b16 %v5341, %v5338
        %v5393 = vpack.c.b16 %v5345, %v5342
        %v5394 = vpack.c.b16 %v5346, %v5343
        %v5395 = vpack.c.b16 %v5347, %v5344
        %5444 = vmatprep.subr.bf16.mxu0 %v5349
        %5445 = vmatpush1.bf16.msra.mxu0 %v5348
        %5446 = vmatprep.subr.bf16.mxu0 %v5352
        %5447 = vmatpush1.bf16.msra.mxu0 %v5351
        %5448 = vmatprep.subr.bf16.mxu0 %v5355
        %5449 = vmatpush1.bf16.msra.mxu0 %v5354
        %5450 = vmatprep.subr.bf16.mxu0 %v5358
        %5451 = vmatpush1.bf16.msra.mxu0 %v5357
        %5452 = vmatprep.subr.bf16.mxu0 %v5361
        %5453 = vmatpush1.bf16.msra.mxu0 %v5360
        %5454 = vmatprep.subr.bf16.mxu0 %v5364
        %5455 = vmatpush1.bf16.msra.mxu0 %v5363
        %5456 = vmatprep.subr.bf16.mxu0 %v5367
        %5457 = vmatpush1.bf16.msra.mxu0 %v5366
        %5458 = vmatprep.subr.bf16.mxu0 %v5370
        %5459 = vmatpush1.bf16.msra.mxu0 %v5369
        %5460 = vmatprep.subr.bf16.mxu0 %v5373
        %5461 = vmatpush1.bf16.msra.mxu0 %v5372
        %5462 = vmatprep.subr.bf16.mxu0 %v5376
        %5463 = vmatpush1.bf16.msra.mxu0 %v5375
        %5464 = vmatprep.subr.bf16.mxu0 %v5379
        %5465 = vmatpush1.bf16.msra.mxu0 %v5378
        %5466 = vmatprep.subr.bf16.mxu0 %v5382
        %5467 = vmatpush1.bf16.msra.mxu0 %v5381
        %5468 = vmatprep.subr.bf16.mxu0 %v5385
        %5469 = vmatpush1.bf16.msra.mxu0 %v5384
        %5470 = vmatprep.subr.bf16.mxu0 %v5388
        %5471 = vmatpush1.bf16.msra.mxu0 %v5387
        %5472 = vmatprep.subr.bf16.mxu0 %v5391
        %5473 = vmatpush1.bf16.msra.mxu0 %v5390
        %5474 = vmatprep.subr.bf16.mxu0 %v5394
        %5475 = vmatpush1.bf16.msra.mxu0 %v5393
        %5476 = vmatprep.mubr.bf16.mxu0 %v5185
        %5477 = vmatmul.mubr.bf16.gmra.mrb[0].mxu0 %v5184
        %v5478 = vpop.f32.mrb[0].mxu0
        %v5479 = vadd.f32 0.0, %v5478
        %v5480 = vpop.f32.mrb[0].mxu0
        %v5481 = vadd.f32 0.0, %v5480
        %v5482 = vpop.f32.mrb[0].mxu0
        %v5483 = vpop.f32.mrb[0].mxu0
        %5484 = vdwg.mxu0
        %5485 = vmatprep.subr.bf16.mxu0 0
        %5486 = vmatpush1.bf16.msra.mxu0 %v5350
        %5487 = vmatprep.subr.bf16.mxu0 0
        %5488 = vmatpush1.bf16.msra.mxu0 %v5353
        %5489 = vmatprep.subr.bf16.mxu0 0
        %5490 = vmatpush1.bf16.msra.mxu0 %v5356
        %5491 = vmatprep.subr.bf16.mxu0 0
        %5492 = vmatpush1.bf16.msra.mxu0 %v5359
        %5493 = vmatprep.subr.bf16.mxu0 0
        %5494 = vmatpush1.bf16.msra.mxu0 %v5362
        %5495 = vmatprep.subr.bf16.mxu0 0
        %5496 = vmatpush1.bf16.msra.mxu0 %v5365
        %5497 = vmatprep.subr.bf16.mxu0 0
        %5498 = vmatpush1.bf16.msra.mxu0 %v5368
        %5499 = vmatprep.subr.bf16.mxu0 0
        %5500 = vmatpush1.bf16.msra.mxu0 %v5371
        %5501 = vmatprep.subr.bf16.mxu0 0
        %5502 = vmatpush1.bf16.msra.mxu0 %v5374
        %5503 = vmatprep.subr.bf16.mxu0 0
        %5504 = vmatpush1.bf16.msra.mxu0 %v5377
        %5505 = vmatprep.subr.bf16.mxu0 0
        %5506 = vmatpush1.bf16.msra.mxu0 %v5380
        %5507 = vmatprep.subr.bf16.mxu0 0
        %5508 = vmatpush1.bf16.msra.mxu0 %v5383
        %5509 = vmatprep.subr.bf16.mxu0 0
        %5510 = vmatpush1.bf16.msra.mxu0 %v5386
        %5511 = vmatprep.subr.bf16.mxu0 0
        %5512 = vmatpush1.bf16.msra.mxu0 %v5389
        %5513 = vmatprep.subr.bf16.mxu0 0
        %5514 = vmatpush1.bf16.msra.mxu0 %v5392
        %5515 = vmatprep.subr.bf16.mxu0 0
        %5516 = vmatpush1.bf16.msra.mxu0 %v5395
        %5517 = vmatprep.mubr.bf16.mxu0 %v5185
        %5518 = vmatmul.mubr.bf16.gmra.mrb[0].mxu0 %v5184
        %v5519 = vpop.f32.mrb[0].mxu0
        %v5520 = vadd.f32 0.0, %v5519
        %v5521 = vpop.f32.mrb[0].mxu0
        %v5522 = vpop.f32.mrb[0].mxu0
        %v5523 = vpop.f32.mrb[0].mxu0
        %5524 = vdwg.mxu0
        %v5525 = vadd.f32 %v5116, %v5479
        %v5526 = vadd.f32 %v5117, %v5481
        %v5527 = vadd.f32 %v5118, %v5520
        %s5528 = scalar_lea.vmem %s11, 1920
        %v5529 = vld [vmem:[%s5528] sm:$0xff]
        %v5530 = vld [vmem:[%s5528 + $0x8] sm:$0xf]
        %v5531 = vld [vmem:[%s5528 + $0xc] sm:$0xff]
        %v5532 = vld [vmem:[%s5528 + $0x14] sm:$0xf]
        %v5533 = vld [vmem:[%s5528 + $0x18] sm:$0xff]
        %v5534 = vld [vmem:[%s5528 + $0x20] sm:$0xf]
        %v5535 = vld [vmem:[%s5528 + $0x24] sm:$0xff]
        %v5536 = vld [vmem:[%s5528 + $0x2c] sm:$0xf]
        %v5537 = vld [vmem:[%s5528 + $0x30] sm:$0xff]
        %v5538 = vld [vmem:[%s5528 + $0x38] sm:$0xf]
        %v5539 = vld [vmem:[%s5528 + $0x3c] sm:$0xff]
        %v5540 = vld [vmem:[%s5528 + $0x44] sm:$0xf]
        %v5541 = vld [vmem:[%s5528 + $0x48] sm:$0xff]
        %v5542 = vld [vmem:[%s5528 + $0x50] sm:$0xf]
        %v5543 = vld [vmem:[%s5528 + $0x54] sm:$0xff]
        %v5544 = vld [vmem:[%s5528 + $0x5c] sm:$0xf]
        %v5545 = vld [vmem:[%s5528 + $0x60] sm:$0xff]
        %v5546 = vld [vmem:[%s5528 + $0x68] sm:$0xf]
        %v5547 = vld [vmem:[%s5528 + $0x6c] sm:$0xff]
        %v5548 = vld [vmem:[%s5528 + $0x74] sm:$0xf]
        %v5549 = vld [vmem:[%s5528 + $0x78] sm:$0xff]
        %v5550 = vld [vmem:[%s5528 + $0x80] sm:$0xf]
        %v5551 = vld [vmem:[%s5528 + $0x84] sm:$0xff]
        %v5552 = vld [vmem:[%s5528 + $0x8c] sm:$0xf]
        %v5553 = vld [vmem:[%s5528 + $0x90] sm:$0xff]
        %v5554 = vld [vmem:[%s5528 + $0x98] sm:$0xf]
        %v5555 = vld [vmem:[%s5528 + $0x9c] sm:$0xff]
        %v5556 = vld [vmem:[%s5528 + $0xa4] sm:$0xf]
        %v5557 = vld [vmem:[%s5528 + $0xa8] sm:$0xff]
        %v5558 = vld [vmem:[%s5528 + $0xb0] sm:$0xf]
        %v5559 = vld [vmem:[%s5528 + $0xb4] sm:$0xff]
        %v5560 = vld [vmem:[%s5528 + $0xbc] sm:$0xf]
        %v5561 = vld [vmem:[%s5528 + $0xc0] sm:$0xff]
        %v5562 = vld [vmem:[%s5528 + $0xc8] sm:$0xf]
        %v5563 = vld [vmem:[%s5528 + $0xcc] sm:$0xff]
        %v5564 = vld [vmem:[%s5528 + $0xd4] sm:$0xf]
        %v5565 = vld [vmem:[%s5528 + $0xd8] sm:$0xff]
        %v5566 = vld [vmem:[%s5528 + $0xe0] sm:$0xf]
        %v5567 = vld [vmem:[%s5528 + $0xe4] sm:$0xff]
        %v5568 = vld [vmem:[%s5528 + $0xec] sm:$0xf]
        %v5569 = vld [vmem:[%s5528 + $0xf0] sm:$0xff]
        %v5570 = vld [vmem:[%s5528 + $0xf8] sm:$0xf]
        %v5571 = vld [vmem:[%s5528 + $0xfc] sm:$0xff]
        %v5572 = vld [vmem:[%s5528 + $0x104] sm:$0xf]
        %v5573 = vld [vmem:[%s5528 + $0x108] sm:$0xff]
        %v5574 = vld [vmem:[%s5528 + $0x110] sm:$0xf]
        %v5575 = vld [vmem:[%s5528 + $0x114] sm:$0xff]
        %v5576 = vld [vmem:[%s5528 + $0x11c] sm:$0xf]
        %v5577 = vld [vmem:[%s5528 + $0x120] sm:$0xff]
        %v5578 = vld [vmem:[%s5528 + $0x128] sm:$0xf]
        %v5579 = vld [vmem:[%s5528 + $0x12c] sm:$0xff]
        %v5580 = vld [vmem:[%s5528 + $0x134] sm:$0xf]
        %v5581 = vld [vmem:[%s5528 + $0x138] sm:$0xff]
        %v5582 = vld [vmem:[%s5528 + $0x140] sm:$0xf]
        %v5583 = vld [vmem:[%s5528 + $0x144] sm:$0xff]
        %v5584 = vld [vmem:[%s5528 + $0x14c] sm:$0xf]
        %v5585 = vld [vmem:[%s5528 + $0x150] sm:$0xff]
        %v5586 = vld [vmem:[%s5528 + $0x158] sm:$0xf]
        %v5587 = vld [vmem:[%s5528 + $0x15c] sm:$0xff]
        %v5588 = vld [vmem:[%s5528 + $0x164] sm:$0xf]
        %v5589 = vld [vmem:[%s5528 + $0x168] sm:$0xff]
        %v5590 = vld [vmem:[%s5528 + $0x170] sm:$0xf]
        %v5591 = vld [vmem:[%s5528 + $0x174] sm:$0xff]
        %v5592 = vld [vmem:[%s5528 + $0x17c] sm:$0xf]
        %v5593 = vrot.slane %v3618, 2
        %v5594 = vrot.slane %v3621, 2
        %v5661 = vunpack.c.l.b16 %v5529
        %v5662 = vunpack.c.h.b16 %v5529
        %v5663 = vunpack.c.l.b16 %v5530
        %v5664 = vunpack.c.l.b16 %v5531
        %v5665 = vunpack.c.h.b16 %v5531
        %v5666 = vunpack.c.l.b16 %v5532
        %v5667 = vunpack.c.l.b16 %v5533
        %v5668 = vunpack.c.h.b16 %v5533
        %v5669 = vunpack.c.l.b16 %v5534
        %v5670 = vunpack.c.l.b16 %v5535
        %v5671 = vunpack.c.h.b16 %v5535
        %v5672 = vunpack.c.l.b16 %v5536
        %v5673 = vunpack.c.l.b16 %v5537
        %v5674 = vunpack.c.h.b16 %v5537
        %v5675 = vunpack.c.l.b16 %v5538
        %v5676 = vunpack.c.l.b16 %v5539
        %v5677 = vunpack.c.h.b16 %v5539
        %v5678 = vunpack.c.l.b16 %v5540
        %v5679 = vunpack.c.l.b16 %v5541
        %v5680 = vunpack.c.h.b16 %v5541
        %v5681 = vunpack.c.l.b16 %v5542
        %v5682 = vunpack.c.l.b16 %v5543
        %v5683 = vunpack.c.h.b16 %v5543
        %v5684 = vunpack.c.l.b16 %v5544
        %v5685 = vunpack.c.l.b16 %v5545
        %v5686 = vunpack.c.h.b16 %v5545
        %v5687 = vunpack.c.l.b16 %v5546
        %v5688 = vunpack.c.l.b16 %v5547
        %v5689 = vunpack.c.h.b16 %v5547
        %v5690 = vunpack.c.l.b16 %v5548
        %v5691 = vunpack.c.l.b16 %v5549
        %v5692 = vunpack.c.h.b16 %v5549
        %v5693 = vunpack.c.l.b16 %v5550
        %v5694 = vunpack.c.l.b16 %v5551
        %v5695 = vunpack.c.h.b16 %v5551
        %v5696 = vunpack.c.l.b16 %v5552
        %v5697 = vunpack.c.l.b16 %v5553
        %v5698 = vunpack.c.h.b16 %v5553
        %v5699 = vunpack.c.l.b16 %v5554
        %v5700 = vunpack.c.l.b16 %v5555
        %v5701 = vunpack.c.h.b16 %v5555
        %v5702 = vunpack.c.l.b16 %v5556
        %v5703 = vunpack.c.l.b16 %v5557
        %v5704 = vunpack.c.h.b16 %v5557
        %v5705 = vunpack.c.l.b16 %v5558
        %v5706 = vunpack.c.l.b16 %v5559
        %v5707 = vunpack.c.h.b16 %v5559
        %v5708 = vunpack.c.l.b16 %v5560
        %v5709 = vunpack.c.l.b16 %v5561
        %v5710 = vunpack.c.h.b16 %v5561
        %v5711 = vunpack.c.l.b16 %v5562
        %v5712 = vunpack.c.l.b16 %v5563
        %v5713 = vunpack.c.h.b16 %v5563
        %v5714 = vunpack.c.l.b16 %v5564
        %v5715 = vunpack.c.l.b16 %v5565
        %v5716 = vunpack.c.h.b16 %v5565
        %v5717 = vunpack.c.l.b16 %v5566
        %v5718 = vunpack.c.l.b16 %v5567
        %v5719 = vunpack.c.h.b16 %v5567
        %v5720 = vunpack.c.l.b16 %v5568
        %v5721 = vunpack.c.l.b16 %v5569
        %v5722 = vunpack.c.h.b16 %v5569
        %v5723 = vunpack.c.l.b16 %v5570
        %v5724 = vunpack.c.l.b16 %v5571
        %v5725 = vunpack.c.h.b16 %v5571
        %v5726 = vunpack.c.l.b16 %v5572
        %v5727 = vunpack.c.l.b16 %v5573
        %v5728 = vunpack.c.h.b16 %v5573
        %v5729 = vunpack.c.l.b16 %v5574
        %v5730 = vunpack.c.l.b16 %v5575
        %v5731 = vunpack.c.h.b16 %v5575
        %v5732 = vunpack.c.l.b16 %v5576
        %v5733 = vunpack.c.l.b16 %v5577
        %v5734 = vunpack.c.h.b16 %v5577
        %v5735 = vunpack.c.l.b16 %v5578
        %v5736 = vunpack.c.l.b16 %v5579
        %v5737 = vunpack.c.h.b16 %v5579
        %v5738 = vunpack.c.l.b16 %v5580
        %v5739 = vunpack.c.l.b16 %v5581
        %v5740 = vunpack.c.h.b16 %v5581
        %v5741 = vunpack.c.l.b16 %v5582
        %v5742 = vunpack.c.l.b16 %v5583
        %v5743 = vunpack.c.h.b16 %v5583
        %v5744 = vunpack.c.l.b16 %v5584
        %v5745 = vunpack.c.l.b16 %v5585
        %v5746 = vunpack.c.h.b16 %v5585
        %v5747 = vunpack.c.l.b16 %v5586
        %v5748 = vunpack.c.l.b16 %v5587
        %v5749 = vunpack.c.h.b16 %v5587
        %v5750 = vunpack.c.l.b16 %v5588
        %v5751 = vunpack.c.l.b16 %v5589
        %v5752 = vunpack.c.h.b16 %v5589
        %v5753 = vunpack.c.l.b16 %v5590
        %v5754 = vunpack.c.l.b16 %v5591
        %v5755 = vunpack.c.h.b16 %v5591
        %v5756 = vunpack.c.l.b16 %v5592
        %v5757 = vpack.c.b16 %v5664, %v5661
        %v5758 = vpack.c.b16 %v5665, %v5662
        %v5759 = vpack.c.b16 %v5666, %v5663
        %v5760 = vpack.c.b16 %v5670, %v5667
        %v5761 = vpack.c.b16 %v5671, %v5668
        %v5762 = vpack.c.b16 %v5672, %v5669
        %v5763 = vpack.c.b16 %v5676, %v5673
        %v5764 = vpack.c.b16 %v5677, %v5674
        %v5765 = vpack.c.b16 %v5678, %v5675
        %v5766 = vpack.c.b16 %v5682, %v5679
        %v5767 = vpack.c.b16 %v5683, %v5680
        %v5768 = vpack.c.b16 %v5684, %v5681
        %v5769 = vpack.c.b16 %v5688, %v5685
        %v5770 = vpack.c.b16 %v5689, %v5686
        %v5771 = vpack.c.b16 %v5690, %v5687
        %v5772 = vpack.c.b16 %v5694, %v5691
        %v5773 = vpack.c.b16 %v5695, %v5692
        %v5774 = vpack.c.b16 %v5696, %v5693
        %v5775 = vpack.c.b16 %v5700, %v5697
        %v5776 = vpack.c.b16 %v5701, %v5698
        %v5777 = vpack.c.b16 %v5702, %v5699
        %v5778 = vpack.c.b16 %v5706, %v5703
        %v5779 = vpack.c.b16 %v5707, %v5704
        %v5780 = vpack.c.b16 %v5708, %v5705
        %v5781 = vpack.c.b16 %v5712, %v5709
        %v5782 = vpack.c.b16 %v5713, %v5710
        %v5783 = vpack.c.b16 %v5714, %v5711
        %v5784 = vpack.c.b16 %v5718, %v5715
        %v5785 = vpack.c.b16 %v5719, %v5716
        %v5786 = vpack.c.b16 %v5720, %v5717
        %v5787 = vpack.c.b16 %v5724, %v5721
        %v5788 = vpack.c.b16 %v5725, %v5722
        %v5789 = vpack.c.b16 %v5726, %v5723
        %v5790 = vpack.c.b16 %v5730, %v5727
        %v5791 = vpack.c.b16 %v5731, %v5728
        %v5792 = vpack.c.b16 %v5732, %v5729
        %v5793 = vpack.c.b16 %v5736, %v5733
        %v5794 = vpack.c.b16 %v5737, %v5734
        %v5795 = vpack.c.b16 %v5738, %v5735
        %v5796 = vpack.c.b16 %v5742, %v5739
        %v5797 = vpack.c.b16 %v5743, %v5740
        %v5798 = vpack.c.b16 %v5744, %v5741
        %v5799 = vpack.c.b16 %v5748, %v5745
        %v5800 = vpack.c.b16 %v5749, %v5746
        %v5801 = vpack.c.b16 %v5750, %v5747
        %v5802 = vpack.c.b16 %v5754, %v5751
        %v5803 = vpack.c.b16 %v5755, %v5752
        %v5804 = vpack.c.b16 %v5756, %v5753
        %5853 = vmatprep.subr.bf16.mxu0 %v5758
        %5854 = vmatpush1.bf16.msra.mxu0 %v5757
        %5855 = vmatprep.subr.bf16.mxu0 %v5761
        %5856 = vmatpush1.bf16.msra.mxu0 %v5760
        %5857 = vmatprep.subr.bf16.mxu0 %v5764
        %5858 = vmatpush1.bf16.msra.mxu0 %v5763
        %5859 = vmatprep.subr.bf16.mxu0 %v5767
        %5860 = vmatpush1.bf16.msra.mxu0 %v5766
        %5861 = vmatprep.subr.bf16.mxu0 %v5770
        %5862 = vmatpush1.bf16.msra.mxu0 %v5769
        %5863 = vmatprep.subr.bf16.mxu0 %v5773
        %5864 = vmatpush1.bf16.msra.mxu0 %v5772
        %5865 = vmatprep.subr.bf16.mxu0 %v5776
        %5866 = vmatpush1.bf16.msra.mxu0 %v5775
        %5867 = vmatprep.subr.bf16.mxu0 %v5779
        %5868 = vmatpush1.bf16.msra.mxu0 %v5778
        %5869 = vmatprep.subr.bf16.mxu0 %v5782
        %5870 = vmatpush1.bf16.msra.mxu0 %v5781
        %5871 = vmatprep.subr.bf16.mxu0 %v5785
        %5872 = vmatpush1.bf16.msra.mxu0 %v5784
        %5873 = vmatprep.subr.bf16.mxu0 %v5788
        %5874 = vmatpush1.bf16.msra.mxu0 %v5787
        %5875 = vmatprep.subr.bf16.mxu0 %v5791
        %5876 = vmatpush1.bf16.msra.mxu0 %v5790
        %5877 = vmatprep.subr.bf16.mxu0 %v5794
        %5878 = vmatpush1.bf16.msra.mxu0 %v5793
        %5879 = vmatprep.subr.bf16.mxu0 %v5797
        %5880 = vmatpush1.bf16.msra.mxu0 %v5796
        %5881 = vmatprep.subr.bf16.mxu0 %v5800
        %5882 = vmatpush1.bf16.msra.mxu0 %v5799
        %5883 = vmatprep.subr.bf16.mxu0 %v5803
        %5884 = vmatpush1.bf16.msra.mxu0 %v5802
        %5885 = vmatprep.mubr.bf16.mxu0 %v5594
        %5886 = vmatmul.mubr.bf16.gmra.mrb[0].mxu0 %v5593
        %v5887 = vpop.f32.mrb[0].mxu0
        %v5888 = vadd.f32 0.0, %v5887
        %v5889 = vpop.f32.mrb[0].mxu0
        %v5890 = vadd.f32 0.0, %v5889
        %v5891 = vpop.f32.mrb[0].mxu0
        %v5892 = vpop.f32.mrb[0].mxu0
        %5893 = vdwg.mxu0
        %5894 = vmatprep.subr.bf16.mxu0 0
        %5895 = vmatpush1.bf16.msra.mxu0 %v5759
        %5896 = vmatprep.subr.bf16.mxu0 0
        %5897 = vmatpush1.bf16.msra.mxu0 %v5762
        %5898 = vmatprep.subr.bf16.mxu0 0
        %5899 = vmatpush1.bf16.msra.mxu0 %v5765
        %5900 = vmatprep.subr.bf16.mxu0 0
        %5901 = vmatpush1.bf16.msra.mxu0 %v5768
        %5902 = vmatprep.subr.bf16.mxu0 0
        %5903 = vmatpush1.bf16.msra.mxu0 %v5771
        %5904 = vmatprep.subr.bf16.mxu0 0
        %5905 = vmatpush1.bf16.msra.mxu0 %v5774
        %5906 = vmatprep.subr.bf16.mxu0 0
        %5907 = vmatpush1.bf16.msra.mxu0 %v5777
        %5908 = vmatprep.subr.bf16.mxu0 0
        %5909 = vmatpush1.bf16.msra.mxu0 %v5780
        %5910 = vmatprep.subr.bf16.mxu0 0
        %5911 = vmatpush1.bf16.msra.mxu0 %v5783
        %5912 = vmatprep.subr.bf16.mxu0 0
        %5913 = vmatpush1.bf16.msra.mxu0 %v5786
        %5914 = vmatprep.subr.bf16.mxu0 0
        %5915 = vmatpush1.bf16.msra.mxu0 %v5789
        %5916 = vmatprep.subr.bf16.mxu0 0
        %5917 = vmatpush1.bf16.msra.mxu0 %v5792
        %5918 = vmatprep.subr.bf16.mxu0 0
        %5919 = vmatpush1.bf16.msra.mxu0 %v5795
        %5920 = vmatprep.subr.bf16.mxu0 0
        %5921 = vmatpush1.bf16.msra.mxu0 %v5798
        %5922 = vmatprep.subr.bf16.mxu0 0
        %5923 = vmatpush1.bf16.msra.mxu0 %v5801
        %5924 = vmatprep.subr.bf16.mxu0 0
        %5925 = vmatpush1.bf16.msra.mxu0 %v5804
        %5926 = vmatprep.mubr.bf16.mxu0 %v5594
        %5927 = vmatmul.mubr.bf16.gmra.mrb[0].mxu0 %v5593
        %v5928 = vpop.f32.mrb[0].mxu0
        %v5929 = vadd.f32 0.0, %v5928
        %v5930 = vpop.f32.mrb[0].mxu0
        %v5931 = vpop.f32.mrb[0].mxu0
        %v5932 = vpop.f32.mrb[0].mxu0
        %5933 = vdwg.mxu0
        %v5934 = vadd.f32 %v5525, %v5888
        %v5935 = vadd.f32 %v5526, %v5890
        %v5936 = vadd.f32 %v5527, %v5929
        %s5937 = scalar_lea.vmem %s11, 2304
        %v5938 = vld [vmem:[%s5937] sm:$0xff]
        %v5939 = vld [vmem:[%s5937 + $0x8] sm:$0xf]
        %v5940 = vld [vmem:[%s5937 + $0xc] sm:$0xff]
        %v5941 = vld [vmem:[%s5937 + $0x14] sm:$0xf]
        %v5942 = vld [vmem:[%s5937 + $0x18] sm:$0xff]
        %v5943 = vld [vmem:[%s5937 + $0x20] sm:$0xf]
        %v5944 = vld [vmem:[%s5937 + $0x24] sm:$0xff]
        %v5945 = vld [vmem:[%s5937 + $0x2c] sm:$0xf]
        %v5946 = vld [vmem:[%s5937 + $0x30] sm:$0xff]
        %v5947 = vld [vmem:[%s5937 + $0x38] sm:$0xf]
        %v5948 = vld [vmem:[%s5937 + $0x3c] sm:$0xff]
        %v5949 = vld [vmem:[%s5937 + $0x44] sm:$0xf]
        %v5950 = vld [vmem:[%s5937 + $0x48] sm:$0xff]
        %v5951 = vld [vmem:[%s5937 + $0x50] sm:$0xf]
        %v5952 = vld [vmem:[%s5937 + $0x54] sm:$0xff]
        %v5953 = vld [vmem:[%s5937 + $0x5c] sm:$0xf]
        %v5954 = vld [vmem:[%s5937 + $0x60] sm:$0xff]
        %v5955 = vld [vmem:[%s5937 + $0x68] sm:$0xf]
        %v5956 = vld [vmem:[%s5937 + $0x6c] sm:$0xff]
        %v5957 = vld [vmem:[%s5937 + $0x74] sm:$0xf]
        %v5958 = vld [vmem:[%s5937 + $0x78] sm:$0xff]
        %v5959 = vld [vmem:[%s5937 + $0x80] sm:$0xf]
        %v5960 = vld [vmem:[%s5937 + $0x84] sm:$0xff]
        %v5961 = vld [vmem:[%s5937 + $0x8c] sm:$0xf]
        %v5962 = vld [vmem:[%s5937 + $0x90] sm:$0xff]
        %v5963 = vld [vmem:[%s5937 + $0x98] sm:$0xf]
        %v5964 = vld [vmem:[%s5937 + $0x9c] sm:$0xff]
        %v5965 = vld [vmem:[%s5937 + $0xa4] sm:$0xf]
        %v5966 = vld [vmem:[%s5937 + $0xa8] sm:$0xff]
        %v5967 = vld [vmem:[%s5937 + $0xb0] sm:$0xf]
        %v5968 = vld [vmem:[%s5937 + $0xb4] sm:$0xff]
        %v5969 = vld [vmem:[%s5937 + $0xbc] sm:$0xf]
        %v5970 = vld [vmem:[%s5937 + $0xc0] sm:$0xff]
        %v5971 = vld [vmem:[%s5937 + $0xc8] sm:$0xf]
        %v5972 = vld [vmem:[%s5937 + $0xcc] sm:$0xff]
        %v5973 = vld [vmem:[%s5937 + $0xd4] sm:$0xf]
        %v5974 = vld [vmem:[%s5937 + $0xd8] sm:$0xff]
        %v5975 = vld [vmem:[%s5937 + $0xe0] sm:$0xf]
        %v5976 = vld [vmem:[%s5937 + $0xe4] sm:$0xff]
        %v5977 = vld [vmem:[%s5937 + $0xec] sm:$0xf]
        %v5978 = vld [vmem:[%s5937 + $0xf0] sm:$0xff]
        %v5979 = vld [vmem:[%s5937 + $0xf8] sm:$0xf]
        %v5980 = vld [vmem:[%s5937 + $0xfc] sm:$0xff]
        %v5981 = vld [vmem:[%s5937 + $0x104] sm:$0xf]
        %v5982 = vld [vmem:[%s5937 + $0x108] sm:$0xff]
        %v5983 = vld [vmem:[%s5937 + $0x110] sm:$0xf]
        %v5984 = vld [vmem:[%s5937 + $0x114] sm:$0xff]
        %v5985 = vld [vmem:[%s5937 + $0x11c] sm:$0xf]
        %v5986 = vld [vmem:[%s5937 + $0x120] sm:$0xff]
        %v5987 = vld [vmem:[%s5937 + $0x128] sm:$0xf]
        %v5988 = vld [vmem:[%s5937 + $0x12c] sm:$0xff]
        %v5989 = vld [vmem:[%s5937 + $0x134] sm:$0xf]
        %v5990 = vld [vmem:[%s5937 + $0x138] sm:$0xff]
        %v5991 = vld [vmem:[%s5937 + $0x140] sm:$0xf]
        %v5992 = vld [vmem:[%s5937 + $0x144] sm:$0xff]
        %v5993 = vld [vmem:[%s5937 + $0x14c] sm:$0xf]
        %v5994 = vld [vmem:[%s5937 + $0x150] sm:$0xff]
        %v5995 = vld [vmem:[%s5937 + $0x158] sm:$0xf]
        %v5996 = vld [vmem:[%s5937 + $0x15c] sm:$0xff]
        %v5997 = vld [vmem:[%s5937 + $0x164] sm:$0xf]
        %v5998 = vld [vmem:[%s5937 + $0x168] sm:$0xff]
        %v5999 = vld [vmem:[%s5937 + $0x170] sm:$0xf]
        %v6000 = vld [vmem:[%s5937 + $0x174] sm:$0xff]
        %v6001 = vld [vmem:[%s5937 + $0x17c] sm:$0xf]
        %v6002 = vrot.slane %v3486, 3
        %v6003 = vrot.slane %v3487, 3
        %v6070 = vunpack.c.l.b16 %v5938
        %v6071 = vunpack.c.h.b16 %v5938
        %v6072 = vunpack.c.l.b16 %v5939
        %v6073 = vunpack.c.l.b16 %v5940
        %v6074 = vunpack.c.h.b16 %v5940
        %v6075 = vunpack.c.l.b16 %v5941
        %v6076 = vunpack.c.l.b16 %v5942
        %v6077 = vunpack.c.h.b16 %v5942
        %v6078 = vunpack.c.l.b16 %v5943
        %v6079 = vunpack.c.l.b16 %v5944
        %v6080 = vunpack.c.h.b16 %v5944
        %v6081 = vunpack.c.l.b16 %v5945
        %v6082 = vunpack.c.l.b16 %v5946
        %v6083 = vunpack.c.h.b16 %v5946
        %v6084 = vunpack.c.l.b16 %v5947
        %v6085 = vunpack.c.l.b16 %v5948
        %v6086 = vunpack.c.h.b16 %v5948
        %v6087 = vunpack.c.l.b16 %v5949
        %v6088 = vunpack.c.l.b16 %v5950
        %v6089 = vunpack.c.h.b16 %v5950
        %v6090 = vunpack.c.l.b16 %v5951
        %v6091 = vunpack.c.l.b16 %v5952
        %v6092 = vunpack.c.h.b16 %v5952
        %v6093 = vunpack.c.l.b16 %v5953
        %v6094 = vunpack.c.l.b16 %v5954
        %v6095 = vunpack.c.h.b16 %v5954
        %v6096 = vunpack.c.l.b16 %v5955
        %v6097 = vunpack.c.l.b16 %v5956
        %v6098 = vunpack.c.h.b16 %v5956
        %v6099 = vunpack.c.l.b16 %v5957
        %v6100 = vunpack.c.l.b16 %v5958
        %v6101 = vunpack.c.h.b16 %v5958
        %v6102 = vunpack.c.l.b16 %v5959
        %v6103 = vunpack.c.l.b16 %v5960
        %v6104 = vunpack.c.h.b16 %v5960
        %v6105 = vunpack.c.l.b16 %v5961
        %v6106 = vunpack.c.l.b16 %v5962
        %v6107 = vunpack.c.h.b16 %v5962
        %v6108 = vunpack.c.l.b16 %v5963
        %v6109 = vunpack.c.l.b16 %v5964
        %v6110 = vunpack.c.h.b16 %v5964
        %v6111 = vunpack.c.l.b16 %v5965
        %v6112 = vunpack.c.l.b16 %v5966
        %v6113 = vunpack.c.h.b16 %v5966
        %v6114 = vunpack.c.l.b16 %v5967
        %v6115 = vunpack.c.l.b16 %v5968
        %v6116 = vunpack.c.h.b16 %v5968
        %v6117 = vunpack.c.l.b16 %v5969
        %v6118 = vunpack.c.l.b16 %v5970
        %v6119 = vunpack.c.h.b16 %v5970
        %v6120 = vunpack.c.l.b16 %v5971
        %v6121 = vunpack.c.l.b16 %v5972
        %v6122 = vunpack.c.h.b16 %v5972
        %v6123 = vunpack.c.l.b16 %v5973
        %v6124 = vunpack.c.l.b16 %v5974
        %v6125 = vunpack.c.h.b16 %v5974
        %v6126 = vunpack.c.l.b16 %v5975
        %v6127 = vunpack.c.l.b16 %v5976
        %v6128 = vunpack.c.h.b16 %v5976
        %v6129 = vunpack.c.l.b16 %v5977
        %v6130 = vunpack.c.l.b16 %v5978
        %v6131 = vunpack.c.h.b16 %v5978
        %v6132 = vunpack.c.l.b16 %v5979
        %v6133 = vunpack.c.l.b16 %v5980
        %v6134 = vunpack.c.h.b16 %v5980
        %v6135 = vunpack.c.l.b16 %v5981
        %v6136 = vunpack.c.l.b16 %v5982
        %v6137 = vunpack.c.h.b16 %v5982
        %v6138 = vunpack.c.l.b16 %v5983
        %v6139 = vunpack.c.l.b16 %v5984
        %v6140 = vunpack.c.h.b16 %v5984
        %v6141 = vunpack.c.l.b16 %v5985
        %v6142 = vunpack.c.l.b16 %v5986
        %v6143 = vunpack.c.h.b16 %v5986
        %v6144 = vunpack.c.l.b16 %v5987
        %v6145 = vunpack.c.l.b16 %v5988
        %v6146 = vunpack.c.h.b16 %v5988
        %v6147 = vunpack.c.l.b16 %v5989
        %v6148 = vunpack.c.l.b16 %v5990
        %v6149 = vunpack.c.h.b16 %v5990
        %v6150 = vunpack.c.l.b16 %v5991
        %v6151 = vunpack.c.l.b16 %v5992
        %v6152 = vunpack.c.h.b16 %v5992
        %v6153 = vunpack.c.l.b16 %v5993
        %v6154 = vunpack.c.l.b16 %v5994
        %v6155 = vunpack.c.h.b16 %v5994
        %v6156 = vunpack.c.l.b16 %v5995
        %v6157 = vunpack.c.l.b16 %v5996
        %v6158 = vunpack.c.h.b16 %v5996
        %v6159 = vunpack.c.l.b16 %v5997
        %v6160 = vunpack.c.l.b16 %v5998
        %v6161 = vunpack.c.h.b16 %v5998
        %v6162 = vunpack.c.l.b16 %v5999
        %v6163 = vunpack.c.l.b16 %v6000
        %v6164 = vunpack.c.h.b16 %v6000
        %v6165 = vunpack.c.l.b16 %v6001
        %v6166 = vpack.c.b16 %v6073, %v6070
        %v6167 = vpack.c.b16 %v6074, %v6071
        %v6168 = vpack.c.b16 %v6075, %v6072
        %v6169 = vpack.c.b16 %v6079, %v6076
        %v6170 = vpack.c.b16 %v6080, %v6077
        %v6171 = vpack.c.b16 %v6081, %v6078
        %v6172 = vpack.c.b16 %v6085, %v6082
        %v6173 = vpack.c.b16 %v6086, %v6083
        %v6174 = vpack.c.b16 %v6087, %v6084
        %v6175 = vpack.c.b16 %v6091, %v6088
        %v6176 = vpack.c.b16 %v6092, %v6089
        %v6177 = vpack.c.b16 %v6093, %v6090
        %v6178 = vpack.c.b16 %v6097, %v6094
        %v6179 = vpack.c.b16 %v6098, %v6095
        %v6180 = vpack.c.b16 %v6099, %v6096
        %v6181 = vpack.c.b16 %v6103, %v6100
        %v6182 = vpack.c.b16 %v6104, %v6101
        %v6183 = vpack.c.b16 %v6105, %v6102
        %v6184 = vpack.c.b16 %v6109, %v6106
        %v6185 = vpack.c.b16 %v6110, %v6107
        %v6186 = vpack.c.b16 %v6111, %v6108
        %v6187 = vpack.c.b16 %v6115, %v6112
        %v6188 = vpack.c.b16 %v6116, %v6113
        %v6189 = vpack.c.b16 %v6117, %v6114
        %v6190 = vpack.c.b16 %v6121, %v6118
        %v6191 = vpack.c.b16 %v6122, %v6119
        %v6192 = vpack.c.b16 %v6123, %v6120
        %v6193 = vpack.c.b16 %v6127, %v6124
        %v6194 = vpack.c.b16 %v6128, %v6125
        %v6195 = vpack.c.b16 %v6129, %v6126
        %v6196 = vpack.c.b16 %v6133, %v6130
        %v6197 = vpack.c.b16 %v6134, %v6131
        %v6198 = vpack.c.b16 %v6135, %v6132
        %v6199 = vpack.c.b16 %v6139, %v6136
        %v6200 = vpack.c.b16 %v6140, %v6137
        %v6201 = vpack.c.b16 %v6141, %v6138
        %v6202 = vpack.c.b16 %v6145, %v6142
        %v6203 = vpack.c.b16 %v6146, %v6143
        %v6204 = vpack.c.b16 %v6147, %v6144
        %v6205 = vpack.c.b16 %v6151, %v6148
        %v6206 = vpack.c.b16 %v6152, %v6149
        %v6207 = vpack.c.b16 %v6153, %v6150
        %v6208 = vpack.c.b16 %v6157, %v6154
        %v6209 = vpack.c.b16 %v6158, %v6155
        %v6210 = vpack.c.b16 %v6159, %v6156
        %v6211 = vpack.c.b16 %v6163, %v6160
        %v6212 = vpack.c.b16 %v6164, %v6161
        %v6213 = vpack.c.b16 %v6165, %v6162
        %6262 = vmatprep.subr.bf16.mxu0 %v6167
        %6263 = vmatpush1.bf16.msra.mxu0 %v6166
        %6264 = vmatprep.subr.bf16.mxu0 %v6170
        %6265 = vmatpush1.bf16.msra.mxu0 %v6169
        %6266 = vmatprep.subr.bf16.mxu0 %v6173
        %6267 = vmatpush1.bf16.msra.mxu0 %v6172
        %6268 = vmatprep.subr.bf16.mxu0 %v6176
        %6269 = vmatpush1.bf16.msra.mxu0 %v6175
        %6270 = vmatprep.subr.bf16.mxu0 %v6179
        %6271 = vmatpush1.bf16.msra.mxu0 %v6178
        %6272 = vmatprep.subr.bf16.mxu0 %v6182
        %6273 = vmatpush1.bf16.msra.mxu0 %v6181
        %6274 = vmatprep.subr.bf16.mxu0 %v6185
        %6275 = vmatpush1.bf16.msra.mxu0 %v6184
        %6276 = vmatprep.subr.bf16.mxu0 %v6188
        %6277 = vmatpush1.bf16.msra.mxu0 %v6187
        %6278 = vmatprep.subr.bf16.mxu0 %v6191
        %6279 = vmatpush1.bf16.msra.mxu0 %v6190
        %6280 = vmatprep.subr.bf16.mxu0 %v6194
        %6281 = vmatpush1.bf16.msra.mxu0 %v6193
        %6282 = vmatprep.subr.bf16.mxu0 %v6197
        %6283 = vmatpush1.bf16.msra.mxu0 %v6196
        %6284 = vmatprep.subr.bf16.mxu0 %v6200
        %6285 = vmatpush1.bf16.msra.mxu0 %v6199
        %6286 = vmatprep.subr.bf16.mxu0 %v6203
        %6287 = vmatpush1.bf16.msra.mxu0 %v6202
        %6288 = vmatprep.subr.bf16.mxu0 %v6206
        %6289 = vmatpush1.bf16.msra.mxu0 %v6205
        %6290 = vmatprep.subr.bf16.mxu0 %v6209
        %6291 = vmatpush1.bf16.msra.mxu0 %v6208
        %6292 = vmatprep.subr.bf16.mxu0 %v6212
        %6293 = vmatpush1.bf16.msra.mxu0 %v6211
        %6294 = vmatprep.mubr.bf16.mxu0 %v6003
        %6295 = vmatmul.mubr.bf16.gmra.mrb[0].mxu0 %v6002
        %v6296 = vpop.f32.mrb[0].mxu0
        %v6297 = vadd.f32 0.0, %v6296
        %v6298 = vpop.f32.mrb[0].mxu0
        %v6299 = vadd.f32 0.0, %v6298
        %v6300 = vpop.f32.mrb[0].mxu0
        %v6301 = vpop.f32.mrb[0].mxu0
        %6302 = vdwg.mxu0
        %6303 = vmatprep.subr.bf16.mxu0 0
        %6304 = vmatpush1.bf16.msra.mxu0 %v6168
        %6305 = vmatprep.subr.bf16.mxu0 0
        %6306 = vmatpush1.bf16.msra.mxu0 %v6171
        %6307 = vmatprep.subr.bf16.mxu0 0
        %6308 = vmatpush1.bf16.msra.mxu0 %v6174
        %6309 = vmatprep.subr.bf16.mxu0 0
        %6310 = vmatpush1.bf16.msra.mxu0 %v6177
        %6311 = vmatprep.subr.bf16.mxu0 0
        %6312 = vmatpush1.bf16.msra.mxu0 %v6180
        %6313 = vmatprep.subr.bf16.mxu0 0
        %6314 = vmatpush1.bf16.msra.mxu0 %v6183
        %6315 = vmatprep.subr.bf16.mxu0 0
        %6316 = vmatpush1.bf16.msra.mxu0 %v6186
        %6317 = vmatprep.subr.bf16.mxu0 0
        %6318 = vmatpush1.bf16.msra.mxu0 %v6189
        %6319 = vmatprep.subr.bf16.mxu0 0
        %6320 = vmatpush1.bf16.msra.mxu0 %v6192
        %6321 = vmatprep.subr.bf16.mxu0 0
        %6322 = vmatpush1.bf16.msra.mxu0 %v6195
        %6323 = vmatprep.subr.bf16.mxu0 0
        %6324 = vmatpush1.bf16.msra.mxu0 %v6198
        %6325 = vmatprep.subr.bf16.mxu0 0
        %6326 = vmatpush1.bf16.msra.mxu0 %v6201
        %6327 = vmatprep.subr.bf16.mxu0 0
        %6328 = vmatpush1.bf16.msra.mxu0 %v6204
        %6329 = vmatprep.subr.bf16.mxu0 0
        %6330 = vmatpush1.bf16.msra.mxu0 %v6207
        %6331 = vmatprep.subr.bf16.mxu0 0
        %6332 = vmatpush1.bf16.msra.mxu0 %v6210
        %6333 = vmatprep.subr.bf16.mxu0 0
        %6334 = vmatpush1.bf16.msra.mxu0 %v6213
        %6335 = vmatprep.mubr.bf16.mxu0 %v6003
        %6336 = vmatmul.mubr.bf16.gmra.mrb[0].mxu0 %v6002
        %v6337 = vpop.f32.mrb[0].mxu0
        %v6338 = vadd.f32 0.0, %v6337
        %v6339 = vpop.f32.mrb[0].mxu0
        %v6340 = vpop.f32.mrb[0].mxu0
        %v6341 = vpop.f32.mrb[0].mxu0
        %6342 = vdwg.mxu0
        %v6343 = vadd.f32 %v5934, %v6297
        %v6344 = vadd.f32 %v5935, %v6299
        %v6345 = vadd.f32 %v5936, %v6338
        %s6346 = scalar_lea.vmem %s11, 2688
        %v6347 = vld [vmem:[%s6346] sm:$0xff]
        %v6348 = vld [vmem:[%s6346 + $0x8] sm:$0xf]
        %v6349 = vld [vmem:[%s6346 + $0xc] sm:$0xff]
        %v6350 = vld [vmem:[%s6346 + $0x14] sm:$0xf]
        %v6351 = vld [vmem:[%s6346 + $0x18] sm:$0xff]
        %v6352 = vld [vmem:[%s6346 + $0x20] sm:$0xf]
        %v6353 = vld [vmem:[%s6346 + $0x24] sm:$0xff]
        %v6354 = vld [vmem:[%s6346 + $0x2c] sm:$0xf]
        %v6355 = vld [vmem:[%s6346 + $0x30] sm:$0xff]
        %v6356 = vld [vmem:[%s6346 + $0x38] sm:$0xf]
        %v6357 = vld [vmem:[%s6346 + $0x3c] sm:$0xff]
        %v6358 = vld [vmem:[%s6346 + $0x44] sm:$0xf]
        %v6359 = vld [vmem:[%s6346 + $0x48] sm:$0xff]
        %v6360 = vld [vmem:[%s6346 + $0x50] sm:$0xf]
        %v6361 = vld [vmem:[%s6346 + $0x54] sm:$0xff]
        %v6362 = vld [vmem:[%s6346 + $0x5c] sm:$0xf]
        %v6363 = vld [vmem:[%s6346 + $0x60] sm:$0xff]
        %v6364 = vld [vmem:[%s6346 + $0x68] sm:$0xf]
        %v6365 = vld [vmem:[%s6346 + $0x6c] sm:$0xff]
        %v6366 = vld [vmem:[%s6346 + $0x74] sm:$0xf]
        %v6367 = vld [vmem:[%s6346 + $0x78] sm:$0xff]
        %v6368 = vld [vmem:[%s6346 + $0x80] sm:$0xf]
        %v6369 = vld [vmem:[%s6346 + $0x84] sm:$0xff]
        %v6370 = vld [vmem:[%s6346 + $0x8c] sm:$0xf]
        %v6371 = vld [vmem:[%s6346 + $0x90] sm:$0xff]
        %v6372 = vld [vmem:[%s6346 + $0x98] sm:$0xf]
        %v6373 = vld [vmem:[%s6346 + $0x9c] sm:$0xff]
        %v6374 = vld [vmem:[%s6346 + $0xa4] sm:$0xf]
        %v6375 = vld [vmem:[%s6346 + $0xa8] sm:$0xff]
        %v6376 = vld [vmem:[%s6346 + $0xb0] sm:$0xf]
        %v6377 = vld [vmem:[%s6346 + $0xb4] sm:$0xff]
        %v6378 = vld [vmem:[%s6346 + $0xbc] sm:$0xf]
        %v6379 = vld [vmem:[%s6346 + $0xc0] sm:$0xff]
        %v6380 = vld [vmem:[%s6346 + $0xc8] sm:$0xf]
        %v6381 = vld [vmem:[%s6346 + $0xcc] sm:$0xff]
        %v6382 = vld [vmem:[%s6346 + $0xd4] sm:$0xf]
        %v6383 = vld [vmem:[%s6346 + $0xd8] sm:$0xff]
        %v6384 = vld [vmem:[%s6346 + $0xe0] sm:$0xf]
        %v6385 = vld [vmem:[%s6346 + $0xe4] sm:$0xff]
        %v6386 = vld [vmem:[%s6346 + $0xec] sm:$0xf]
        %v6387 = vld [vmem:[%s6346 + $0xf0] sm:$0xff]
        %v6388 = vld [vmem:[%s6346 + $0xf8] sm:$0xf]
        %v6389 = vld [vmem:[%s6346 + $0xfc] sm:$0xff]
        %v6390 = vld [vmem:[%s6346 + $0x104] sm:$0xf]
        %v6391 = vld [vmem:[%s6346 + $0x108] sm:$0xff]
        %v6392 = vld [vmem:[%s6346 + $0x110] sm:$0xf]
        %v6393 = vld [vmem:[%s6346 + $0x114] sm:$0xff]
        %v6394 = vld [vmem:[%s6346 + $0x11c] sm:$0xf]
        %v6395 = vld [vmem:[%s6346 + $0x120] sm:$0xff]
        %v6396 = vld [vmem:[%s6346 + $0x128] sm:$0xf]
        %v6397 = vld [vmem:[%s6346 + $0x12c] sm:$0xff]
        %v6398 = vld [vmem:[%s6346 + $0x134] sm:$0xf]
        %v6399 = vld [vmem:[%s6346 + $0x138] sm:$0xff]
        %v6400 = vld [vmem:[%s6346 + $0x140] sm:$0xf]
        %v6401 = vld [vmem:[%s6346 + $0x144] sm:$0xff]
        %v6402 = vld [vmem:[%s6346 + $0x14c] sm:$0xf]
        %v6403 = vld [vmem:[%s6346 + $0x150] sm:$0xff]
        %v6404 = vld [vmem:[%s6346 + $0x158] sm:$0xf]
        %v6405 = vld [vmem:[%s6346 + $0x15c] sm:$0xff]
        %v6406 = vld [vmem:[%s6346 + $0x164] sm:$0xf]
        %v6407 = vld [vmem:[%s6346 + $0x168] sm:$0xff]
        %v6408 = vld [vmem:[%s6346 + $0x170] sm:$0xf]
        %v6409 = vld [vmem:[%s6346 + $0x174] sm:$0xff]
        %v6410 = vld [vmem:[%s6346 + $0x17c] sm:$0xf]
        %v6411 = vrot.slane %v3618, 3
        %v6412 = vrot.slane %v3621, 3
        %v6479 = vunpack.c.l.b16 %v6347
        %v6480 = vunpack.c.h.b16 %v6347
        %v6481 = vunpack.c.l.b16 %v6348
        %v6482 = vunpack.c.l.b16 %v6349
        %v6483 = vunpack.c.h.b16 %v6349
        %v6484 = vunpack.c.l.b16 %v6350
        %v6485 = vunpack.c.l.b16 %v6351
        %v6486 = vunpack.c.h.b16 %v6351
        %v6487 = vunpack.c.l.b16 %v6352
        %v6488 = vunpack.c.l.b16 %v6353
        %v6489 = vunpack.c.h.b16 %v6353
        %v6490 = vunpack.c.l.b16 %v6354
        %v6491 = vunpack.c.l.b16 %v6355
        %v6492 = vunpack.c.h.b16 %v6355
        %v6493 = vunpack.c.l.b16 %v6356
        %v6494 = vunpack.c.l.b16 %v6357
        %v6495 = vunpack.c.h.b16 %v6357
        %v6496 = vunpack.c.l.b16 %v6358
        %v6497 = vunpack.c.l.b16 %v6359
        %v6498 = vunpack.c.h.b16 %v6359
        %v6499 = vunpack.c.l.b16 %v6360
        %v6500 = vunpack.c.l.b16 %v6361
        %v6501 = vunpack.c.h.b16 %v6361
        %v6502 = vunpack.c.l.b16 %v6362
        %v6503 = vunpack.c.l.b16 %v6363
        %v6504 = vunpack.c.h.b16 %v6363
        %v6505 = vunpack.c.l.b16 %v6364
        %v6506 = vunpack.c.l.b16 %v6365
        %v6507 = vunpack.c.h.b16 %v6365
        %v6508 = vunpack.c.l.b16 %v6366
        %v6509 = vunpack.c.l.b16 %v6367
        %v6510 = vunpack.c.h.b16 %v6367
        %v6511 = vunpack.c.l.b16 %v6368
        %v6512 = vunpack.c.l.b16 %v6369
        %v6513 = vunpack.c.h.b16 %v6369
        %v6514 = vunpack.c.l.b16 %v6370
        %v6515 = vunpack.c.l.b16 %v6371
        %v6516 = vunpack.c.h.b16 %v6371
        %v6517 = vunpack.c.l.b16 %v6372
        %v6518 = vunpack.c.l.b16 %v6373
        %v6519 = vunpack.c.h.b16 %v6373
        %v6520 = vunpack.c.l.b16 %v6374
        %v6521 = vunpack.c.l.b16 %v6375
        %v6522 = vunpack.c.h.b16 %v6375
        %v6523 = vunpack.c.l.b16 %v6376
        %v6524 = vunpack.c.l.b16 %v6377
        %v6525 = vunpack.c.h.b16 %v6377
        %v6526 = vunpack.c.l.b16 %v6378
        %v6527 = vunpack.c.l.b16 %v6379
        %v6528 = vunpack.c.h.b16 %v6379
        %v6529 = vunpack.c.l.b16 %v6380
        %v6530 = vunpack.c.l.b16 %v6381
        %v6531 = vunpack.c.h.b16 %v6381
        %v6532 = vunpack.c.l.b16 %v6382
        %v6533 = vunpack.c.l.b16 %v6383
        %v6534 = vunpack.c.h.b16 %v6383
        %v6535 = vunpack.c.l.b16 %v6384
        %v6536 = vunpack.c.l.b16 %v6385
        %v6537 = vunpack.c.h.b16 %v6385
        %v6538 = vunpack.c.l.b16 %v6386
        %v6539 = vunpack.c.l.b16 %v6387
        %v6540 = vunpack.c.h.b16 %v6387
        %v6541 = vunpack.c.l.b16 %v6388
        %v6542 = vunpack.c.l.b16 %v6389
        %v6543 = vunpack.c.h.b16 %v6389
        %v6544 = vunpack.c.l.b16 %v6390
        %v6545 = vunpack.c.l.b16 %v6391
        %v6546 = vunpack.c.h.b16 %v6391
        %v6547 = vunpack.c.l.b16 %v6392
        %v6548 = vunpack.c.l.b16 %v6393
        %v6549 = vunpack.c.h.b16 %v6393
        %v6550 = vunpack.c.l.b16 %v6394
        %v6551 = vunpack.c.l.b16 %v6395
        %v6552 = vunpack.c.h.b16 %v6395
        %v6553 = vunpack.c.l.b16 %v6396
        %v6554 = vunpack.c.l.b16 %v6397
        %v6555 = vunpack.c.h.b16 %v6397
        %v6556 = vunpack.c.l.b16 %v6398
        %v6557 = vunpack.c.l.b16 %v6399
        %v6558 = vunpack.c.h.b16 %v6399
        %v6559 = vunpack.c.l.b16 %v6400
        %v6560 = vunpack.c.l.b16 %v6401
        %v6561 = vunpack.c.h.b16 %v6401
        %v6562 = vunpack.c.l.b16 %v6402
        %v6563 = vunpack.c.l.b16 %v6403
        %v6564 = vunpack.c.h.b16 %v6403
        %v6565 = vunpack.c.l.b16 %v6404
        %v6566 = vunpack.c.l.b16 %v6405
        %v6567 = vunpack.c.h.b16 %v6405
        %v6568 = vunpack.c.l.b16 %v6406
        %v6569 = vunpack.c.l.b16 %v6407
        %v6570 = vunpack.c.h.b16 %v6407
        %v6571 = vunpack.c.l.b16 %v6408
        %v6572 = vunpack.c.l.b16 %v6409
        %v6573 = vunpack.c.h.b16 %v6409
        %v6574 = vunpack.c.l.b16 %v6410
        %v6575 = vpack.c.b16 %v6482, %v6479
        %v6576 = vpack.c.b16 %v6483, %v6480
        %v6577 = vpack.c.b16 %v6484, %v6481
        %v6578 = vpack.c.b16 %v6488, %v6485
        %v6579 = vpack.c.b16 %v6489, %v6486
        %v6580 = vpack.c.b16 %v6490, %v6487
        %v6581 = vpack.c.b16 %v6494, %v6491
        %v6582 = vpack.c.b16 %v6495, %v6492
        %v6583 = vpack.c.b16 %v6496, %v6493
        %v6584 = vpack.c.b16 %v6500, %v6497
        %v6585 = vpack.c.b16 %v6501, %v6498
        %v6586 = vpack.c.b16 %v6502, %v6499
        %v6587 = vpack.c.b16 %v6506, %v6503
        %v6588 = vpack.c.b16 %v6507, %v6504
        %v6589 = vpack.c.b16 %v6508, %v6505
        %v6590 = vpack.c.b16 %v6512, %v6509
        %v6591 = vpack.c.b16 %v6513, %v6510
        %v6592 = vpack.c.b16 %v6514, %v6511
        %v6593 = vpack.c.b16 %v6518, %v6515
        %v6594 = vpack.c.b16 %v6519, %v6516
        %v6595 = vpack.c.b16 %v6520, %v6517
        %v6596 = vpack.c.b16 %v6524, %v6521
        %v6597 = vpack.c.b16 %v6525, %v6522
        %v6598 = vpack.c.b16 %v6526, %v6523
        %v6599 = vpack.c.b16 %v6530, %v6527
        %v6600 = vpack.c.b16 %v6531, %v6528
        %v6601 = vpack.c.b16 %v6532, %v6529
        %v6602 = vpack.c.b16 %v6536, %v6533
        %v6603 = vpack.c.b16 %v6537, %v6534
        %v6604 = vpack.c.b16 %v6538, %v6535
        %v6605 = vpack.c.b16 %v6542, %v6539
        %v6606 = vpack.c.b16 %v6543, %v6540
        %v6607 = vpack.c.b16 %v6544, %v6541
        %v6608 = vpack.c.b16 %v6548, %v6545
        %v6609 = vpack.c.b16 %v6549, %v6546
        %v6610 = vpack.c.b16 %v6550, %v6547
        %v6611 = vpack.c.b16 %v6554, %v6551
        %v6612 = vpack.c.b16 %v6555, %v6552
        %v6613 = vpack.c.b16 %v6556, %v6553
        %v6614 = vpack.c.b16 %v6560, %v6557
        %v6615 = vpack.c.b16 %v6561, %v6558
        %v6616 = vpack.c.b16 %v6562, %v6559
        %v6617 = vpack.c.b16 %v6566, %v6563
        %v6618 = vpack.c.b16 %v6567, %v6564
        %v6619 = vpack.c.b16 %v6568, %v6565
        %v6620 = vpack.c.b16 %v6572, %v6569
        %v6621 = vpack.c.b16 %v6573, %v6570
        %v6622 = vpack.c.b16 %v6574, %v6571
        %6671 = vmatprep.subr.bf16.mxu0 %v6576
        %6672 = vmatpush1.bf16.msra.mxu0 %v6575
        %6673 = vmatprep.subr.bf16.mxu0 %v6579
        %6674 = vmatpush1.bf16.msra.mxu0 %v6578
        %6675 = vmatprep.subr.bf16.mxu0 %v6582
        %6676 = vmatpush1.bf16.msra.mxu0 %v6581
        %6677 = vmatprep.subr.bf16.mxu0 %v6585
        %6678 = vmatpush1.bf16.msra.mxu0 %v6584
        %6679 = vmatprep.subr.bf16.mxu0 %v6588
        %6680 = vmatpush1.bf16.msra.mxu0 %v6587
        %6681 = vmatprep.subr.bf16.mxu0 %v6591
        %6682 = vmatpush1.bf16.msra.mxu0 %v6590
        %6683 = vmatprep.subr.bf16.mxu0 %v6594
        %6684 = vmatpush1.bf16.msra.mxu0 %v6593
        %6685 = vmatprep.subr.bf16.mxu0 %v6597
        %6686 = vmatpush1.bf16.msra.mxu0 %v6596
        %6687 = vmatprep.subr.bf16.mxu0 %v6600
        %6688 = vmatpush1.bf16.msra.mxu0 %v6599
        %6689 = vmatprep.subr.bf16.mxu0 %v6603
        %6690 = vmatpush1.bf16.msra.mxu0 %v6602
        %6691 = vmatprep.subr.bf16.mxu0 %v6606
        %6692 = vmatpush1.bf16.msra.mxu0 %v6605
        %6693 = vmatprep.subr.bf16.mxu0 %v6609
        %6694 = vmatpush1.bf16.msra.mxu0 %v6608
        %6695 = vmatprep.subr.bf16.mxu0 %v6612
        %6696 = vmatpush1.bf16.msra.mxu0 %v6611
        %6697 = vmatprep.subr.bf16.mxu0 %v6615
        %6698 = vmatpush1.bf16.msra.mxu0 %v6614
        %6699 = vmatprep.subr.bf16.mxu0 %v6618
        %6700 = vmatpush1.bf16.msra.mxu0 %v6617
        %6701 = vmatprep.subr.bf16.mxu0 %v6621
        %6702 = vmatpush1.bf16.msra.mxu0 %v6620
        %6703 = vmatprep.mubr.bf16.mxu0 %v6412
        %6704 = vmatmul.mubr.bf16.gmra.mrb[0].mxu0 %v6411
        %v6705 = vpop.f32.mrb[0].mxu0
        %v6706 = vadd.f32 0.0, %v6705
        %v6707 = vpop.f32.mrb[0].mxu0
        %v6708 = vadd.f32 0.0, %v6707
        %v6709 = vpop.f32.mrb[0].mxu0
        %v6710 = vpop.f32.mrb[0].mxu0
        %6711 = vdwg.mxu0
        %6712 = vmatprep.subr.bf16.mxu0 0
        %6713 = vmatpush1.bf16.msra.mxu0 %v6577
        %6714 = vmatprep.subr.bf16.mxu0 0
        %6715 = vmatpush1.bf16.msra.mxu0 %v6580
        %6716 = vmatprep.subr.bf16.mxu0 0
        %6717 = vmatpush1.bf16.msra.mxu0 %v6583
        %6718 = vmatprep.subr.bf16.mxu0 0
        %6719 = vmatpush1.bf16.msra.mxu0 %v6586
        %6720 = vmatprep.subr.bf16.mxu0 0
        %6721 = vmatpush1.bf16.msra.mxu0 %v6589
        %6722 = vmatprep.subr.bf16.mxu0 0
        %6723 = vmatpush1.bf16.msra.mxu0 %v6592
        %6724 = vmatprep.subr.bf16.mxu0 0
        %6725 = vmatpush1.bf16.msra.mxu0 %v6595
        %6726 = vmatprep.subr.bf16.mxu0 0
        %6727 = vmatpush1.bf16.msra.mxu0 %v6598
        %6728 = vmatprep.subr.bf16.mxu0 0
        %6729 = vmatpush1.bf16.msra.mxu0 %v6601
        %6730 = vmatprep.subr.bf16.mxu0 0
        %6731 = vmatpush1.bf16.msra.mxu0 %v6604
        %6732 = vmatprep.subr.bf16.mxu0 0
        %6733 = vmatpush1.bf16.msra.mxu0 %v6607
        %6734 = vmatprep.subr.bf16.mxu0 0
        %6735 = vmatpush1.bf16.msra.mxu0 %v6610
        %6736 = vmatprep.subr.bf16.mxu0 0
        %6737 = vmatpush1.bf16.msra.mxu0 %v6613
        %6738 = vmatprep.subr.bf16.mxu0 0
        %6739 = vmatpush1.bf16.msra.mxu0 %v6616
        %6740 = vmatprep.subr.bf16.mxu0 0
        %6741 = vmatpush1.bf16.msra.mxu0 %v6619
        %6742 = vmatprep.subr.bf16.mxu0 0
        %6743 = vmatpush1.bf16.msra.mxu0 %v6622
        %6744 = vmatprep.mubr.bf16.mxu0 %v6412
        %6745 = vmatmul.mubr.bf16.gmra.mrb[0].mxu0 %v6411
        %v6746 = vpop.f32.mrb[0].mxu0
        %v6747 = vadd.f32 0.0, %v6746
        %v6748 = vpop.f32.mrb[0].mxu0
        %v6749 = vpop.f32.mrb[0].mxu0
        %v6750 = vpop.f32.mrb[0].mxu0
        %6751 = vdwg.mxu0
        %v6752 = vadd.f32 %v6343, %v6706
        %v6753 = vadd.f32 %v6344, %v6708
        %v6754 = vadd.f32 %v6345, %v6747
        %s6755 = scalar_lea.vmem %s11, 3072
        %v6756 = vld [vmem:[%s6755] sm:$0xff]
        %v6757 = vld [vmem:[%s6755 + $0x8] sm:$0xf]
        %v6758 = vld [vmem:[%s6755 + $0xc] sm:$0xff]
        %v6759 = vld [vmem:[%s6755 + $0x14] sm:$0xf]
        %v6760 = vld [vmem:[%s6755 + $0x18] sm:$0xff]
        %v6761 = vld [vmem:[%s6755 + $0x20] sm:$0xf]
        %v6762 = vld [vmem:[%s6755 + $0x24] sm:$0xff]
        %v6763 = vld [vmem:[%s6755 + $0x2c] sm:$0xf]
        %v6764 = vld [vmem:[%s6755 + $0x30] sm:$0xff]
        %v6765 = vld [vmem:[%s6755 + $0x38] sm:$0xf]
        %v6766 = vld [vmem:[%s6755 + $0x3c] sm:$0xff]
        %v6767 = vld [vmem:[%s6755 + $0x44] sm:$0xf]
        %v6768 = vld [vmem:[%s6755 + $0x48] sm:$0xff]
        %v6769 = vld [vmem:[%s6755 + $0x50] sm:$0xf]
        %v6770 = vld [vmem:[%s6755 + $0x54] sm:$0xff]
        %v6771 = vld [vmem:[%s6755 + $0x5c] sm:$0xf]
        %v6772 = vld [vmem:[%s6755 + $0x60] sm:$0xff]
        %v6773 = vld [vmem:[%s6755 + $0x68] sm:$0xf]
        %v6774 = vld [vmem:[%s6755 + $0x6c] sm:$0xff]
        %v6775 = vld [vmem:[%s6755 + $0x74] sm:$0xf]
        %v6776 = vld [vmem:[%s6755 + $0x78] sm:$0xff]
        %v6777 = vld [vmem:[%s6755 + $0x80] sm:$0xf]
        %v6778 = vld [vmem:[%s6755 + $0x84] sm:$0xff]
        %v6779 = vld [vmem:[%s6755 + $0x8c] sm:$0xf]
        %v6780 = vld [vmem:[%s6755 + $0x90] sm:$0xff]
        %v6781 = vld [vmem:[%s6755 + $0x98] sm:$0xf]
        %v6782 = vld [vmem:[%s6755 + $0x9c] sm:$0xff]
        %v6783 = vld [vmem:[%s6755 + $0xa4] sm:$0xf]
        %v6784 = vld [vmem:[%s6755 + $0xa8] sm:$0xff]
        %v6785 = vld [vmem:[%s6755 + $0xb0] sm:$0xf]
        %v6786 = vld [vmem:[%s6755 + $0xb4] sm:$0xff]
        %v6787 = vld [vmem:[%s6755 + $0xbc] sm:$0xf]
        %v6788 = vld [vmem:[%s6755 + $0xc0] sm:$0xff]
        %v6789 = vld [vmem:[%s6755 + $0xc8] sm:$0xf]
        %v6790 = vld [vmem:[%s6755 + $0xcc] sm:$0xff]
        %v6791 = vld [vmem:[%s6755 + $0xd4] sm:$0xf]
        %v6792 = vld [vmem:[%s6755 + $0xd8] sm:$0xff]
        %v6793 = vld [vmem:[%s6755 + $0xe0] sm:$0xf]
        %v6794 = vld [vmem:[%s6755 + $0xe4] sm:$0xff]
        %v6795 = vld [vmem:[%s6755 + $0xec] sm:$0xf]
        %v6796 = vld [vmem:[%s6755 + $0xf0] sm:$0xff]
        %v6797 = vld [vmem:[%s6755 + $0xf8] sm:$0xf]
        %v6798 = vld [vmem:[%s6755 + $0xfc] sm:$0xff]
        %v6799 = vld [vmem:[%s6755 + $0x104] sm:$0xf]
        %v6800 = vld [vmem:[%s6755 + $0x108] sm:$0xff]
        %v6801 = vld [vmem:[%s6755 + $0x110] sm:$0xf]
        %v6802 = vld [vmem:[%s6755 + $0x114] sm:$0xff]
        %v6803 = vld [vmem:[%s6755 + $0x11c] sm:$0xf]
        %v6804 = vld [vmem:[%s6755 + $0x120] sm:$0xff]
        %v6805 = vld [vmem:[%s6755 + $0x128] sm:$0xf]
        %v6806 = vld [vmem:[%s6755 + $0x12c] sm:$0xff]
        %v6807 = vld [vmem:[%s6755 + $0x134] sm:$0xf]
        %v6808 = vld [vmem:[%s6755 + $0x138] sm:$0xff]
        %v6809 = vld [vmem:[%s6755 + $0x140] sm:$0xf]
        %v6810 = vld [vmem:[%s6755 + $0x144] sm:$0xff]
        %v6811 = vld [vmem:[%s6755 + $0x14c] sm:$0xf]
        %v6812 = vld [vmem:[%s6755 + $0x150] sm:$0xff]
        %v6813 = vld [vmem:[%s6755 + $0x158] sm:$0xf]
        %v6814 = vld [vmem:[%s6755 + $0x15c] sm:$0xff]
        %v6815 = vld [vmem:[%s6755 + $0x164] sm:$0xf]
        %v6816 = vld [vmem:[%s6755 + $0x168] sm:$0xff]
        %v6817 = vld [vmem:[%s6755 + $0x170] sm:$0xf]
        %v6818 = vld [vmem:[%s6755 + $0x174] sm:$0xff]
        %v6819 = vld [vmem:[%s6755 + $0x17c] sm:$0xf]
        %v6820 = vrot.slane %v3486, 4
        %v6821 = vrot.slane %v3487, 4
        %v6888 = vunpack.c.l.b16 %v6756
        %v6889 = vunpack.c.h.b16 %v6756
        %v6890 = vunpack.c.l.b16 %v6757
        %v6891 = vunpack.c.l.b16 %v6758
        %v6892 = vunpack.c.h.b16 %v6758
        %v6893 = vunpack.c.l.b16 %v6759
        %v6894 = vunpack.c.l.b16 %v6760
        %v6895 = vunpack.c.h.b16 %v6760
        %v6896 = vunpack.c.l.b16 %v6761
        %v6897 = vunpack.c.l.b16 %v6762
        %v6898 = vunpack.c.h.b16 %v6762
        %v6899 = vunpack.c.l.b16 %v6763
        %v6900 = vunpack.c.l.b16 %v6764
        %v6901 = vunpack.c.h.b16 %v6764
        %v6902 = vunpack.c.l.b16 %v6765
        %v6903 = vunpack.c.l.b16 %v6766
        %v6904 = vunpack.c.h.b16 %v6766
        %v6905 = vunpack.c.l.b16 %v6767
        %v6906 = vunpack.c.l.b16 %v6768
        %v6907 = vunpack.c.h.b16 %v6768
        %v6908 = vunpack.c.l.b16 %v6769
        %v6909 = vunpack.c.l.b16 %v6770
        %v6910 = vunpack.c.h.b16 %v6770
        %v6911 = vunpack.c.l.b16 %v6771
        %v6912 = vunpack.c.l.b16 %v6772
        %v6913 = vunpack.c.h.b16 %v6772
        %v6914 = vunpack.c.l.b16 %v6773
        %v6915 = vunpack.c.l.b16 %v6774
        %v6916 = vunpack.c.h.b16 %v6774
        %v6917 = vunpack.c.l.b16 %v6775
        %v6918 = vunpack.c.l.b16 %v6776
        %v6919 = vunpack.c.h.b16 %v6776
        %v6920 = vunpack.c.l.b16 %v6777
        %v6921 = vunpack.c.l.b16 %v6778
        %v6922 = vunpack.c.h.b16 %v6778
        %v6923 = vunpack.c.l.b16 %v6779
        %v6924 = vunpack.c.l.b16 %v6780
        %v6925 = vunpack.c.h.b16 %v6780
        %v6926 = vunpack.c.l.b16 %v6781
        %v6927 = vunpack.c.l.b16 %v6782
        %v6928 = vunpack.c.h.b16 %v6782
        %v6929 = vunpack.c.l.b16 %v6783
        %v6930 = vunpack.c.l.b16 %v6784
        %v6931 = vunpack.c.h.b16 %v6784
        %v6932 = vunpack.c.l.b16 %v6785
        %v6933 = vunpack.c.l.b16 %v6786
        %v6934 = vunpack.c.h.b16 %v6786
        %v6935 = vunpack.c.l.b16 %v6787
        %v6936 = vunpack.c.l.b16 %v6788
        %v6937 = vunpack.c.h.b16 %v6788
        %v6938 = vunpack.c.l.b16 %v6789
        %v6939 = vunpack.c.l.b16 %v6790
        %v6940 = vunpack.c.h.b16 %v6790
        %v6941 = vunpack.c.l.b16 %v6791
        %v6942 = vunpack.c.l.b16 %v6792
        %v6943 = vunpack.c.h.b16 %v6792
        %v6944 = vunpack.c.l.b16 %v6793
        %v6945 = vunpack.c.l.b16 %v6794
        %v6946 = vunpack.c.h.b16 %v6794
        %v6947 = vunpack.c.l.b16 %v6795
        %v6948 = vunpack.c.l.b16 %v6796
        %v6949 = vunpack.c.h.b16 %v6796
        %v6950 = vunpack.c.l.b16 %v6797
        %v6951 = vunpack.c.l.b16 %v6798
        %v6952 = vunpack.c.h.b16 %v6798
        %v6953 = vunpack.c.l.b16 %v6799
        %v6954 = vunpack.c.l.b16 %v6800
        %v6955 = vunpack.c.h.b16 %v6800
        %v6956 = vunpack.c.l.b16 %v6801
        %v6957 = vunpack.c.l.b16 %v6802
        %v6958 = vunpack.c.h.b16 %v6802
        %v6959 = vunpack.c.l.b16 %v6803
        %v6960 = vunpack.c.l.b16 %v6804
        %v6961 = vunpack.c.h.b16 %v6804
        %v6962 = vunpack.c.l.b16 %v6805
        %v6963 = vunpack.c.l.b16 %v6806
        %v6964 = vunpack.c.h.b16 %v6806
        %v6965 = vunpack.c.l.b16 %v6807
        %v6966 = vunpack.c.l.b16 %v6808
        %v6967 = vunpack.c.h.b16 %v6808
        %v6968 = vunpack.c.l.b16 %v6809
        %v6969 = vunpack.c.l.b16 %v6810
        %v6970 = vunpack.c.h.b16 %v6810
        %v6971 = vunpack.c.l.b16 %v6811
        %v6972 = vunpack.c.l.b16 %v6812
        %v6973 = vunpack.c.h.b16 %v6812
        %v6974 = vunpack.c.l.b16 %v6813
        %v6975 = vunpack.c.l.b16 %v6814
        %v6976 = vunpack.c.h.b16 %v6814
        %v6977 = vunpack.c.l.b16 %v6815
        %v6978 = vunpack.c.l.b16 %v6816
        %v6979 = vunpack.c.h.b16 %v6816
        %v6980 = vunpack.c.l.b16 %v6817
        %v6981 = vunpack.c.l.b16 %v6818
        %v6982 = vunpack.c.h.b16 %v6818
        %v6983 = vunpack.c.l.b16 %v6819
        %v6984 = vpack.c.b16 %v6891, %v6888
        %v6985 = vpack.c.b16 %v6892, %v6889
        %v6986 = vpack.c.b16 %v6893, %v6890
        %v6987 = vpack.c.b16 %v6897, %v6894
        %v6988 = vpack.c.b16 %v6898, %v6895
        %v6989 = vpack.c.b16 %v6899, %v6896
        %v6990 = vpack.c.b16 %v6903, %v6900
        %v6991 = vpack.c.b16 %v6904, %v6901
        %v6992 = vpack.c.b16 %v6905, %v6902
        %v6993 = vpack.c.b16 %v6909, %v6906
        %v6994 = vpack.c.b16 %v6910, %v6907
        %v6995 = vpack.c.b16 %v6911, %v6908
        %v6996 = vpack.c.b16 %v6915, %v6912
        %v6997 = vpack.c.b16 %v6916, %v6913
        %v6998 = vpack.c.b16 %v6917, %v6914
        %v6999 = vpack.c.b16 %v6921, %v6918
        %v7000 = vpack.c.b16 %v6922, %v6919
        %v7001 = vpack.c.b16 %v6923, %v6920
        %v7002 = vpack.c.b16 %v6927, %v6924
        %v7003 = vpack.c.b16 %v6928, %v6925
        %v7004 = vpack.c.b16 %v6929, %v6926
        %v7005 = vpack.c.b16 %v6933, %v6930
        %v7006 = vpack.c.b16 %v6934, %v6931
        %v7007 = vpack.c.b16 %v6935, %v6932
        %v7008 = vpack.c.b16 %v6939, %v6936
        %v7009 = vpack.c.b16 %v6940, %v6937
        %v7010 = vpack.c.b16 %v6941, %v6938
        %v7011 = vpack.c.b16 %v6945, %v6942
        %v7012 = vpack.c.b16 %v6946, %v6943
        %v7013 = vpack.c.b16 %v6947, %v6944
        %v7014 = vpack.c.b16 %v6951, %v6948
        %v7015 = vpack.c.b16 %v6952, %v6949
        %v7016 = vpack.c.b16 %v6953, %v6950
        %v7017 = vpack.c.b16 %v6957, %v6954
        %v7018 = vpack.c.b16 %v6958, %v6955
        %v7019 = vpack.c.b16 %v6959, %v6956
        %v7020 = vpack.c.b16 %v6963, %v6960
        %v7021 = vpack.c.b16 %v6964, %v6961
        %v7022 = vpack.c.b16 %v6965, %v6962
        %v7023 = vpack.c.b16 %v6969, %v6966
        %v7024 = vpack.c.b16 %v6970, %v6967
        %v7025 = vpack.c.b16 %v6971, %v6968
        %v7026 = vpack.c.b16 %v6975, %v6972
        %v7027 = vpack.c.b16 %v6976, %v6973
        %v7028 = vpack.c.b16 %v6977, %v6974
        %v7029 = vpack.c.b16 %v6981, %v6978
        %v7030 = vpack.c.b16 %v6982, %v6979
        %v7031 = vpack.c.b16 %v6983, %v6980
        %7080 = vmatprep.subr.bf16.mxu0 %v6985
        %7081 = vmatpush1.bf16.msra.mxu0 %v6984
        %7082 = vmatprep.subr.bf16.mxu0 %v6988
        %7083 = vmatpush1.bf16.msra.mxu0 %v6987
        %7084 = vmatprep.subr.bf16.mxu0 %v6991
        %7085 = vmatpush1.bf16.msra.mxu0 %v6990
        %7086 = vmatprep.subr.bf16.mxu0 %v6994
        %7087 = vmatpush1.bf16.msra.mxu0 %v6993
        %7088 = vmatprep.subr.bf16.mxu0 %v6997
        %7089 = vmatpush1.bf16.msra.mxu0 %v6996
        %7090 = vmatprep.subr.bf16.mxu0 %v7000
        %7091 = vmatpush1.bf16.msra.mxu0 %v6999
        %7092 = vmatprep.subr.bf16.mxu0 %v7003
        %7093 = vmatpush1.bf16.msra.mxu0 %v7002
        %7094 = vmatprep.subr.bf16.mxu0 %v7006
        %7095 = vmatpush1.bf16.msra.mxu0 %v7005
        %7096 = vmatprep.subr.bf16.mxu0 %v7009
        %7097 = vmatpush1.bf16.msra.mxu0 %v7008
        %7098 = vmatprep.subr.bf16.mxu0 %v7012
        %7099 = vmatpush1.bf16.msra.mxu0 %v7011
        %7100 = vmatprep.subr.bf16.mxu0 %v7015
        %7101 = vmatpush1.bf16.msra.mxu0 %v7014
        %7102 = vmatprep.subr.bf16.mxu0 %v7018
        %7103 = vmatpush1.bf16.msra.mxu0 %v7017
        %7104 = vmatprep.subr.bf16.mxu0 %v7021
        %7105 = vmatpush1.bf16.msra.mxu0 %v7020
        %7106 = vmatprep.subr.bf16.mxu0 %v7024
        %7107 = vmatpush1.bf16.msra.mxu0 %v7023
        %7108 = vmatprep.subr.bf16.mxu0 %v7027
        %7109 = vmatpush1.bf16.msra.mxu0 %v7026
        %7110 = vmatprep.subr.bf16.mxu0 %v7030
        %7111 = vmatpush1.bf16.msra.mxu0 %v7029
        %7112 = vmatprep.mubr.bf16.mxu0 %v6821
        %7113 = vmatmul.mubr.bf16.gmra.mrb[0].mxu0 %v6820
        %v7114 = vpop.f32.mrb[0].mxu0
        %v7115 = vadd.f32 0.0, %v7114
        %v7116 = vpop.f32.mrb[0].mxu0
        %v7117 = vadd.f32 0.0, %v7116
        %v7118 = vpop.f32.mrb[0].mxu0
        %v7119 = vpop.f32.mrb[0].mxu0
        %7120 = vdwg.mxu0
        %7121 = vmatprep.subr.bf16.mxu0 0
        %7122 = vmatpush1.bf16.msra.mxu0 %v6986
        %7123 = vmatprep.subr.bf16.mxu0 0
        %7124 = vmatpush1.bf16.msra.mxu0 %v6989
        %7125 = vmatprep.subr.bf16.mxu0 0
        %7126 = vmatpush1.bf16.msra.mxu0 %v6992
        %7127 = vmatprep.subr.bf16.mxu0 0
        %7128 = vmatpush1.bf16.msra.mxu0 %v6995
        %7129 = vmatprep.subr.bf16.mxu0 0
        %7130 = vmatpush1.bf16.msra.mxu0 %v6998
        %7131 = vmatprep.subr.bf16.mxu0 0
        %7132 = vmatpush1.bf16.msra.mxu0 %v7001
        %7133 = vmatprep.subr.bf16.mxu0 0
        %7134 = vmatpush1.bf16.msra.mxu0 %v7004
        %7135 = vmatprep.subr.bf16.mxu0 0
        %7136 = vmatpush1.bf16.msra.mxu0 %v7007
        %7137 = vmatprep.subr.bf16.mxu0 0
        %7138 = vmatpush1.bf16.msra.mxu0 %v7010
        %7139 = vmatprep.subr.bf16.mxu0 0
        %7140 = vmatpush1.bf16.msra.mxu0 %v7013
        %7141 = vmatprep.subr.bf16.mxu0 0
        %7142 = vmatpush1.bf16.msra.mxu0 %v7016
        %7143 = vmatprep.subr.bf16.mxu0 0
        %7144 = vmatpush1.bf16.msra.mxu0 %v7019
        %7145 = vmatprep.subr.bf16.mxu0 0
        %7146 = vmatpush1.bf16.msra.mxu0 %v7022
        %7147 = vmatprep.subr.bf16.mxu0 0
        %7148 = vmatpush1.bf16.msra.mxu0 %v7025
        %7149 = vmatprep.subr.bf16.mxu0 0
        %7150 = vmatpush1.bf16.msra.mxu0 %v7028
        %7151 = vmatprep.subr.bf16.mxu0 0
        %7152 = vmatpush1.bf16.msra.mxu0 %v7031
        %7153 = vmatprep.mubr.bf16.mxu0 %v6821
        %7154 = vmatmul.mubr.bf16.gmra.mrb[0].mxu0 %v6820
        %v7155 = vpop.f32.mrb[0].mxu0
        %v7156 = vadd.f32 0.0, %v7155
        %v7157 = vpop.f32.mrb[0].mxu0
        %v7158 = vpop.f32.mrb[0].mxu0
        %v7159 = vpop.f32.mrb[0].mxu0
        %7160 = vdwg.mxu0
        %v7161 = vadd.f32 %v6752, %v7115
        %v7162 = vadd.f32 %v6753, %v7117
        %v7163 = vadd.f32 %v6754, %v7156
        %s7164 = scalar_lea.vmem %s11, 3456
        %v7165 = vld [vmem:[%s7164] sm:$0xff]
        %v7166 = vld [vmem:[%s7164 + $0x8] sm:$0xf]
        %v7167 = vld [vmem:[%s7164 + $0xc] sm:$0xff]
        %v7168 = vld [vmem:[%s7164 + $0x14] sm:$0xf]
        %v7169 = vld [vmem:[%s7164 + $0x18] sm:$0xff]
        %v7170 = vld [vmem:[%s7164 + $0x20] sm:$0xf]
        %v7171 = vld [vmem:[%s7164 + $0x24] sm:$0xff]
        %v7172 = vld [vmem:[%s7164 + $0x2c] sm:$0xf]
        %v7173 = vld [vmem:[%s7164 + $0x30] sm:$0xff]
        %v7174 = vld [vmem:[%s7164 + $0x38] sm:$0xf]
        %v7175 = vld [vmem:[%s7164 + $0x3c] sm:$0xff]
        %v7176 = vld [vmem:[%s7164 + $0x44] sm:$0xf]
        %v7177 = vld [vmem:[%s7164 + $0x48] sm:$0xff]
        %v7178 = vld [vmem:[%s7164 + $0x50] sm:$0xf]
        %v7179 = vld [vmem:[%s7164 + $0x54] sm:$0xff]
        %v7180 = vld [vmem:[%s7164 + $0x5c] sm:$0xf]
        %v7181 = vld [vmem:[%s7164 + $0x60] sm:$0xff]
        %v7182 = vld [vmem:[%s7164 + $0x68] sm:$0xf]
        %v7183 = vld [vmem:[%s7164 + $0x6c] sm:$0xff]
        %v7184 = vld [vmem:[%s7164 + $0x74] sm:$0xf]
        %v7185 = vld [vmem:[%s7164 + $0x78] sm:$0xff]
        %v7186 = vld [vmem:[%s7164 + $0x80] sm:$0xf]
        %v7187 = vld [vmem:[%s7164 + $0x84] sm:$0xff]
        %v7188 = vld [vmem:[%s7164 + $0x8c] sm:$0xf]
        %v7189 = vld [vmem:[%s7164 + $0x90] sm:$0xff]
        %v7190 = vld [vmem:[%s7164 + $0x98] sm:$0xf]
        %v7191 = vld [vmem:[%s7164 + $0x9c] sm:$0xff]
        %v7192 = vld [vmem:[%s7164 + $0xa4] sm:$0xf]
        %v7193 = vld [vmem:[%s7164 + $0xa8] sm:$0xff]
        %v7194 = vld [vmem:[%s7164 + $0xb0] sm:$0xf]
        %v7195 = vld [vmem:[%s7164 + $0xb4] sm:$0xff]
        %v7196 = vld [vmem:[%s7164 + $0xbc] sm:$0xf]
        %v7197 = vld [vmem:[%s7164 + $0xc0] sm:$0xff]
        %v7198 = vld [vmem:[%s7164 + $0xc8] sm:$0xf]
        %v7199 = vld [vmem:[%s7164 + $0xcc] sm:$0xff]
        %v7200 = vld [vmem:[%s7164 + $0xd4] sm:$0xf]
        %v7201 = vld [vmem:[%s7164 + $0xd8] sm:$0xff]
        %v7202 = vld [vmem:[%s7164 + $0xe0] sm:$0xf]
        %v7203 = vld [vmem:[%s7164 + $0xe4] sm:$0xff]
        %v7204 = vld [vmem:[%s7164 + $0xec] sm:$0xf]
        %v7205 = vld [vmem:[%s7164 + $0xf0] sm:$0xff]
        %v7206 = vld [vmem:[%s7164 + $0xf8] sm:$0xf]
        %v7207 = vld [vmem:[%s7164 + $0xfc] sm:$0xff]
        %v7208 = vld [vmem:[%s7164 + $0x104] sm:$0xf]
        %v7209 = vld [vmem:[%s7164 + $0x108] sm:$0xff]
        %v7210 = vld [vmem:[%s7164 + $0x110] sm:$0xf]
        %v7211 = vld [vmem:[%s7164 + $0x114] sm:$0xff]
        %v7212 = vld [vmem:[%s7164 + $0x11c] sm:$0xf]
        %v7213 = vld [vmem:[%s7164 + $0x120] sm:$0xff]
        %v7214 = vld [vmem:[%s7164 + $0x128] sm:$0xf]
        %v7215 = vld [vmem:[%s7164 + $0x12c] sm:$0xff]
        %v7216 = vld [vmem:[%s7164 + $0x134] sm:$0xf]
        %v7217 = vld [vmem:[%s7164 + $0x138] sm:$0xff]
        %v7218 = vld [vmem:[%s7164 + $0x140] sm:$0xf]
        %v7219 = vld [vmem:[%s7164 + $0x144] sm:$0xff]
        %v7220 = vld [vmem:[%s7164 + $0x14c] sm:$0xf]
        %v7221 = vld [vmem:[%s7164 + $0x150] sm:$0xff]
        %v7222 = vld [vmem:[%s7164 + $0x158] sm:$0xf]
        %v7223 = vld [vmem:[%s7164 + $0x15c] sm:$0xff]
        %v7224 = vld [vmem:[%s7164 + $0x164] sm:$0xf]
        %v7225 = vld [vmem:[%s7164 + $0x168] sm:$0xff]
        %v7226 = vld [vmem:[%s7164 + $0x170] sm:$0xf]
        %v7227 = vld [vmem:[%s7164 + $0x174] sm:$0xff]
        %v7228 = vld [vmem:[%s7164 + $0x17c] sm:$0xf]
        %v7229 = vrot.slane %v3618, 4
        %v7230 = vrot.slane %v3621, 4
        %v7297 = vunpack.c.l.b16 %v7165
        %v7298 = vunpack.c.h.b16 %v7165
        %v7299 = vunpack.c.l.b16 %v7166
        %v7300 = vunpack.c.l.b16 %v7167
        %v7301 = vunpack.c.h.b16 %v7167
        %v7302 = vunpack.c.l.b16 %v7168
        %v7303 = vunpack.c.l.b16 %v7169
        %v7304 = vunpack.c.h.b16 %v7169
        %v7305 = vunpack.c.l.b16 %v7170
        %v7306 = vunpack.c.l.b16 %v7171
        %v7307 = vunpack.c.h.b16 %v7171
        %v7308 = vunpack.c.l.b16 %v7172
        %v7309 = vunpack.c.l.b16 %v7173
        %v7310 = vunpack.c.h.b16 %v7173
        %v7311 = vunpack.c.l.b16 %v7174
        %v7312 = vunpack.c.l.b16 %v7175
        %v7313 = vunpack.c.h.b16 %v7175
        %v7314 = vunpack.c.l.b16 %v7176
        %v7315 = vunpack.c.l.b16 %v7177
        %v7316 = vunpack.c.h.b16 %v7177
        %v7317 = vunpack.c.l.b16 %v7178
        %v7318 = vunpack.c.l.b16 %v7179
        %v7319 = vunpack.c.h.b16 %v7179
        %v7320 = vunpack.c.l.b16 %v7180
        %v7321 = vunpack.c.l.b16 %v7181
        %v7322 = vunpack.c.h.b16 %v7181
        %v7323 = vunpack.c.l.b16 %v7182
        %v7324 = vunpack.c.l.b16 %v7183
        %v7325 = vunpack.c.h.b16 %v7183
        %v7326 = vunpack.c.l.b16 %v7184
        %v7327 = vunpack.c.l.b16 %v7185
        %v7328 = vunpack.c.h.b16 %v7185
        %v7329 = vunpack.c.l.b16 %v7186
        %v7330 = vunpack.c.l.b16 %v7187
        %v7331 = vunpack.c.h.b16 %v7187
        %v7332 = vunpack.c.l.b16 %v7188
        %v7333 = vunpack.c.l.b16 %v7189
        %v7334 = vunpack.c.h.b16 %v7189
        %v7335 = vunpack.c.l.b16 %v7190
        %v7336 = vunpack.c.l.b16 %v7191
        %v7337 = vunpack.c.h.b16 %v7191
        %v7338 = vunpack.c.l.b16 %v7192
        %v7339 = vunpack.c.l.b16 %v7193
        %v7340 = vunpack.c.h.b16 %v7193
        %v7341 = vunpack.c.l.b16 %v7194
        %v7342 = vunpack.c.l.b16 %v7195
        %v7343 = vunpack.c.h.b16 %v7195
        %v7344 = vunpack.c.l.b16 %v7196
        %v7345 = vunpack.c.l.b16 %v7197
        %v7346 = vunpack.c.h.b16 %v7197
        %v7347 = vunpack.c.l.b16 %v7198
        %v7348 = vunpack.c.l.b16 %v7199
        %v7349 = vunpack.c.h.b16 %v7199
        %v7350 = vunpack.c.l.b16 %v7200
        %v7351 = vunpack.c.l.b16 %v7201
        %v7352 = vunpack.c.h.b16 %v7201
        %v7353 = vunpack.c.l.b16 %v7202
        %v7354 = vunpack.c.l.b16 %v7203
        %v7355 = vunpack.c.h.b16 %v7203
        %v7356 = vunpack.c.l.b16 %v7204
        %v7357 = vunpack.c.l.b16 %v7205
        %v7358 = vunpack.c.h.b16 %v7205
        %v7359 = vunpack.c.l.b16 %v7206
        %v7360 = vunpack.c.l.b16 %v7207
        %v7361 = vunpack.c.h.b16 %v7207
        %v7362 = vunpack.c.l.b16 %v7208
        %v7363 = vunpack.c.l.b16 %v7209
        %v7364 = vunpack.c.h.b16 %v7209
        %v7365 = vunpack.c.l.b16 %v7210
        %v7366 = vunpack.c.l.b16 %v7211
        %v7367 = vunpack.c.h.b16 %v7211
        %v7368 = vunpack.c.l.b16 %v7212
        %v7369 = vunpack.c.l.b16 %v7213
        %v7370 = vunpack.c.h.b16 %v7213
        %v7371 = vunpack.c.l.b16 %v7214
        %v7372 = vunpack.c.l.b16 %v7215
        %v7373 = vunpack.c.h.b16 %v7215
        %v7374 = vunpack.c.l.b16 %v7216
        %v7375 = vunpack.c.l.b16 %v7217
        %v7376 = vunpack.c.h.b16 %v7217
        %v7377 = vunpack.c.l.b16 %v7218
        %v7378 = vunpack.c.l.b16 %v7219
        %v7379 = vunpack.c.h.b16 %v7219
        %v7380 = vunpack.c.l.b16 %v7220
        %v7381 = vunpack.c.l.b16 %v7221
        %v7382 = vunpack.c.h.b16 %v7221
        %v7383 = vunpack.c.l.b16 %v7222
        %v7384 = vunpack.c.l.b16 %v7223
        %v7385 = vunpack.c.h.b16 %v7223
        %v7386 = vunpack.c.l.b16 %v7224
        %v7387 = vunpack.c.l.b16 %v7225
        %v7388 = vunpack.c.h.b16 %v7225
        %v7389 = vunpack.c.l.b16 %v7226
        %v7390 = vunpack.c.l.b16 %v7227
        %v7391 = vunpack.c.h.b16 %v7227
        %v7392 = vunpack.c.l.b16 %v7228
        %v7393 = vpack.c.b16 %v7300, %v7297
        %v7394 = vpack.c.b16 %v7301, %v7298
        %v7395 = vpack.c.b16 %v7302, %v7299
        %v7396 = vpack.c.b16 %v7306, %v7303
        %v7397 = vpack.c.b16 %v7307, %v7304
        %v7398 = vpack.c.b16 %v7308, %v7305
        %v7399 = vpack.c.b16 %v7312, %v7309
        %v7400 = vpack.c.b16 %v7313, %v7310
        %v7401 = vpack.c.b16 %v7314, %v7311
        %v7402 = vpack.c.b16 %v7318, %v7315
        %v7403 = vpack.c.b16 %v7319, %v7316
        %v7404 = vpack.c.b16 %v7320, %v7317
        %v7405 = vpack.c.b16 %v7324, %v7321
        %v7406 = vpack.c.b16 %v7325, %v7322
        %v7407 = vpack.c.b16 %v7326, %v7323
        %v7408 = vpack.c.b16 %v7330, %v7327
        %v7409 = vpack.c.b16 %v7331, %v7328
        %v7410 = vpack.c.b16 %v7332, %v7329
        %v7411 = vpack.c.b16 %v7336, %v7333
        %v7412 = vpack.c.b16 %v7337, %v7334
        %v7413 = vpack.c.b16 %v7338, %v7335
        %v7414 = vpack.c.b16 %v7342, %v7339
        %v7415 = vpack.c.b16 %v7343, %v7340
        %v7416 = vpack.c.b16 %v7344, %v7341
        %v7417 = vpack.c.b16 %v7348, %v7345
        %v7418 = vpack.c.b16 %v7349, %v7346
        %v7419 = vpack.c.b16 %v7350, %v7347
        %v7420 = vpack.c.b16 %v7354, %v7351
        %v7421 = vpack.c.b16 %v7355, %v7352
        %v7422 = vpack.c.b16 %v7356, %v7353
        %v7423 = vpack.c.b16 %v7360, %v7357
        %v7424 = vpack.c.b16 %v7361, %v7358
        %v7425 = vpack.c.b16 %v7362, %v7359
        %v7426 = vpack.c.b16 %v7366, %v7363
        %v7427 = vpack.c.b16 %v7367, %v7364
        %v7428 = vpack.c.b16 %v7368, %v7365
        %v7429 = vpack.c.b16 %v7372, %v7369
        %v7430 = vpack.c.b16 %v7373, %v7370
        %v7431 = vpack.c.b16 %v7374, %v7371
        %v7432 = vpack.c.b16 %v7378, %v7375
        %v7433 = vpack.c.b16 %v7379, %v7376
        %v7434 = vpack.c.b16 %v7380, %v7377
        %v7435 = vpack.c.b16 %v7384, %v7381
        %v7436 = vpack.c.b16 %v7385, %v7382
        %v7437 = vpack.c.b16 %v7386, %v7383
        %v7438 = vpack.c.b16 %v7390, %v7387
        %v7439 = vpack.c.b16 %v7391, %v7388
        %v7440 = vpack.c.b16 %v7392, %v7389
        %7489 = vmatprep.subr.bf16.mxu0 %v7394
        %7490 = vmatpush1.bf16.msra.mxu0 %v7393
        %7491 = vmatprep.subr.bf16.mxu0 %v7397
        %7492 = vmatpush1.bf16.msra.mxu0 %v7396
        %7493 = vmatprep.subr.bf16.mxu0 %v7400
        %7494 = vmatpush1.bf16.msra.mxu0 %v7399
        %7495 = vmatprep.subr.bf16.mxu0 %v7403
        %7496 = vmatpush1.bf16.msra.mxu0 %v7402
        %7497 = vmatprep.subr.bf16.mxu0 %v7406
        %7498 = vmatpush1.bf16.msra.mxu0 %v7405
        %7499 = vmatprep.subr.bf16.mxu0 %v7409
        %7500 = vmatpush1.bf16.msra.mxu0 %v7408
        %7501 = vmatprep.subr.bf16.mxu0 %v7412
        %7502 = vmatpush1.bf16.msra.mxu0 %v7411
        %7503 = vmatprep.subr.bf16.mxu0 %v7415
        %7504 = vmatpush1.bf16.msra.mxu0 %v7414
        %7505 = vmatprep.subr.bf16.mxu0 %v7418
        %7506 = vmatpush1.bf16.msra.mxu0 %v7417
        %7507 = vmatprep.subr.bf16.mxu0 %v7421
        %7508 = vmatpush1.bf16.msra.mxu0 %v7420
        %7509 = vmatprep.subr.bf16.mxu0 %v7424
        %7510 = vmatpush1.bf16.msra.mxu0 %v7423
        %7511 = vmatprep.subr.bf16.mxu0 %v7427
        %7512 = vmatpush1.bf16.msra.mxu0 %v7426
        %7513 = vmatprep.subr.bf16.mxu0 %v7430
        %7514 = vmatpush1.bf16.msra.mxu0 %v7429
        %7515 = vmatprep.subr.bf16.mxu0 %v7433
        %7516 = vmatpush1.bf16.msra.mxu0 %v7432
        %7517 = vmatprep.subr.bf16.mxu0 %v7436
        %7518 = vmatpush1.bf16.msra.mxu0 %v7435
        %7519 = vmatprep.subr.bf16.mxu0 %v7439
        %7520 = vmatpush1.bf16.msra.mxu0 %v7438
        %7521 = vmatprep.mubr.bf16.mxu0 %v7230
        %7522 = vmatmul.mubr.bf16.gmra.mrb[0].mxu0 %v7229
        %v7523 = vpop.f32.mrb[0].mxu0
        %v7524 = vadd.f32 0.0, %v7523
        %v7525 = vpop.f32.mrb[0].mxu0
        %v7526 = vadd.f32 0.0, %v7525
        %v7527 = vpop.f32.mrb[0].mxu0
        %v7528 = vpop.f32.mrb[0].mxu0
        %7529 = vdwg.mxu0
        %7530 = vmatprep.subr.bf16.mxu0 0
        %7531 = vmatpush1.bf16.msra.mxu0 %v7395
        %7532 = vmatprep.subr.bf16.mxu0 0
        %7533 = vmatpush1.bf16.msra.mxu0 %v7398
        %7534 = vmatprep.subr.bf16.mxu0 0
        %7535 = vmatpush1.bf16.msra.mxu0 %v7401
        %7536 = vmatprep.subr.bf16.mxu0 0
        %7537 = vmatpush1.bf16.msra.mxu0 %v7404
        %7538 = vmatprep.subr.bf16.mxu0 0
        %7539 = vmatpush1.bf16.msra.mxu0 %v7407
        %7540 = vmatprep.subr.bf16.mxu0 0
        %7541 = vmatpush1.bf16.msra.mxu0 %v7410
        %7542 = vmatprep.subr.bf16.mxu0 0
        %7543 = vmatpush1.bf16.msra.mxu0 %v7413
        %7544 = vmatprep.subr.bf16.mxu0 0
        %7545 = vmatpush1.bf16.msra.mxu0 %v7416
        %7546 = vmatprep.subr.bf16.mxu0 0
        %7547 = vmatpush1.bf16.msra.mxu0 %v7419
        %7548 = vmatprep.subr.bf16.mxu0 0
        %7549 = vmatpush1.bf16.msra.mxu0 %v7422
        %7550 = vmatprep.subr.bf16.mxu0 0
        %7551 = vmatpush1.bf16.msra.mxu0 %v7425
        %7552 = vmatprep.subr.bf16.mxu0 0
        %7553 = vmatpush1.bf16.msra.mxu0 %v7428
        %7554 = vmatprep.subr.bf16.mxu0 0
        %7555 = vmatpush1.bf16.msra.mxu0 %v7431
        %7556 = vmatprep.subr.bf16.mxu0 0
        %7557 = vmatpush1.bf16.msra.mxu0 %v7434
        %7558 = vmatprep.subr.bf16.mxu0 0
        %7559 = vmatpush1.bf16.msra.mxu0 %v7437
        %7560 = vmatprep.subr.bf16.mxu0 0
        %7561 = vmatpush1.bf16.msra.mxu0 %v7440
        %7562 = vmatprep.mubr.bf16.mxu0 %v7230
        %7563 = vmatmul.mubr.bf16.gmra.mrb[0].mxu0 %v7229
        %v7564 = vpop.f32.mrb[0].mxu0
        %v7565 = vadd.f32 0.0, %v7564
        %v7566 = vpop.f32.mrb[0].mxu0
        %v7567 = vpop.f32.mrb[0].mxu0
        %v7568 = vpop.f32.mrb[0].mxu0
        %7569 = vdwg.mxu0
        %v7570 = vadd.f32 %v7161, %v7524
        %v7571 = vadd.f32 %v7162, %v7526
        %v7572 = vadd.f32 %v7163, %v7565
        %s7573 = scalar_lea.vmem %s11, 3840
        %v7574 = vld [vmem:[%s7573] sm:$0xff]
        %v7575 = vld [vmem:[%s7573 + $0x8] sm:$0xf]
        %v7576 = vld [vmem:[%s7573 + $0xc] sm:$0xff]
        %v7577 = vld [vmem:[%s7573 + $0x14] sm:$0xf]
        %v7578 = vld [vmem:[%s7573 + $0x18] sm:$0xff]
        %v7579 = vld [vmem:[%s7573 + $0x20] sm:$0xf]
        %v7580 = vld [vmem:[%s7573 + $0x24] sm:$0xff]
        %v7581 = vld [vmem:[%s7573 + $0x2c] sm:$0xf]
        %v7582 = vld [vmem:[%s7573 + $0x30] sm:$0xff]
        %v7583 = vld [vmem:[%s7573 + $0x38] sm:$0xf]
        %v7584 = vld [vmem:[%s7573 + $0x3c] sm:$0xff]
        %v7585 = vld [vmem:[%s7573 + $0x44] sm:$0xf]
        %v7586 = vld [vmem:[%s7573 + $0x48] sm:$0xff]
        %v7587 = vld [vmem:[%s7573 + $0x50] sm:$0xf]
        %v7588 = vld [vmem:[%s7573 + $0x54] sm:$0xff]
        %v7589 = vld [vmem:[%s7573 + $0x5c] sm:$0xf]
        %v7590 = vld [vmem:[%s7573 + $0x60] sm:$0xff]
        %v7591 = vld [vmem:[%s7573 + $0x68] sm:$0xf]
        %v7592 = vld [vmem:[%s7573 + $0x6c] sm:$0xff]
        %v7593 = vld [vmem:[%s7573 + $0x74] sm:$0xf]
        %v7594 = vld [vmem:[%s7573 + $0x78] sm:$0xff]
        %v7595 = vld [vmem:[%s7573 + $0x80] sm:$0xf]
        %v7596 = vld [vmem:[%s7573 + $0x84] sm:$0xff]
        %v7597 = vld [vmem:[%s7573 + $0x8c] sm:$0xf]
        %v7598 = vld [vmem:[%s7573 + $0x90] sm:$0xff]
        %v7599 = vld [vmem:[%s7573 + $0x98] sm:$0xf]
        %v7600 = vld [vmem:[%s7573 + $0x9c] sm:$0xff]
        %v7601 = vld [vmem:[%s7573 + $0xa4] sm:$0xf]
        %v7602 = vld [vmem:[%s7573 + $0xa8] sm:$0xff]
        %v7603 = vld [vmem:[%s7573 + $0xb0] sm:$0xf]
        %v7604 = vld [vmem:[%s7573 + $0xb4] sm:$0xff]
        %v7605 = vld [vmem:[%s7573 + $0xbc] sm:$0xf]
        %v7606 = vld [vmem:[%s7573 + $0xc0] sm:$0xff]
        %v7607 = vld [vmem:[%s7573 + $0xc8] sm:$0xf]
        %v7608 = vld [vmem:[%s7573 + $0xcc] sm:$0xff]
        %v7609 = vld [vmem:[%s7573 + $0xd4] sm:$0xf]
        %v7610 = vld [vmem:[%s7573 + $0xd8] sm:$0xff]
        %v7611 = vld [vmem:[%s7573 + $0xe0] sm:$0xf]
        %v7612 = vld [vmem:[%s7573 + $0xe4] sm:$0xff]
        %v7613 = vld [vmem:[%s7573 + $0xec] sm:$0xf]
        %v7614 = vld [vmem:[%s7573 + $0xf0] sm:$0xff]
        %v7615 = vld [vmem:[%s7573 + $0xf8] sm:$0xf]
        %v7616 = vld [vmem:[%s7573 + $0xfc] sm:$0xff]
        %v7617 = vld [vmem:[%s7573 + $0x104] sm:$0xf]
        %v7618 = vld [vmem:[%s7573 + $0x108] sm:$0xff]
        %v7619 = vld [vmem:[%s7573 + $0x110] sm:$0xf]
        %v7620 = vld [vmem:[%s7573 + $0x114] sm:$0xff]
        %v7621 = vld [vmem:[%s7573 + $0x11c] sm:$0xf]
        %v7622 = vld [vmem:[%s7573 + $0x120] sm:$0xff]
        %v7623 = vld [vmem:[%s7573 + $0x128] sm:$0xf]
        %v7624 = vld [vmem:[%s7573 + $0x12c] sm:$0xff]
        %v7625 = vld [vmem:[%s7573 + $0x134] sm:$0xf]
        %v7626 = vld [vmem:[%s7573 + $0x138] sm:$0xff]
        %v7627 = vld [vmem:[%s7573 + $0x140] sm:$0xf]
        %v7628 = vld [vmem:[%s7573 + $0x144] sm:$0xff]
        %v7629 = vld [vmem:[%s7573 + $0x14c] sm:$0xf]
        %v7630 = vld [vmem:[%s7573 + $0x150] sm:$0xff]
        %v7631 = vld [vmem:[%s7573 + $0x158] sm:$0xf]
        %v7632 = vld [vmem:[%s7573 + $0x15c] sm:$0xff]
        %v7633 = vld [vmem:[%s7573 + $0x164] sm:$0xf]
        %v7634 = vld [vmem:[%s7573 + $0x168] sm:$0xff]
        %v7635 = vld [vmem:[%s7573 + $0x170] sm:$0xf]
        %v7636 = vld [vmem:[%s7573 + $0x174] sm:$0xff]
        %v7637 = vld [vmem:[%s7573 + $0x17c] sm:$0xf]
        %v7638 = vrot.slane %v3486, 5
        %v7639 = vrot.slane %v3487, 5
        %v7706 = vunpack.c.l.b16 %v7574
        %v7707 = vunpack.c.h.b16 %v7574
        %v7708 = vunpack.c.l.b16 %v7575
        %v7709 = vunpack.c.l.b16 %v7576
        %v7710 = vunpack.c.h.b16 %v7576
        %v7711 = vunpack.c.l.b16 %v7577
        %v7712 = vunpack.c.l.b16 %v7578
        %v7713 = vunpack.c.h.b16 %v7578
        %v7714 = vunpack.c.l.b16 %v7579
        %v7715 = vunpack.c.l.b16 %v7580
        %v7716 = vunpack.c.h.b16 %v7580
        %v7717 = vunpack.c.l.b16 %v7581
        %v7718 = vunpack.c.l.b16 %v7582
        %v7719 = vunpack.c.h.b16 %v7582
        %v7720 = vunpack.c.l.b16 %v7583
        %v7721 = vunpack.c.l.b16 %v7584
        %v7722 = vunpack.c.h.b16 %v7584
        %v7723 = vunpack.c.l.b16 %v7585
        %v7724 = vunpack.c.l.b16 %v7586
        %v7725 = vunpack.c.h.b16 %v7586
        %v7726 = vunpack.c.l.b16 %v7587
        %v7727 = vunpack.c.l.b16 %v7588
        %v7728 = vunpack.c.h.b16 %v7588
        %v7729 = vunpack.c.l.b16 %v7589
        %v7730 = vunpack.c.l.b16 %v7590
        %v7731 = vunpack.c.h.b16 %v7590
        %v7732 = vunpack.c.l.b16 %v7591
        %v7733 = vunpack.c.l.b16 %v7592
        %v7734 = vunpack.c.h.b16 %v7592
        %v7735 = vunpack.c.l.b16 %v7593
        %v7736 = vunpack.c.l.b16 %v7594
        %v7737 = vunpack.c.h.b16 %v7594
        %v7738 = vunpack.c.l.b16 %v7595
        %v7739 = vunpack.c.l.b16 %v7596
        %v7740 = vunpack.c.h.b16 %v7596
        %v7741 = vunpack.c.l.b16 %v7597
        %v7742 = vunpack.c.l.b16 %v7598
        %v7743 = vunpack.c.h.b16 %v7598
        %v7744 = vunpack.c.l.b16 %v7599
        %v7745 = vunpack.c.l.b16 %v7600
        %v7746 = vunpack.c.h.b16 %v7600
        %v7747 = vunpack.c.l.b16 %v7601
        %v7748 = vunpack.c.l.b16 %v7602
        %v7749 = vunpack.c.h.b16 %v7602
        %v7750 = vunpack.c.l.b16 %v7603
        %v7751 = vunpack.c.l.b16 %v7604
        %v7752 = vunpack.c.h.b16 %v7604
        %v7753 = vunpack.c.l.b16 %v7605
        %v7754 = vunpack.c.l.b16 %v7606
        %v7755 = vunpack.c.h.b16 %v7606
        %v7756 = vunpack.c.l.b16 %v7607
        %v7757 = vunpack.c.l.b16 %v7608
        %v7758 = vunpack.c.h.b16 %v7608
        %v7759 = vunpack.c.l.b16 %v7609
        %v7760 = vunpack.c.l.b16 %v7610
        %v7761 = vunpack.c.h.b16 %v7610
        %v7762 = vunpack.c.l.b16 %v7611
        %v7763 = vunpack.c.l.b16 %v7612
        %v7764 = vunpack.c.h.b16 %v7612
        %v7765 = vunpack.c.l.b16 %v7613
        %v7766 = vunpack.c.l.b16 %v7614
        %v7767 = vunpack.c.h.b16 %v7614
        %v7768 = vunpack.c.l.b16 %v7615
        %v7769 = vunpack.c.l.b16 %v7616
        %v7770 = vunpack.c.h.b16 %v7616
        %v7771 = vunpack.c.l.b16 %v7617
        %v7772 = vunpack.c.l.b16 %v7618
        %v7773 = vunpack.c.h.b16 %v7618
        %v7774 = vunpack.c.l.b16 %v7619
        %v7775 = vunpack.c.l.b16 %v7620
        %v7776 = vunpack.c.h.b16 %v7620
        %v7777 = vunpack.c.l.b16 %v7621
        %v7778 = vunpack.c.l.b16 %v7622
        %v7779 = vunpack.c.h.b16 %v7622
        %v7780 = vunpack.c.l.b16 %v7623
        %v7781 = vunpack.c.l.b16 %v7624
        %v7782 = vunpack.c.h.b16 %v7624
        %v7783 = vunpack.c.l.b16 %v7625
        %v7784 = vunpack.c.l.b16 %v7626
        %v7785 = vunpack.c.h.b16 %v7626
        %v7786 = vunpack.c.l.b16 %v7627
        %v7787 = vunpack.c.l.b16 %v7628
        %v7788 = vunpack.c.h.b16 %v7628
        %v7789 = vunpack.c.l.b16 %v7629
        %v7790 = vunpack.c.l.b16 %v7630
        %v7791 = vunpack.c.h.b16 %v7630
        %v7792 = vunpack.c.l.b16 %v7631
        %v7793 = vunpack.c.l.b16 %v7632
        %v7794 = vunpack.c.h.b16 %v7632
        %v7795 = vunpack.c.l.b16 %v7633
        %v7796 = vunpack.c.l.b16 %v7634
        %v7797 = vunpack.c.h.b16 %v7634
        %v7798 = vunpack.c.l.b16 %v7635
        %v7799 = vunpack.c.l.b16 %v7636
        %v7800 = vunpack.c.h.b16 %v7636
        %v7801 = vunpack.c.l.b16 %v7637
        %v7802 = vpack.c.b16 %v7709, %v7706
        %v7803 = vpack.c.b16 %v7710, %v7707
        %v7804 = vpack.c.b16 %v7711, %v7708
        %v7805 = vpack.c.b16 %v7715, %v7712
        %v7806 = vpack.c.b16 %v7716, %v7713
        %v7807 = vpack.c.b16 %v7717, %v7714
        %v7808 = vpack.c.b16 %v7721, %v7718
        %v7809 = vpack.c.b16 %v7722, %v7719
        %v7810 = vpack.c.b16 %v7723, %v7720
        %v7811 = vpack.c.b16 %v7727, %v7724
        %v7812 = vpack.c.b16 %v7728, %v7725
        %v7813 = vpack.c.b16 %v7729, %v7726
        %v7814 = vpack.c.b16 %v7733, %v7730
        %v7815 = vpack.c.b16 %v7734, %v7731
        %v7816 = vpack.c.b16 %v7735, %v7732
        %v7817 = vpack.c.b16 %v7739, %v7736
        %v7818 = vpack.c.b16 %v7740, %v7737
        %v7819 = vpack.c.b16 %v7741, %v7738
        %v7820 = vpack.c.b16 %v7745, %v7742
        %v7821 = vpack.c.b16 %v7746, %v7743
        %v7822 = vpack.c.b16 %v7747, %v7744
        %v7823 = vpack.c.b16 %v7751, %v7748
        %v7824 = vpack.c.b16 %v7752, %v7749
        %v7825 = vpack.c.b16 %v7753, %v7750
        %v7826 = vpack.c.b16 %v7757, %v7754
        %v7827 = vpack.c.b16 %v7758, %v7755
        %v7828 = vpack.c.b16 %v7759, %v7756
        %v7829 = vpack.c.b16 %v7763, %v7760
        %v7830 = vpack.c.b16 %v7764, %v7761
        %v7831 = vpack.c.b16 %v7765, %v7762
        %v7832 = vpack.c.b16 %v7769, %v7766
        %v7833 = vpack.c.b16 %v7770, %v7767
        %v7834 = vpack.c.b16 %v7771, %v7768
        %v7835 = vpack.c.b16 %v7775, %v7772
        %v7836 = vpack.c.b16 %v7776, %v7773
        %v7837 = vpack.c.b16 %v7777, %v7774
        %v7838 = vpack.c.b16 %v7781, %v7778
        %v7839 = vpack.c.b16 %v7782, %v7779
        %v7840 = vpack.c.b16 %v7783, %v7780
        %v7841 = vpack.c.b16 %v7787, %v7784
        %v7842 = vpack.c.b16 %v7788, %v7785
        %v7843 = vpack.c.b16 %v7789, %v7786
        %v7844 = vpack.c.b16 %v7793, %v7790
        %v7845 = vpack.c.b16 %v7794, %v7791
        %v7846 = vpack.c.b16 %v7795, %v7792
        %v7847 = vpack.c.b16 %v7799, %v7796
        %v7848 = vpack.c.b16 %v7800, %v7797
        %v7849 = vpack.c.b16 %v7801, %v7798
        %7898 = vmatprep.subr.bf16.mxu0 %v7803
        %7899 = vmatpush1.bf16.msra.mxu0 %v7802
        %7900 = vmatprep.subr.bf16.mxu0 %v7806
        %7901 = vmatpush1.bf16.msra.mxu0 %v7805
        %7902 = vmatprep.subr.bf16.mxu0 %v7809
        %7903 = vmatpush1.bf16.msra.mxu0 %v7808
        %7904 = vmatprep.subr.bf16.mxu0 %v7812
        %7905 = vmatpush1.bf16.msra.mxu0 %v7811
        %7906 = vmatprep.subr.bf16.mxu0 %v7815
        %7907 = vmatpush1.bf16.msra.mxu0 %v7814
        %7908 = vmatprep.subr.bf16.mxu0 %v7818
        %7909 = vmatpush1.bf16.msra.mxu0 %v7817
        %7910 = vmatprep.subr.bf16.mxu0 %v7821
        %7911 = vmatpush1.bf16.msra.mxu0 %v7820
        %7912 = vmatprep.subr.bf16.mxu0 %v7824
        %7913 = vmatpush1.bf16.msra.mxu0 %v7823
        %7914 = vmatprep.subr.bf16.mxu0 %v7827
        %7915 = vmatpush1.bf16.msra.mxu0 %v7826
        %7916 = vmatprep.subr.bf16.mxu0 %v7830
        %7917 = vmatpush1.bf16.msra.mxu0 %v7829
        %7918 = vmatprep.subr.bf16.mxu0 %v7833
        %7919 = vmatpush1.bf16.msra.mxu0 %v7832
        %7920 = vmatprep.subr.bf16.mxu0 %v7836
        %7921 = vmatpush1.bf16.msra.mxu0 %v7835
        %7922 = vmatprep.subr.bf16.mxu0 %v7839
        %7923 = vmatpush1.bf16.msra.mxu0 %v7838
        %7924 = vmatprep.subr.bf16.mxu0 %v7842
        %7925 = vmatpush1.bf16.msra.mxu0 %v7841
        %7926 = vmatprep.subr.bf16.mxu0 %v7845
        %7927 = vmatpush1.bf16.msra.mxu0 %v7844
        %7928 = vmatprep.subr.bf16.mxu0 %v7848
        %7929 = vmatpush1.bf16.msra.mxu0 %v7847
        %7930 = vmatprep.mubr.bf16.mxu0 %v7639
        %7931 = vmatmul.mubr.bf16.gmra.mrb[0].mxu0 %v7638
        %v7932 = vpop.f32.mrb[0].mxu0
        %v7933 = vadd.f32 0.0, %v7932
        %v7934 = vpop.f32.mrb[0].mxu0
        %v7935 = vadd.f32 0.0, %v7934
        %v7936 = vpop.f32.mrb[0].mxu0
        %v7937 = vpop.f32.mrb[0].mxu0
        %7938 = vdwg.mxu0
        %7939 = vmatprep.subr.bf16.mxu0 0
        %7940 = vmatpush1.bf16.msra.mxu0 %v7804
        %7941 = vmatprep.subr.bf16.mxu0 0
        %7942 = vmatpush1.bf16.msra.mxu0 %v7807
        %7943 = vmatprep.subr.bf16.mxu0 0
        %7944 = vmatpush1.bf16.msra.mxu0 %v7810
        %7945 = vmatprep.subr.bf16.mxu0 0
        %7946 = vmatpush1.bf16.msra.mxu0 %v7813
        %7947 = vmatprep.subr.bf16.mxu0 0
        %7948 = vmatpush1.bf16.msra.mxu0 %v7816
        %7949 = vmatprep.subr.bf16.mxu0 0
        %7950 = vmatpush1.bf16.msra.mxu0 %v7819
        %7951 = vmatprep.subr.bf16.mxu0 0
        %7952 = vmatpush1.bf16.msra.mxu0 %v7822
        %7953 = vmatprep.subr.bf16.mxu0 0
        %7954 = vmatpush1.bf16.msra.mxu0 %v7825
        %7955 = vmatprep.subr.bf16.mxu0 0
        %7956 = vmatpush1.bf16.msra.mxu0 %v7828
        %7957 = vmatprep.subr.bf16.mxu0 0
        %7958 = vmatpush1.bf16.msra.mxu0 %v7831
        %7959 = vmatprep.subr.bf16.mxu0 0
        %7960 = vmatpush1.bf16.msra.mxu0 %v7834
        %7961 = vmatprep.subr.bf16.mxu0 0
        %7962 = vmatpush1.bf16.msra.mxu0 %v7837
        %7963 = vmatprep.subr.bf16.mxu0 0
        %7964 = vmatpush1.bf16.msra.mxu0 %v7840
        %7965 = vmatprep.subr.bf16.mxu0 0
        %7966 = vmatpush1.bf16.msra.mxu0 %v7843
        %7967 = vmatprep.subr.bf16.mxu0 0
        %7968 = vmatpush1.bf16.msra.mxu0 %v7846
        %7969 = vmatprep.subr.bf16.mxu0 0
        %7970 = vmatpush1.bf16.msra.mxu0 %v7849
        %7971 = vmatprep.mubr.bf16.mxu0 %v7639
        %7972 = vmatmul.mubr.bf16.gmra.mrb[0].mxu0 %v7638
        %v7973 = vpop.f32.mrb[0].mxu0
        %v7974 = vadd.f32 0.0, %v7973
        %v7975 = vpop.f32.mrb[0].mxu0
        %v7976 = vpop.f32.mrb[0].mxu0
        %v7977 = vpop.f32.mrb[0].mxu0
        %7978 = vdwg.mxu0
        %v7979 = vadd.f32 %v7570, %v7933
        %v7980 = vadd.f32 %v7571, %v7935
        %v7981 = vadd.f32 %v7572, %v7974
        %s7982 = scalar_lea.vmem %s11, 4224
        %v7983 = vld [vmem:[%s7982] sm:$0xff]
        %v7984 = vld [vmem:[%s7982 + $0x8] sm:$0xf]
        %v7985 = vld [vmem:[%s7982 + $0xc] sm:$0xff]
        %v7986 = vld [vmem:[%s7982 + $0x14] sm:$0xf]
        %v7987 = vld [vmem:[%s7982 + $0x18] sm:$0xff]
        %v7988 = vld [vmem:[%s7982 + $0x20] sm:$0xf]
        %v7989 = vld [vmem:[%s7982 + $0x24] sm:$0xff]
        %v7990 = vld [vmem:[%s7982 + $0x2c] sm:$0xf]
        %v7991 = vld [vmem:[%s7982 + $0x30] sm:$0xff]
        %v7992 = vld [vmem:[%s7982 + $0x38] sm:$0xf]
        %v7993 = vld [vmem:[%s7982 + $0x3c] sm:$0xff]
        %v7994 = vld [vmem:[%s7982 + $0x44] sm:$0xf]
        %v7995 = vld [vmem:[%s7982 + $0x48] sm:$0xff]
        %v7996 = vld [vmem:[%s7982 + $0x50] sm:$0xf]
        %v7997 = vld [vmem:[%s7982 + $0x54] sm:$0xff]
        %v7998 = vld [vmem:[%s7982 + $0x5c] sm:$0xf]
        %v7999 = vld [vmem:[%s7982 + $0x60] sm:$0xff]
        %v8000 = vld [vmem:[%s7982 + $0x68] sm:$0xf]
        %v8001 = vld [vmem:[%s7982 + $0x6c] sm:$0xff]
        %v8002 = vld [vmem:[%s7982 + $0x74] sm:$0xf]
        %v8003 = vld [vmem:[%s7982 + $0x78] sm:$0xff]
        %v8004 = vld [vmem:[%s7982 + $0x80] sm:$0xf]
        %v8005 = vld [vmem:[%s7982 + $0x84] sm:$0xff]
        %v8006 = vld [vmem:[%s7982 + $0x8c] sm:$0xf]
        %v8007 = vld [vmem:[%s7982 + $0x90] sm:$0xff]
        %v8008 = vld [vmem:[%s7982 + $0x98] sm:$0xf]
        %v8009 = vld [vmem:[%s7982 + $0x9c] sm:$0xff]
        %v8010 = vld [vmem:[%s7982 + $0xa4] sm:$0xf]
        %v8011 = vld [vmem:[%s7982 + $0xa8] sm:$0xff]
        %v8012 = vld [vmem:[%s7982 + $0xb0] sm:$0xf]
        %v8013 = vld [vmem:[%s7982 + $0xb4] sm:$0xff]
        %v8014 = vld [vmem:[%s7982 + $0xbc] sm:$0xf]
        %v8015 = vld [vmem:[%s7982 + $0xc0] sm:$0xff]
        %v8016 = vld [vmem:[%s7982 + $0xc8] sm:$0xf]
        %v8017 = vld [vmem:[%s7982 + $0xcc] sm:$0xff]
        %v8018 = vld [vmem:[%s7982 + $0xd4] sm:$0xf]
        %v8019 = vld [vmem:[%s7982 + $0xd8] sm:$0xff]
        %v8020 = vld [vmem:[%s7982 + $0xe0] sm:$0xf]
        %v8021 = vld [vmem:[%s7982 + $0xe4] sm:$0xff]
        %v8022 = vld [vmem:[%s7982 + $0xec] sm:$0xf]
        %v8023 = vld [vmem:[%s7982 + $0xf0] sm:$0xff]
        %v8024 = vld [vmem:[%s7982 + $0xf8] sm:$0xf]
        %v8025 = vld [vmem:[%s7982 + $0xfc] sm:$0xff]
        %v8026 = vld [vmem:[%s7982 + $0x104] sm:$0xf]
        %v8027 = vld [vmem:[%s7982 + $0x108] sm:$0xff]
        %v8028 = vld [vmem:[%s7982 + $0x110] sm:$0xf]
        %v8029 = vld [vmem:[%s7982 + $0x114] sm:$0xff]
        %v8030 = vld [vmem:[%s7982 + $0x11c] sm:$0xf]
        %v8031 = vld [vmem:[%s7982 + $0x120] sm:$0xff]
        %v8032 = vld [vmem:[%s7982 + $0x128] sm:$0xf]
        %v8033 = vld [vmem:[%s7982 + $0x12c] sm:$0xff]
        %v8034 = vld [vmem:[%s7982 + $0x134] sm:$0xf]
        %v8035 = vld [vmem:[%s7982 + $0x138] sm:$0xff]
        %v8036 = vld [vmem:[%s7982 + $0x140] sm:$0xf]
        %v8037 = vld [vmem:[%s7982 + $0x144] sm:$0xff]
        %v8038 = vld [vmem:[%s7982 + $0x14c] sm:$0xf]
        %v8039 = vld [vmem:[%s7982 + $0x150] sm:$0xff]
        %v8040 = vld [vmem:[%s7982 + $0x158] sm:$0xf]
        %v8041 = vld [vmem:[%s7982 + $0x15c] sm:$0xff]
        %v8042 = vld [vmem:[%s7982 + $0x164] sm:$0xf]
        %v8043 = vld [vmem:[%s7982 + $0x168] sm:$0xff]
        %v8044 = vld [vmem:[%s7982 + $0x170] sm:$0xf]
        %v8045 = vld [vmem:[%s7982 + $0x174] sm:$0xff]
        %v8046 = vld [vmem:[%s7982 + $0x17c] sm:$0xf]
        %v8047 = vrot.slane %v3618, 5
        %v8048 = vrot.slane %v3621, 5
        %v8115 = vunpack.c.l.b16 %v7983
        %v8116 = vunpack.c.h.b16 %v7983
        %v8117 = vunpack.c.l.b16 %v7984
        %v8118 = vunpack.c.l.b16 %v7985
        %v8119 = vunpack.c.h.b16 %v7985
        %v8120 = vunpack.c.l.b16 %v7986
        %v8121 = vunpack.c.l.b16 %v7987
        %v8122 = vunpack.c.h.b16 %v7987
        %v8123 = vunpack.c.l.b16 %v7988
        %v8124 = vunpack.c.l.b16 %v7989
        %v8125 = vunpack.c.h.b16 %v7989
        %v8126 = vunpack.c.l.b16 %v7990
        %v8127 = vunpack.c.l.b16 %v7991
        %v8128 = vunpack.c.h.b16 %v7991
        %v8129 = vunpack.c.l.b16 %v7992
        %v8130 = vunpack.c.l.b16 %v7993
        %v8131 = vunpack.c.h.b16 %v7993
        %v8132 = vunpack.c.l.b16 %v7994
        %v8133 = vunpack.c.l.b16 %v7995
        %v8134 = vunpack.c.h.b16 %v7995
        %v8135 = vunpack.c.l.b16 %v7996
        %v8136 = vunpack.c.l.b16 %v7997
        %v8137 = vunpack.c.h.b16 %v7997
        %v8138 = vunpack.c.l.b16 %v7998
        %v8139 = vunpack.c.l.b16 %v7999
        %v8140 = vunpack.c.h.b16 %v7999
        %v8141 = vunpack.c.l.b16 %v8000
        %v8142 = vunpack.c.l.b16 %v8001
        %v8143 = vunpack.c.h.b16 %v8001
        %v8144 = vunpack.c.l.b16 %v8002
        %v8145 = vunpack.c.l.b16 %v8003
        %v8146 = vunpack.c.h.b16 %v8003
        %v8147 = vunpack.c.l.b16 %v8004
        %v8148 = vunpack.c.l.b16 %v8005
        %v8149 = vunpack.c.h.b16 %v8005
        %v8150 = vunpack.c.l.b16 %v8006
        %v8151 = vunpack.c.l.b16 %v8007
        %v8152 = vunpack.c.h.b16 %v8007
        %v8153 = vunpack.c.l.b16 %v8008
        %v8154 = vunpack.c.l.b16 %v8009
        %v8155 = vunpack.c.h.b16 %v8009
        %v8156 = vunpack.c.l.b16 %v8010
        %v8157 = vunpack.c.l.b16 %v8011
        %v8158 = vunpack.c.h.b16 %v8011
        %v8159 = vunpack.c.l.b16 %v8012
        %v8160 = vunpack.c.l.b16 %v8013
        %v8161 = vunpack.c.h.b16 %v8013
        %v8162 = vunpack.c.l.b16 %v8014
        %v8163 = vunpack.c.l.b16 %v8015
        %v8164 = vunpack.c.h.b16 %v8015
        %v8165 = vunpack.c.l.b16 %v8016
        %v8166 = vunpack.c.l.b16 %v8017
        %v8167 = vunpack.c.h.b16 %v8017
        %v8168 = vunpack.c.l.b16 %v8018
        %v8169 = vunpack.c.l.b16 %v8019
        %v8170 = vunpack.c.h.b16 %v8019
        %v8171 = vunpack.c.l.b16 %v8020
        %v8172 = vunpack.c.l.b16 %v8021
        %v8173 = vunpack.c.h.b16 %v8021
        %v8174 = vunpack.c.l.b16 %v8022
        %v8175 = vunpack.c.l.b16 %v8023
        %v8176 = vunpack.c.h.b16 %v8023
        %v8177 = vunpack.c.l.b16 %v8024
        %v8178 = vunpack.c.l.b16 %v8025
        %v8179 = vunpack.c.h.b16 %v8025
        %v8180 = vunpack.c.l.b16 %v8026
        %v8181 = vunpack.c.l.b16 %v8027
        %v8182 = vunpack.c.h.b16 %v8027
        %v8183 = vunpack.c.l.b16 %v8028
        %v8184 = vunpack.c.l.b16 %v8029
        %v8185 = vunpack.c.h.b16 %v8029
        %v8186 = vunpack.c.l.b16 %v8030
        %v8187 = vunpack.c.l.b16 %v8031
        %v8188 = vunpack.c.h.b16 %v8031
        %v8189 = vunpack.c.l.b16 %v8032
        %v8190 = vunpack.c.l.b16 %v8033
        %v8191 = vunpack.c.h.b16 %v8033
        %v8192 = vunpack.c.l.b16 %v8034
        %v8193 = vunpack.c.l.b16 %v8035
        %v8194 = vunpack.c.h.b16 %v8035
        %v8195 = vunpack.c.l.b16 %v8036
        %v8196 = vunpack.c.l.b16 %v8037
        %v8197 = vunpack.c.h.b16 %v8037
        %v8198 = vunpack.c.l.b16 %v8038
        %v8199 = vunpack.c.l.b16 %v8039
        %v8200 = vunpack.c.h.b16 %v8039
        %v8201 = vunpack.c.l.b16 %v8040
        %v8202 = vunpack.c.l.b16 %v8041
        %v8203 = vunpack.c.h.b16 %v8041
        %v8204 = vunpack.c.l.b16 %v8042
        %v8205 = vunpack.c.l.b16 %v8043
        %v8206 = vunpack.c.h.b16 %v8043
        %v8207 = vunpack.c.l.b16 %v8044
        %v8208 = vunpack.c.l.b16 %v8045
        %v8209 = vunpack.c.h.b16 %v8045
        %v8210 = vunpack.c.l.b16 %v8046
        %v8211 = vpack.c.b16 %v8118, %v8115
        %v8212 = vpack.c.b16 %v8119, %v8116
        %v8213 = vpack.c.b16 %v8120, %v8117
        %v8214 = vpack.c.b16 %v8124, %v8121
        %v8215 = vpack.c.b16 %v8125, %v8122
        %v8216 = vpack.c.b16 %v8126, %v8123
        %v8217 = vpack.c.b16 %v8130, %v8127
        %v8218 = vpack.c.b16 %v8131, %v8128
        %v8219 = vpack.c.b16 %v8132, %v8129
        %v8220 = vpack.c.b16 %v8136, %v8133
        %v8221 = vpack.c.b16 %v8137, %v8134
        %v8222 = vpack.c.b16 %v8138, %v8135
        %v8223 = vpack.c.b16 %v8142, %v8139
        %v8224 = vpack.c.b16 %v8143, %v8140
        %v8225 = vpack.c.b16 %v8144, %v8141
        %v8226 = vpack.c.b16 %v8148, %v8145
        %v8227 = vpack.c.b16 %v8149, %v8146
        %v8228 = vpack.c.b16 %v8150, %v8147
        %v8229 = vpack.c.b16 %v8154, %v8151
        %v8230 = vpack.c.b16 %v8155, %v8152
        %v8231 = vpack.c.b16 %v8156, %v8153
        %v8232 = vpack.c.b16 %v8160, %v8157
        %v8233 = vpack.c.b16 %v8161, %v8158
        %v8234 = vpack.c.b16 %v8162, %v8159
        %v8235 = vpack.c.b16 %v8166, %v8163
        %v8236 = vpack.c.b16 %v8167, %v8164
        %v8237 = vpack.c.b16 %v8168, %v8165
        %v8238 = vpack.c.b16 %v8172, %v8169
        %v8239 = vpack.c.b16 %v8173, %v8170
        %v8240 = vpack.c.b16 %v8174, %v8171
        %v8241 = vpack.c.b16 %v8178, %v8175
        %v8242 = vpack.c.b16 %v8179, %v8176
        %v8243 = vpack.c.b16 %v8180, %v8177
        %v8244 = vpack.c.b16 %v8184, %v8181
        %v8245 = vpack.c.b16 %v8185, %v8182
        %v8246 = vpack.c.b16 %v8186, %v8183
        %v8247 = vpack.c.b16 %v8190, %v8187
        %v8248 = vpack.c.b16 %v8191, %v8188
        %v8249 = vpack.c.b16 %v8192, %v8189
        %v8250 = vpack.c.b16 %v8196, %v8193
        %v8251 = vpack.c.b16 %v8197, %v8194
        %v8252 = vpack.c.b16 %v8198, %v8195
        %v8253 = vpack.c.b16 %v8202, %v8199
        %v8254 = vpack.c.b16 %v8203, %v8200
        %v8255 = vpack.c.b16 %v8204, %v8201
        %v8256 = vpack.c.b16 %v8208, %v8205
        %v8257 = vpack.c.b16 %v8209, %v8206
        %v8258 = vpack.c.b16 %v8210, %v8207
        %8307 = vmatprep.subr.bf16.mxu0 %v8212
        %8308 = vmatpush1.bf16.msra.mxu0 %v8211
        %8309 = vmatprep.subr.bf16.mxu0 %v8215
        %8310 = vmatpush1.bf16.msra.mxu0 %v8214
        %8311 = vmatprep.subr.bf16.mxu0 %v8218
        %8312 = vmatpush1.bf16.msra.mxu0 %v8217
        %8313 = vmatprep.subr.bf16.mxu0 %v8221
        %8314 = vmatpush1.bf16.msra.mxu0 %v8220
        %8315 = vmatprep.subr.bf16.mxu0 %v8224
        %8316 = vmatpush1.bf16.msra.mxu0 %v8223
        %8317 = vmatprep.subr.bf16.mxu0 %v8227
        %8318 = vmatpush1.bf16.msra.mxu0 %v8226
        %8319 = vmatprep.subr.bf16.mxu0 %v8230
        %8320 = vmatpush1.bf16.msra.mxu0 %v8229
        %8321 = vmatprep.subr.bf16.mxu0 %v8233
        %8322 = vmatpush1.bf16.msra.mxu0 %v8232
        %8323 = vmatprep.subr.bf16.mxu0 %v8236
        %8324 = vmatpush1.bf16.msra.mxu0 %v8235
        %8325 = vmatprep.subr.bf16.mxu0 %v8239
        %8326 = vmatpush1.bf16.msra.mxu0 %v8238
        %8327 = vmatprep.subr.bf16.mxu0 %v8242
        %8328 = vmatpush1.bf16.msra.mxu0 %v8241
        %8329 = vmatprep.subr.bf16.mxu0 %v8245
        %8330 = vmatpush1.bf16.msra.mxu0 %v8244
        %8331 = vmatprep.subr.bf16.mxu0 %v8248
        %8332 = vmatpush1.bf16.msra.mxu0 %v8247
        %8333 = vmatprep.subr.bf16.mxu0 %v8251
        %8334 = vmatpush1.bf16.msra.mxu0 %v8250
        %8335 = vmatprep.subr.bf16.mxu0 %v8254
        %8336 = vmatpush1.bf16.msra.mxu0 %v8253
        %8337 = vmatprep.subr.bf16.mxu0 %v8257
        %8338 = vmatpush1.bf16.msra.mxu0 %v8256
        %8339 = vmatprep.mubr.bf16.mxu0 %v8048
        %8340 = vmatmul.mubr.bf16.gmra.mrb[0].mxu0 %v8047
        %v8341 = vpop.f32.mrb[0].mxu0
        %v8342 = vadd.f32 0.0, %v8341
        %v8343 = vpop.f32.mrb[0].mxu0
        %v8344 = vadd.f32 0.0, %v8343
        %v8345 = vpop.f32.mrb[0].mxu0
        %v8346 = vpop.f32.mrb[0].mxu0
        %8347 = vdwg.mxu0
        %8348 = vmatprep.subr.bf16.mxu0 0
        %8349 = vmatpush1.bf16.msra.mxu0 %v8213
        %8350 = vmatprep.subr.bf16.mxu0 0
        %8351 = vmatpush1.bf16.msra.mxu0 %v8216
        %8352 = vmatprep.subr.bf16.mxu0 0
        %8353 = vmatpush1.bf16.msra.mxu0 %v8219
        %8354 = vmatprep.subr.bf16.mxu0 0
        %8355 = vmatpush1.bf16.msra.mxu0 %v8222
        %8356 = vmatprep.subr.bf16.mxu0 0
        %8357 = vmatpush1.bf16.msra.mxu0 %v8225
        %8358 = vmatprep.subr.bf16.mxu0 0
        %8359 = vmatpush1.bf16.msra.mxu0 %v8228
        %8360 = vmatprep.subr.bf16.mxu0 0
        %8361 = vmatpush1.bf16.msra.mxu0 %v8231
        %8362 = vmatprep.subr.bf16.mxu0 0
        %8363 = vmatpush1.bf16.msra.mxu0 %v8234
        %8364 = vmatprep.subr.bf16.mxu0 0
        %8365 = vmatpush1.bf16.msra.mxu0 %v8237
        %8366 = vmatprep.subr.bf16.mxu0 0
        %8367 = vmatpush1.bf16.msra.mxu0 %v8240
        %8368 = vmatprep.subr.bf16.mxu0 0
        %8369 = vmatpush1.bf16.msra.mxu0 %v8243
        %8370 = vmatprep.subr.bf16.mxu0 0
        %8371 = vmatpush1.bf16.msra.mxu0 %v8246
        %8372 = vmatprep.subr.bf16.mxu0 0
        %8373 = vmatpush1.bf16.msra.mxu0 %v8249
        %8374 = vmatprep.subr.bf16.mxu0 0
        %8375 = vmatpush1.bf16.msra.mxu0 %v8252
        %8376 = vmatprep.subr.bf16.mxu0 0
        %8377 = vmatpush1.bf16.msra.mxu0 %v8255
        %8378 = vmatprep.subr.bf16.mxu0 0
        %8379 = vmatpush1.bf16.msra.mxu0 %v8258
        %8380 = vmatprep.mubr.bf16.mxu0 %v8048
        %8381 = vmatmul.mubr.bf16.gmra.mrb[0].mxu0 %v8047
        %v8382 = vpop.f32.mrb[0].mxu0
        %v8383 = vadd.f32 0.0, %v8382
        %v8384 = vpop.f32.mrb[0].mxu0
        %v8385 = vpop.f32.mrb[0].mxu0
        %v8386 = vpop.f32.mrb[0].mxu0
        %8387 = vdwg.mxu0
        %v8388 = vadd.f32 %v7979, %v8342
        %v8389 = vadd.f32 %v7980, %v8344
        %v8390 = vadd.f32 %v7981, %v8383
        %s8391 = scalar_lea.vmem %s11, 4608
        %v8392 = vld [vmem:[%s8391] sm:$0xff]
        %v8393 = vld [vmem:[%s8391 + $0x8] sm:$0xf]
        %v8394 = vld [vmem:[%s8391 + $0xc] sm:$0xff]
        %v8395 = vld [vmem:[%s8391 + $0x14] sm:$0xf]
        %v8396 = vld [vmem:[%s8391 + $0x18] sm:$0xff]
        %v8397 = vld [vmem:[%s8391 + $0x20] sm:$0xf]
        %v8398 = vld [vmem:[%s8391 + $0x24] sm:$0xff]
        %v8399 = vld [vmem:[%s8391 + $0x2c] sm:$0xf]
        %v8400 = vld [vmem:[%s8391 + $0x30] sm:$0xff]
        %v8401 = vld [vmem:[%s8391 + $0x38] sm:$0xf]
        %v8402 = vld [vmem:[%s8391 + $0x3c] sm:$0xff]
        %v8403 = vld [vmem:[%s8391 + $0x44] sm:$0xf]
        %v8404 = vld [vmem:[%s8391 + $0x48] sm:$0xff]
        %v8405 = vld [vmem:[%s8391 + $0x50] sm:$0xf]
        %v8406 = vld [vmem:[%s8391 + $0x54] sm:$0xff]
        %v8407 = vld [vmem:[%s8391 + $0x5c] sm:$0xf]
        %v8408 = vld [vmem:[%s8391 + $0x60] sm:$0xff]
        %v8409 = vld [vmem:[%s8391 + $0x68] sm:$0xf]
        %v8410 = vld [vmem:[%s8391 + $0x6c] sm:$0xff]
        %v8411 = vld [vmem:[%s8391 + $0x74] sm:$0xf]
        %v8412 = vld [vmem:[%s8391 + $0x78] sm:$0xff]
        %v8413 = vld [vmem:[%s8391 + $0x80] sm:$0xf]
        %v8414 = vld [vmem:[%s8391 + $0x84] sm:$0xff]
        %v8415 = vld [vmem:[%s8391 + $0x8c] sm:$0xf]
        %v8416 = vld [vmem:[%s8391 + $0x90] sm:$0xff]
        %v8417 = vld [vmem:[%s8391 + $0x98] sm:$0xf]
        %v8418 = vld [vmem:[%s8391 + $0x9c] sm:$0xff]
        %v8419 = vld [vmem:[%s8391 + $0xa4] sm:$0xf]
        %v8420 = vld [vmem:[%s8391 + $0xa8] sm:$0xff]
        %v8421 = vld [vmem:[%s8391 + $0xb0] sm:$0xf]
        %v8422 = vld [vmem:[%s8391 + $0xb4] sm:$0xff]
        %v8423 = vld [vmem:[%s8391 + $0xbc] sm:$0xf]
        %v8424 = vld [vmem:[%s8391 + $0xc0] sm:$0xff]
        %v8425 = vld [vmem:[%s8391 + $0xc8] sm:$0xf]
        %v8426 = vld [vmem:[%s8391 + $0xcc] sm:$0xff]
        %v8427 = vld [vmem:[%s8391 + $0xd4] sm:$0xf]
        %v8428 = vld [vmem:[%s8391 + $0xd8] sm:$0xff]
        %v8429 = vld [vmem:[%s8391 + $0xe0] sm:$0xf]
        %v8430 = vld [vmem:[%s8391 + $0xe4] sm:$0xff]
        %v8431 = vld [vmem:[%s8391 + $0xec] sm:$0xf]
        %v8432 = vld [vmem:[%s8391 + $0xf0] sm:$0xff]
        %v8433 = vld [vmem:[%s8391 + $0xf8] sm:$0xf]
        %v8434 = vld [vmem:[%s8391 + $0xfc] sm:$0xff]
        %v8435 = vld [vmem:[%s8391 + $0x104] sm:$0xf]
        %v8436 = vld [vmem:[%s8391 + $0x108] sm:$0xff]
        %v8437 = vld [vmem:[%s8391 + $0x110] sm:$0xf]
        %v8438 = vld [vmem:[%s8391 + $0x114] sm:$0xff]
        %v8439 = vld [vmem:[%s8391 + $0x11c] sm:$0xf]
        %v8440 = vld [vmem:[%s8391 + $0x120] sm:$0xff]
        %v8441 = vld [vmem:[%s8391 + $0x128] sm:$0xf]
        %v8442 = vld [vmem:[%s8391 + $0x12c] sm:$0xff]
        %v8443 = vld [vmem:[%s8391 + $0x134] sm:$0xf]
        %v8444 = vld [vmem:[%s8391 + $0x138] sm:$0xff]
        %v8445 = vld [vmem:[%s8391 + $0x140] sm:$0xf]
        %v8446 = vld [vmem:[%s8391 + $0x144] sm:$0xff]
        %v8447 = vld [vmem:[%s8391 + $0x14c] sm:$0xf]
        %v8448 = vld [vmem:[%s8391 + $0x150] sm:$0xff]
        %v8449 = vld [vmem:[%s8391 + $0x158] sm:$0xf]
        %v8450 = vld [vmem:[%s8391 + $0x15c] sm:$0xff]
        %v8451 = vld [vmem:[%s8391 + $0x164] sm:$0xf]
        %v8452 = vld [vmem:[%s8391 + $0x168] sm:$0xff]
        %v8453 = vld [vmem:[%s8391 + $0x170] sm:$0xf]
        %v8454 = vld [vmem:[%s8391 + $0x174] sm:$0xff]
        %v8455 = vld [vmem:[%s8391 + $0x17c] sm:$0xf]
        %v8456 = vrot.slane %v3486, 6
        %v8457 = vrot.slane %v3487, 6
        %v8524 = vunpack.c.l.b16 %v8392
        %v8525 = vunpack.c.h.b16 %v8392
        %v8526 = vunpack.c.l.b16 %v8393
        %v8527 = vunpack.c.l.b16 %v8394
        %v8528 = vunpack.c.h.b16 %v8394
        %v8529 = vunpack.c.l.b16 %v8395
        %v8530 = vunpack.c.l.b16 %v8396
        %v8531 = vunpack.c.h.b16 %v8396
        %v8532 = vunpack.c.l.b16 %v8397
        %v8533 = vunpack.c.l.b16 %v8398
        %v8534 = vunpack.c.h.b16 %v8398
        %v8535 = vunpack.c.l.b16 %v8399
        %v8536 = vunpack.c.l.b16 %v8400
        %v8537 = vunpack.c.h.b16 %v8400
        %v8538 = vunpack.c.l.b16 %v8401
        %v8539 = vunpack.c.l.b16 %v8402
        %v8540 = vunpack.c.h.b16 %v8402
        %v8541 = vunpack.c.l.b16 %v8403
        %v8542 = vunpack.c.l.b16 %v8404
        %v8543 = vunpack.c.h.b16 %v8404
        %v8544 = vunpack.c.l.b16 %v8405
        %v8545 = vunpack.c.l.b16 %v8406
        %v8546 = vunpack.c.h.b16 %v8406
        %v8547 = vunpack.c.l.b16 %v8407
        %v8548 = vunpack.c.l.b16 %v8408
        %v8549 = vunpack.c.h.b16 %v8408
        %v8550 = vunpack.c.l.b16 %v8409
        %v8551 = vunpack.c.l.b16 %v8410
        %v8552 = vunpack.c.h.b16 %v8410
        %v8553 = vunpack.c.l.b16 %v8411
        %v8554 = vunpack.c.l.b16 %v8412
        %v8555 = vunpack.c.h.b16 %v8412
        %v8556 = vunpack.c.l.b16 %v8413
        %v8557 = vunpack.c.l.b16 %v8414
        %v8558 = vunpack.c.h.b16 %v8414
        %v8559 = vunpack.c.l.b16 %v8415
        %v8560 = vunpack.c.l.b16 %v8416
        %v8561 = vunpack.c.h.b16 %v8416
        %v8562 = vunpack.c.l.b16 %v8417
        %v8563 = vunpack.c.l.b16 %v8418
        %v8564 = vunpack.c.h.b16 %v8418
        %v8565 = vunpack.c.l.b16 %v8419
        %v8566 = vunpack.c.l.b16 %v8420
        %v8567 = vunpack.c.h.b16 %v8420
        %v8568 = vunpack.c.l.b16 %v8421
        %v8569 = vunpack.c.l.b16 %v8422
        %v8570 = vunpack.c.h.b16 %v8422
        %v8571 = vunpack.c.l.b16 %v8423
        %v8572 = vunpack.c.l.b16 %v8424
        %v8573 = vunpack.c.h.b16 %v8424
        %v8574 = vunpack.c.l.b16 %v8425
        %v8575 = vunpack.c.l.b16 %v8426
        %v8576 = vunpack.c.h.b16 %v8426
        %v8577 = vunpack.c.l.b16 %v8427
        %v8578 = vunpack.c.l.b16 %v8428
        %v8579 = vunpack.c.h.b16 %v8428
        %v8580 = vunpack.c.l.b16 %v8429
        %v8581 = vunpack.c.l.b16 %v8430
        %v8582 = vunpack.c.h.b16 %v8430
        %v8583 = vunpack.c.l.b16 %v8431
        %v8584 = vunpack.c.l.b16 %v8432
        %v8585 = vunpack.c.h.b16 %v8432
        %v8586 = vunpack.c.l.b16 %v8433
        %v8587 = vunpack.c.l.b16 %v8434
        %v8588 = vunpack.c.h.b16 %v8434
        %v8589 = vunpack.c.l.b16 %v8435
        %v8590 = vunpack.c.l.b16 %v8436
        %v8591 = vunpack.c.h.b16 %v8436
        %v8592 = vunpack.c.l.b16 %v8437
        %v8593 = vunpack.c.l.b16 %v8438
        %v8594 = vunpack.c.h.b16 %v8438
        %v8595 = vunpack.c.l.b16 %v8439
        %v8596 = vunpack.c.l.b16 %v8440
        %v8597 = vunpack.c.h.b16 %v8440
        %v8598 = vunpack.c.l.b16 %v8441
        %v8599 = vunpack.c.l.b16 %v8442
        %v8600 = vunpack.c.h.b16 %v8442
        %v8601 = vunpack.c.l.b16 %v8443
        %v8602 = vunpack.c.l.b16 %v8444
        %v8603 = vunpack.c.h.b16 %v8444
        %v8604 = vunpack.c.l.b16 %v8445
        %v8605 = vunpack.c.l.b16 %v8446
        %v8606 = vunpack.c.h.b16 %v8446
        %v8607 = vunpack.c.l.b16 %v8447
        %v8608 = vunpack.c.l.b16 %v8448
        %v8609 = vunpack.c.h.b16 %v8448
        %v8610 = vunpack.c.l.b16 %v8449
        %v8611 = vunpack.c.l.b16 %v8450
        %v8612 = vunpack.c.h.b16 %v8450
        %v8613 = vunpack.c.l.b16 %v8451
        %v8614 = vunpack.c.l.b16 %v8452
        %v8615 = vunpack.c.h.b16 %v8452
        %v8616 = vunpack.c.l.b16 %v8453
        %v8617 = vunpack.c.l.b16 %v8454
        %v8618 = vunpack.c.h.b16 %v8454
        %v8619 = vunpack.c.l.b16 %v8455
        %v8620 = vpack.c.b16 %v8527, %v8524
        %v8621 = vpack.c.b16 %v8528, %v8525
        %v8622 = vpack.c.b16 %v8529, %v8526
        %v8623 = vpack.c.b16 %v8533, %v8530
        %v8624 = vpack.c.b16 %v8534, %v8531
        %v8625 = vpack.c.b16 %v8535, %v8532
        %v8626 = vpack.c.b16 %v8539, %v8536
        %v8627 = vpack.c.b16 %v8540, %v8537
        %v8628 = vpack.c.b16 %v8541, %v8538
        %v8629 = vpack.c.b16 %v8545, %v8542
        %v8630 = vpack.c.b16 %v8546, %v8543
        %v8631 = vpack.c.b16 %v8547, %v8544
        %v8632 = vpack.c.b16 %v8551, %v8548
        %v8633 = vpack.c.b16 %v8552, %v8549
        %v8634 = vpack.c.b16 %v8553, %v8550
        %v8635 = vpack.c.b16 %v8557, %v8554
        %v8636 = vpack.c.b16 %v8558, %v8555
        %v8637 = vpack.c.b16 %v8559, %v8556
        %v8638 = vpack.c.b16 %v8563, %v8560
        %v8639 = vpack.c.b16 %v8564, %v8561
        %v8640 = vpack.c.b16 %v8565, %v8562
        %v8641 = vpack.c.b16 %v8569, %v8566
        %v8642 = vpack.c.b16 %v8570, %v8567
        %v8643 = vpack.c.b16 %v8571, %v8568
        %v8644 = vpack.c.b16 %v8575, %v8572
        %v8645 = vpack.c.b16 %v8576, %v8573
        %v8646 = vpack.c.b16 %v8577, %v8574
        %v8647 = vpack.c.b16 %v8581, %v8578
        %v8648 = vpack.c.b16 %v8582, %v8579
        %v8649 = vpack.c.b16 %v8583, %v8580
        %v8650 = vpack.c.b16 %v8587, %v8584
        %v8651 = vpack.c.b16 %v8588, %v8585
        %v8652 = vpack.c.b16 %v8589, %v8586
        %v8653 = vpack.c.b16 %v8593, %v8590
        %v8654 = vpack.c.b16 %v8594, %v8591
        %v8655 = vpack.c.b16 %v8595, %v8592
        %v8656 = vpack.c.b16 %v8599, %v8596
        %v8657 = vpack.c.b16 %v8600, %v8597
        %v8658 = vpack.c.b16 %v8601, %v8598
        %v8659 = vpack.c.b16 %v8605, %v8602
        %v8660 = vpack.c.b16 %v8606, %v8603
        %v8661 = vpack.c.b16 %v8607, %v8604
        %v8662 = vpack.c.b16 %v8611, %v8608
        %v8663 = vpack.c.b16 %v8612, %v8609
        %v8664 = vpack.c.b16 %v8613, %v8610
        %v8665 = vpack.c.b16 %v8617, %v8614
        %v8666 = vpack.c.b16 %v8618, %v8615
        %v8667 = vpack.c.b16 %v8619, %v8616
        %8716 = vmatprep.subr.bf16.mxu0 %v8621
        %8717 = vmatpush1.bf16.msra.mxu0 %v8620
        %8718 = vmatprep.subr.bf16.mxu0 %v8624
        %8719 = vmatpush1.bf16.msra.mxu0 %v8623
        %8720 = vmatprep.subr.bf16.mxu0 %v8627
        %8721 = vmatpush1.bf16.msra.mxu0 %v8626
        %8722 = vmatprep.subr.bf16.mxu0 %v8630
        %8723 = vmatpush1.bf16.msra.mxu0 %v8629
        %8724 = vmatprep.subr.bf16.mxu0 %v8633
        %8725 = vmatpush1.bf16.msra.mxu0 %v8632
        %8726 = vmatprep.subr.bf16.mxu0 %v8636
        %8727 = vmatpush1.bf16.msra.mxu0 %v8635
        %8728 = vmatprep.subr.bf16.mxu0 %v8639
        %8729 = vmatpush1.bf16.msra.mxu0 %v8638
        %8730 = vmatprep.subr.bf16.mxu0 %v8642
        %8731 = vmatpush1.bf16.msra.mxu0 %v8641
        %8732 = vmatprep.subr.bf16.mxu0 %v8645
        %8733 = vmatpush1.bf16.msra.mxu0 %v8644
        %8734 = vmatprep.subr.bf16.mxu0 %v8648
        %8735 = vmatpush1.bf16.msra.mxu0 %v8647
        %8736 = vmatprep.subr.bf16.mxu0 %v8651
        %8737 = vmatpush1.bf16.msra.mxu0 %v8650
        %8738 = vmatprep.subr.bf16.mxu0 %v8654
        %8739 = vmatpush1.bf16.msra.mxu0 %v8653
        %8740 = vmatprep.subr.bf16.mxu0 %v8657
        %8741 = vmatpush1.bf16.msra.mxu0 %v8656
        %8742 = vmatprep.subr.bf16.mxu0 %v8660
        %8743 = vmatpush1.bf16.msra.mxu0 %v8659
        %8744 = vmatprep.subr.bf16.mxu0 %v8663
        %8745 = vmatpush1.bf16.msra.mxu0 %v8662
        %8746 = vmatprep.subr.bf16.mxu0 %v8666
        %8747 = vmatpush1.bf16.msra.mxu0 %v8665
        %8748 = vmatprep.mubr.bf16.mxu0 %v8457
        %8749 = vmatmul.mubr.bf16.gmra.mrb[0].mxu0 %v8456
        %v8750 = vpop.f32.mrb[0].mxu0
        %v8751 = vadd.f32 0.0, %v8750
        %v8752 = vpop.f32.mrb[0].mxu0
        %v8753 = vadd.f32 0.0, %v8752
        %v8754 = vpop.f32.mrb[0].mxu0
        %v8755 = vpop.f32.mrb[0].mxu0
        %8756 = vdwg.mxu0
        %8757 = vmatprep.subr.bf16.mxu0 0
        %8758 = vmatpush1.bf16.msra.mxu0 %v8622
        %8759 = vmatprep.subr.bf16.mxu0 0
        %8760 = vmatpush1.bf16.msra.mxu0 %v8625
        %8761 = vmatprep.subr.bf16.mxu0 0
        %8762 = vmatpush1.bf16.msra.mxu0 %v8628
        %8763 = vmatprep.subr.bf16.mxu0 0
        %8764 = vmatpush1.bf16.msra.mxu0 %v8631
        %8765 = vmatprep.subr.bf16.mxu0 0
        %8766 = vmatpush1.bf16.msra.mxu0 %v8634
        %8767 = vmatprep.subr.bf16.mxu0 0
        %8768 = vmatpush1.bf16.msra.mxu0 %v8637
        %8769 = vmatprep.subr.bf16.mxu0 0
        %8770 = vmatpush1.bf16.msra.mxu0 %v8640
        %8771 = vmatprep.subr.bf16.mxu0 0
        %8772 = vmatpush1.bf16.msra.mxu0 %v8643
        %8773 = vmatprep.subr.bf16.mxu0 0
        %8774 = vmatpush1.bf16.msra.mxu0 %v8646
        %8775 = vmatprep.subr.bf16.mxu0 0
        %8776 = vmatpush1.bf16.msra.mxu0 %v8649
        %8777 = vmatprep.subr.bf16.mxu0 0
        %8778 = vmatpush1.bf16.msra.mxu0 %v8652
        %8779 = vmatprep.subr.bf16.mxu0 0
        %8780 = vmatpush1.bf16.msra.mxu0 %v8655
        %8781 = vmatprep.subr.bf16.mxu0 0
        %8782 = vmatpush1.bf16.msra.mxu0 %v8658
        %8783 = vmatprep.subr.bf16.mxu0 0
        %8784 = vmatpush1.bf16.msra.mxu0 %v8661
        %8785 = vmatprep.subr.bf16.mxu0 0
        %8786 = vmatpush1.bf16.msra.mxu0 %v8664
        %8787 = vmatprep.subr.bf16.mxu0 0
        %8788 = vmatpush1.bf16.msra.mxu0 %v8667
        %8789 = vmatprep.mubr.bf16.mxu0 %v8457
        %8790 = vmatmul.mubr.bf16.gmra.mrb[0].mxu0 %v8456
        %v8791 = vpop.f32.mrb[0].mxu0
        %v8792 = vadd.f32 0.0, %v8791
        %v8793 = vpop.f32.mrb[0].mxu0
        %v8794 = vpop.f32.mrb[0].mxu0
        %v8795 = vpop.f32.mrb[0].mxu0
        %8796 = vdwg.mxu0
        %v8797 = vadd.f32 %v8388, %v8751
        %v8798 = vadd.f32 %v8389, %v8753
        %v8799 = vadd.f32 %v8390, %v8792
        %s8800 = scalar_lea.vmem %s11, 4992
        %v8801 = vld [vmem:[%s8800] sm:$0xff]
        %v8802 = vld [vmem:[%s8800 + $0x8] sm:$0xf]
        %v8803 = vld [vmem:[%s8800 + $0xc] sm:$0xff]
        %v8804 = vld [vmem:[%s8800 + $0x14] sm:$0xf]
        %v8805 = vld [vmem:[%s8800 + $0x18] sm:$0xff]
        %v8806 = vld [vmem:[%s8800 + $0x20] sm:$0xf]
        %v8807 = vld [vmem:[%s8800 + $0x24] sm:$0xff]
        %v8808 = vld [vmem:[%s8800 + $0x2c] sm:$0xf]
        %v8809 = vld [vmem:[%s8800 + $0x30] sm:$0xff]
        %v8810 = vld [vmem:[%s8800 + $0x38] sm:$0xf]
        %v8811 = vld [vmem:[%s8800 + $0x3c] sm:$0xff]
        %v8812 = vld [vmem:[%s8800 + $0x44] sm:$0xf]
        %v8813 = vld [vmem:[%s8800 + $0x48] sm:$0xff]
        %v8814 = vld [vmem:[%s8800 + $0x50] sm:$0xf]
        %v8815 = vld [vmem:[%s8800 + $0x54] sm:$0xff]
        %v8816 = vld [vmem:[%s8800 + $0x5c] sm:$0xf]
        %v8817 = vld [vmem:[%s8800 + $0x60] sm:$0xff]
        %v8818 = vld [vmem:[%s8800 + $0x68] sm:$0xf]
        %v8819 = vld [vmem:[%s8800 + $0x6c] sm:$0xff]
        %v8820 = vld [vmem:[%s8800 + $0x74] sm:$0xf]
        %v8821 = vld [vmem:[%s8800 + $0x78] sm:$0xff]
        %v8822 = vld [vmem:[%s8800 + $0x80] sm:$0xf]
        %v8823 = vld [vmem:[%s8800 + $0x84] sm:$0xff]
        %v8824 = vld [vmem:[%s8800 + $0x8c] sm:$0xf]
        %v8825 = vld [vmem:[%s8800 + $0x90] sm:$0xff]
        %v8826 = vld [vmem:[%s8800 + $0x98] sm:$0xf]
        %v8827 = vld [vmem:[%s8800 + $0x9c] sm:$0xff]
        %v8828 = vld [vmem:[%s8800 + $0xa4] sm:$0xf]
        %v8829 = vld [vmem:[%s8800 + $0xa8] sm:$0xff]
        %v8830 = vld [vmem:[%s8800 + $0xb0] sm:$0xf]
        %v8831 = vld [vmem:[%s8800 + $0xb4] sm:$0xff]
        %v8832 = vld [vmem:[%s8800 + $0xbc] sm:$0xf]
        %v8833 = vld [vmem:[%s8800 + $0xc0] sm:$0xff]
        %v8834 = vld [vmem:[%s8800 + $0xc8] sm:$0xf]
        %v8835 = vld [vmem:[%s8800 + $0xcc] sm:$0xff]
        %v8836 = vld [vmem:[%s8800 + $0xd4] sm:$0xf]
        %v8837 = vld [vmem:[%s8800 + $0xd8] sm:$0xff]
        %v8838 = vld [vmem:[%s8800 + $0xe0] sm:$0xf]
        %v8839 = vld [vmem:[%s8800 + $0xe4] sm:$0xff]
        %v8840 = vld [vmem:[%s8800 + $0xec] sm:$0xf]
        %v8841 = vld [vmem:[%s8800 + $0xf0] sm:$0xff]
        %v8842 = vld [vmem:[%s8800 + $0xf8] sm:$0xf]
        %v8843 = vld [vmem:[%s8800 + $0xfc] sm:$0xff]
        %v8844 = vld [vmem:[%s8800 + $0x104] sm:$0xf]
        %v8845 = vld [vmem:[%s8800 + $0x108] sm:$0xff]
        %v8846 = vld [vmem:[%s8800 + $0x110] sm:$0xf]
        %v8847 = vld [vmem:[%s8800 + $0x114] sm:$0xff]
        %v8848 = vld [vmem:[%s8800 + $0x11c] sm:$0xf]
        %v8849 = vld [vmem:[%s8800 + $0x120] sm:$0xff]
        %v8850 = vld [vmem:[%s8800 + $0x128] sm:$0xf]
        %v8851 = vld [vmem:[%s8800 + $0x12c] sm:$0xff]
        %v8852 = vld [vmem:[%s8800 + $0x134] sm:$0xf]
        %v8853 = vld [vmem:[%s8800 + $0x138] sm:$0xff]
        %v8854 = vld [vmem:[%s8800 + $0x140] sm:$0xf]
        %v8855 = vld [vmem:[%s8800 + $0x144] sm:$0xff]
        %v8856 = vld [vmem:[%s8800 + $0x14c] sm:$0xf]
        %v8857 = vld [vmem:[%s8800 + $0x150] sm:$0xff]
        %v8858 = vld [vmem:[%s8800 + $0x158] sm:$0xf]
        %v8859 = vld [vmem:[%s8800 + $0x15c] sm:$0xff]
        %v8860 = vld [vmem:[%s8800 + $0x164] sm:$0xf]
        %v8861 = vld [vmem:[%s8800 + $0x168] sm:$0xff]
        %v8862 = vld [vmem:[%s8800 + $0x170] sm:$0xf]
        %v8863 = vld [vmem:[%s8800 + $0x174] sm:$0xff]
        %v8864 = vld [vmem:[%s8800 + $0x17c] sm:$0xf]
        %v8865 = vrot.slane %v3618, 6
        %v8866 = vrot.slane %v3621, 6
        %v8933 = vunpack.c.l.b16 %v8801
        %v8934 = vunpack.c.h.b16 %v8801
        %v8935 = vunpack.c.l.b16 %v8802
        %v8936 = vunpack.c.l.b16 %v8803
        %v8937 = vunpack.c.h.b16 %v8803
        %v8938 = vunpack.c.l.b16 %v8804
        %v8939 = vunpack.c.l.b16 %v8805
        %v8940 = vunpack.c.h.b16 %v8805
        %v8941 = vunpack.c.l.b16 %v8806
        %v8942 = vunpack.c.l.b16 %v8807
        %v8943 = vunpack.c.h.b16 %v8807
        %v8944 = vunpack.c.l.b16 %v8808
        %v8945 = vunpack.c.l.b16 %v8809
        %v8946 = vunpack.c.h.b16 %v8809
        %v8947 = vunpack.c.l.b16 %v8810
        %v8948 = vunpack.c.l.b16 %v8811
        %v8949 = vunpack.c.h.b16 %v8811
        %v8950 = vunpack.c.l.b16 %v8812
        %v8951 = vunpack.c.l.b16 %v8813
        %v8952 = vunpack.c.h.b16 %v8813
        %v8953 = vunpack.c.l.b16 %v8814
        %v8954 = vunpack.c.l.b16 %v8815
        %v8955 = vunpack.c.h.b16 %v8815
        %v8956 = vunpack.c.l.b16 %v8816
        %v8957 = vunpack.c.l.b16 %v8817
        %v8958 = vunpack.c.h.b16 %v8817
        %v8959 = vunpack.c.l.b16 %v8818
        %v8960 = vunpack.c.l.b16 %v8819
        %v8961 = vunpack.c.h.b16 %v8819
        %v8962 = vunpack.c.l.b16 %v8820
        %v8963 = vunpack.c.l.b16 %v8821
        %v8964 = vunpack.c.h.b16 %v8821
        %v8965 = vunpack.c.l.b16 %v8822
        %v8966 = vunpack.c.l.b16 %v8823
        %v8967 = vunpack.c.h.b16 %v8823
        %v8968 = vunpack.c.l.b16 %v8824
        %v8969 = vunpack.c.l.b16 %v8825
        %v8970 = vunpack.c.h.b16 %v8825
        %v8971 = vunpack.c.l.b16 %v8826
        %v8972 = vunpack.c.l.b16 %v8827
        %v8973 = vunpack.c.h.b16 %v8827
        %v8974 = vunpack.c.l.b16 %v8828
        %v8975 = vunpack.c.l.b16 %v8829
        %v8976 = vunpack.c.h.b16 %v8829
        %v8977 = vunpack.c.l.b16 %v8830
        %v8978 = vunpack.c.l.b16 %v8831
        %v8979 = vunpack.c.h.b16 %v8831
        %v8980 = vunpack.c.l.b16 %v8832
        %v8981 = vunpack.c.l.b16 %v8833
        %v8982 = vunpack.c.h.b16 %v8833
        %v8983 = vunpack.c.l.b16 %v8834
        %v8984 = vunpack.c.l.b16 %v8835
        %v8985 = vunpack.c.h.b16 %v8835
        %v8986 = vunpack.c.l.b16 %v8836
        %v8987 = vunpack.c.l.b16 %v8837
        %v8988 = vunpack.c.h.b16 %v8837
        %v8989 = vunpack.c.l.b16 %v8838
        %v8990 = vunpack.c.l.b16 %v8839
        %v8991 = vunpack.c.h.b16 %v8839
        %v8992 = vunpack.c.l.b16 %v8840
        %v8993 = vunpack.c.l.b16 %v8841
        %v8994 = vunpack.c.h.b16 %v8841
        %v8995 = vunpack.c.l.b16 %v8842
        %v8996 = vunpack.c.l.b16 %v8843
        %v8997 = vunpack.c.h.b16 %v8843
        %v8998 = vunpack.c.l.b16 %v8844
        %v8999 = vunpack.c.l.b16 %v8845
        %v9000 = vunpack.c.h.b16 %v8845
        %v9001 = vunpack.c.l.b16 %v8846
        %v9002 = vunpack.c.l.b16 %v8847
        %v9003 = vunpack.c.h.b16 %v8847
        %v9004 = vunpack.c.l.b16 %v8848
        %v9005 = vunpack.c.l.b16 %v8849
        %v9006 = vunpack.c.h.b16 %v8849
        %v9007 = vunpack.c.l.b16 %v8850
        %v9008 = vunpack.c.l.b16 %v8851
        %v9009 = vunpack.c.h.b16 %v8851
        %v9010 = vunpack.c.l.b16 %v8852
        %v9011 = vunpack.c.l.b16 %v8853
        %v9012 = vunpack.c.h.b16 %v8853
        %v9013 = vunpack.c.l.b16 %v8854
        %v9014 = vunpack.c.l.b16 %v8855
        %v9015 = vunpack.c.h.b16 %v8855
        %v9016 = vunpack.c.l.b16 %v8856
        %v9017 = vunpack.c.l.b16 %v8857
        %v9018 = vunpack.c.h.b16 %v8857
        %v9019 = vunpack.c.l.b16 %v8858
        %v9020 = vunpack.c.l.b16 %v8859
        %v9021 = vunpack.c.h.b16 %v8859
        %v9022 = vunpack.c.l.b16 %v8860
        %v9023 = vunpack.c.l.b16 %v8861
        %v9024 = vunpack.c.h.b16 %v8861
        %v9025 = vunpack.c.l.b16 %v8862
        %v9026 = vunpack.c.l.b16 %v8863
        %v9027 = vunpack.c.h.b16 %v8863
        %v9028 = vunpack.c.l.b16 %v8864
        %v9029 = vpack.c.b16 %v8936, %v8933
        %v9030 = vpack.c.b16 %v8937, %v8934
        %v9031 = vpack.c.b16 %v8938, %v8935
        %v9032 = vpack.c.b16 %v8942, %v8939
        %v9033 = vpack.c.b16 %v8943, %v8940
        %v9034 = vpack.c.b16 %v8944, %v8941
        %v9035 = vpack.c.b16 %v8948, %v8945
        %v9036 = vpack.c.b16 %v8949, %v8946
        %v9037 = vpack.c.b16 %v8950, %v8947
        %v9038 = vpack.c.b16 %v8954, %v8951
        %v9039 = vpack.c.b16 %v8955, %v8952
        %v9040 = vpack.c.b16 %v8956, %v8953
        %v9041 = vpack.c.b16 %v8960, %v8957
        %v9042 = vpack.c.b16 %v8961, %v8958
        %v9043 = vpack.c.b16 %v8962, %v8959
        %v9044 = vpack.c.b16 %v8966, %v8963
        %v9045 = vpack.c.b16 %v8967, %v8964
        %v9046 = vpack.c.b16 %v8968, %v8965
        %v9047 = vpack.c.b16 %v8972, %v8969
        %v9048 = vpack.c.b16 %v8973, %v8970
        %v9049 = vpack.c.b16 %v8974, %v8971
        %v9050 = vpack.c.b16 %v8978, %v8975
        %v9051 = vpack.c.b16 %v8979, %v8976
        %v9052 = vpack.c.b16 %v8980, %v8977
        %v9053 = vpack.c.b16 %v8984, %v8981
        %v9054 = vpack.c.b16 %v8985, %v8982
        %v9055 = vpack.c.b16 %v8986, %v8983
        %v9056 = vpack.c.b16 %v8990, %v8987
        %v9057 = vpack.c.b16 %v8991, %v8988
        %v9058 = vpack.c.b16 %v8992, %v8989
        %v9059 = vpack.c.b16 %v8996, %v8993
        %v9060 = vpack.c.b16 %v8997, %v8994
        %v9061 = vpack.c.b16 %v8998, %v8995
        %v9062 = vpack.c.b16 %v9002, %v8999
        %v9063 = vpack.c.b16 %v9003, %v9000
        %v9064 = vpack.c.b16 %v9004, %v9001
        %v9065 = vpack.c.b16 %v9008, %v9005
        %v9066 = vpack.c.b16 %v9009, %v9006
        %v9067 = vpack.c.b16 %v9010, %v9007
        %v9068 = vpack.c.b16 %v9014, %v9011
        %v9069 = vpack.c.b16 %v9015, %v9012
        %v9070 = vpack.c.b16 %v9016, %v9013
        %v9071 = vpack.c.b16 %v9020, %v9017
        %v9072 = vpack.c.b16 %v9021, %v9018
        %v9073 = vpack.c.b16 %v9022, %v9019
        %v9074 = vpack.c.b16 %v9026, %v9023
        %v9075 = vpack.c.b16 %v9027, %v9024
        %v9076 = vpack.c.b16 %v9028, %v9025
        %9125 = vmatprep.subr.bf16.mxu0 %v9030
        %9126 = vmatpush1.bf16.msra.mxu0 %v9029
        %9127 = vmatprep.subr.bf16.mxu0 %v9033
        %9128 = vmatpush1.bf16.msra.mxu0 %v9032
        %9129 = vmatprep.subr.bf16.mxu0 %v9036
        %9130 = vmatpush1.bf16.msra.mxu0 %v9035
        %9131 = vmatprep.subr.bf16.mxu0 %v9039
        %9132 = vmatpush1.bf16.msra.mxu0 %v9038
        %9133 = vmatprep.subr.bf16.mxu0 %v9042
        %9134 = vmatpush1.bf16.msra.mxu0 %v9041
        %9135 = vmatprep.subr.bf16.mxu0 %v9045
        %9136 = vmatpush1.bf16.msra.mxu0 %v9044
        %9137 = vmatprep.subr.bf16.mxu0 %v9048
        %9138 = vmatpush1.bf16.msra.mxu0 %v9047
        %9139 = vmatprep.subr.bf16.mxu0 %v9051
        %9140 = vmatpush1.bf16.msra.mxu0 %v9050
        %9141 = vmatprep.subr.bf16.mxu0 %v9054
        %9142 = vmatpush1.bf16.msra.mxu0 %v9053
        %9143 = vmatprep.subr.bf16.mxu0 %v9057
        %9144 = vmatpush1.bf16.msra.mxu0 %v9056
        %9145 = vmatprep.subr.bf16.mxu0 %v9060
        %9146 = vmatpush1.bf16.msra.mxu0 %v9059
        %9147 = vmatprep.subr.bf16.mxu0 %v9063
        %9148 = vmatpush1.bf16.msra.mxu0 %v9062
        %9149 = vmatprep.subr.bf16.mxu0 %v9066
        %9150 = vmatpush1.bf16.msra.mxu0 %v9065
        %9151 = vmatprep.subr.bf16.mxu0 %v9069
        %9152 = vmatpush1.bf16.msra.mxu0 %v9068
        %9153 = vmatprep.subr.bf16.mxu0 %v9072
        %9154 = vmatpush1.bf16.msra.mxu0 %v9071
        %9155 = vmatprep.subr.bf16.mxu0 %v9075
        %9156 = vmatpush1.bf16.msra.mxu0 %v9074
        %9157 = vmatprep.mubr.bf16.mxu0 %v8866
        %9158 = vmatmul.mubr.bf16.gmra.mrb[0].mxu0 %v8865
        %v9159 = vpop.f32.mrb[0].mxu0
        %v9160 = vadd.f32 0.0, %v9159
        %v9161 = vpop.f32.mrb[0].mxu0
        %v9162 = vadd.f32 0.0, %v9161
        %v9163 = vpop.f32.mrb[0].mxu0
        %v9164 = vpop.f32.mrb[0].mxu0
        %9165 = vdwg.mxu0
        %9166 = vmatprep.subr.bf16.mxu0 0
        %9167 = vmatpush1.bf16.msra.mxu0 %v9031
        %9168 = vmatprep.subr.bf16.mxu0 0
        %9169 = vmatpush1.bf16.msra.mxu0 %v9034
        %9170 = vmatprep.subr.bf16.mxu0 0
        %9171 = vmatpush1.bf16.msra.mxu0 %v9037
        %9172 = vmatprep.subr.bf16.mxu0 0
        %9173 = vmatpush1.bf16.msra.mxu0 %v9040
        %9174 = vmatprep.subr.bf16.mxu0 0
        %9175 = vmatpush1.bf16.msra.mxu0 %v9043
        %9176 = vmatprep.subr.bf16.mxu0 0
        %9177 = vmatpush1.bf16.msra.mxu0 %v9046
        %9178 = vmatprep.subr.bf16.mxu0 0
        %9179 = vmatpush1.bf16.msra.mxu0 %v9049
        %9180 = vmatprep.subr.bf16.mxu0 0
        %9181 = vmatpush1.bf16.msra.mxu0 %v9052
        %9182 = vmatprep.subr.bf16.mxu0 0
        %9183 = vmatpush1.bf16.msra.mxu0 %v9055
        %9184 = vmatprep.subr.bf16.mxu0 0
        %9185 = vmatpush1.bf16.msra.mxu0 %v9058
        %9186 = vmatprep.subr.bf16.mxu0 0
        %9187 = vmatpush1.bf16.msra.mxu0 %v9061
        %9188 = vmatprep.subr.bf16.mxu0 0
        %9189 = vmatpush1.bf16.msra.mxu0 %v9064
        %9190 = vmatprep.subr.bf16.mxu0 0
        %9191 = vmatpush1.bf16.msra.mxu0 %v9067
        %9192 = vmatprep.subr.bf16.mxu0 0
        %9193 = vmatpush1.bf16.msra.mxu0 %v9070
        %9194 = vmatprep.subr.bf16.mxu0 0
        %9195 = vmatpush1.bf16.msra.mxu0 %v9073
        %9196 = vmatprep.subr.bf16.mxu0 0
        %9197 = vmatpush1.bf16.msra.mxu0 %v9076
        %9198 = vmatprep.mubr.bf16.mxu0 %v8866
        %9199 = vmatmul.mubr.bf16.gmra.mrb[0].mxu0 %v8865
        %v9200 = vpop.f32.mrb[0].mxu0
        %v9201 = vadd.f32 0.0, %v9200
        %v9202 = vpop.f32.mrb[0].mxu0
        %v9203 = vpop.f32.mrb[0].mxu0
        %v9204 = vpop.f32.mrb[0].mxu0
        %9205 = vdwg.mxu0
        %v9206 = vadd.f32 %v8797, %v9160
        %v9207 = vadd.f32 %v8798, %v9162
        %v9208 = vadd.f32 %v8799, %v9201
        %v9209 = vld [vmem:[%s12] ss:$4 sm:$0x7]
        %v9211 = vlaneseq
        %v9212 = vshrl.u32 %v9211, 7
        %v9213 = vsub.s32 0, %v9212
        %v9214 = vrot.slane %v9209, %v9213
        %v9215 = vlaneseq
        %v9216 = vshrl.u32 %v9215, 7
        %v9217 = vsub.s32 1, %v9216
        %v9218 = vrot.slane %v9209, %v9217
        %v9219 = vlaneseq
        %v9220 = vshrl.u32 %v9219, 7
        %v9221 = vsub.s32 2, %v9220
        %v9222 = vrot.slane %v9209, %v9221
        %v9226 = vadd.f32 %v9206, %v9214
        %v9227 = vadd.f32 %v9207, %v9218
        %v9228 = vadd.f32 %v9208, %v9222
        %s9229 = scalar_lea.vmem %s12, 1
        %v9230 = vld [vmem:[%s9229] ss:$4 sm:$0x7]
        %v9232 = vlaneseq
        %v9233 = vshrl.u32 %v9232, 7
        %v9234 = vsub.s32 0, %v9233
        %v9235 = vrot.slane %v9230, %v9234
        %v9236 = vlaneseq
        %v9237 = vshrl.u32 %v9236, 7
        %v9238 = vsub.s32 1, %v9237
        %v9239 = vrot.slane %v9230, %v9238
        %v9240 = vlaneseq
        %v9241 = vshrl.u32 %v9240, 7
        %v9242 = vsub.s32 2, %v9241
        %v9243 = vrot.slane %v9230, %v9242
        %v9247 = vmul.f32 %v9226, %v9235
        %v9248 = vmul.f32 %v9227, %v9239
        %v9249 = vmul.f32 %v9228, %v9243
        %s9250 = scalar_lea.vmem %s12, 2
        %v9251 = vld [vmem:[%s9250] ss:$4 sm:$0x7]
        %v9253 = vlaneseq
        %v9254 = vshrl.u32 %v9253, 7
        %v9255 = vsub.s32 0, %v9254
        %v9256 = vrot.slane %v9251, %v9255
        %v9257 = vlaneseq
        %v9258 = vshrl.u32 %v9257, 7
        %v9259 = vsub.s32 1, %v9258
        %v9260 = vrot.slane %v9251, %v9259
        %v9261 = vlaneseq
        %v9262 = vshrl.u32 %v9261, 7
        %v9263 = vsub.s32 2, %v9262
        %v9264 = vrot.slane %v9251, %v9263
        %v9268 = vadd.f32 %v9247, %v9256
        %v9269 = vadd.f32 %v9248, %v9260
        %v9270 = vadd.f32 %v9249, %v9264
        %v9271 = vpack.c.bf16 %v9268, %v9268
        %v9272 = vpack.c.bf16 %v9269, %v9269
        %v9273 = vpack.c.bf16 %v9270, %v9270
        %v9274 = vld [vmem:[%s13] sm:$0xff]
        %v9275 = vld [vmem:[%s13 + $0x8] sm:$0xff]
        %v9276 = vld [vmem:[%s13 + $0x10] sm:$0xff]
        %v9277 = vld [vmem:[%s13 + $0x18] sm:$0xff]
        %v9278 = vld [vmem:[%s13 + $0x20] sm:$0xff]
        %v9279 = vld [vmem:[%s13 + $0x28] sm:$0xff]
        %v9280 = vld [vmem:[%s13 + $0x30] sm:$0xff]
        %v9281 = vld [vmem:[%s13 + $0x38] sm:$0xff]
        %v9282 = vld [vmem:[%s13 + $0x40] sm:$0xff]
        %v9283 = vld [vmem:[%s13 + $0x48] sm:$0xff]
        %v9284 = vld [vmem:[%s13 + $0x50] sm:$0xff]
        %v9285 = vld [vmem:[%s13 + $0x58] sm:$0xff]
        %v9286 = vld [vmem:[%s13 + $0x60] sm:$0xff]
        %v9287 = vld [vmem:[%s13 + $0x68] sm:$0xff]
        %v9288 = vld [vmem:[%s13 + $0x70] sm:$0xff]
        %v9289 = vld [vmem:[%s13 + $0x78] sm:$0xff]
        %v9290 = vld [vmem:[%s13 + $0x80] sm:$0xff]
        %v9291 = vld [vmem:[%s13 + $0x88] sm:$0xff]
        %v9292 = vld [vmem:[%s13 + $0x90] sm:$0xff]
        %v9293 = vld [vmem:[%s13 + $0x98] sm:$0xff]
        %v9294 = vld [vmem:[%s13 + $0xa0] sm:$0xff]
        %v9295 = vld [vmem:[%s13 + $0xa8] sm:$0xff]
        %v9296 = vld [vmem:[%s13 + $0xb0] sm:$0xff]
        %v9297 = vld [vmem:[%s13 + $0xb8] sm:$0xff]
        %v9298 = vld [vmem:[%s13 + $0xc0] sm:$0xff]
        %v9299 = vld [vmem:[%s13 + $0xc8] sm:$0xff]
        %v9300 = vld [vmem:[%s13 + $0xd0] sm:$0xff]
        %v9301 = vld [vmem:[%s13 + $0xd8] sm:$0xff]
        %v9302 = vld [vmem:[%s13 + $0xe0] sm:$0xff]
        %v9303 = vld [vmem:[%s13 + $0xe8] sm:$0xff]
        %v9304 = vld [vmem:[%s13 + $0xf0] sm:$0xff]
        %v9305 = vld [vmem:[%s13 + $0xf8] sm:$0xff]
        %v9306 = vld [vmem:[%s13 + $0x100] sm:$0xff]
        %v9307 = vld [vmem:[%s13 + $0x108] sm:$0xff]
        %v9308 = vld [vmem:[%s13 + $0x110] sm:$0xff]
        %v9309 = vld [vmem:[%s13 + $0x118] sm:$0xff]
        %v9310 = vld [vmem:[%s13 + $0x120] sm:$0xff]
        %v9311 = vld [vmem:[%s13 + $0x128] sm:$0x33]
        %v9312 = vld [vmem:[%s14] sm:$0x3]
        %v9351 = vunpack.c.l.b16 %v9274
        %v9352 = vunpack.c.h.b16 %v9274
        %v9353 = vunpack.c.l.b16 %v9275
        %v9354 = vunpack.c.h.b16 %v9275
        %v9355 = vunpack.c.l.b16 %v9276
        %v9356 = vunpack.c.h.b16 %v9276
        %v9357 = vunpack.c.l.b16 %v9277
        %v9358 = vunpack.c.h.b16 %v9277
        %v9359 = vunpack.c.l.b16 %v9278
        %v9360 = vunpack.c.h.b16 %v9278
        %v9361 = vunpack.c.l.b16 %v9279
        %v9362 = vunpack.c.h.b16 %v9279
        %v9363 = vunpack.c.l.b16 %v9280
        %v9364 = vunpack.c.h.b16 %v9280
        %v9365 = vunpack.c.l.b16 %v9281
        %v9366 = vunpack.c.h.b16 %v9281
        %v9367 = vunpack.c.l.b16 %v9282
        %v9368 = vunpack.c.h.b16 %v9282
        %v9369 = vunpack.c.l.b16 %v9283
        %v9370 = vunpack.c.h.b16 %v9283
        %v9371 = vunpack.c.l.b16 %v9284
        %v9372 = vunpack.c.h.b16 %v9284
        %v9373 = vunpack.c.l.b16 %v9285
        %v9374 = vunpack.c.h.b16 %v9285
        %v9375 = vunpack.c.l.b16 %v9286
        %v9376 = vunpack.c.h.b16 %v9286
        %v9377 = vunpack.c.l.b16 %v9287
        %v9378 = vunpack.c.h.b16 %v9287
        %v9379 = vunpack.c.l.b16 %v9288
        %v9380 = vunpack.c.h.b16 %v9288
        %v9381 = vunpack.c.l.b16 %v9289
        %v9382 = vunpack.c.h.b16 %v9289
        %v9383 = vunpack.c.l.b16 %v9290
        %v9384 = vunpack.c.h.b16 %v9290
        %v9385 = vunpack.c.l.b16 %v9291
        %v9386 = vunpack.c.h.b16 %v9291
        %v9387 = vunpack.c.l.b16 %v9292
        %v9388 = vunpack.c.h.b16 %v9292
        %v9389 = vunpack.c.l.b16 %v9293
        %v9390 = vunpack.c.h.b16 %v9293
        %v9391 = vunpack.c.l.b16 %v9294
        %v9392 = vunpack.c.h.b16 %v9294
        %v9393 = vunpack.c.l.b16 %v9295
        %v9394 = vunpack.c.h.b16 %v9295
        %v9395 = vunpack.c.l.b16 %v9296
        %v9396 = vunpack.c.h.b16 %v9296
        %v9397 = vunpack.c.l.b16 %v9297
        %v9398 = vunpack.c.h.b16 %v9297
        %v9399 = vunpack.c.l.b16 %v9298
        %v9400 = vunpack.c.h.b16 %v9298
        %v9401 = vunpack.c.l.b16 %v9299
        %v9402 = vunpack.c.h.b16 %v9299
        %v9403 = vunpack.c.l.b16 %v9300
        %v9404 = vunpack.c.h.b16 %v9300
        %v9405 = vunpack.c.l.b16 %v9301
        %v9406 = vunpack.c.h.b16 %v9301
        %v9407 = vunpack.c.l.b16 %v9302
        %v9408 = vunpack.c.h.b16 %v9302
        %v9409 = vunpack.c.l.b16 %v9303
        %v9410 = vunpack.c.h.b16 %v9303
        %v9411 = vunpack.c.l.b16 %v9304
        %v9412 = vunpack.c.h.b16 %v9304
        %v9413 = vunpack.c.l.b16 %v9305
        %v9414 = vunpack.c.h.b16 %v9305
        %v9415 = vunpack.c.l.b16 %v9306
        %v9416 = vunpack.c.h.b16 %v9306
        %v9417 = vunpack.c.l.b16 %v9307
        %v9418 = vunpack.c.h.b16 %v9307
        %v9419 = vunpack.c.l.b16 %v9308
        %v9420 = vunpack.c.h.b16 %v9308
        %v9421 = vunpack.c.l.b16 %v9309
        %v9422 = vunpack.c.h.b16 %v9309
        %v9423 = vunpack.c.l.b16 %v9310
        %v9424 = vunpack.c.h.b16 %v9310
        %v9425 = vunpack.c.l.b16 %v9311
        %v9426 = vunpack.c.h.b16 %v9311
        %v9427 = vpack.c.b16 %v9353, %v9351
        %v9428 = vpack.c.b16 %v9354, %v9352
        %v9429 = vpack.c.b16 %v9357, %v9355
        %v9430 = vpack.c.b16 %v9358, %v9356
        %v9431 = vpack.c.b16 %v9361, %v9359
        %v9432 = vpack.c.b16 %v9362, %v9360
        %v9433 = vpack.c.b16 %v9365, %v9363
        %v9434 = vpack.c.b16 %v9366, %v9364
        %v9435 = vpack.c.b16 %v9369, %v9367
        %v9436 = vpack.c.b16 %v9370, %v9368
        %v9437 = vpack.c.b16 %v9373, %v9371
        %v9438 = vpack.c.b16 %v9374, %v9372
        %v9439 = vpack.c.b16 %v9377, %v9375
        %v9440 = vpack.c.b16 %v9378, %v9376
        %v9441 = vpack.c.b16 %v9381, %v9379
        %v9442 = vpack.c.b16 %v9382, %v9380
        %v9443 = vpack.c.b16 %v9385, %v9383
        %v9444 = vpack.c.b16 %v9386, %v9384
        %v9445 = vpack.c.b16 %v9389, %v9387
        %v9446 = vpack.c.b16 %v9390, %v9388
        %v9447 = vpack.c.b16 %v9393, %v9391
        %v9448 = vpack.c.b16 %v9394, %v9392
        %v9449 = vpack.c.b16 %v9397, %v9395
        %v9450 = vpack.c.b16 %v9398, %v9396
        %v9451 = vpack.c.b16 %v9401, %v9399
        %v9452 = vpack.c.b16 %v9402, %v9400
        %v9453 = vpack.c.b16 %v9405, %v9403
        %v9454 = vpack.c.b16 %v9406, %v9404
        %v9455 = vpack.c.b16 %v9409, %v9407
        %v9456 = vpack.c.b16 %v9410, %v9408
        %v9457 = vpack.c.b16 %v9413, %v9411
        %v9458 = vpack.c.b16 %v9414, %v9412
        %v9459 = vpack.c.b16 %v9417, %v9415
        %v9460 = vpack.c.b16 %v9418, %v9416
        %v9461 = vpack.c.b16 %v9421, %v9419
        %v9462 = vpack.c.b16 %v9422, %v9420
        %v9463 = vpack.c.b16 %v9425, %v9423
        %v9464 = vpack.c.b16 %v9426, %v9424
        %v9502 = vlaneseq
        %v9503 = vshrl.u32 %v9502, 7
        %v9504 = vsub.s32 0, %v9503
        %v9505 = vrot.slane %v9312, %v9504
        %v9506 = vlaneseq
        %v9507 = vshrl.u32 %v9506, 7
        %v9508 = vsub.s32 1, %v9507
        %v9509 = vrot.slane %v9312, %v9508
        %vm9512 = vcmask 359424
        %v9514 = vsel %vm9512, %v9273, 0
        %vm9516 = vcmask 1045504
        %v9518 = vsel %vm9516, %v9463, 0
        %v9521 = vsel %vm9516, %v9464, 0
        %9523 = vmatprep.subr.bf16.mxu0 %v9428
        %9524 = vmatpush1.bf16.msra.mxu0 %v9427
        %9525 = vmatprep.subr.bf16.mxu0 %v9430
        %9526 = vmatpush1.bf16.msra.mxu0 %v9429
        %9527 = vmatprep.subr.bf16.mxu0 %v9432
        %9528 = vmatpush1.bf16.msra.mxu0 %v9431
        %9529 = vmatprep.subr.bf16.mxu0 %v9434
        %9530 = vmatpush1.bf16.msra.mxu0 %v9433
        %9531 = vmatprep.subr.bf16.mxu0 %v9436
        %9532 = vmatpush1.bf16.msra.mxu0 %v9435
        %9533 = vmatprep.subr.bf16.mxu0 %v9438
        %9534 = vmatpush1.bf16.msra.mxu0 %v9437
        %9535 = vmatprep.subr.bf16.mxu0 %v9440
        %9536 = vmatpush1.bf16.msra.mxu0 %v9439
        %9537 = vmatprep.subr.bf16.mxu0 %v9442
        %9538 = vmatpush1.bf16.msra.mxu0 %v9441
        %9539 = vmatprep.subr.bf16.mxu0 %v9444
        %9540 = vmatpush1.bf16.msra.mxu0 %v9443
        %9541 = vmatprep.subr.bf16.mxu0 %v9446
        %9542 = vmatpush1.bf16.msra.mxu0 %v9445
        %9543 = vmatprep.subr.bf16.mxu0 %v9448
        %9544 = vmatpush1.bf16.msra.mxu0 %v9447
        %9545 = vmatprep.subr.bf16.mxu0 %v9450
        %9546 = vmatpush1.bf16.msra.mxu0 %v9449
        %9547 = vmatprep.subr.bf16.mxu0 %v9452
        %9548 = vmatpush1.bf16.msra.mxu0 %v9451
        %9549 = vmatprep.subr.bf16.mxu0 %v9454
        %9550 = vmatpush1.bf16.msra.mxu0 %v9453
        %9551 = vmatprep.subr.bf16.mxu0 %v9456
        %9552 = vmatpush1.bf16.msra.mxu0 %v9455
        %9553 = vmatprep.subr.bf16.mxu0 %v9458
        %9554 = vmatpush1.bf16.msra.mxu0 %v9457
        %9555 = vmatprep.mubr.bf16.mxu0 %v9272
        %9556 = vmatmul.mubr.bf16.gmra.mrb[0].mxu0 %v9271
        %v9557 = vpop.f32.mrb[0].mxu0
        %v9558 = vadd.f32 %v9505, %v9557
        %v9559 = vpop.f32.mrb[0].mxu0
        %v9560 = vadd.f32 %v9509, %v9559
        %v9561 = vpop.f32.mrb[0].mxu0
        %v9562 = vpop.f32.mrb[0].mxu0
        %9563 = vdwg.mxu0
        %9564 = vmatprep.subr.bf16.mxu0 %v9460
        %9565 = vmatpush1.bf16.msra.mxu0 %v9459
        %9566 = vmatprep.subr.bf16.mxu0 %v9462
        %9567 = vmatpush1.bf16.msra.mxu0 %v9461
        %9568 = vmatprep.subr.bf16.mxu0 %v9521
        %9569 = vmatpush1.bf16.msra.mxu0 %v9518
        %9570 = vmatprep.subr.bf16.mxu0 0
        %9571 = vmatpush1.bf16.msra.mxu0 0
        %9572 = vmatprep.subr.bf16.mxu0 0
        %9573 = vmatpush1.bf16.msra.mxu0 0
        %9574 = vmatprep.subr.bf16.mxu0 0
        %9575 = vmatpush1.bf16.msra.mxu0 0
        %9576 = vmatprep.subr.bf16.mxu0 0
        %9577 = vmatpush1.bf16.msra.mxu0 0
        %9578 = vmatprep.subr.bf16.mxu0 0
        %9579 = vmatpush1.bf16.msra.mxu0 0
        %9580 = vmatprep.subr.bf16.mxu0 0
        %9581 = vmatpush1.bf16.msra.mxu0 0
        %9582 = vmatprep.subr.bf16.mxu0 0
        %9583 = vmatpush1.bf16.msra.mxu0 0
        %9584 = vmatprep.subr.bf16.mxu0 0
        %9585 = vmatpush1.bf16.msra.mxu0 0
        %9586 = vmatprep.subr.bf16.mxu0 0
        %9587 = vmatpush1.bf16.msra.mxu0 0
        %9588 = vmatprep.subr.bf16.mxu0 0
        %9589 = vmatpush1.bf16.msra.mxu0 0
        %9590 = vmatprep.subr.bf16.mxu0 0
        %9591 = vmatpush1.bf16.msra.mxu0 0
        %9592 = vmatprep.subr.bf16.mxu0 0
        %9593 = vmatpush1.bf16.msra.mxu0 0
        %9594 = vmatprep.subr.bf16.mxu0 0
        %9595 = vmatpush1.bf16.msra.mxu0 0
        %9596 = vmatprep.mubr.bf16.mxu0 0
        %9597 = vmatmul.mubr.bf16.gmra.mrb[0].mxu0 %v9514
        %v9598 = vpop.f32.mrb[0].mxu0
        %v9599 = vadd.f32 %v9558, %v9598
        %v9600 = vpop.f32.mrb[0].mxu0
        %v9601 = vadd.f32 %v9560, %v9600
        %v9602 = vpop.f32.mrb[0].mxu0
        %v9603 = vpop.f32.mrb[0].mxu0
        %9604 = vdwg.mxu0
        %v9605 = vpack.c.bf16 %v9599, %v9599
        %v9606 = vpack.c.bf16 %v9601, %v9601
        %v9607 = vld [vmem:[%s15] sm:$0xf]
        %v9608 = vld [vmem:[%s15 + $0x4] sm:$0xf]
        %v9609 = vld [vmem:[%s15 + $0x8] sm:$0xf]
        %v9610 = vld [vmem:[%s15 + $0xc] sm:$0xf]
        %v9611 = vld [vmem:[%s15 + $0x10] sm:$0xf]
        %v9612 = vld [vmem:[%s15 + $0x14] sm:$0xf]
        %v9613 = vld [vmem:[%s15 + $0x18] sm:$0xf]
        %v9614 = vld [vmem:[%s15 + $0x1c] sm:$0xf]
        %v9615 = vld [vmem:[%s15 + $0x20] sm:$0xf]
        %v9616 = vld [vmem:[%s15 + $0x24] sm:$0xf]
        %v9617 = vld [vmem:[%s15 + $0x28] sm:$0xf]
        %v9618 = vld [vmem:[%s15 + $0x2c] sm:$0xf]
        %v9619 = vld [vmem:[%s15 + $0x30] sm:$0xf]
        %v9620 = vld [vmem:[%s15 + $0x34] sm:$0xf]
        %v9621 = vld [vmem:[%s15 + $0x38] sm:$0xf]
        %v9622 = vld [vmem:[%s15 + $0x3c] sm:$0xf]
        %v9623 = vld [vmem:[%s15 + $0x40] sm:$0xf]
        %v9624 = vld [vmem:[%s15 + $0x44] sm:$0xf]
        %v9625 = vld [vmem:[%s15 + $0x48] sm:$0x7]
        %v9626 = vld [vmem:[%s16] sm:$0x1]
        %v9646 = vunpack.c.l.b16 %v9607
        %v9647 = vunpack.c.l.b16 %v9608
        %v9648 = vunpack.c.l.b16 %v9609
        %v9649 = vunpack.c.l.b16 %v9610
        %v9650 = vunpack.c.l.b16 %v9611
        %v9651 = vunpack.c.l.b16 %v9612
        %v9652 = vunpack.c.l.b16 %v9613
        %v9653 = vunpack.c.l.b16 %v9614
        %v9654 = vunpack.c.l.b16 %v9615
        %v9655 = vunpack.c.l.b16 %v9616
        %v9656 = vunpack.c.l.b16 %v9617
        %v9657 = vunpack.c.l.b16 %v9618
        %v9658 = vunpack.c.l.b16 %v9619
        %v9659 = vunpack.c.l.b16 %v9620
        %v9660 = vunpack.c.l.b16 %v9621
        %v9661 = vunpack.c.l.b16 %v9622
        %v9662 = vunpack.c.l.b16 %v9623
        %v9663 = vunpack.c.l.b16 %v9624
        %v9664 = vunpack.c.l.b16 %v9625
        %v9665 = vpack.c.b16 %v9647, %v9646
        %v9666 = vpack.c.b16 %v9649, %v9648
        %v9667 = vpack.c.b16 %v9651, %v9650
        %v9668 = vpack.c.b16 %v9653, %v9652
        %v9669 = vpack.c.b16 %v9655, %v9654
        %v9670 = vpack.c.b16 %v9657, %v9656
        %v9671 = vpack.c.b16 %v9659, %v9658
        %v9672 = vpack.c.b16 %v9661, %v9660
        %v9673 = vpack.c.b16 %v9663, %v9662
        %v9674 = vpack.c.b16 %v9664, %v9664
        %vm9684 = vcmask 179200
        %v9686 = vsel %vm9684, %v9606, 0
        %vm9688 = vcmask 1042432
        %v9690 = vsel %vm9688, %v9674, 0
        %9692 = vmatprep.subr.bf16.mxu0 0
        %9693 = vmatpush1.bf16.msra.mxu0 %v9665
        %9694 = vmatprep.subr.bf16.mxu0 0
        %9695 = vmatpush1.bf16.msra.mxu0 %v9666
        %9696 = vmatprep.subr.bf16.mxu0 0
        %9697 = vmatpush1.bf16.msra.mxu0 %v9667
        %9698 = vmatprep.subr.bf16.mxu0 0
        %9699 = vmatpush1.bf16.msra.mxu0 %v9668
        %9700 = vmatprep.subr.bf16.mxu0 0
        %9701 = vmatpush1.bf16.msra.mxu0 %v9669
        %9702 = vmatprep.subr.bf16.mxu0 0
        %9703 = vmatpush1.bf16.msra.mxu0 %v9670
        %9704 = vmatprep.subr.bf16.mxu0 0
        %9705 = vmatpush1.bf16.msra.mxu0 %v9671
        %9706 = vmatprep.subr.bf16.mxu0 0
        %9707 = vmatpush1.bf16.msra.mxu0 %v9672
        %9708 = vmatprep.subr.bf16.mxu0 0
        %9709 = vmatpush1.bf16.msra.mxu0 %v9673
        %9710 = vmatprep.subr.bf16.mxu0 0
        %9711 = vmatpush1.bf16.msra.mxu0 %v9690
        %9712 = vmatprep.subr.bf16.mxu0 0
        %9713 = vmatpush1.bf16.msra.mxu0 0
        %9714 = vmatprep.subr.bf16.mxu0 0
        %9715 = vmatpush1.bf16.msra.mxu0 0
        %9716 = vmatprep.subr.bf16.mxu0 0
        %9717 = vmatpush1.bf16.msra.mxu0 0
        %9718 = vmatprep.subr.bf16.mxu0 0
        %9719 = vmatpush1.bf16.msra.mxu0 0
        %9720 = vmatprep.subr.bf16.mxu0 0
        %9721 = vmatpush1.bf16.msra.mxu0 0
        %9722 = vmatprep.subr.bf16.mxu0 0
        %9723 = vmatpush1.bf16.msra.mxu0 0
        %9724 = vmatprep.mubr.bf16.mxu0 %v9686
        %9725 = vmatmul.mubr.bf16.gmra.mrb[0].mxu0 %v9605
        %v9726 = vpop.f32.mrb[0].mxu0
        %v9727 = vadd.f32 %v9626, %v9726
        %v9728 = vpop.f32.mrb[0].mxu0
        %v9729 = vpop.f32.mrb[0].mxu0
        %v9730 = vpop.f32.mrb[0].mxu0
        %9731 = vdwg.mxu0
        %vm9732 = vcmask 57344
        %9733 = vst.msk [vmem:[%s540] sm:$0x1] %vm9732, %v9727
        %s9734 = sand.u32 %s401, 1
        %s9735 = scalar_lea.sflag [#allocation7], %s9734
        %s9736 = sand.u32 %s401, 1
        %s9737 = scalar_lea.vmem [#allocation6], %s9736
        // Predicated region
        $region89: #{forward.1} parent=87 // pred_check
          %p9738 = pneg %p411
        $region90: #{forward.1} parent=87 // pred_check_branch
          %9740 = sbr.rel (%p9738) target = $region92
        $region91: #{forward.1} parent=87 // pred_region
          %s9742 = ssub.s32 16, 16
          %9743 = vsyncadd %s9735, %s9742
          %s9744 = smul.addr %s31, 16
          %s9745 = scalar_lea.hbm %s17, %s9744
          %s9747 = sshll.u32 %s9737, 4
          %s9748 = int_to_ptr.vmem [resolvable:$true] %s9747
          %9750 = dma.vmem_to_hbm [thread:$0]  %s9748, 16, %s9745, %s9735
        $region92: #{forward.1} parent=87 // pred_fallthru
          _
      $region88: #{forward.1} parent=5 // pred_fallthru
        _
      %p9751 = scmp.le.s32.totalorder 2, %s26
      // Predicated region
      $region93: #{forward.1} parent=5 // pred_check
        %p9752 = pneg %p9751
      $region94: #{forward.1} parent=5 // pred_check_branch
        %9754 = sbr.rel (%p9752) target = $region96
      $region95: #{forward.1} parent=5 // pred_region
        %s9755 = ssub.s32 %s26, 2
        // Predicated region
        $region97: #{forward.1} parent=95 // pred_check
          %p9756 = pneg %p417
        $region98: #{forward.1} parent=95 // pred_check_branch
          %9758 = sbr.rel (%p9756) target = $region100
        $region99: #{forward.1} parent=95 // pred_region
          %s9759 = sand.u32 %s402, 1
          %s9760 = scalar_lea.sflag [#allocation7], %s9759
          %s9761 = sand.u32 %s402, 1
          %s9762 = scalar_lea.vmem [#allocation6], %s9761
          %9763 = dma.done %s9760, 16
        $region100: #{forward.1} parent=95 // pred_fallthru
          _
      $region96: #{forward.1} parent=5 // pred_fallthru
        _
    $region6: #{forward.1} parent=1 // loop_footer
      %s30 = sadd.s32 1, %s26
    $region7: #{forward.1} parent=1 // loop_footer_branch
      %25 = sbr.rel target = $region3
    $region8: #{forward.1} parent=1 // loop_exit
      _
    %9764 = vsyncpa [#allocation7], 1
    %s9765 = scalar_lea.sflag [#allocation7], 1
    %9766 = vsyncpa %s9765, 1

</llo_original>
